<compile_context>
chip_gen: v7x
topology: tpu7x:2x2x1
jax: 0.10.0
libtpu: 0.0.40
codegen_flags: <defaults>
</compile_context>

<pallas_src>
import functools

import jax
import jax.numpy as jnp
import numpy as np
from jax import lax
from jax.experimental import pallas as pl
from jax.experimental.pallas import tpu as pltpu


# ---------------------------------------------------------------------------
# numerics shared by kernel and pure-JAX reference (identical math paths)
# ---------------------------------------------------------------------------
def _sigmoid(x):
    # single-EUP-op sigmoid: sigmoid(x) = 0.5 * tanh(0.5 * x) + 0.5
    return 0.5 * jnp.tanh(0.5 * x) + 0.5


# ---------------------------------------------------------------------------
# Pallas kernel: full PtrNet1 forward pass (grid=(), everything VMEM resident)
# ---------------------------------------------------------------------------
def _ptrnet1_kernel(task_ref, env_ref,
                    w_emb_ref, w_env_ref,
                    wih_e_ref, whh_e_ref, b_e_ref,
                    wih_d_ref, whh_d_ref, b_d_ref,
                    wq_ref, bq_ref, wrefs_ref, brefs_ref,
                    wq2_ref, bq2_ref,
                    vec_ref, vec2_ref, dec0_ref,
                    pi_ref, ll_ref,
                    enc_scratch,
                    *, n_glimpse, clip_logits, inv_T):
    B, C, _ = task_ref.shape
    E = w_emb_ref.shape[1]
    H = whh_e_ref.shape[0]
    INF = 1e8

    # ---- embeddings: Linear(2, E, bias=False) + Env Linear(2*dt, E, bias=False) ----
    task = task_ref[...]                                        # (B, C, 2)
    w_emb = w_emb_ref[...]                                      # (2, E)
    emb = (task[:, :, 0:1] * w_emb[0:1, :][None, :, :]
           + task[:, :, 1:2] * w_emb[1:2, :][None, :, :])       # (B, C, E)
    env_emb = jnp.dot(env_ref[...], w_env_ref[...],
                      preferred_element_type=jnp.float32)        # (B, E)
    embed_enc = emb + env_emb[:, None, :]                        # (B, C, E)
    embed_flat = embed_enc.reshape(B * C, E)

    whh_e = whh_e_ref[...]
    whh_d = whh_d_ref[...]

    # ---- hoisted LSTM input projections (bias folded in), one big matmul each ----
    gates_in_e = (jnp.dot(embed_flat, wih_e_ref[...],
                          preferred_element_type=jnp.float32)
                  + b_e_ref[...]).reshape(B, C, 4 * H)           # (B, C, 4H)
    gates_in_d = (jnp.dot(embed_flat, wih_d_ref[...],
                          preferred_element_type=jnp.float32)
                  + b_d_ref[...]).reshape(B, C, 4 * H)           # (B, C, 4H)
    gates_dec0 = jnp.broadcast_to(
        jnp.dot(dec0_ref[...], wih_d_ref[...],
                preferred_element_type=jnp.float32) + b_d_ref[...],
        (B, 4 * H))                                              # (B, 4H)

    def lstm_step(gx, h, c, whh):
        # gx already contains x @ W_ih + (b_ih + b_hh)
        g = gx + jnp.dot(h, whh, preferred_element_type=jnp.float32)
        sg = _sigmoid(g)            # full 4H-lane EUP pass
        tg = jnp.tanh(g)            # full 4H-lane EUP pass
        i_g = sg[:, 0:H]
        f_g = sg[:, H:2 * H]
        o_g = sg[:, 3 * H:4 * H]
        g_g = tg[:, 2 * H:3 * H]
        c_new = f_g * c + i_g * g_g
        h_new = o_g * jnp.tanh(c_new)
        return h_new, c_new

    # ---- encoder LSTM (fully unrolled, static slices, no one-hot gathers) ----
    h = jnp.zeros((B, H), jnp.float32)
    c = jnp.zeros((B, H), jnp.float32)
    for t in range(C):
        h, c = lstm_step(gates_in_e[:, t, :], h, c, whh_e)
        enc_scratch[:, t, :] = h                                 # static sub-tile store

    enc_h = enc_scratch[...]                                     # (B, C, H)

    # ---- fused W_ref / W_ref2 projections: one (H,2H) matmul, split lanes once ----
    u2all = (jnp.dot(enc_h.reshape(B * C, H), wrefs_ref[...],
                     preferred_element_type=jnp.float32)
             + brefs_ref[...]).reshape(B, C, 2 * H)
    u2 = u2all[:, :, 0:H]                                        # (B, C, H)
    u2p = u2all[:, :, H:2 * H]                                   # (B, C, H)

    wq = wq_ref[...]; bq = bq_ref[...]
    wq2 = wq2_ref[...]; bq2 = bq2_ref[...]
    vec = vec_ref[...][None, :, :]                               # (1, 1, E)
    vec2 = vec2_ref[...][None, :, :]                             # (1, 1, E)
    idx_f = lax.broadcasted_iota(jnp.int32, (B, C), 1).astype(jnp.float32)

    # ---- decoder LSTM + glimpse + pointer + greedy selection (fully unrolled) ----
    mask = jnp.zeros((B, C), jnp.float32)
    ll = jnp.zeros((B, 1), jnp.float32)
    gx = gates_dec0
    for t in range(C):
        h, c = lstm_step(gx, h, c, whh_d)
        query = h
        for _ in range(n_glimpse):
            q1 = jnp.dot(query, wq, preferred_element_type=jnp.float32) + bq
            u = jnp.sum(jnp.tanh(q1[:, None, :] + u2) * vec, axis=2)      # (B, C)
            u = (u - INF * mask) * inv_T
            m = jnp.max(u, axis=1, keepdims=True)
            p = jnp.exp(u - m)
            a = p / jnp.sum(p, axis=1, keepdims=True)
            query = jnp.sum(a[:, :, None] * u2, axis=1)                   # (B, H)

        q2 = jnp.dot(query, wq2, preferred_element_type=jnp.float32) + bq2
        logits = jnp.sum(clip_logits * jnp.tanh(q2[:, None, :] + u2p) * vec2, axis=2)
        logits = logits - INF * mask
        lmax = jnp.max(logits, axis=1, keepdims=True)
        s = logits - lmax
        log_p = s - jnp.log(jnp.sum(jnp.exp(s), axis=1, keepdims=True))   # (B, C)

        # greedy argmax (first maximal index)
        maxv = jnp.max(log_p, axis=1, keepdims=True)
        cand = jnp.where(log_p == maxv, idx_f, float(C))
        nxt_f = jnp.min(cand, axis=1, keepdims=True)                      # (B, 1)
        onehot = (idx_f == nxt_f).astype(jnp.float32)                     # (B, C)

        ll = ll + jnp.sum(onehot * log_p, axis=1, keepdims=True)
        mask = mask + onehot
        pi_ref[:, t:t + 1] = nxt_f                                        # per-step store

        if t + 1 < C:
            # next-step LSTM input pre-activation, gathered from the hoisted matmul
            gx = jnp.sum(onehot[:, :, None] * gates_in_d, axis=1)         # (B, 4H)

    ll_ref[...] = ll


# ---------------------------------------------------------------------------
# wrapper
# ---------------------------------------------------------------------------
def ptrnet1_pallas(params, task_data, env_data, *, n_glimpse=1,
                   clip_logits=10.0, softmax_T=1.0):
    (w_emb, w_env, wih_e, whh_e, b_e, wih_d, whh_d, b_d,
     wq, bq, wref, bref, wq2, bq2, wref2, bref2, vec, vec2, dec0) = params
    B, C, _ = task_data.shape
    E = w_emb.shape[1]
    H = whh_e.shape[0]

    env_flat = env_data.reshape(B, -1).astype(jnp.float32)
    # fuse the two Conv1d(k=1) projections: single (H, 2H) weight / (1, 2H) bias
    wrefs = jnp.concatenate([wref, wref2], axis=1)
    brefs = jnp.concatenate([bref, bref2], axis=1)

    inputs = [task_data.astype(jnp.float32), env_flat,
              w_emb, w_env, wih_e, whh_e, b_e, wih_d, whh_d, b_d,
              wq, bq, wrefs, brefs, wq2, bq2, vec, vec2, dec0]

    vmem = pl.BlockSpec(memory_space=pltpu.MemorySpace.VMEM)
    kernel = functools.partial(_ptrnet1_kernel, n_glimpse=n_glimpse,
                               clip_logits=float(clip_logits),
                               inv_T=float(1.0 / softmax_T))

    # advisory cost estimate (helps XLA schedule around the custom call)
    flops = (2 * 2 * B * C * E * 4 * H            # hoisted input projections
             + 2 * 2 * C * B * H * 4 * H          # recurrent matmuls (enc + dec)
             + 2 * B * C * H * 2 * H              # fused W_ref|W_ref2 projection
             + C * (n_glimpse + 1) * 2 * B * H * H            # W_q / W_q2 per step
             + C * (n_glimpse + 1) * 6 * B * C * H)           # attention elementwise
    transcendentals = (2 * C * B * (2 * 4 * H + H)            # LSTM tanh passes
                       + C * (n_glimpse + 1) * B * C * (H + 1))
    bytes_accessed = 4 * (sum(int(np.prod(x.shape)) for x in inputs) + B * C + B)

    pi_f, ll = pl.pallas_call(
        kernel,
        out_shape=(jax.ShapeDtypeStruct((B, C), jnp.float32),
                   jax.ShapeDtypeStruct((B, 1), jnp.float32)),
        in_specs=[vmem] * len(inputs),
        out_specs=(vmem, vmem),
        scratch_shapes=[pltpu.VMEM((B, C, H), jnp.float32)],
        cost_estimate=pl.CostEstimate(flops=int(flops),
                                      transcendentals=int(transcendentals),
                                      bytes_accessed=int(bytes_accessed)),
    )(*inputs)
    return pi_f.astype(jnp.int32), ll[:, 0]


# ---------------------------------------------------------------------------
# pure-JAX reference (same math, used for correctness check)
# ---------------------------------------------------------------------------
def ptrnet1_reference(params, task_data, env_data, *, n_glimpse=1,
                      clip_logits=10.0, softmax_T=1.0):
    (w_emb, w_env, wih_e, whh_e, b_e, wih_d, whh_d, b_d,
     wq, bq, wref, bref, wq2, bq2, wref2, bref2, vec, vec2, dec0) = params
    B, C, _ = task_data.shape
    E = w_emb.shape[1]
    H = whh_e.shape[0]
    INF = 1e8
    inv_T = 1.0 / softmax_T

    env_flat = env_data.reshape(B, -1)
    emb = jnp.einsum('bci,ie->bce', task_data, w_emb)
    env_emb = env_flat @ w_env
    embed_enc = emb + env_emb[:, None, :]

    def lstm_cell(x, h, c, wih, whh, b):
        g = x @ wih + h @ whh + b
        i_g = _sigmoid(g[:, :H]); f_g = _sigmoid(g[:, H:2 * H])
        g_g = jnp.tanh(g[:, 2 * H:3 * H]); o_g = _sigmoid(g[:, 3 * H:])
        c = f_g * c + i_g * g_g
        h = o_g * jnp.tanh(c)
        return h, c

    h = jnp.zeros((B, H)); c = jnp.zeros((B, H))
    enc = []
    for t in range(C):
        h, c = lstm_cell(embed_enc[:, t], h, c, wih_e, whh_e, b_e)
        enc.append(h)
    enc_h = jnp.stack(enc, axis=1)
    u2 = jnp.einsum('bch,hk->bck', enc_h, wref) + bref
    u2p = jnp.einsum('bch,hk->bck', enc_h, wref2) + bref2

    mask = jnp.zeros((B, C))
    dec_in = jnp.broadcast_to(dec0, (B, E))
    pi, ll = [], jnp.zeros((B,))
    for _ in range(C):
        h, c = lstm_cell(dec_in, h, c, wih_d, whh_d, b_d)
        query = h
        for _ in range(n_glimpse):
            q1 = query @ wq + bq
            u = jnp.sum(jnp.tanh(q1[:, None, :] + u2) * vec[None], axis=2)
            u = (u - INF * mask) * inv_T
            m = jnp.max(u, axis=1, keepdims=True)
            p = jnp.exp(u - m)
            a = p / jnp.sum(p, axis=1, keepdims=True)
            query = jnp.sum(a[:, :, None] * u2, axis=1)
        q2 = query @ wq2 + bq2
        logits = jnp.sum(clip_logits * jnp.tanh(q2[:, None, :] + u2p) * vec2[None],
                         axis=2) - INF * mask
        lmax = jnp.max(logits, axis=1, keepdims=True)
        s = logits - lmax
        log_p = s - jnp.log(jnp.sum(jnp.exp(s), axis=1, keepdims=True))
        nxt = jnp.argmax(log_p, axis=1)
        onehot = jax.nn.one_hot(nxt, C, dtype=jnp.float32)
        dec_in = jnp.sum(onehot[:, :, None] * embed_enc, axis=1)
        ll = ll + jnp.sum(onehot * log_p, axis=1)
        mask = mask + onehot
        pi.append(nxt)
    return jnp.stack(pi, axis=1).astype(jnp.int32), ll


# ---------------------------------------------------------------------------
# deterministic parameter init (uniform [-0.08, 0.08], as in _initialize_weights)
# ---------------------------------------------------------------------------
def init_params(key, embed=32, hidden=32, delta_t=4, init_min=-0.08, init_max=0.08):
    names_shapes = [
        ("w_emb", (2, embed)),
        ("w_env", (delta_t * 2, embed)),
        ("wih_e", (embed, 4 * hidden)),
        ("whh_e", (hidden, 4 * hidden)),
        ("bih_e", (1, 4 * hidden)),
        ("bhh_e", (1, 4 * hidden)),
        ("wih_d", (embed, 4 * hidden)),
        ("whh_d", (hidden, 4 * hidden)),
        ("bih_d", (1, 4 * hidden)),
        ("bhh_d", (1, 4 * hidden)),
        ("wq", (hidden, hidden)),
        ("bq", (1, hidden)),
        ("wref", (hidden, hidden)),
        ("bref", (1, hidden)),
        ("wq2", (hidden, hidden)),
        ("bq2", (1, hidden)),
        ("wref2", (hidden, hidden)),
        ("bref2", (1, hidden)),
        ("vec", (1, embed)),
        ("vec2", (1, embed)),
        ("dec0", (1, embed)),
    ]
    keys = jax.random.split(key, len(names_shapes))
    vals = {n: jax.random.uniform(k, s, jnp.float32, init_min, init_max)
            for (n, s), k in zip(names_shapes, keys)}
    # PyTorch LSTM has separate ih/hh biases; their sum is what enters the cell.
    return (
        vals["w_emb"], vals["w_env"],
        vals["wih_e"], vals["whh_e"], vals["bih_e"] + vals["bhh_e"],
        vals["wih_d"], vals["whh_d"], vals["bih_d"] + vals["bhh_d"],
        vals["wq"], vals["bq"], vals["wref"], vals["bref"],
        vals["wq2"], vals["bq2"], vals["wref2"], vals["bref2"],
        vals["vec"], vals["vec2"], vals["dec0"],
    )


if __name__ == "__main__":
    key = jax.random.PRNGKey(0)
    B, C, E, H, DT = 2, 8, 32, 32, 4        # batch, city_t, embed, hidden, delta_t
    kp, kt, ke = jax.random.split(key, 3)

    params = init_params(kp, embed=E, hidden=H, delta_t=DT)
    task_data = jax.random.uniform(kt, (B, C, 2), jnp.float32)    # (batch, city_t, 2)
    env_data = jax.random.uniform(ke, (B, DT, 2), jnp.float32)    # (batch, delta_t, 2)

    pi, ll = ptrnet1_pallas(params, task_data, env_data,
                            n_glimpse=1, clip_logits=10.0, softmax_T=1.0)
    jax.block_until_ready((pi, ll))

    pi_ref, ll_ref = ptrnet1_reference(params, task_data, env_data,
                                       n_glimpse=1, clip_logits=10.0, softmax_T=1.0)
    assert pi.shape == (B, C) and ll.shape == (B,)
    np.testing.assert_array_equal(np.asarray(pi), np.asarray(pi_ref))
    np.testing.assert_allclose(np.asarray(ll), np.asarray(ll_ref), rtol=1e-3, atol=1e-3)

    print("KERNEL_OK")
</pallas_src>

<mosaic_0001>
module attributes {stable_mosaic.version = 11 : i64} {
  func.func @_ptrnet1_kernel(%arg0: memref<2x8x2xf32, #tpu.memory_space<vmem>>, %arg1: memref<2x8xf32, #tpu.memory_space<vmem>>, %arg2: memref<2x32xf32, #tpu.memory_space<vmem>>, %arg3: memref<8x32xf32, #tpu.memory_space<vmem>>, %arg4: memref<32x128xf32, #tpu.memory_space<vmem>>, %arg5: memref<32x128xf32, #tpu.memory_space<vmem>>, %arg6: memref<1x128xf32, #tpu.memory_space<vmem>>, %arg7: memref<32x128xf32, #tpu.memory_space<vmem>>, %arg8: memref<32x128xf32, #tpu.memory_space<vmem>>, %arg9: memref<1x128xf32, #tpu.memory_space<vmem>>, %arg10: memref<32x32xf32, #tpu.memory_space<vmem>>, %arg11: memref<1x32xf32, #tpu.memory_space<vmem>>, %arg12: memref<32x64xf32, #tpu.memory_space<vmem>>, %arg13: memref<1x64xf32, #tpu.memory_space<vmem>>, %arg14: memref<32x32xf32, #tpu.memory_space<vmem>>, %arg15: memref<1x32xf32, #tpu.memory_space<vmem>>, %arg16: memref<1x32xf32, #tpu.memory_space<vmem>>, %arg17: memref<1x32xf32, #tpu.memory_space<vmem>>, %arg18: memref<1x32xf32, #tpu.memory_space<vmem>>, %arg19: memref<2x8xf32, #tpu.memory_space<vmem>>, %arg20: memref<2x1xf32, #tpu.memory_space<vmem>>, %arg21: memref<2x8x32xf32, #tpu.memory_space<vmem>>) attributes {dimension_semantics = [], scalar_prefetch = 0 : i64, scratch_operands = 1 : i64, tpu.core_type = #tpu.core_type<tc>} {
    %c0 = arith.constant 0 : index
    %c0_0 = arith.constant 0 : index
    %c0_1 = arith.constant 0 : index
    %0 = vector.load %arg0[%c0, %c0_0, %c0_1] : memref<2x8x2xf32, #tpu.memory_space<vmem>>, vector<2x8x2xf32>
    %c0_2 = arith.constant 0 : index
    %c0_3 = arith.constant 0 : index
    %1 = vector.load %arg2[%c0_2, %c0_3] : memref<2x32xf32, #tpu.memory_space<vmem>>, vector<2x32xf32>
    %2 = vector.extract_strided_slice %0 {offsets = [0, 0, 0], sizes = [2, 8, 1], strides = [1, 1, 1]} : vector<2x8x2xf32> to vector<2x8x1xf32>
    %3 = vector.extract_strided_slice %1 {offsets = [0, 0], sizes = [1, 32], strides = [1, 1]} : vector<2x32xf32> to vector<1x32xf32>
    %4 = vector.shape_cast %3 : vector<1x32xf32> to vector<1x1x32xf32>
    %5 = vector.broadcast %2 : vector<2x8x1xf32> to vector<2x8x32xf32>
    %6 = vector.broadcast %4 : vector<1x1x32xf32> to vector<2x8x32xf32>
    %7 = arith.mulf %5, %6 : vector<2x8x32xf32>
    %8 = vector.extract_strided_slice %0 {offsets = [0, 0, 1], sizes = [2, 8, 1], strides = [1, 1, 1]} : vector<2x8x2xf32> to vector<2x8x1xf32>
    %9 = vector.extract_strided_slice %1 {offsets = [1, 0], sizes = [1, 32], strides = [1, 1]} : vector<2x32xf32> to vector<1x32xf32>
    %10 = vector.shape_cast %9 : vector<1x32xf32> to vector<1x1x32xf32>
    %11 = vector.broadcast %8 : vector<2x8x1xf32> to vector<2x8x32xf32>
    %12 = vector.broadcast %10 : vector<1x1x32xf32> to vector<2x8x32xf32>
    %13 = arith.mulf %11, %12 : vector<2x8x32xf32>
    %14 = arith.addf %7, %13 : vector<2x8x32xf32>
    %c0_4 = arith.constant 0 : index
    %c0_5 = arith.constant 0 : index
    %15 = vector.load %arg1[%c0_4, %c0_5] : memref<2x8xf32, #tpu.memory_space<vmem>>, vector<2x8xf32>
    %c0_6 = arith.constant 0 : index
    %c0_7 = arith.constant 0 : index
    %16 = vector.load %arg3[%c0_6, %c0_7] : memref<8x32xf32, #tpu.memory_space<vmem>>, vector<8x32xf32>
    %cst = arith.constant dense<0.000000e+00> : vector<2x32xf32>
    %17 = tpu.matmul %15, %16, %cst {dimension_numbers = #tpu.dot_dimension_numbers<[1], [0], [0], [1], [0, 0, 1, 1], [], []>} : vector<2x8xf32>, vector<8x32xf32>, vector<2x32xf32> -> vector<2x32xf32>
    %18 = vector.shape_cast %17 : vector<2x32xf32> to vector<2x1x32xf32>
    %19 = vector.broadcast %18 : vector<2x1x32xf32> to vector<2x8x32xf32>
    %20 = arith.addf %14, %19 : vector<2x8x32xf32>
    %21 = vector.shape_cast %20 : vector<2x8x32xf32> to vector<16x32xf32>
    %c0_8 = arith.constant 0 : index
    %c0_9 = arith.constant 0 : index
    %22 = vector.load %arg5[%c0_8, %c0_9] : memref<32x128xf32, #tpu.memory_space<vmem>>, vector<32x128xf32>
    %c0_10 = arith.constant 0 : index
    %c0_11 = arith.constant 0 : index
    %23 = vector.load %arg8[%c0_10, %c0_11] : memref<32x128xf32, #tpu.memory_space<vmem>>, vector<32x128xf32>
    %c0_12 = arith.constant 0 : index
    %c0_13 = arith.constant 0 : index
    %24 = vector.load %arg4[%c0_12, %c0_13] : memref<32x128xf32, #tpu.memory_space<vmem>>, vector<32x128xf32>
    %cst_14 = arith.constant dense<0.000000e+00> : vector<16x128xf32>
    %25 = tpu.matmul %21, %24, %cst_14 {dimension_numbers = #tpu.dot_dimension_numbers<[1], [0], [0], [1], [0, 0, 1, 1], [], []>} : vector<16x32xf32>, vector<32x128xf32>, vector<16x128xf32> -> vector<16x128xf32>
    %c0_15 = arith.constant 0 : index
    %c0_16 = arith.constant 0 : index
    %26 = vector.load %arg6[%c0_15, %c0_16] : memref<1x128xf32, #tpu.memory_space<vmem>>, vector<1x128xf32>
    %27 = vector.broadcast %26 : vector<1x128xf32> to vector<16x128xf32>
    %28 = arith.addf %25, %27 : vector<16x128xf32>
    %29 = vector.shape_cast %28 : vector<16x128xf32> to vector<2x8x128xf32>
    %c0_17 = arith.constant 0 : index
    %c0_18 = arith.constant 0 : index
    %30 = vector.load %arg7[%c0_17, %c0_18] : memref<32x128xf32, #tpu.memory_space<vmem>>, vector<32x128xf32>
    %cst_19 = arith.constant dense<0.000000e+00> : vector<16x128xf32>
    %31 = tpu.matmul %21, %30, %cst_19 {dimension_numbers = #tpu.dot_dimension_numbers<[1], [0], [0], [1], [0, 0, 1, 1], [], []>} : vector<16x32xf32>, vector<32x128xf32>, vector<16x128xf32> -> vector<16x128xf32>
    %c0_20 = arith.constant 0 : index
    %c0_21 = arith.constant 0 : index
    %32 = vector.load %arg9[%c0_20, %c0_21] : memref<1x128xf32, #tpu.memory_space<vmem>>, vector<1x128xf32>
    %33 = vector.broadcast %32 : vector<1x128xf32> to vector<16x128xf32>
    %34 = arith.addf %31, %33 : vector<16x128xf32>
    %35 = vector.shape_cast %34 : vector<16x128xf32> to vector<2x8x128xf32>
    %c0_22 = arith.constant 0 : index
    %c0_23 = arith.constant 0 : index
    %36 = vector.load %arg18[%c0_22, %c0_23] : memref<1x32xf32, #tpu.memory_space<vmem>>, vector<1x32xf32>
    %c0_24 = arith.constant 0 : index
    %c0_25 = arith.constant 0 : index
    %37 = vector.load %arg7[%c0_24, %c0_25] : memref<32x128xf32, #tpu.memory_space<vmem>>, vector<32x128xf32>
    %cst_26 = arith.constant dense<0.000000e+00> : vector<1x128xf32>
    %38 = tpu.matmul %36, %37, %cst_26 {dimension_numbers = #tpu.dot_dimension_numbers<[1], [0], [0], [1], [0, 0, 1, 1], [], []>} : vector<1x32xf32>, vector<32x128xf32>, vector<1x128xf32> -> vector<1x128xf32>
    %c0_27 = arith.constant 0 : index
    %c0_28 = arith.constant 0 : index
    %39 = vector.load %arg9[%c0_27, %c0_28] : memref<1x128xf32, #tpu.memory_space<vmem>>, vector<1x128xf32>
    %40 = arith.addf %38, %39 : vector<1x128xf32>
    %41 = vector.shape_cast %40 : vector<1x128xf32> to vector<1x128xf32>
    %42 = vector.broadcast %41 : vector<1x128xf32> to vector<2x128xf32>
    %cst_29 = arith.constant 0.000000e+00 : f32
    %43 = vector.broadcast %cst_29 : f32 to vector<2x32xf32>
    %cst_30 = arith.constant 0.000000e+00 : f32
    %44 = vector.broadcast %cst_30 : f32 to vector<2x32xf32>
    %45 = vector.extract_strided_slice %29 {offsets = [0, 0, 0], sizes = [2, 1, 128], strides = [1, 1, 1]} : vector<2x8x128xf32> to vector<2x1x128xf32>
    %46 = vector.shape_cast %45 : vector<2x1x128xf32> to vector<2x128xf32>
    %cst_31 = arith.constant dense<0.000000e+00> : vector<2x128xf32>
    %47 = tpu.matmul %43, %22, %cst_31 {dimension_numbers = #tpu.dot_dimension_numbers<[1], [0], [0], [1], [0, 0, 1, 1], [], []>} : vector<2x32xf32>, vector<32x128xf32>, vector<2x128xf32> -> vector<2x128xf32>
    %48 = arith.addf %46, %47 : vector<2x128xf32>
    %cst_32 = arith.constant 5.000000e-01 : f32
    %49 = vector.broadcast %cst_32 : f32 to vector<2x128xf32>
    %50 = arith.mulf %49, %48 : vector<2x128xf32>
    %51 = math.tanh %50 : vector<2x128xf32>
    %cst_33 = arith.constant 5.000000e-01 : f32
    %52 = vector.broadcast %cst_33 : f32 to vector<2x128xf32>
    %53 = arith.mulf %52, %51 : vector<2x128xf32>
    %cst_34 = arith.constant 5.000000e-01 : f32
    %54 = vector.broadcast %cst_34 : f32 to vector<2x128xf32>
    %55 = arith.addf %53, %54 : vector<2x128xf32>
    %56 = math.tanh %48 : vector<2x128xf32>
    %57 = vector.extract_strided_slice %55 {offsets = [0, 0], sizes = [2, 32], strides = [1, 1]} : vector<2x128xf32> to vector<2x32xf32>
    %58 = vector.extract_strided_slice %55 {offsets = [0, 32], sizes = [2, 32], strides = [1, 1]} : vector<2x128xf32> to vector<2x32xf32>
    %59 = vector.extract_strided_slice %55 {offsets = [0, 96], sizes = [2, 32], strides = [1, 1]} : vector<2x128xf32> to vector<2x32xf32>
    %60 = vector.extract_strided_slice %56 {offsets = [0, 64], sizes = [2, 32], strides = [1, 1]} : vector<2x128xf32> to vector<2x32xf32>
    %61 = arith.mulf %58, %44 : vector<2x32xf32>
    %62 = arith.mulf %57, %60 : vector<2x32xf32>
    %63 = arith.addf %61, %62 : vector<2x32xf32>
    %64 = math.tanh %63 : vector<2x32xf32>
    %65 = arith.mulf %59, %64 : vector<2x32xf32>
    %c0_35 = arith.constant 0 : index
    %c0_36 = arith.constant 0 : index
    %c0_37 = arith.constant 0 : index
    %66 = vector.load %arg21[%c0_35, %c0_36, %c0_37] : memref<2x8x32xf32, #tpu.memory_space<vmem>>, vector<2x1x32xf32>
    %67 = vector.shape_cast %66 : vector<2x1x32xf32> to vector<2x32xf32>
    %68 = vector.shape_cast %65 : vector<2x32xf32> to vector<2x1x32xf32>
    tpu.vector_store %arg21[%c0_35, %c0_36, %c0_37], %68 {strides = array<i32>} : memref<2x8x32xf32, #tpu.memory_space<vmem>>, vector<2x1x32xf32>,
    %69 = vector.extract_strided_slice %29 {offsets = [0, 1, 0], sizes = [2, 1, 128], strides = [1, 1, 1]} : vector<2x8x128xf32> to vector<2x1x128xf32>
    %70 = vector.shape_cast %69 : vector<2x1x128xf32> to vector<2x128xf32>
    %cst_38 = arith.constant dense<0.000000e+00> : vector<2x128xf32>
    %71 = tpu.matmul %65, %22, %cst_38 {dimension_numbers = #tpu.dot_dimension_numbers<[1], [0], [0], [1], [0, 0, 1, 1], [], []>} : vector<2x32xf32>, vector<32x128xf32>, vector<2x128xf32> -> vector<2x128xf32>
    %72 = arith.addf %70, %71 : vector<2x128xf32>
    %cst_39 = arith.constant 5.000000e-01 : f32
    %73 = vector.broadcast %cst_39 : f32 to vector<2x128xf32>
    %74 = arith.mulf %73, %72 : vector<2x128xf32>
    %75 = math.tanh %74 : vector<2x128xf32>
    %cst_40 = arith.constant 5.000000e-01 : f32
    %76 = vector.broadcast %cst_40 : f32 to vector<2x128xf32>
    %77 = arith.mulf %76, %75 : vector<2x128xf32>
    %cst_41 = arith.constant 5.000000e-01 : f32
    %78 = vector.broadcast %cst_41 : f32 to vector<2x128xf32>
    %79 = arith.addf %77, %78 : vector<2x128xf32>
    %80 = math.tanh %72 : vector<2x128xf32>
    %81 = vector.extract_strided_slice %79 {offsets = [0, 0], sizes = [2, 32], strides = [1, 1]} : vector<2x128xf32> to vector<2x32xf32>
    %82 = vector.extract_strided_slice %79 {offsets = [0, 32], sizes = [2, 32], strides = [1, 1]} : vector<2x128xf32> to vector<2x32xf32>
    %83 = vector.extract_strided_slice %79 {offsets = [0, 96], sizes = [2, 32], strides = [1, 1]} : vector<2x128xf32> to vector<2x32xf32>
    %84 = vector.extract_strided_slice %80 {offsets = [0, 64], sizes = [2, 32], strides = [1, 1]} : vector<2x128xf32> to vector<2x32xf32>
    %85 = arith.mulf %82, %63 : vector<2x32xf32>
    %86 = arith.mulf %81, %84 : vector<2x32xf32>
    %87 = arith.addf %85, %86 : vector<2x32xf32>
    %88 = math.tanh %87 : vector<2x32xf32>
    %89 = arith.mulf %83, %88 : vector<2x32xf32>
    %c0_42 = arith.constant 0 : index
    %c1 = arith.constant 1 : index
    %c0_43 = arith.constant 0 : index
    %90 = vector.load %arg21[%c0_42, %c1, %c0_43] : memref<2x8x32xf32, #tpu.memory_space<vmem>>, vector<2x1x32xf32>
    %91 = vector.shape_cast %90 : vector<2x1x32xf32> to vector<2x32xf32>
    %92 = vector.shape_cast %89 : vector<2x32xf32> to vector<2x1x32xf32>
    tpu.vector_store %arg21[%c0_42, %c1, %c0_43], %92 {strides = array<i32>} : memref<2x8x32xf32, #tpu.memory_space<vmem>>, vector<2x1x32xf32>,
    %93 = vector.extract_strided_slice %29 {offsets = [0, 2, 0], sizes = [2, 1, 128], strides = [1, 1, 1]} : vector<2x8x128xf32> to vector<2x1x128xf32>
    %94 = vector.shape_cast %93 : vector<2x1x128xf32> to vector<2x128xf32>
    %cst_44 = arith.constant dense<0.000000e+00> : vector<2x128xf32>
    %95 = tpu.matmul %89, %22, %cst_44 {dimension_numbers = #tpu.dot_dimension_numbers<[1], [0], [0], [1], [0, 0, 1, 1], [], []>} : vector<2x32xf32>, vector<32x128xf32>, vector<2x128xf32> -> vector<2x128xf32>
    %96 = arith.addf %94, %95 : vector<2x128xf32>
    %cst_45 = arith.constant 5.000000e-01 : f32
    %97 = vector.broadcast %cst_45 : f32 to vector<2x128xf32>
    %98 = arith.mulf %97, %96 : vector<2x128xf32>
    %99 = math.tanh %98 : vector<2x128xf32>
    %cst_46 = arith.constant 5.000000e-01 : f32
    %100 = vector.broadcast %cst_46 : f32 to vector<2x128xf32>
    %101 = arith.mulf %100, %99 : vector<2x128xf32>
    %cst_47 = arith.constant 5.000000e-01 : f32
    %102 = vector.broadcast %cst_47 : f32 to vector<2x128xf32>
    %103 = arith.addf %101, %102 : vector<2x128xf32>
    %104 = math.tanh %96 : vector<2x128xf32>
    %105 = vector.extract_strided_slice %103 {offsets = [0, 0], sizes = [2, 32], strides = [1, 1]} : vector<2x128xf32> to vector<2x32xf32>
    %106 = vector.extract_strided_slice %103 {offsets = [0, 32], sizes = [2, 32], strides = [1, 1]} : vector<2x128xf32> to vector<2x32xf32>
    %107 = vector.extract_strided_slice %103 {offsets = [0, 96], sizes = [2, 32], strides = [1, 1]} : vector<2x128xf32> to vector<2x32xf32>
    %108 = vector.extract_strided_slice %104 {offsets = [0, 64], sizes = [2, 32], strides = [1, 1]} : vector<2x128xf32> to vector<2x32xf32>
    %109 = arith.mulf %106, %87 : vector<2x32xf32>
    %110 = arith.mulf %105, %108 : vector<2x32xf32>
    %111 = arith.addf %109, %110 : vector<2x32xf32>
    %112 = math.tanh %111 : vector<2x32xf32>
    %113 = arith.mulf %107, %112 : vector<2x32xf32>
    %c0_48 = arith.constant 0 : index
    %c2 = arith.constant 2 : index
    %c0_49 = arith.constant 0 : index
    %114 = vector.load %arg21[%c0_48, %c2, %c0_49] : memref<2x8x32xf32, #tpu.memory_space<vmem>>, vector<2x1x32xf32>
    %115 = vector.shape_cast %114 : vector<2x1x32xf32> to vector<2x32xf32>
    %116 = vector.shape_cast %113 : vector<2x32xf32> to vector<2x1x32xf32>
    tpu.vector_store %arg21[%c0_48, %c2, %c0_49], %116 {strides = array<i32>} : memref<2x8x32xf32, #tpu.memory_space<vmem>>, vector<2x1x32xf32>,
    %117 = vector.extract_strided_slice %29 {offsets = [0, 3, 0], sizes = [2, 1, 128], strides = [1, 1, 1]} : vector<2x8x128xf32> to vector<2x1x128xf32>
    %118 = vector.shape_cast %117 : vector<2x1x128xf32> to vector<2x128xf32>
    %cst_50 = arith.constant dense<0.000000e+00> : vector<2x128xf32>
    %119 = tpu.matmul %113, %22, %cst_50 {dimension_numbers = #tpu.dot_dimension_numbers<[1], [0], [0], [1], [0, 0, 1, 1], [], []>} : vector<2x32xf32>, vector<32x128xf32>, vector<2x128xf32> -> vector<2x128xf32>
    %120 = arith.addf %118, %119 : vector<2x128xf32>
    %cst_51 = arith.constant 5.000000e-01 : f32
    %121 = vector.broadcast %cst_51 : f32 to vector<2x128xf32>
    %122 = arith.mulf %121, %120 : vector<2x128xf32>
    %123 = math.tanh %122 : vector<2x128xf32>
    %cst_52 = arith.constant 5.000000e-01 : f32
    %124 = vector.broadcast %cst_52 : f32 to vector<2x128xf32>
    %125 = arith.mulf %124, %123 : vector<2x128xf32>
    %cst_53 = arith.constant 5.000000e-01 : f32
    %126 = vector.broadcast %cst_53 : f32 to vector<2x128xf32>
    %127 = arith.addf %125, %126 : vector<2x128xf32>
    %128 = math.tanh %120 : vector<2x128xf32>
    %129 = vector.extract_strided_slice %127 {offsets = [0, 0], sizes = [2, 32], strides = [1, 1]} : vector<2x128xf32> to vector<2x32xf32>
    %130 = vector.extract_strided_slice %127 {offsets = [0, 32], sizes = [2, 32], strides = [1, 1]} : vector<2x128xf32> to vector<2x32xf32>
    %131 = vector.extract_strided_slice %127 {offsets = [0, 96], sizes = [2, 32], strides = [1, 1]} : vector<2x128xf32> to vector<2x32xf32>
    %132 = vector.extract_strided_slice %128 {offsets = [0, 64], sizes = [2, 32], strides = [1, 1]} : vector<2x128xf32> to vector<2x32xf32>
    %133 = arith.mulf %130, %111 : vector<2x32xf32>
    %134 = arith.mulf %129, %132 : vector<2x32xf32>
    %135 = arith.addf %133, %134 : vector<2x32xf32>
    %136 = math.tanh %135 : vector<2x32xf32>
    %137 = arith.mulf %131, %136 : vector<2x32xf32>
    %c0_54 = arith.constant 0 : index
    %c3 = arith.constant 3 : index
    %c0_55 = arith.constant 0 : index
    %138 = vector.load %arg21[%c0_54, %c3, %c0_55] : memref<2x8x32xf32, #tpu.memory_space<vmem>>, vector<2x1x32xf32>
    %139 = vector.shape_cast %138 : vector<2x1x32xf32> to vector<2x32xf32>
    %140 = vector.shape_cast %137 : vector<2x32xf32> to vector<2x1x32xf32>
    tpu.vector_store %arg21[%c0_54, %c3, %c0_55], %140 {strides = array<i32>} : memref<2x8x32xf32, #tpu.memory_space<vmem>>, vector<2x1x32xf32>,
    %141 = vector.extract_strided_slice %29 {offsets = [0, 4, 0], sizes = [2, 1, 128], strides = [1, 1, 1]} : vector<2x8x128xf32> to vector<2x1x128xf32>
    %142 = vector.shape_cast %141 : vector<2x1x128xf32> to vector<2x128xf32>
    %cst_56 = arith.constant dense<0.000000e+00> : vector<2x128xf32>
    %143 = tpu.matmul %137, %22, %cst_56 {dimension_numbers = #tpu.dot_dimension_numbers<[1], [0], [0], [1], [0, 0, 1, 1], [], []>} : vector<2x32xf32>, vector<32x128xf32>, vector<2x128xf32> -> vector<2x128xf32>
    %144 = arith.addf %142, %143 : vector<2x128xf32>
    %cst_57 = arith.constant 5.000000e-01 : f32
    %145 = vector.broadcast %cst_57 : f32 to vector<2x128xf32>
    %146 = arith.mulf %145, %144 : vector<2x128xf32>
    %147 = math.tanh %146 : vector<2x128xf32>
    %cst_58 = arith.constant 5.000000e-01 : f32
    %148 = vector.broadcast %cst_58 : f32 to vector<2x128xf32>
    %149 = arith.mulf %148, %147 : vector<2x128xf32>
    %cst_59 = arith.constant 5.000000e-01 : f32
    %150 = vector.broadcast %cst_59 : f32 to vector<2x128xf32>
    %151 = arith.addf %149, %150 : vector<2x128xf32>
    %152 = math.tanh %144 : vector<2x128xf32>
    %153 = vector.extract_strided_slice %151 {offsets = [0, 0], sizes = [2, 32], strides = [1, 1]} : vector<2x128xf32> to vector<2x32xf32>
    %154 = vector.extract_strided_slice %151 {offsets = [0, 32], sizes = [2, 32], strides = [1, 1]} : vector<2x128xf32> to vector<2x32xf32>
    %155 = vector.extract_strided_slice %151 {offsets = [0, 96], sizes = [2, 32], strides = [1, 1]} : vector<2x128xf32> to vector<2x32xf32>
    %156 = vector.extract_strided_slice %152 {offsets = [0, 64], sizes = [2, 32], strides = [1, 1]} : vector<2x128xf32> to vector<2x32xf32>
    %157 = arith.mulf %154, %135 : vector<2x32xf32>
    %158 = arith.mulf %153, %156 : vector<2x32xf32>
    %159 = arith.addf %157, %158 : vector<2x32xf32>
    %160 = math.tanh %159 : vector<2x32xf32>
    %161 = arith.mulf %155, %160 : vector<2x32xf32>
    %c0_60 = arith.constant 0 : index
    %c4 = arith.constant 4 : index
    %c0_61 = arith.constant 0 : index
    %162 = vector.load %arg21[%c0_60, %c4, %c0_61] : memref<2x8x32xf32, #tpu.memory_space<vmem>>, vector<2x1x32xf32>
    %163 = vector.shape_cast %162 : vector<2x1x32xf32> to vector<2x32xf32>
    %164 = vector.shape_cast %161 : vector<2x32xf32> to vector<2x1x32xf32>
    tpu.vector_store %arg21[%c0_60, %c4, %c0_61], %164 {strides = array<i32>} : memref<2x8x32xf32, #tpu.memory_space<vmem>>, vector<2x1x32xf32>,
    %165 = vector.extract_strided_slice %29 {offsets = [0, 5, 0], sizes = [2, 1, 128], strides = [1, 1, 1]} : vector<2x8x128xf32> to vector<2x1x128xf32>
    %166 = vector.shape_cast %165 : vector<2x1x128xf32> to vector<2x128xf32>
    %cst_62 = arith.constant dense<0.000000e+00> : vector<2x128xf32>
    %167 = tpu.matmul %161, %22, %cst_62 {dimension_numbers = #tpu.dot_dimension_numbers<[1], [0], [0], [1], [0, 0, 1, 1], [], []>} : vector<2x32xf32>, vector<32x128xf32>, vector<2x128xf32> -> vector<2x128xf32>
    %168 = arith.addf %166, %167 : vector<2x128xf32>
    %cst_63 = arith.constant 5.000000e-01 : f32
    %169 = vector.broadcast %cst_63 : f32 to vector<2x128xf32>
    %170 = arith.mulf %169, %168 : vector<2x128xf32>
    %171 = math.tanh %170 : vector<2x128xf32>
    %cst_64 = arith.constant 5.000000e-01 : f32
    %172 = vector.broadcast %cst_64 : f32 to vector<2x128xf32>
    %173 = arith.mulf %172, %171 : vector<2x128xf32>
    %cst_65 = arith.constant 5.000000e-01 : f32
    %174 = vector.broadcast %cst_65 : f32 to vector<2x128xf32>
    %175 = arith.addf %173, %174 : vector<2x128xf32>
    %176 = math.tanh %168 : vector<2x128xf32>
    %177 = vector.extract_strided_slice %175 {offsets = [0, 0], sizes = [2, 32], strides = [1, 1]} : vector<2x128xf32> to vector<2x32xf32>
    %178 = vector.extract_strided_slice %175 {offsets = [0, 32], sizes = [2, 32], strides = [1, 1]} : vector<2x128xf32> to vector<2x32xf32>
    %179 = vector.extract_strided_slice %175 {offsets = [0, 96], sizes = [2, 32], strides = [1, 1]} : vector<2x128xf32> to vector<2x32xf32>
    %180 = vector.extract_strided_slice %176 {offsets = [0, 64], sizes = [2, 32], strides = [1, 1]} : vector<2x128xf32> to vector<2x32xf32>
    %181 = arith.mulf %178, %159 : vector<2x32xf32>
    %182 = arith.mulf %177, %180 : vector<2x32xf32>
    %183 = arith.addf %181, %182 : vector<2x32xf32>
    %184 = math.tanh %183 : vector<2x32xf32>
    %185 = arith.mulf %179, %184 : vector<2x32xf32>
    %c0_66 = arith.constant 0 : index
    %c5 = arith.constant 5 : index
    %c0_67 = arith.constant 0 : index
    %186 = vector.load %arg21[%c0_66, %c5, %c0_67] : memref<2x8x32xf32, #tpu.memory_space<vmem>>, vector<2x1x32xf32>
    %187 = vector.shape_cast %186 : vector<2x1x32xf32> to vector<2x32xf32>
    %188 = vector.shape_cast %185 : vector<2x32xf32> to vector<2x1x32xf32>
    tpu.vector_store %arg21[%c0_66, %c5, %c0_67], %188 {strides = array<i32>} : memref<2x8x32xf32, #tpu.memory_space<vmem>>, vector<2x1x32xf32>,
    %189 = vector.extract_strided_slice %29 {offsets = [0, 6, 0], sizes = [2, 1, 128], strides = [1, 1, 1]} : vector<2x8x128xf32> to vector<2x1x128xf32>
    %190 = vector.shape_cast %189 : vector<2x1x128xf32> to vector<2x128xf32>
    %cst_68 = arith.constant dense<0.000000e+00> : vector<2x128xf32>
    %191 = tpu.matmul %185, %22, %cst_68 {dimension_numbers = #tpu.dot_dimension_numbers<[1], [0], [0], [1], [0, 0, 1, 1], [], []>} : vector<2x32xf32>, vector<32x128xf32>, vector<2x128xf32> -> vector<2x128xf32>
    %192 = arith.addf %190, %191 : vector<2x128xf32>
    %cst_69 = arith.constant 5.000000e-01 : f32
    %193 = vector.broadcast %cst_69 : f32 to vector<2x128xf32>
    %194 = arith.mulf %193, %192 : vector<2x128xf32>
    %195 = math.tanh %194 : vector<2x128xf32>
    %cst_70 = arith.constant 5.000000e-01 : f32
    %196 = vector.broadcast %cst_70 : f32 to vector<2x128xf32>
    %197 = arith.mulf %196, %195 : vector<2x128xf32>
    %cst_71 = arith.constant 5.000000e-01 : f32
    %198 = vector.broadcast %cst_71 : f32 to vector<2x128xf32>
    %199 = arith.addf %197, %198 : vector<2x128xf32>
    %200 = math.tanh %192 : vector<2x128xf32>
    %201 = vector.extract_strided_slice %199 {offsets = [0, 0], sizes = [2, 32], strides = [1, 1]} : vector<2x128xf32> to vector<2x32xf32>
    %202 = vector.extract_strided_slice %199 {offsets = [0, 32], sizes = [2, 32], strides = [1, 1]} : vector<2x128xf32> to vector<2x32xf32>
    %203 = vector.extract_strided_slice %199 {offsets = [0, 96], sizes = [2, 32], strides = [1, 1]} : vector<2x128xf32> to vector<2x32xf32>
    %204 = vector.extract_strided_slice %200 {offsets = [0, 64], sizes = [2, 32], strides = [1, 1]} : vector<2x128xf32> to vector<2x32xf32>
    %205 = arith.mulf %202, %183 : vector<2x32xf32>
    %206 = arith.mulf %201, %204 : vector<2x32xf32>
    %207 = arith.addf %205, %206 : vector<2x32xf32>
    %208 = math.tanh %207 : vector<2x32xf32>
    %209 = arith.mulf %203, %208 : vector<2x32xf32>
    %c0_72 = arith.constant 0 : index
    %c6 = arith.constant 6 : index
    %c0_73 = arith.constant 0 : index
    %210 = vector.load %arg21[%c0_72, %c6, %c0_73] : memref<2x8x32xf32, #tpu.memory_space<vmem>>, vector<2x1x32xf32>
    %211 = vector.shape_cast %210 : vector<2x1x32xf32> to vector<2x32xf32>
    %212 = vector.shape_cast %209 : vector<2x32xf32> to vector<2x1x32xf32>
    tpu.vector_store %arg21[%c0_72, %c6, %c0_73], %212 {strides = array<i32>} : memref<2x8x32xf32, #tpu.memory_space<vmem>>, vector<2x1x32xf32>,
    %213 = vector.extract_strided_slice %29 {offsets = [0, 7, 0], sizes = [2, 1, 128], strides = [1, 1, 1]} : vector<2x8x128xf32> to vector<2x1x128xf32>
    %214 = vector.shape_cast %213 : vector<2x1x128xf32> to vector<2x128xf32>
    %cst_74 = arith.constant dense<0.000000e+00> : vector<2x128xf32>
    %215 = tpu.matmul %209, %22, %cst_74 {dimension_numbers = #tpu.dot_dimension_numbers<[1], [0], [0], [1], [0, 0, 1, 1], [], []>} : vector<2x32xf32>, vector<32x128xf32>, vector<2x128xf32> -> vector<2x128xf32>
    %216 = arith.addf %214, %215 : vector<2x128xf32>
    %cst_75 = arith.constant 5.000000e-01 : f32
    %217 = vector.broadcast %cst_75 : f32 to vector<2x128xf32>
    %218 = arith.mulf %217, %216 : vector<2x128xf32>
    %219 = math.tanh %218 : vector<2x128xf32>
    %cst_76 = arith.constant 5.000000e-01 : f32
    %220 = vector.broadcast %cst_76 : f32 to vector<2x128xf32>
    %221 = arith.mulf %220, %219 : vector<2x128xf32>
    %cst_77 = arith.constant 5.000000e-01 : f32
    %222 = vector.broadcast %cst_77 : f32 to vector<2x128xf32>
    %223 = arith.addf %221, %222 : vector<2x128xf32>
    %224 = math.tanh %216 : vector<2x128xf32>
    %225 = vector.extract_strided_slice %223 {offsets = [0, 0], sizes = [2, 32], strides = [1, 1]} : vector<2x128xf32> to vector<2x32xf32>
    %226 = vector.extract_strided_slice %223 {offsets = [0, 32], sizes = [2, 32], strides = [1, 1]} : vector<2x128xf32> to vector<2x32xf32>
    %227 = vector.extract_strided_slice %223 {offsets = [0, 96], sizes = [2, 32], strides = [1, 1]} : vector<2x128xf32> to vector<2x32xf32>
    %228 = vector.extract_strided_slice %224 {offsets = [0, 64], sizes = [2, 32], strides = [1, 1]} : vector<2x128xf32> to vector<2x32xf32>
    %229 = arith.mulf %226, %207 : vector<2x32xf32>
    %230 = arith.mulf %225, %228 : vector<2x32xf32>
    %231 = arith.addf %229, %230 : vector<2x32xf32>
    %232 = math.tanh %231 : vector<2x32xf32>
    %233 = arith.mulf %227, %232 : vector<2x32xf32>
    %c0_78 = arith.constant 0 : index
    %c7 = arith.constant 7 : index
    %c0_79 = arith.constant 0 : index
    %234 = vector.load %arg21[%c0_78, %c7, %c0_79] : memref<2x8x32xf32, #tpu.memory_space<vmem>>, vector<2x1x32xf32>
    %235 = vector.shape_cast %234 : vector<2x1x32xf32> to vector<2x32xf32>
    %236 = vector.shape_cast %233 : vector<2x32xf32> to vector<2x1x32xf32>
    tpu.vector_store %arg21[%c0_78, %c7, %c0_79], %236 {strides = array<i32>} : memref<2x8x32xf32, #tpu.memory_space<vmem>>, vector<2x1x32xf32>,
    %c0_80 = arith.constant 0 : index
    %c0_81 = arith.constant 0 : index
    %c0_82 = arith.constant 0 : index
    %237 = vector.load %arg21[%c0_80, %c0_81, %c0_82] : memref<2x8x32xf32, #tpu.memory_space<vmem>>, vector<2x8x32xf32>
    %238 = vector.shape_cast %237 : vector<2x8x32xf32> to vector<16x32xf32>
    %c0_83 = arith.constant 0 : index
    %c0_84 = arith.constant 0 : index
    %239 = vector.load %arg12[%c0_83, %c0_84] : memref<32x64xf32, #tpu.memory_space<vmem>>, vector<32x64xf32>
    %cst_85 = arith.constant dense<0.000000e+00> : vector<16x64xf32>
    %240 = tpu.matmul %238, %239, %cst_85 {dimension_numbers = #tpu.dot_dimension_numbers<[1], [0], [0], [1], [0, 0, 1, 1], [], []>} : vector<16x32xf32>, vector<32x64xf32>, vector<16x64xf32> -> vector<16x64xf32>
    %c0_86 = arith.constant 0 : index
    %c0_87 = arith.constant 0 : index
    %241 = vector.load %arg13[%c0_86, %c0_87] : memref<1x64xf32, #tpu.memory_space<vmem>>, vector<1x64xf32>
    %242 = vector.broadcast %241 : vector<1x64xf32> to vector<16x64xf32>
    %243 = arith.addf %240, %242 : vector<16x64xf32>
    %244 = vector.shape_cast %243 : vector<16x64xf32> to vector<2x8x64xf32>
    %245 = vector.extract_strided_slice %244 {offsets = [0, 0, 0], sizes = [2, 8, 32], strides = [1, 1, 1]} : vector<2x8x64xf32> to vector<2x8x32xf32>
    %246 = vector.extract_strided_slice %244 {offsets = [0, 0, 32], sizes = [2, 8, 32], strides = [1, 1, 1]} : vector<2x8x64xf32> to vector<2x8x32xf32>
    %c0_88 = arith.constant 0 : index
    %c0_89 = arith.constant 0 : index
    %247 = vector.load %arg10[%c0_88, %c0_89] : memref<32x32xf32, #tpu.memory_space<vmem>>, vector<32x32xf32>
    %c0_90 = arith.constant 0 : index
    %c0_91 = arith.constant 0 : index
    %248 = vector.load %arg11[%c0_90, %c0_91] : memref<1x32xf32, #tpu.memory_space<vmem>>, vector<1x32xf32>
    %c0_92 = arith.constant 0 : index
    %c0_93 = arith.constant 0 : index
    %249 = vector.load %arg14[%c0_92, %c0_93] : memref<32x32xf32, #tpu.memory_space<vmem>>, vector<32x32xf32>
    %c0_94 = arith.constant 0 : index
    %c0_95 = arith.constant 0 : index
    %250 = vector.load %arg15[%c0_94, %c0_95] : memref<1x32xf32, #tpu.memory_space<vmem>>, vector<1x32xf32>
    %c0_96 = arith.constant 0 : index
    %c0_97 = arith.constant 0 : index
    %251 = vector.load %arg16[%c0_96, %c0_97] : memref<1x32xf32, #tpu.memory_space<vmem>>, vector<1x32xf32>
    %252 = vector.shape_cast %251 : vector<1x32xf32> to vector<1x1x32xf32>
    %c0_98 = arith.constant 0 : index
    %c0_99 = arith.constant 0 : index
    %253 = vector.load %arg17[%c0_98, %c0_99] : memref<1x32xf32, #tpu.memory_space<vmem>>, vector<1x32xf32>
    %254 = vector.shape_cast %253 : vector<1x32xf32> to vector<1x1x32xf32>
    %255 = tpu.iota {dimensions = array<i32: 1>} : vector<2x8xi32>
    %256 = arith.sitofp %255 : vector<2x8xi32> to vector<2x8xf32>
    %cst_100 = arith.constant 0.000000e+00 : f32
    %257 = vector.broadcast %cst_100 : f32 to vector<2x8xf32>
    %cst_101 = arith.constant 0.000000e+00 : f32
    %258 = vector.broadcast %cst_101 : f32 to vector<2x1xf32>
    %cst_102 = arith.constant dense<0.000000e+00> : vector<2x128xf32>
    %259 = tpu.matmul %233, %23, %cst_102 {dimension_numbers = #tpu.dot_dimension_numbers<[1], [0], [0], [1], [0, 0, 1, 1], [], []>} : vector<2x32xf32>, vector<32x128xf32>, vector<2x128xf32> -> vector<2x128xf32>
    %260 = arith.addf %42, %259 : vector<2x128xf32>
    %cst_103 = arith.constant 5.000000e-01 : f32
    %261 = vector.broadcast %cst_103 : f32 to vector<2x128xf32>
    %262 = arith.mulf %261, %260 : vector<2x128xf32>
    %263 = math.tanh %262 : vector<2x128xf32>
    %cst_104 = arith.constant 5.000000e-01 : f32
    %264 = vector.broadcast %cst_104 : f32 to vector<2x128xf32>
    %265 = arith.mulf %264, %263 : vector<2x128xf32>
    %cst_105 = arith.constant 5.000000e-01 : f32
    %266 = vector.broadcast %cst_105 : f32 to vector<2x128xf32>
    %267 = arith.addf %265, %266 : vector<2x128xf32>
    %268 = math.tanh %260 : vector<2x128xf32>
    %269 = vector.extract_strided_slice %267 {offsets = [0, 0], sizes = [2, 32], strides = [1, 1]} : vector<2x128xf32> to vector<2x32xf32>
    %270 = vector.extract_strided_slice %267 {offsets = [0, 32], sizes = [2, 32], strides = [1, 1]} : vector<2x128xf32> to vector<2x32xf32>
    %271 = vector.extract_strided_slice %267 {offsets = [0, 96], sizes = [2, 32], strides = [1, 1]} : vector<2x128xf32> to vector<2x32xf32>
    %272 = vector.extract_strided_slice %268 {offsets = [0, 64], sizes = [2, 32], strides = [1, 1]} : vector<2x128xf32> to vector<2x32xf32>
    %273 = arith.mulf %270, %231 : vector<2x32xf32>
    %274 = arith.mulf %269, %272 : vector<2x32xf32>
    %275 = arith.addf %273, %274 : vector<2x32xf32>
    %276 = math.tanh %275 : vector<2x32xf32>
    %277 = arith.mulf %271, %276 : vector<2x32xf32>
    %cst_106 = arith.constant dense<0.000000e+00> : vector<2x32xf32>
    %278 = tpu.matmul %277, %247, %cst_106 {dimension_numbers = #tpu.dot_dimension_numbers<[1], [0], [0], [1], [0, 0, 1, 1], [], []>} : vector<2x32xf32>, vector<32x32xf32>, vector<2x32xf32> -> vector<2x32xf32>
    %279 = vector.broadcast %248 : vector<1x32xf32> to vector<2x32xf32>
    %280 = arith.addf %278, %279 : vector<2x32xf32>
    %281 = vector.shape_cast %280 : vector<2x32xf32> to vector<2x1x32xf32>
    %282 = vector.broadcast %281 : vector<2x1x32xf32> to vector<2x8x32xf32>
    %283 = arith.addf %282, %245 : vector<2x8x32xf32>
    %284 = math.tanh %283 : vector<2x8x32xf32>
    %285 = vector.broadcast %252 : vector<1x1x32xf32> to vector<2x8x32xf32>
    %286 = arith.mulf %284, %285 : vector<2x8x32xf32>
    %cst_107 = arith.constant dense<0.000000e+00> : vector<2x8xf32>
    %287 = vector.multi_reduction <add>, %286, %cst_107 [2] : vector<2x8x32xf32> to vector<2x8xf32>
    %cst_108 = arith.constant 1.000000e+08 : f32
    %288 = vector.broadcast %cst_108 : f32 to vector<2x8xf32>
    %289 = arith.mulf %288, %257 : vector<2x8xf32>
    %290 = arith.subf %287, %289 : vector<2x8xf32>
    %cst_109 = arith.constant 1.000000e+00 : f32
    %291 = vector.broadcast %cst_109 : f32 to vector<2x8xf32>
    %292 = arith.mulf %290, %291 : vector<2x8xf32>
    %cst_110 = arith.constant dense<0xFF800000> : vector<2xf32>
    %293 = vector.multi_reduction <maximumf>, %292, %cst_110 [1] : vector<2x8xf32> to vector<2xf32>
    %294 = vector.shape_cast %293 : vector<2xf32> to vector<2x1xf32>
    %295 = vector.broadcast %294 : vector<2x1xf32> to vector<2x8xf32>
    %296 = arith.subf %292, %295 : vector<2x8xf32>
    %297 = math.exp %296 : vector<2x8xf32>
    %cst_111 = arith.constant dense<0.000000e+00> : vector<2xf32>
    %298 = vector.multi_reduction <add>, %297, %cst_111 [1] : vector<2x8xf32> to vector<2xf32>
    %299 = vector.shape_cast %298 : vector<2xf32> to vector<2x1xf32>
    %300 = vector.broadcast %299 : vector<2x1xf32> to vector<2x8xf32>
    %301 = arith.divf %297, %300 : vector<2x8xf32>
    %302 = vector.shape_cast %301 : vector<2x8xf32> to vector<2x8x1xf32>
    %303 = vector.broadcast %302 : vector<2x8x1xf32> to vector<2x8x32xf32>
    %304 = arith.mulf %303, %245 : vector<2x8x32xf32>
    %cst_112 = arith.constant dense<0.000000e+00> : vector<2x32xf32>
    %305 = vector.multi_reduction <add>, %304, %cst_112 [1] : vector<2x8x32xf32> to vector<2x32xf32>
    %cst_113 = arith.constant dense<0.000000e+00> : vector<2x32xf32>
    %306 = tpu.matmul %305, %249, %cst_113 {dimension_numbers = #tpu.dot_dimension_numbers<[1], [0], [0], [1], [0, 0, 1, 1], [], []>} : vector<2x32xf32>, vector<32x32xf32>, vector<2x32xf32> -> vector<2x32xf32>
    %307 = vector.broadcast %250 : vector<1x32xf32> to vector<2x32xf32>
    %308 = arith.addf %306, %307 : vector<2x32xf32>
    %309 = vector.shape_cast %308 : vector<2x32xf32> to vector<2x1x32xf32>
    %310 = vector.broadcast %309 : vector<2x1x32xf32> to vector<2x8x32xf32>
    %311 = arith.addf %310, %246 : vector<2x8x32xf32>
    %312 = math.tanh %311 : vector<2x8x32xf32>
    %cst_114 = arith.constant 1.000000e+01 : f32
    %313 = vector.broadcast %cst_114 : f32 to vector<2x8x32xf32>
    %314 = arith.mulf %313, %312 : vector<2x8x32xf32>
    %315 = vector.broadcast %254 : vector<1x1x32xf32> to vector<2x8x32xf32>
    %316 = arith.mulf %314, %315 : vector<2x8x32xf32>
    %cst_115 = arith.constant dense<0.000000e+00> : vector<2x8xf32>
    %317 = vector.multi_reduction <add>, %316, %cst_115 [2] : vector<2x8x32xf32> to vector<2x8xf32>
    %cst_116 = arith.constant 1.000000e+08 : f32
    %318 = vector.broadcast %cst_116 : f32 to vector<2x8xf32>
    %319 = arith.mulf %318, %257 : vector<2x8xf32>
    %320 = arith.subf %317, %319 : vector<2x8xf32>
    %cst_117 = arith.constant dense<0xFF800000> : vector<2xf32>
    %321 = vector.multi_reduction <maximumf>, %320, %cst_117 [1] : vector<2x8xf32> to vector<2xf32>
    %322 = vector.shape_cast %321 : vector<2xf32> to vector<2x1xf32>
    %323 = vector.broadcast %322 : vector<2x1xf32> to vector<2x8xf32>
    %324 = arith.subf %320, %323 : vector<2x8xf32>
    %325 = math.exp %324 : vector<2x8xf32>
    %cst_118 = arith.constant dense<0.000000e+00> : vector<2xf32>
    %326 = vector.multi_reduction <add>, %325, %cst_118 [1] : vector<2x8xf32> to vector<2xf32>
    %327 = vector.shape_cast %326 : vector<2xf32> to vector<2x1xf32>
    %328 = math.log %327 : vector<2x1xf32>
    %329 = vector.broadcast %328 : vector<2x1xf32> to vector<2x8xf32>
    %330 = arith.subf %324, %329 : vector<2x8xf32>
    %cst_119 = arith.constant dense<0xFF800000> : vector<2xf32>
    %331 = vector.multi_reduction <maximumf>, %330, %cst_119 [1] : vector<2x8xf32> to vector<2xf32>
    %332 = vector.shape_cast %331 : vector<2xf32> to vector<2x1xf32>
    %333 = vector.broadcast %332 : vector<2x1xf32> to vector<2x8xf32>
    %334 = arith.cmpf oeq, %330, %333 : vector<2x8xf32>
    %cst_120 = arith.constant 8.000000e+00 : f32
    %335 = vector.broadcast %cst_120 : f32 to vector<2x8xf32>
    %336 = arith.select %334, %256, %335 : vector<2x8xi1>, vector<2x8xf32>
    %cst_121 = arith.constant dense<0x7F800000> : vector<2xf32>
    %337 = vector.multi_reduction <minimumf>, %336, %cst_121 [1] : vector<2x8xf32> to vector<2xf32>
    %338 = vector.shape_cast %337 : vector<2xf32> to vector<2x1xf32>
    %339 = vector.broadcast %338 : vector<2x1xf32> to vector<2x8xf32>
    %340 = arith.cmpf oeq, %256, %339 : vector<2x8xf32>
    %341 = arith.extui %340 : vector<2x8xi1> to vector<2x8xi32>
    %342 = arith.sitofp %341 : vector<2x8xi32> to vector<2x8xf32>
    %343 = arith.mulf %342, %330 : vector<2x8xf32>
    %cst_122 = arith.constant dense<0.000000e+00> : vector<2xf32>
    %344 = vector.multi_reduction <add>, %343, %cst_122 [1] : vector<2x8xf32> to vector<2xf32>
    %345 = vector.shape_cast %344 : vector<2xf32> to vector<2x1xf32>
    %346 = arith.addf %258, %345 : vector<2x1xf32>
    %347 = arith.addf %257, %342 : vector<2x8xf32>
    %c0_123 = arith.constant 0 : index
    %c0_124 = arith.constant 0 : index
    %348 = vector.load %arg19[%c0_123, %c0_124] : memref<2x8xf32, #tpu.memory_space<vmem>>, vector<2x1xf32>
    tpu.vector_store %arg19[%c0_123, %c0_124], %338 {strides = array<i32>} : memref<2x8xf32, #tpu.memory_space<vmem>>, vector<2x1xf32>,
    %349 = vector.shape_cast %342 : vector<2x8xf32> to vector<2x8x1xf32>
    %350 = vector.broadcast %349 : vector<2x8x1xf32> to vector<2x8x128xf32>
    %351 = arith.mulf %350, %35 : vector<2x8x128xf32>
    %cst_125 = arith.constant dense<0.000000e+00> : vector<2x128xf32>
    %352 = vector.multi_reduction <add>, %351, %cst_125 [1] : vector<2x8x128xf32> to vector<2x128xf32>
    %cst_126 = arith.constant dense<0.000000e+00> : vector<2x128xf32>
    %353 = tpu.matmul %277, %23, %cst_126 {dimension_numbers = #tpu.dot_dimension_numbers<[1], [0], [0], [1], [0, 0, 1, 1], [], []>} : vector<2x32xf32>, vector<32x128xf32>, vector<2x128xf32> -> vector<2x128xf32>
    %354 = arith.addf %352, %353 : vector<2x128xf32>
    %cst_127 = arith.constant 5.000000e-01 : f32
    %355 = vector.broadcast %cst_127 : f32 to vector<2x128xf32>
    %356 = arith.mulf %355, %354 : vector<2x128xf32>
    %357 = math.tanh %356 : vector<2x128xf32>
    %cst_128 = arith.constant 5.000000e-01 : f32
    %358 = vector.broadcast %cst_128 : f32 to vector<2x128xf32>
    %359 = arith.mulf %358, %357 : vector<2x128xf32>
    %cst_129 = arith.constant 5.000000e-01 : f32
    %360 = vector.broadcast %cst_129 : f32 to vector<2x128xf32>
    %361 = arith.addf %359, %360 : vector<2x128xf32>
    %362 = math.tanh %354 : vector<2x128xf32>
    %363 = vector.extract_strided_slice %361 {offsets = [0, 0], sizes = [2, 32], strides = [1, 1]} : vector<2x128xf32> to vector<2x32xf32>
    %364 = vector.extract_strided_slice %361 {offsets = [0, 32], sizes = [2, 32], strides = [1, 1]} : vector<2x128xf32> to vector<2x32xf32>
    %365 = vector.extract_strided_slice %361 {offsets = [0, 96], sizes = [2, 32], strides = [1, 1]} : vector<2x128xf32> to vector<2x32xf32>
    %366 = vector.extract_strided_slice %362 {offsets = [0, 64], sizes = [2, 32], strides = [1, 1]} : vector<2x128xf32> to vector<2x32xf32>
    %367 = arith.mulf %364, %275 : vector<2x32xf32>
    %368 = arith.mulf %363, %366 : vector<2x32xf32>
    %369 = arith.addf %367, %368 : vector<2x32xf32>
    %370 = math.tanh %369 : vector<2x32xf32>
    %371 = arith.mulf %365, %370 : vector<2x32xf32>
    %cst_130 = arith.constant dense<0.000000e+00> : vector<2x32xf32>
    %372 = tpu.matmul %371, %247, %cst_130 {dimension_numbers = #tpu.dot_dimension_numbers<[1], [0], [0], [1], [0, 0, 1, 1], [], []>} : vector<2x32xf32>, vector<32x32xf32>, vector<2x32xf32> -> vector<2x32xf32>
    %373 = vector.broadcast %248 : vector<1x32xf32> to vector<2x32xf32>
    %374 = arith.addf %372, %373 : vector<2x32xf32>
    %375 = vector.shape_cast %374 : vector<2x32xf32> to vector<2x1x32xf32>
    %376 = vector.broadcast %375 : vector<2x1x32xf32> to vector<2x8x32xf32>
    %377 = arith.addf %376, %245 : vector<2x8x32xf32>
    %378 = math.tanh %377 : vector<2x8x32xf32>
    %379 = vector.broadcast %252 : vector<1x1x32xf32> to vector<2x8x32xf32>
    %380 = arith.mulf %378, %379 : vector<2x8x32xf32>
    %cst_131 = arith.constant dense<0.000000e+00> : vector<2x8xf32>
    %381 = vector.multi_reduction <add>, %380, %cst_131 [2] : vector<2x8x32xf32> to vector<2x8xf32>
    %cst_132 = arith.constant 1.000000e+08 : f32
    %382 = vector.broadcast %cst_132 : f32 to vector<2x8xf32>
    %383 = arith.mulf %382, %347 : vector<2x8xf32>
    %384 = arith.subf %381, %383 : vector<2x8xf32>
    %cst_133 = arith.constant 1.000000e+00 : f32
    %385 = vector.broadcast %cst_133 : f32 to vector<2x8xf32>
    %386 = arith.mulf %384, %385 : vector<2x8xf32>
    %cst_134 = arith.constant dense<0xFF800000> : vector<2xf32>
    %387 = vector.multi_reduction <maximumf>, %386, %cst_134 [1] : vector<2x8xf32> to vector<2xf32>
    %388 = vector.shape_cast %387 : vector<2xf32> to vector<2x1xf32>
    %389 = vector.broadcast %388 : vector<2x1xf32> to vector<2x8xf32>
    %390 = arith.subf %386, %389 : vector<2x8xf32>
    %391 = math.exp %390 : vector<2x8xf32>
    %cst_135 = arith.constant dense<0.000000e+00> : vector<2xf32>
    %392 = vector.multi_reduction <add>, %391, %cst_135 [1] : vector<2x8xf32> to vector<2xf32>
    %393 = vector.shape_cast %392 : vector<2xf32> to vector<2x1xf32>
    %394 = vector.broadcast %393 : vector<2x1xf32> to vector<2x8xf32>
    %395 = arith.divf %391, %394 : vector<2x8xf32>
    %396 = vector.shape_cast %395 : vector<2x8xf32> to vector<2x8x1xf32>
    %397 = vector.broadcast %396 : vector<2x8x1xf32> to vector<2x8x32xf32>
    %398 = arith.mulf %397, %245 : vector<2x8x32xf32>
    %cst_136 = arith.constant dense<0.000000e+00> : vector<2x32xf32>
    %399 = vector.multi_reduction <add>, %398, %cst_136 [1] : vector<2x8x32xf32> to vector<2x32xf32>
    %cst_137 = arith.constant dense<0.000000e+00> : vector<2x32xf32>
    %400 = tpu.matmul %399, %249, %cst_137 {dimension_numbers = #tpu.dot_dimension_numbers<[1], [0], [0], [1], [0, 0, 1, 1], [], []>} : vector<2x32xf32>, vector<32x32xf32>, vector<2x32xf32> -> vector<2x32xf32>
    %401 = vector.broadcast %250 : vector<1x32xf32> to vector<2x32xf32>
    %402 = arith.addf %400, %401 : vector<2x32xf32>
    %403 = vector.shape_cast %402 : vector<2x32xf32> to vector<2x1x32xf32>
    %404 = vector.broadcast %403 : vector<2x1x32xf32> to vector<2x8x32xf32>
    %405 = arith.addf %404, %246 : vector<2x8x32xf32>
    %406 = math.tanh %405 : vector<2x8x32xf32>
    %cst_138 = arith.constant 1.000000e+01 : f32
    %407 = vector.broadcast %cst_138 : f32 to vector<2x8x32xf32>
    %408 = arith.mulf %407, %406 : vector<2x8x32xf32>
    %409 = vector.broadcast %254 : vector<1x1x32xf32> to vector<2x8x32xf32>
    %410 = arith.mulf %408, %409 : vector<2x8x32xf32>
    %cst_139 = arith.constant dense<0.000000e+00> : vector<2x8xf32>
    %411 = vector.multi_reduction <add>, %410, %cst_139 [2] : vector<2x8x32xf32> to vector<2x8xf32>
    %cst_140 = arith.constant 1.000000e+08 : f32
    %412 = vector.broadcast %cst_140 : f32 to vector<2x8xf32>
    %413 = arith.mulf %412, %347 : vector<2x8xf32>
    %414 = arith.subf %411, %413 : vector<2x8xf32>
    %cst_141 = arith.constant dense<0xFF800000> : vector<2xf32>
    %415 = vector.multi_reduction <maximumf>, %414, %cst_141 [1] : vector<2x8xf32> to vector<2xf32>
    %416 = vector.shape_cast %415 : vector<2xf32> to vector<2x1xf32>
    %417 = vector.broadcast %416 : vector<2x1xf32> to vector<2x8xf32>
    %418 = arith.subf %414, %417 : vector<2x8xf32>
    %419 = math.exp %418 : vector<2x8xf32>
    %cst_142 = arith.constant dense<0.000000e+00> : vector<2xf32>
    %420 = vector.multi_reduction <add>, %419, %cst_142 [1] : vector<2x8xf32> to vector<2xf32>
    %421 = vector.shape_cast %420 : vector<2xf32> to vector<2x1xf32>
    %422 = math.log %421 : vector<2x1xf32>
    %423 = vector.broadcast %422 : vector<2x1xf32> to vector<2x8xf32>
    %424 = arith.subf %418, %423 : vector<2x8xf32>
    %cst_143 = arith.constant dense<0xFF800000> : vector<2xf32>
    %425 = vector.multi_reduction <maximumf>, %424, %cst_143 [1] : vector<2x8xf32> to vector<2xf32>
    %426 = vector.shape_cast %425 : vector<2xf32> to vector<2x1xf32>
    %427 = vector.broadcast %426 : vector<2x1xf32> to vector<2x8xf32>
    %428 = arith.cmpf oeq, %424, %427 : vector<2x8xf32>
    %cst_144 = arith.constant 8.000000e+00 : f32
    %429 = vector.broadcast %cst_144 : f32 to vector<2x8xf32>
    %430 = arith.select %428, %256, %429 : vector<2x8xi1>, vector<2x8xf32>
    %cst_145 = arith.constant dense<0x7F800000> : vector<2xf32>
    %431 = vector.multi_reduction <minimumf>, %430, %cst_145 [1] : vector<2x8xf32> to vector<2xf32>
    %432 = vector.shape_cast %431 : vector<2xf32> to vector<2x1xf32>
    %433 = vector.broadcast %432 : vector<2x1xf32> to vector<2x8xf32>
    %434 = arith.cmpf oeq, %256, %433 : vector<2x8xf32>
    %435 = arith.extui %434 : vector<2x8xi1> to vector<2x8xi32>
    %436 = arith.sitofp %435 : vector<2x8xi32> to vector<2x8xf32>
    %437 = arith.mulf %436, %424 : vector<2x8xf32>
    %cst_146 = arith.constant dense<0.000000e+00> : vector<2xf32>
    %438 = vector.multi_reduction <add>, %437, %cst_146 [1] : vector<2x8xf32> to vector<2xf32>
    %439 = vector.shape_cast %438 : vector<2xf32> to vector<2x1xf32>
    %440 = arith.addf %346, %439 : vector<2x1xf32>
    %441 = arith.addf %347, %436 : vector<2x8xf32>
    %c0_147 = arith.constant 0 : index
    %c1_148 = arith.constant 1 : index
    %442 = vector.load %arg19[%c0_147, %c1_148] : memref<2x8xf32, #tpu.memory_space<vmem>>, vector<2x1xf32>
    tpu.vector_store %arg19[%c0_147, %c1_148], %432 {strides = array<i32>} : memref<2x8xf32, #tpu.memory_space<vmem>>, vector<2x1xf32>,
    %443 = vector.shape_cast %436 : vector<2x8xf32> to vector<2x8x1xf32>
    %444 = vector.broadcast %443 : vector<2x8x1xf32> to vector<2x8x128xf32>
    %445 = arith.mulf %444, %35 : vector<2x8x128xf32>
    %cst_149 = arith.constant dense<0.000000e+00> : vector<2x128xf32>
    %446 = vector.multi_reduction <add>, %445, %cst_149 [1] : vector<2x8x128xf32> to vector<2x128xf32>
    %cst_150 = arith.constant dense<0.000000e+00> : vector<2x128xf32>
    %447 = tpu.matmul %371, %23, %cst_150 {dimension_numbers = #tpu.dot_dimension_numbers<[1], [0], [0], [1], [0, 0, 1, 1], [], []>} : vector<2x32xf32>, vector<32x128xf32>, vector<2x128xf32> -> vector<2x128xf32>
    %448 = arith.addf %446, %447 : vector<2x128xf32>
    %cst_151 = arith.constant 5.000000e-01 : f32
    %449 = vector.broadcast %cst_151 : f32 to vector<2x128xf32>
    %450 = arith.mulf %449, %448 : vector<2x128xf32>
    %451 = math.tanh %450 : vector<2x128xf32>
    %cst_152 = arith.constant 5.000000e-01 : f32
    %452 = vector.broadcast %cst_152 : f32 to vector<2x128xf32>
    %453 = arith.mulf %452, %451 : vector<2x128xf32>
    %cst_153 = arith.constant 5.000000e-01 : f32
    %454 = vector.broadcast %cst_153 : f32 to vector<2x128xf32>
    %455 = arith.addf %453, %454 : vector<2x128xf32>
    %456 = math.tanh %448 : vector<2x128xf32>
    %457 = vector.extract_strided_slice %455 {offsets = [0, 0], sizes = [2, 32], strides = [1, 1]} : vector<2x128xf32> to vector<2x32xf32>
    %458 = vector.extract_strided_slice %455 {offsets = [0, 32], sizes = [2, 32], strides = [1, 1]} : vector<2x128xf32> to vector<2x32xf32>
    %459 = vector.extract_strided_slice %455 {offsets = [0, 96], sizes = [2, 32], strides = [1, 1]} : vector<2x128xf32> to vector<2x32xf32>
    %460 = vector.extract_strided_slice %456 {offsets = [0, 64], sizes = [2, 32], strides = [1, 1]} : vector<2x128xf32> to vector<2x32xf32>
    %461 = arith.mulf %458, %369 : vector<2x32xf32>
    %462 = arith.mulf %457, %460 : vector<2x32xf32>
    %463 = arith.addf %461, %462 : vector<2x32xf32>
    %464 = math.tanh %463 : vector<2x32xf32>
    %465 = arith.mulf %459, %464 : vector<2x32xf32>
    %cst_154 = arith.constant dense<0.000000e+00> : vector<2x32xf32>
    %466 = tpu.matmul %465, %247, %cst_154 {dimension_numbers = #tpu.dot_dimension_numbers<[1], [0], [0], [1], [0, 0, 1, 1], [], []>} : vector<2x32xf32>, vector<32x32xf32>, vector<2x32xf32> -> vector<2x32xf32>
    %467 = vector.broadcast %248 : vector<1x32xf32> to vector<2x32xf32>
    %468 = arith.addf %466, %467 : vector<2x32xf32>
    %469 = vector.shape_cast %468 : vector<2x32xf32> to vector<2x1x32xf32>
    %470 = vector.broadcast %469 : vector<2x1x32xf32> to vector<2x8x32xf32>
    %471 = arith.addf %470, %245 : vector<2x8x32xf32>
    %472 = math.tanh %471 : vector<2x8x32xf32>
    %473 = vector.broadcast %252 : vector<1x1x32xf32> to vector<2x8x32xf32>
    %474 = arith.mulf %472, %473 : vector<2x8x32xf32>
    %cst_155 = arith.constant dense<0.000000e+00> : vector<2x8xf32>
    %475 = vector.multi_reduction <add>, %474, %cst_155 [2] : vector<2x8x32xf32> to vector<2x8xf32>
    %cst_156 = arith.constant 1.000000e+08 : f32
    %476 = vector.broadcast %cst_156 : f32 to vector<2x8xf32>
    %477 = arith.mulf %476, %441 : vector<2x8xf32>
    %478 = arith.subf %475, %477 : vector<2x8xf32>
    %cst_157 = arith.constant 1.000000e+00 : f32
    %479 = vector.broadcast %cst_157 : f32 to vector<2x8xf32>
    %480 = arith.mulf %478, %479 : vector<2x8xf32>
    %cst_158 = arith.constant dense<0xFF800000> : vector<2xf32>
    %481 = vector.multi_reduction <maximumf>, %480, %cst_158 [1] : vector<2x8xf32> to vector<2xf32>
    %482 = vector.shape_cast %481 : vector<2xf32> to vector<2x1xf32>
    %483 = vector.broadcast %482 : vector<2x1xf32> to vector<2x8xf32>
    %484 = arith.subf %480, %483 : vector<2x8xf32>
    %485 = math.exp %484 : vector<2x8xf32>
    %cst_159 = arith.constant dense<0.000000e+00> : vector<2xf32>
    %486 = vector.multi_reduction <add>, %485, %cst_159 [1] : vector<2x8xf32> to vector<2xf32>
    %487 = vector.shape_cast %486 : vector<2xf32> to vector<2x1xf32>
    %488 = vector.broadcast %487 : vector<2x1xf32> to vector<2x8xf32>
    %489 = arith.divf %485, %488 : vector<2x8xf32>
    %490 = vector.shape_cast %489 : vector<2x8xf32> to vector<2x8x1xf32>
    %491 = vector.broadcast %490 : vector<2x8x1xf32> to vector<2x8x32xf32>
    %492 = arith.mulf %491, %245 : vector<2x8x32xf32>
    %cst_160 = arith.constant dense<0.000000e+00> : vector<2x32xf32>
    %493 = vector.multi_reduction <add>, %492, %cst_160 [1] : vector<2x8x32xf32> to vector<2x32xf32>
    %cst_161 = arith.constant dense<0.000000e+00> : vector<2x32xf32>
    %494 = tpu.matmul %493, %249, %cst_161 {dimension_numbers = #tpu.dot_dimension_numbers<[1], [0], [0], [1], [0, 0, 1, 1], [], []>} : vector<2x32xf32>, vector<32x32xf32>, vector<2x32xf32> -> vector<2x32xf32>
    %495 = vector.broadcast %250 : vector<1x32xf32> to vector<2x32xf32>
    %496 = arith.addf %494, %495 : vector<2x32xf32>
    %497 = vector.shape_cast %496 : vector<2x32xf32> to vector<2x1x32xf32>
    %498 = vector.broadcast %497 : vector<2x1x32xf32> to vector<2x8x32xf32>
    %499 = arith.addf %498, %246 : vector<2x8x32xf32>
    %500 = math.tanh %499 : vector<2x8x32xf32>
    %cst_162 = arith.constant 1.000000e+01 : f32
    %501 = vector.broadcast %cst_162 : f32 to vector<2x8x32xf32>
    %502 = arith.mulf %501, %500 : vector<2x8x32xf32>
    %503 = vector.broadcast %254 : vector<1x1x32xf32> to vector<2x8x32xf32>
    %504 = arith.mulf %502, %503 : vector<2x8x32xf32>
    %cst_163 = arith.constant dense<0.000000e+00> : vector<2x8xf32>
    %505 = vector.multi_reduction <add>, %504, %cst_163 [2] : vector<2x8x32xf32> to vector<2x8xf32>
    %cst_164 = arith.constant 1.000000e+08 : f32
    %506 = vector.broadcast %cst_164 : f32 to vector<2x8xf32>
    %507 = arith.mulf %506, %441 : vector<2x8xf32>
    %508 = arith.subf %505, %507 : vector<2x8xf32>
    %cst_165 = arith.constant dense<0xFF800000> : vector<2xf32>
    %509 = vector.multi_reduction <maximumf>, %508, %cst_165 [1] : vector<2x8xf32> to vector<2xf32>
    %510 = vector.shape_cast %509 : vector<2xf32> to vector<2x1xf32>
    %511 = vector.broadcast %510 : vector<2x1xf32> to vector<2x8xf32>
    %512 = arith.subf %508, %511 : vector<2x8xf32>
    %513 = math.exp %512 : vector<2x8xf32>
    %cst_166 = arith.constant dense<0.000000e+00> : vector<2xf32>
    %514 = vector.multi_reduction <add>, %513, %cst_166 [1] : vector<2x8xf32> to vector<2xf32>
    %515 = vector.shape_cast %514 : vector<2xf32> to vector<2x1xf32>
    %516 = math.log %515 : vector<2x1xf32>
    %517 = vector.broadcast %516 : vector<2x1xf32> to vector<2x8xf32>
    %518 = arith.subf %512, %517 : vector<2x8xf32>
    %cst_167 = arith.constant dense<0xFF800000> : vector<2xf32>
    %519 = vector.multi_reduction <maximumf>, %518, %cst_167 [1] : vector<2x8xf32> to vector<2xf32>
    %520 = vector.shape_cast %519 : vector<2xf32> to vector<2x1xf32>
    %521 = vector.broadcast %520 : vector<2x1xf32> to vector<2x8xf32>
    %522 = arith.cmpf oeq, %518, %521 : vector<2x8xf32>
    %cst_168 = arith.constant 8.000000e+00 : f32
    %523 = vector.broadcast %cst_168 : f32 to vector<2x8xf32>
    %524 = arith.select %522, %256, %523 : vector<2x8xi1>, vector<2x8xf32>
    %cst_169 = arith.constant dense<0x7F800000> : vector<2xf32>
    %525 = vector.multi_reduction <minimumf>, %524, %cst_169 [1] : vector<2x8xf32> to vector<2xf32>
    %526 = vector.shape_cast %525 : vector<2xf32> to vector<2x1xf32>
    %527 = vector.broadcast %526 : vector<2x1xf32> to vector<2x8xf32>
    %528 = arith.cmpf oeq, %256, %527 : vector<2x8xf32>
    %529 = arith.extui %528 : vector<2x8xi1> to vector<2x8xi32>
    %530 = arith.sitofp %529 : vector<2x8xi32> to vector<2x8xf32>
    %531 = arith.mulf %530, %518 : vector<2x8xf32>
    %cst_170 = arith.constant dense<0.000000e+00> : vector<2xf32>
    %532 = vector.multi_reduction <add>, %531, %cst_170 [1] : vector<2x8xf32> to vector<2xf32>
    %533 = vector.shape_cast %532 : vector<2xf32> to vector<2x1xf32>
    %534 = arith.addf %440, %533 : vector<2x1xf32>
    %535 = arith.addf %441, %530 : vector<2x8xf32>
    %c0_171 = arith.constant 0 : index
    %c2_172 = arith.constant 2 : index
    %536 = vector.load %arg19[%c0_171, %c2_172] : memref<2x8xf32, #tpu.memory_space<vmem>>, vector<2x1xf32>
    tpu.vector_store %arg19[%c0_171, %c2_172], %526 {strides = array<i32>} : memref<2x8xf32, #tpu.memory_space<vmem>>, vector<2x1xf32>,
    %537 = vector.shape_cast %530 : vector<2x8xf32> to vector<2x8x1xf32>
    %538 = vector.broadcast %537 : vector<2x8x1xf32> to vector<2x8x128xf32>
    %539 = arith.mulf %538, %35 : vector<2x8x128xf32>
    %cst_173 = arith.constant dense<0.000000e+00> : vector<2x128xf32>
    %540 = vector.multi_reduction <add>, %539, %cst_173 [1] : vector<2x8x128xf32> to vector<2x128xf32>
    %cst_174 = arith.constant dense<0.000000e+00> : vector<2x128xf32>
    %541 = tpu.matmul %465, %23, %cst_174 {dimension_numbers = #tpu.dot_dimension_numbers<[1], [0], [0], [1], [0, 0, 1, 1], [], []>} : vector<2x32xf32>, vector<32x128xf32>, vector<2x128xf32> -> vector<2x128xf32>
    %542 = arith.addf %540, %541 : vector<2x128xf32>
    %cst_175 = arith.constant 5.000000e-01 : f32
    %543 = vector.broadcast %cst_175 : f32 to vector<2x128xf32>
    %544 = arith.mulf %543, %542 : vector<2x128xf32>
    %545 = math.tanh %544 : vector<2x128xf32>
    %cst_176 = arith.constant 5.000000e-01 : f32
    %546 = vector.broadcast %cst_176 : f32 to vector<2x128xf32>
    %547 = arith.mulf %546, %545 : vector<2x128xf32>
    %cst_177 = arith.constant 5.000000e-01 : f32
    %548 = vector.broadcast %cst_177 : f32 to vector<2x128xf32>
    %549 = arith.addf %547, %548 : vector<2x128xf32>
    %550 = math.tanh %542 : vector<2x128xf32>
    %551 = vector.extract_strided_slice %549 {offsets = [0, 0], sizes = [2, 32], strides = [1, 1]} : vector<2x128xf32> to vector<2x32xf32>
    %552 = vector.extract_strided_slice %549 {offsets = [0, 32], sizes = [2, 32], strides = [1, 1]} : vector<2x128xf32> to vector<2x32xf32>
    %553 = vector.extract_strided_slice %549 {offsets = [0, 96], sizes = [2, 32], strides = [1, 1]} : vector<2x128xf32> to vector<2x32xf32>
    %554 = vector.extract_strided_slice %550 {offsets = [0, 64], sizes = [2, 32], strides = [1, 1]} : vector<2x128xf32> to vector<2x32xf32>
    %555 = arith.mulf %552, %463 : vector<2x32xf32>
    %556 = arith.mulf %551, %554 : vector<2x32xf32>
    %557 = arith.addf %555, %556 : vector<2x32xf32>
    %558 = math.tanh %557 : vector<2x32xf32>
    %559 = arith.mulf %553, %558 : vector<2x32xf32>
    %cst_178 = arith.constant dense<0.000000e+00> : vector<2x32xf32>
    %560 = tpu.matmul %559, %247, %cst_178 {dimension_numbers = #tpu.dot_dimension_numbers<[1], [0], [0], [1], [0, 0, 1, 1], [], []>} : vector<2x32xf32>, vector<32x32xf32>, vector<2x32xf32> -> vector<2x32xf32>
    %561 = vector.broadcast %248 : vector<1x32xf32> to vector<2x32xf32>
    %562 = arith.addf %560, %561 : vector<2x32xf32>
    %563 = vector.shape_cast %562 : vector<2x32xf32> to vector<2x1x32xf32>
    %564 = vector.broadcast %563 : vector<2x1x32xf32> to vector<2x8x32xf32>
    %565 = arith.addf %564, %245 : vector<2x8x32xf32>
    %566 = math.tanh %565 : vector<2x8x32xf32>
    %567 = vector.broadcast %252 : vector<1x1x32xf32> to vector<2x8x32xf32>
    %568 = arith.mulf %566, %567 : vector<2x8x32xf32>
    %cst_179 = arith.constant dense<0.000000e+00> : vector<2x8xf32>
    %569 = vector.multi_reduction <add>, %568, %cst_179 [2] : vector<2x8x32xf32> to vector<2x8xf32>
    %cst_180 = arith.constant 1.000000e+08 : f32
    %570 = vector.broadcast %cst_180 : f32 to vector<2x8xf32>
    %571 = arith.mulf %570, %535 : vector<2x8xf32>
    %572 = arith.subf %569, %571 : vector<2x8xf32>
    %cst_181 = arith.constant 1.000000e+00 : f32
    %573 = vector.broadcast %cst_181 : f32 to vector<2x8xf32>
    %574 = arith.mulf %572, %573 : vector<2x8xf32>
    %cst_182 = arith.constant dense<0xFF800000> : vector<2xf32>
    %575 = vector.multi_reduction <maximumf>, %574, %cst_182 [1] : vector<2x8xf32> to vector<2xf32>
    %576 = vector.shape_cast %575 : vector<2xf32> to vector<2x1xf32>
    %577 = vector.broadcast %576 : vector<2x1xf32> to vector<2x8xf32>
    %578 = arith.subf %574, %577 : vector<2x8xf32>
    %579 = math.exp %578 : vector<2x8xf32>
    %cst_183 = arith.constant dense<0.000000e+00> : vector<2xf32>
    %580 = vector.multi_reduction <add>, %579, %cst_183 [1] : vector<2x8xf32> to vector<2xf32>
    %581 = vector.shape_cast %580 : vector<2xf32> to vector<2x1xf32>
    %582 = vector.broadcast %581 : vector<2x1xf32> to vector<2x8xf32>
    %583 = arith.divf %579, %582 : vector<2x8xf32>
    %584 = vector.shape_cast %583 : vector<2x8xf32> to vector<2x8x1xf32>
    %585 = vector.broadcast %584 : vector<2x8x1xf32> to vector<2x8x32xf32>
    %586 = arith.mulf %585, %245 : vector<2x8x32xf32>
    %cst_184 = arith.constant dense<0.000000e+00> : vector<2x32xf32>
    %587 = vector.multi_reduction <add>, %586, %cst_184 [1] : vector<2x8x32xf32> to vector<2x32xf32>
    %cst_185 = arith.constant dense<0.000000e+00> : vector<2x32xf32>
    %588 = tpu.matmul %587, %249, %cst_185 {dimension_numbers = #tpu.dot_dimension_numbers<[1], [0], [0], [1], [0, 0, 1, 1], [], []>} : vector<2x32xf32>, vector<32x32xf32>, vector<2x32xf32> -> vector<2x32xf32>
    %589 = vector.broadcast %250 : vector<1x32xf32> to vector<2x32xf32>
    %590 = arith.addf %588, %589 : vector<2x32xf32>
    %591 = vector.shape_cast %590 : vector<2x32xf32> to vector<2x1x32xf32>
    %592 = vector.broadcast %591 : vector<2x1x32xf32> to vector<2x8x32xf32>
    %593 = arith.addf %592, %246 : vector<2x8x32xf32>
    %594 = math.tanh %593 : vector<2x8x32xf32>
    %cst_186 = arith.constant 1.000000e+01 : f32
    %595 = vector.broadcast %cst_186 : f32 to vector<2x8x32xf32>
    %596 = arith.mulf %595, %594 : vector<2x8x32xf32>
    %597 = vector.broadcast %254 : vector<1x1x32xf32> to vector<2x8x32xf32>
    %598 = arith.mulf %596, %597 : vector<2x8x32xf32>
    %cst_187 = arith.constant dense<0.000000e+00> : vector<2x8xf32>
    %599 = vector.multi_reduction <add>, %598, %cst_187 [2] : vector<2x8x32xf32> to vector<2x8xf32>
    %cst_188 = arith.constant 1.000000e+08 : f32
    %600 = vector.broadcast %cst_188 : f32 to vector<2x8xf32>
    %601 = arith.mulf %600, %535 : vector<2x8xf32>
    %602 = arith.subf %599, %601 : vector<2x8xf32>
    %cst_189 = arith.constant dense<0xFF800000> : vector<2xf32>
    %603 = vector.multi_reduction <maximumf>, %602, %cst_189 [1] : vector<2x8xf32> to vector<2xf32>
    %604 = vector.shape_cast %603 : vector<2xf32> to vector<2x1xf32>
    %605 = vector.broadcast %604 : vector<2x1xf32> to vector<2x8xf32>
    %606 = arith.subf %602, %605 : vector<2x8xf32>
    %607 = math.exp %606 : vector<2x8xf32>
    %cst_190 = arith.constant dense<0.000000e+00> : vector<2xf32>
    %608 = vector.multi_reduction <add>, %607, %cst_190 [1] : vector<2x8xf32> to vector<2xf32>
    %609 = vector.shape_cast %608 : vector<2xf32> to vector<2x1xf32>
    %610 = math.log %609 : vector<2x1xf32>
    %611 = vector.broadcast %610 : vector<2x1xf32> to vector<2x8xf32>
    %612 = arith.subf %606, %611 : vector<2x8xf32>
    %cst_191 = arith.constant dense<0xFF800000> : vector<2xf32>
    %613 = vector.multi_reduction <maximumf>, %612, %cst_191 [1] : vector<2x8xf32> to vector<2xf32>
    %614 = vector.shape_cast %613 : vector<2xf32> to vector<2x1xf32>
    %615 = vector.broadcast %614 : vector<2x1xf32> to vector<2x8xf32>
    %616 = arith.cmpf oeq, %612, %615 : vector<2x8xf32>
    %cst_192 = arith.constant 8.000000e+00 : f32
    %617 = vector.broadcast %cst_192 : f32 to vector<2x8xf32>
    %618 = arith.select %616, %256, %617 : vector<2x8xi1>, vector<2x8xf32>
    %cst_193 = arith.constant dense<0x7F800000> : vector<2xf32>
    %619 = vector.multi_reduction <minimumf>, %618, %cst_193 [1] : vector<2x8xf32> to vector<2xf32>
    %620 = vector.shape_cast %619 : vector<2xf32> to vector<2x1xf32>
    %621 = vector.broadcast %620 : vector<2x1xf32> to vector<2x8xf32>
    %622 = arith.cmpf oeq, %256, %621 : vector<2x8xf32>
    %623 = arith.extui %622 : vector<2x8xi1> to vector<2x8xi32>
    %624 = arith.sitofp %623 : vector<2x8xi32> to vector<2x8xf32>
    %625 = arith.mulf %624, %612 : vector<2x8xf32>
    %cst_194 = arith.constant dense<0.000000e+00> : vector<2xf32>
    %626 = vector.multi_reduction <add>, %625, %cst_194 [1] : vector<2x8xf32> to vector<2xf32>
    %627 = vector.shape_cast %626 : vector<2xf32> to vector<2x1xf32>
    %628 = arith.addf %534, %627 : vector<2x1xf32>
    %629 = arith.addf %535, %624 : vector<2x8xf32>
    %c0_195 = arith.constant 0 : index
    %c3_196 = arith.constant 3 : index
    %630 = vector.load %arg19[%c0_195, %c3_196] : memref<2x8xf32, #tpu.memory_space<vmem>>, vector<2x1xf32>
    tpu.vector_store %arg19[%c0_195, %c3_196], %620 {strides = array<i32>} : memref<2x8xf32, #tpu.memory_space<vmem>>, vector<2x1xf32>,
    %631 = vector.shape_cast %624 : vector<2x8xf32> to vector<2x8x1xf32>
    %632 = vector.broadcast %631 : vector<2x8x1xf32> to vector<2x8x128xf32>
    %633 = arith.mulf %632, %35 : vector<2x8x128xf32>
    %cst_197 = arith.constant dense<0.000000e+00> : vector<2x128xf32>
    %634 = vector.multi_reduction <add>, %633, %cst_197 [1] : vector<2x8x128xf32> to vector<2x128xf32>
    %cst_198 = arith.constant dense<0.000000e+00> : vector<2x128xf32>
    %635 = tpu.matmul %559, %23, %cst_198 {dimension_numbers = #tpu.dot_dimension_numbers<[1], [0], [0], [1], [0, 0, 1, 1], [], []>} : vector<2x32xf32>, vector<32x128xf32>, vector<2x128xf32> -> vector<2x128xf32>
    %636 = arith.addf %634, %635 : vector<2x128xf32>
    %cst_199 = arith.constant 5.000000e-01 : f32
    %637 = vector.broadcast %cst_199 : f32 to vector<2x128xf32>
    %638 = arith.mulf %637, %636 : vector<2x128xf32>
    %639 = math.tanh %638 : vector<2x128xf32>
    %cst_200 = arith.constant 5.000000e-01 : f32
    %640 = vector.broadcast %cst_200 : f32 to vector<2x128xf32>
    %641 = arith.mulf %640, %639 : vector<2x128xf32>
    %cst_201 = arith.constant 5.000000e-01 : f32
    %642 = vector.broadcast %cst_201 : f32 to vector<2x128xf32>
    %643 = arith.addf %641, %642 : vector<2x128xf32>
    %644 = math.tanh %636 : vector<2x128xf32>
    %645 = vector.extract_strided_slice %643 {offsets = [0, 0], sizes = [2, 32], strides = [1, 1]} : vector<2x128xf32> to vector<2x32xf32>
    %646 = vector.extract_strided_slice %643 {offsets = [0, 32], sizes = [2, 32], strides = [1, 1]} : vector<2x128xf32> to vector<2x32xf32>
    %647 = vector.extract_strided_slice %643 {offsets = [0, 96], sizes = [2, 32], strides = [1, 1]} : vector<2x128xf32> to vector<2x32xf32>
    %648 = vector.extract_strided_slice %644 {offsets = [0, 64], sizes = [2, 32], strides = [1, 1]} : vector<2x128xf32> to vector<2x32xf32>
    %649 = arith.mulf %646, %557 : vector<2x32xf32>
    %650 = arith.mulf %645, %648 : vector<2x32xf32>
    %651 = arith.addf %649, %650 : vector<2x32xf32>
    %652 = math.tanh %651 : vector<2x32xf32>
    %653 = arith.mulf %647, %652 : vector<2x32xf32>
    %cst_202 = arith.constant dense<0.000000e+00> : vector<2x32xf32>
    %654 = tpu.matmul %653, %247, %cst_202 {dimension_numbers = #tpu.dot_dimension_numbers<[1], [0], [0], [1], [0, 0, 1, 1], [], []>} : vector<2x32xf32>, vector<32x32xf32>, vector<2x32xf32> -> vector<2x32xf32>
    %655 = vector.broadcast %248 : vector<1x32xf32> to vector<2x32xf32>
    %656 = arith.addf %654, %655 : vector<2x32xf32>
    %657 = vector.shape_cast %656 : vector<2x32xf32> to vector<2x1x32xf32>
    %658 = vector.broadcast %657 : vector<2x1x32xf32> to vector<2x8x32xf32>
    %659 = arith.addf %658, %245 : vector<2x8x32xf32>
    %660 = math.tanh %659 : vector<2x8x32xf32>
    %661 = vector.broadcast %252 : vector<1x1x32xf32> to vector<2x8x32xf32>
    %662 = arith.mulf %660, %661 : vector<2x8x32xf32>
    %cst_203 = arith.constant dense<0.000000e+00> : vector<2x8xf32>
    %663 = vector.multi_reduction <add>, %662, %cst_203 [2] : vector<2x8x32xf32> to vector<2x8xf32>
    %cst_204 = arith.constant 1.000000e+08 : f32
    %664 = vector.broadcast %cst_204 : f32 to vector<2x8xf32>
    %665 = arith.mulf %664, %629 : vector<2x8xf32>
    %666 = arith.subf %663, %665 : vector<2x8xf32>
    %cst_205 = arith.constant 1.000000e+00 : f32
    %667 = vector.broadcast %cst_205 : f32 to vector<2x8xf32>
    %668 = arith.mulf %666, %667 : vector<2x8xf32>
    %cst_206 = arith.constant dense<0xFF800000> : vector<2xf32>
    %669 = vector.multi_reduction <maximumf>, %668, %cst_206 [1] : vector<2x8xf32> to vector<2xf32>
    %670 = vector.shape_cast %669 : vector<2xf32> to vector<2x1xf32>
    %671 = vector.broadcast %670 : vector<2x1xf32> to vector<2x8xf32>
    %672 = arith.subf %668, %671 : vector<2x8xf32>
    %673 = math.exp %672 : vector<2x8xf32>
    %cst_207 = arith.constant dense<0.000000e+00> : vector<2xf32>
    %674 = vector.multi_reduction <add>, %673, %cst_207 [1] : vector<2x8xf32> to vector<2xf32>
    %675 = vector.shape_cast %674 : vector<2xf32> to vector<2x1xf32>
    %676 = vector.broadcast %675 : vector<2x1xf32> to vector<2x8xf32>
    %677 = arith.divf %673, %676 : vector<2x8xf32>
    %678 = vector.shape_cast %677 : vector<2x8xf32> to vector<2x8x1xf32>
    %679 = vector.broadcast %678 : vector<2x8x1xf32> to vector<2x8x32xf32>
    %680 = arith.mulf %679, %245 : vector<2x8x32xf32>
    %cst_208 = arith.constant dense<0.000000e+00> : vector<2x32xf32>
    %681 = vector.multi_reduction <add>, %680, %cst_208 [1] : vector<2x8x32xf32> to vector<2x32xf32>
    %cst_209 = arith.constant dense<0.000000e+00> : vector<2x32xf32>
    %682 = tpu.matmul %681, %249, %cst_209 {dimension_numbers = #tpu.dot_dimension_numbers<[1], [0], [0], [1], [0, 0, 1, 1], [], []>} : vector<2x32xf32>, vector<32x32xf32>, vector<2x32xf32> -> vector<2x32xf32>
    %683 = vector.broadcast %250 : vector<1x32xf32> to vector<2x32xf32>
    %684 = arith.addf %682, %683 : vector<2x32xf32>
    %685 = vector.shape_cast %684 : vector<2x32xf32> to vector<2x1x32xf32>
    %686 = vector.broadcast %685 : vector<2x1x32xf32> to vector<2x8x32xf32>
    %687 = arith.addf %686, %246 : vector<2x8x32xf32>
    %688 = math.tanh %687 : vector<2x8x32xf32>
    %cst_210 = arith.constant 1.000000e+01 : f32
    %689 = vector.broadcast %cst_210 : f32 to vector<2x8x32xf32>
    %690 = arith.mulf %689, %688 : vector<2x8x32xf32>
    %691 = vector.broadcast %254 : vector<1x1x32xf32> to vector<2x8x32xf32>
    %692 = arith.mulf %690, %691 : vector<2x8x32xf32>
    %cst_211 = arith.constant dense<0.000000e+00> : vector<2x8xf32>
    %693 = vector.multi_reduction <add>, %692, %cst_211 [2] : vector<2x8x32xf32> to vector<2x8xf32>
    %cst_212 = arith.constant 1.000000e+08 : f32
    %694 = vector.broadcast %cst_212 : f32 to vector<2x8xf32>
    %695 = arith.mulf %694, %629 : vector<2x8xf32>
    %696 = arith.subf %693, %695 : vector<2x8xf32>
    %cst_213 = arith.constant dense<0xFF800000> : vector<2xf32>
    %697 = vector.multi_reduction <maximumf>, %696, %cst_213 [1] : vector<2x8xf32> to vector<2xf32>
    %698 = vector.shape_cast %697 : vector<2xf32> to vector<2x1xf32>
    %699 = vector.broadcast %698 : vector<2x1xf32> to vector<2x8xf32>
    %700 = arith.subf %696, %699 : vector<2x8xf32>
    %701 = math.exp %700 : vector<2x8xf32>
    %cst_214 = arith.constant dense<0.000000e+00> : vector<2xf32>
    %702 = vector.multi_reduction <add>, %701, %cst_214 [1] : vector<2x8xf32> to vector<2xf32>
    %703 = vector.shape_cast %702 : vector<2xf32> to vector<2x1xf32>
    %704 = math.log %703 : vector<2x1xf32>
    %705 = vector.broadcast %704 : vector<2x1xf32> to vector<2x8xf32>
    %706 = arith.subf %700, %705 : vector<2x8xf32>
    %cst_215 = arith.constant dense<0xFF800000> : vector<2xf32>
    %707 = vector.multi_reduction <maximumf>, %706, %cst_215 [1] : vector<2x8xf32> to vector<2xf32>
    %708 = vector.shape_cast %707 : vector<2xf32> to vector<2x1xf32>
    %709 = vector.broadcast %708 : vector<2x1xf32> to vector<2x8xf32>
    %710 = arith.cmpf oeq, %706, %709 : vector<2x8xf32>
    %cst_216 = arith.constant 8.000000e+00 : f32
    %711 = vector.broadcast %cst_216 : f32 to vector<2x8xf32>
    %712 = arith.select %710, %256, %711 : vector<2x8xi1>, vector<2x8xf32>
    %cst_217 = arith.constant dense<0x7F800000> : vector<2xf32>
    %713 = vector.multi_reduction <minimumf>, %712, %cst_217 [1] : vector<2x8xf32> to vector<2xf32>
    %714 = vector.shape_cast %713 : vector<2xf32> to vector<2x1xf32>
    %715 = vector.broadcast %714 : vector<2x1xf32> to vector<2x8xf32>
    %716 = arith.cmpf oeq, %256, %715 : vector<2x8xf32>
    %717 = arith.extui %716 : vector<2x8xi1> to vector<2x8xi32>
    %718 = arith.sitofp %717 : vector<2x8xi32> to vector<2x8xf32>
    %719 = arith.mulf %718, %706 : vector<2x8xf32>
    %cst_218 = arith.constant dense<0.000000e+00> : vector<2xf32>
    %720 = vector.multi_reduction <add>, %719, %cst_218 [1] : vector<2x8xf32> to vector<2xf32>
    %721 = vector.shape_cast %720 : vector<2xf32> to vector<2x1xf32>
    %722 = arith.addf %628, %721 : vector<2x1xf32>
    %723 = arith.addf %629, %718 : vector<2x8xf32>
    %c0_219 = arith.constant 0 : index
    %c4_220 = arith.constant 4 : index
    %724 = vector.load %arg19[%c0_219, %c4_220] : memref<2x8xf32, #tpu.memory_space<vmem>>, vector<2x1xf32>
    tpu.vector_store %arg19[%c0_219, %c4_220], %714 {strides = array<i32>} : memref<2x8xf32, #tpu.memory_space<vmem>>, vector<2x1xf32>,
    %725 = vector.shape_cast %718 : vector<2x8xf32> to vector<2x8x1xf32>
    %726 = vector.broadcast %725 : vector<2x8x1xf32> to vector<2x8x128xf32>
    %727 = arith.mulf %726, %35 : vector<2x8x128xf32>
    %cst_221 = arith.constant dense<0.000000e+00> : vector<2x128xf32>
    %728 = vector.multi_reduction <add>, %727, %cst_221 [1] : vector<2x8x128xf32> to vector<2x128xf32>
    %cst_222 = arith.constant dense<0.000000e+00> : vector<2x128xf32>
    %729 = tpu.matmul %653, %23, %cst_222 {dimension_numbers = #tpu.dot_dimension_numbers<[1], [0], [0], [1], [0, 0, 1, 1], [], []>} : vector<2x32xf32>, vector<32x128xf32>, vector<2x128xf32> -> vector<2x128xf32>
    %730 = arith.addf %728, %729 : vector<2x128xf32>
    %cst_223 = arith.constant 5.000000e-01 : f32
    %731 = vector.broadcast %cst_223 : f32 to vector<2x128xf32>
    %732 = arith.mulf %731, %730 : vector<2x128xf32>
    %733 = math.tanh %732 : vector<2x128xf32>
    %cst_224 = arith.constant 5.000000e-01 : f32
    %734 = vector.broadcast %cst_224 : f32 to vector<2x128xf32>
    %735 = arith.mulf %734, %733 : vector<2x128xf32>
    %cst_225 = arith.constant 5.000000e-01 : f32
    %736 = vector.broadcast %cst_225 : f32 to vector<2x128xf32>
    %737 = arith.addf %735, %736 : vector<2x128xf32>
    %738 = math.tanh %730 : vector<2x128xf32>
    %739 = vector.extract_strided_slice %737 {offsets = [0, 0], sizes = [2, 32], strides = [1, 1]} : vector<2x128xf32> to vector<2x32xf32>
    %740 = vector.extract_strided_slice %737 {offsets = [0, 32], sizes = [2, 32], strides = [1, 1]} : vector<2x128xf32> to vector<2x32xf32>
    %741 = vector.extract_strided_slice %737 {offsets = [0, 96], sizes = [2, 32], strides = [1, 1]} : vector<2x128xf32> to vector<2x32xf32>
    %742 = vector.extract_strided_slice %738 {offsets = [0, 64], sizes = [2, 32], strides = [1, 1]} : vector<2x128xf32> to vector<2x32xf32>
    %743 = arith.mulf %740, %651 : vector<2x32xf32>
    %744 = arith.mulf %739, %742 : vector<2x32xf32>
    %745 = arith.addf %743, %744 : vector<2x32xf32>
    %746 = math.tanh %745 : vector<2x32xf32>
    %747 = arith.mulf %741, %746 : vector<2x32xf32>
    %cst_226 = arith.constant dense<0.000000e+00> : vector<2x32xf32>
    %748 = tpu.matmul %747, %247, %cst_226 {dimension_numbers = #tpu.dot_dimension_numbers<[1], [0], [0], [1], [0, 0, 1, 1], [], []>} : vector<2x32xf32>, vector<32x32xf32>, vector<2x32xf32> -> vector<2x32xf32>
    %749 = vector.broadcast %248 : vector<1x32xf32> to vector<2x32xf32>
    %750 = arith.addf %748, %749 : vector<2x32xf32>
    %751 = vector.shape_cast %750 : vector<2x32xf32> to vector<2x1x32xf32>
    %752 = vector.broadcast %751 : vector<2x1x32xf32> to vector<2x8x32xf32>
    %753 = arith.addf %752, %245 : vector<2x8x32xf32>
    %754 = math.tanh %753 : vector<2x8x32xf32>
    %755 = vector.broadcast %252 : vector<1x1x32xf32> to vector<2x8x32xf32>
    %756 = arith.mulf %754, %755 : vector<2x8x32xf32>
    %cst_227 = arith.constant dense<0.000000e+00> : vector<2x8xf32>
    %757 = vector.multi_reduction <add>, %756, %cst_227 [2] : vector<2x8x32xf32> to vector<2x8xf32>
    %cst_228 = arith.constant 1.000000e+08 : f32
    %758 = vector.broadcast %cst_228 : f32 to vector<2x8xf32>
    %759 = arith.mulf %758, %723 : vector<2x8xf32>
    %760 = arith.subf %757, %759 : vector<2x8xf32>
    %cst_229 = arith.constant 1.000000e+00 : f32
    %761 = vector.broadcast %cst_229 : f32 to vector<2x8xf32>
    %762 = arith.mulf %760, %761 : vector<2x8xf32>
    %cst_230 = arith.constant dense<0xFF800000> : vector<2xf32>
    %763 = vector.multi_reduction <maximumf>, %762, %cst_230 [1] : vector<2x8xf32> to vector<2xf32>
    %764 = vector.shape_cast %763 : vector<2xf32> to vector<2x1xf32>
    %765 = vector.broadcast %764 : vector<2x1xf32> to vector<2x8xf32>
    %766 = arith.subf %762, %765 : vector<2x8xf32>
    %767 = math.exp %766 : vector<2x8xf32>
    %cst_231 = arith.constant dense<0.000000e+00> : vector<2xf32>
    %768 = vector.multi_reduction <add>, %767, %cst_231 [1] : vector<2x8xf32> to vector<2xf32>
    %769 = vector.shape_cast %768 : vector<2xf32> to vector<2x1xf32>
    %770 = vector.broadcast %769 : vector<2x1xf32> to vector<2x8xf32>
    %771 = arith.divf %767, %770 : vector<2x8xf32>
    %772 = vector.shape_cast %771 : vector<2x8xf32> to vector<2x8x1xf32>
    %773 = vector.broadcast %772 : vector<2x8x1xf32> to vector<2x8x32xf32>
    %774 = arith.mulf %773, %245 : vector<2x8x32xf32>
    %cst_232 = arith.constant dense<0.000000e+00> : vector<2x32xf32>
    %775 = vector.multi_reduction <add>, %774, %cst_232 [1] : vector<2x8x32xf32> to vector<2x32xf32>
    %cst_233 = arith.constant dense<0.000000e+00> : vector<2x32xf32>
    %776 = tpu.matmul %775, %249, %cst_233 {dimension_numbers = #tpu.dot_dimension_numbers<[1], [0], [0], [1], [0, 0, 1, 1], [], []>} : vector<2x32xf32>, vector<32x32xf32>, vector<2x32xf32> -> vector<2x32xf32>
    %777 = vector.broadcast %250 : vector<1x32xf32> to vector<2x32xf32>
    %778 = arith.addf %776, %777 : vector<2x32xf32>
    %779 = vector.shape_cast %778 : vector<2x32xf32> to vector<2x1x32xf32>
    %780 = vector.broadcast %779 : vector<2x1x32xf32> to vector<2x8x32xf32>
    %781 = arith.addf %780, %246 : vector<2x8x32xf32>
    %782 = math.tanh %781 : vector<2x8x32xf32>
    %cst_234 = arith.constant 1.000000e+01 : f32
    %783 = vector.broadcast %cst_234 : f32 to vector<2x8x32xf32>
    %784 = arith.mulf %783, %782 : vector<2x8x32xf32>
    %785 = vector.broadcast %254 : vector<1x1x32xf32> to vector<2x8x32xf32>
    %786 = arith.mulf %784, %785 : vector<2x8x32xf32>
    %cst_235 = arith.constant dense<0.000000e+00> : vector<2x8xf32>
    %787 = vector.multi_reduction <add>, %786, %cst_235 [2] : vector<2x8x32xf32> to vector<2x8xf32>
    %cst_236 = arith.constant 1.000000e+08 : f32
    %788 = vector.broadcast %cst_236 : f32 to vector<2x8xf32>
    %789 = arith.mulf %788, %723 : vector<2x8xf32>
    %790 = arith.subf %787, %789 : vector<2x8xf32>
    %cst_237 = arith.constant dense<0xFF800000> : vector<2xf32>
    %791 = vector.multi_reduction <maximumf>, %790, %cst_237 [1] : vector<2x8xf32> to vector<2xf32>
    %792 = vector.shape_cast %791 : vector<2xf32> to vector<2x1xf32>
    %793 = vector.broadcast %792 : vector<2x1xf32> to vector<2x8xf32>
    %794 = arith.subf %790, %793 : vector<2x8xf32>
    %795 = math.exp %794 : vector<2x8xf32>
    %cst_238 = arith.constant dense<0.000000e+00> : vector<2xf32>
    %796 = vector.multi_reduction <add>, %795, %cst_238 [1] : vector<2x8xf32> to vector<2xf32>
    %797 = vector.shape_cast %796 : vector<2xf32> to vector<2x1xf32>
    %798 = math.log %797 : vector<2x1xf32>
    %799 = vector.broadcast %798 : vector<2x1xf32> to vector<2x8xf32>
    %800 = arith.subf %794, %799 : vector<2x8xf32>
    %cst_239 = arith.constant dense<0xFF800000> : vector<2xf32>
    %801 = vector.multi_reduction <maximumf>, %800, %cst_239 [1] : vector<2x8xf32> to vector<2xf32>
    %802 = vector.shape_cast %801 : vector<2xf32> to vector<2x1xf32>
    %803 = vector.broadcast %802 : vector<2x1xf32> to vector<2x8xf32>
    %804 = arith.cmpf oeq, %800, %803 : vector<2x8xf32>
    %cst_240 = arith.constant 8.000000e+00 : f32
    %805 = vector.broadcast %cst_240 : f32 to vector<2x8xf32>
    %806 = arith.select %804, %256, %805 : vector<2x8xi1>, vector<2x8xf32>
    %cst_241 = arith.constant dense<0x7F800000> : vector<2xf32>
    %807 = vector.multi_reduction <minimumf>, %806, %cst_241 [1] : vector<2x8xf32> to vector<2xf32>
    %808 = vector.shape_cast %807 : vector<2xf32> to vector<2x1xf32>
    %809 = vector.broadcast %808 : vector<2x1xf32> to vector<2x8xf32>
    %810 = arith.cmpf oeq, %256, %809 : vector<2x8xf32>
    %811 = arith.extui %810 : vector<2x8xi1> to vector<2x8xi32>
    %812 = arith.sitofp %811 : vector<2x8xi32> to vector<2x8xf32>
    %813 = arith.mulf %812, %800 : vector<2x8xf32>
    %cst_242 = arith.constant dense<0.000000e+00> : vector<2xf32>
    %814 = vector.multi_reduction <add>, %813, %cst_242 [1] : vector<2x8xf32> to vector<2xf32>
    %815 = vector.shape_cast %814 : vector<2xf32> to vector<2x1xf32>
    %816 = arith.addf %722, %815 : vector<2x1xf32>
    %817 = arith.addf %723, %812 : vector<2x8xf32>
    %c0_243 = arith.constant 0 : index
    %c5_244 = arith.constant 5 : index
    %818 = vector.load %arg19[%c0_243, %c5_244] : memref<2x8xf32, #tpu.memory_space<vmem>>, vector<2x1xf32>
    tpu.vector_store %arg19[%c0_243, %c5_244], %808 {strides = array<i32>} : memref<2x8xf32, #tpu.memory_space<vmem>>, vector<2x1xf32>,
    %819 = vector.shape_cast %812 : vector<2x8xf32> to vector<2x8x1xf32>
    %820 = vector.broadcast %819 : vector<2x8x1xf32> to vector<2x8x128xf32>
    %821 = arith.mulf %820, %35 : vector<2x8x128xf32>
    %cst_245 = arith.constant dense<0.000000e+00> : vector<2x128xf32>
    %822 = vector.multi_reduction <add>, %821, %cst_245 [1] : vector<2x8x128xf32> to vector<2x128xf32>
    %cst_246 = arith.constant dense<0.000000e+00> : vector<2x128xf32>
    %823 = tpu.matmul %747, %23, %cst_246 {dimension_numbers = #tpu.dot_dimension_numbers<[1], [0], [0], [1], [0, 0, 1, 1], [], []>} : vector<2x32xf32>, vector<32x128xf32>, vector<2x128xf32> -> vector<2x128xf32>
    %824 = arith.addf %822, %823 : vector<2x128xf32>
    %cst_247 = arith.constant 5.000000e-01 : f32
    %825 = vector.broadcast %cst_247 : f32 to vector<2x128xf32>
    %826 = arith.mulf %825, %824 : vector<2x128xf32>
    %827 = math.tanh %826 : vector<2x128xf32>
    %cst_248 = arith.constant 5.000000e-01 : f32
    %828 = vector.broadcast %cst_248 : f32 to vector<2x128xf32>
    %829 = arith.mulf %828, %827 : vector<2x128xf32>
    %cst_249 = arith.constant 5.000000e-01 : f32
    %830 = vector.broadcast %cst_249 : f32 to vector<2x128xf32>
    %831 = arith.addf %829, %830 : vector<2x128xf32>
    %832 = math.tanh %824 : vector<2x128xf32>
    %833 = vector.extract_strided_slice %831 {offsets = [0, 0], sizes = [2, 32], strides = [1, 1]} : vector<2x128xf32> to vector<2x32xf32>
    %834 = vector.extract_strided_slice %831 {offsets = [0, 32], sizes = [2, 32], strides = [1, 1]} : vector<2x128xf32> to vector<2x32xf32>
    %835 = vector.extract_strided_slice %831 {offsets = [0, 96], sizes = [2, 32], strides = [1, 1]} : vector<2x128xf32> to vector<2x32xf32>
    %836 = vector.extract_strided_slice %832 {offsets = [0, 64], sizes = [2, 32], strides = [1, 1]} : vector<2x128xf32> to vector<2x32xf32>
    %837 = arith.mulf %834, %745 : vector<2x32xf32>
    %838 = arith.mulf %833, %836 : vector<2x32xf32>
    %839 = arith.addf %837, %838 : vector<2x32xf32>
    %840 = math.tanh %839 : vector<2x32xf32>
    %841 = arith.mulf %835, %840 : vector<2x32xf32>
    %cst_250 = arith.constant dense<0.000000e+00> : vector<2x32xf32>
    %842 = tpu.matmul %841, %247, %cst_250 {dimension_numbers = #tpu.dot_dimension_numbers<[1], [0], [0], [1], [0, 0, 1, 1], [], []>} : vector<2x32xf32>, vector<32x32xf32>, vector<2x32xf32> -> vector<2x32xf32>
    %843 = vector.broadcast %248 : vector<1x32xf32> to vector<2x32xf32>
    %844 = arith.addf %842, %843 : vector<2x32xf32>
    %845 = vector.shape_cast %844 : vector<2x32xf32> to vector<2x1x32xf32>
    %846 = vector.broadcast %845 : vector<2x1x32xf32> to vector<2x8x32xf32>
    %847 = arith.addf %846, %245 : vector<2x8x32xf32>
    %848 = math.tanh %847 : vector<2x8x32xf32>
    %849 = vector.broadcast %252 : vector<1x1x32xf32> to vector<2x8x32xf32>
    %850 = arith.mulf %848, %849 : vector<2x8x32xf32>
    %cst_251 = arith.constant dense<0.000000e+00> : vector<2x8xf32>
    %851 = vector.multi_reduction <add>, %850, %cst_251 [2] : vector<2x8x32xf32> to vector<2x8xf32>
    %cst_252 = arith.constant 1.000000e+08 : f32
    %852 = vector.broadcast %cst_252 : f32 to vector<2x8xf32>
    %853 = arith.mulf %852, %817 : vector<2x8xf32>
    %854 = arith.subf %851, %853 : vector<2x8xf32>
    %cst_253 = arith.constant 1.000000e+00 : f32
    %855 = vector.broadcast %cst_253 : f32 to vector<2x8xf32>
    %856 = arith.mulf %854, %855 : vector<2x8xf32>
    %cst_254 = arith.constant dense<0xFF800000> : vector<2xf32>
    %857 = vector.multi_reduction <maximumf>, %856, %cst_254 [1] : vector<2x8xf32> to vector<2xf32>
    %858 = vector.shape_cast %857 : vector<2xf32> to vector<2x1xf32>
    %859 = vector.broadcast %858 : vector<2x1xf32> to vector<2x8xf32>
    %860 = arith.subf %856, %859 : vector<2x8xf32>
    %861 = math.exp %860 : vector<2x8xf32>
    %cst_255 = arith.constant dense<0.000000e+00> : vector<2xf32>
    %862 = vector.multi_reduction <add>, %861, %cst_255 [1] : vector<2x8xf32> to vector<2xf32>
    %863 = vector.shape_cast %862 : vector<2xf32> to vector<2x1xf32>
    %864 = vector.broadcast %863 : vector<2x1xf32> to vector<2x8xf32>
    %865 = arith.divf %861, %864 : vector<2x8xf32>
    %866 = vector.shape_cast %865 : vector<2x8xf32> to vector<2x8x1xf32>
    %867 = vector.broadcast %866 : vector<2x8x1xf32> to vector<2x8x32xf32>
    %868 = arith.mulf %867, %245 : vector<2x8x32xf32>
    %cst_256 = arith.constant dense<0.000000e+00> : vector<2x32xf32>
    %869 = vector.multi_reduction <add>, %868, %cst_256 [1] : vector<2x8x32xf32> to vector<2x32xf32>
    %cst_257 = arith.constant dense<0.000000e+00> : vector<2x32xf32>
    %870 = tpu.matmul %869, %249, %cst_257 {dimension_numbers = #tpu.dot_dimension_numbers<[1], [0], [0], [1], [0, 0, 1, 1], [], []>} : vector<2x32xf32>, vector<32x32xf32>, vector<2x32xf32> -> vector<2x32xf32>
    %871 = vector.broadcast %250 : vector<1x32xf32> to vector<2x32xf32>
    %872 = arith.addf %870, %871 : vector<2x32xf32>
    %873 = vector.shape_cast %872 : vector<2x32xf32> to vector<2x1x32xf32>
    %874 = vector.broadcast %873 : vector<2x1x32xf32> to vector<2x8x32xf32>
    %875 = arith.addf %874, %246 : vector<2x8x32xf32>
    %876 = math.tanh %875 : vector<2x8x32xf32>
    %cst_258 = arith.constant 1.000000e+01 : f32
    %877 = vector.broadcast %cst_258 : f32 to vector<2x8x32xf32>
    %878 = arith.mulf %877, %876 : vector<2x8x32xf32>
    %879 = vector.broadcast %254 : vector<1x1x32xf32> to vector<2x8x32xf32>
    %880 = arith.mulf %878, %879 : vector<2x8x32xf32>
    %cst_259 = arith.constant dense<0.000000e+00> : vector<2x8xf32>
    %881 = vector.multi_reduction <add>, %880, %cst_259 [2] : vector<2x8x32xf32> to vector<2x8xf32>
    %cst_260 = arith.constant 1.000000e+08 : f32
    %882 = vector.broadcast %cst_260 : f32 to vector<2x8xf32>
    %883 = arith.mulf %882, %817 : vector<2x8xf32>
    %884 = arith.subf %881, %883 : vector<2x8xf32>
    %cst_261 = arith.constant dense<0xFF800000> : vector<2xf32>
    %885 = vector.multi_reduction <maximumf>, %884, %cst_261 [1] : vector<2x8xf32> to vector<2xf32>
    %886 = vector.shape_cast %885 : vector<2xf32> to vector<2x1xf32>
    %887 = vector.broadcast %886 : vector<2x1xf32> to vector<2x8xf32>
    %888 = arith.subf %884, %887 : vector<2x8xf32>
    %889 = math.exp %888 : vector<2x8xf32>
    %cst_262 = arith.constant dense<0.000000e+00> : vector<2xf32>
    %890 = vector.multi_reduction <add>, %889, %cst_262 [1] : vector<2x8xf32> to vector<2xf32>
    %891 = vector.shape_cast %890 : vector<2xf32> to vector<2x1xf32>
    %892 = math.log %891 : vector<2x1xf32>
    %893 = vector.broadcast %892 : vector<2x1xf32> to vector<2x8xf32>
    %894 = arith.subf %888, %893 : vector<2x8xf32>
    %cst_263 = arith.constant dense<0xFF800000> : vector<2xf32>
    %895 = vector.multi_reduction <maximumf>, %894, %cst_263 [1] : vector<2x8xf32> to vector<2xf32>
    %896 = vector.shape_cast %895 : vector<2xf32> to vector<2x1xf32>
    %897 = vector.broadcast %896 : vector<2x1xf32> to vector<2x8xf32>
    %898 = arith.cmpf oeq, %894, %897 : vector<2x8xf32>
    %cst_264 = arith.constant 8.000000e+00 : f32
    %899 = vector.broadcast %cst_264 : f32 to vector<2x8xf32>
    %900 = arith.select %898, %256, %899 : vector<2x8xi1>, vector<2x8xf32>
    %cst_265 = arith.constant dense<0x7F800000> : vector<2xf32>
    %901 = vector.multi_reduction <minimumf>, %900, %cst_265 [1] : vector<2x8xf32> to vector<2xf32>
    %902 = vector.shape_cast %901 : vector<2xf32> to vector<2x1xf32>
    %903 = vector.broadcast %902 : vector<2x1xf32> to vector<2x8xf32>
    %904 = arith.cmpf oeq, %256, %903 : vector<2x8xf32>
    %905 = arith.extui %904 : vector<2x8xi1> to vector<2x8xi32>
    %906 = arith.sitofp %905 : vector<2x8xi32> to vector<2x8xf32>
    %907 = arith.mulf %906, %894 : vector<2x8xf32>
    %cst_266 = arith.constant dense<0.000000e+00> : vector<2xf32>
    %908 = vector.multi_reduction <add>, %907, %cst_266 [1] : vector<2x8xf32> to vector<2xf32>
    %909 = vector.shape_cast %908 : vector<2xf32> to vector<2x1xf32>
    %910 = arith.addf %816, %909 : vector<2x1xf32>
    %911 = arith.addf %817, %906 : vector<2x8xf32>
    %c0_267 = arith.constant 0 : index
    %c6_268 = arith.constant 6 : index
    %912 = vector.load %arg19[%c0_267, %c6_268] : memref<2x8xf32, #tpu.memory_space<vmem>>, vector<2x1xf32>
    tpu.vector_store %arg19[%c0_267, %c6_268], %902 {strides = array<i32>} : memref<2x8xf32, #tpu.memory_space<vmem>>, vector<2x1xf32>,
    %913 = vector.shape_cast %906 : vector<2x8xf32> to vector<2x8x1xf32>
    %914 = vector.broadcast %913 : vector<2x8x1xf32> to vector<2x8x128xf32>
    %915 = arith.mulf %914, %35 : vector<2x8x128xf32>
    %cst_269 = arith.constant dense<0.000000e+00> : vector<2x128xf32>
    %916 = vector.multi_reduction <add>, %915, %cst_269 [1] : vector<2x8x128xf32> to vector<2x128xf32>
    %cst_270 = arith.constant dense<0.000000e+00> : vector<2x128xf32>
    %917 = tpu.matmul %841, %23, %cst_270 {dimension_numbers = #tpu.dot_dimension_numbers<[1], [0], [0], [1], [0, 0, 1, 1], [], []>} : vector<2x32xf32>, vector<32x128xf32>, vector<2x128xf32> -> vector<2x128xf32>
    %918 = arith.addf %916, %917 : vector<2x128xf32>
    %cst_271 = arith.constant 5.000000e-01 : f32
    %919 = vector.broadcast %cst_271 : f32 to vector<2x128xf32>
    %920 = arith.mulf %919, %918 : vector<2x128xf32>
    %921 = math.tanh %920 : vector<2x128xf32>
    %cst_272 = arith.constant 5.000000e-01 : f32
    %922 = vector.broadcast %cst_272 : f32 to vector<2x128xf32>
    %923 = arith.mulf %922, %921 : vector<2x128xf32>
    %cst_273 = arith.constant 5.000000e-01 : f32
    %924 = vector.broadcast %cst_273 : f32 to vector<2x128xf32>
    %925 = arith.addf %923, %924 : vector<2x128xf32>
    %926 = math.tanh %918 : vector<2x128xf32>
    %927 = vector.extract_strided_slice %925 {offsets = [0, 0], sizes = [2, 32], strides = [1, 1]} : vector<2x128xf32> to vector<2x32xf32>
    %928 = vector.extract_strided_slice %925 {offsets = [0, 32], sizes = [2, 32], strides = [1, 1]} : vector<2x128xf32> to vector<2x32xf32>
    %929 = vector.extract_strided_slice %925 {offsets = [0, 96], sizes = [2, 32], strides = [1, 1]} : vector<2x128xf32> to vector<2x32xf32>
    %930 = vector.extract_strided_slice %926 {offsets = [0, 64], sizes = [2, 32], strides = [1, 1]} : vector<2x128xf32> to vector<2x32xf32>
    %931 = arith.mulf %928, %839 : vector<2x32xf32>
    %932 = arith.mulf %927, %930 : vector<2x32xf32>
    %933 = arith.addf %931, %932 : vector<2x32xf32>
    %934 = math.tanh %933 : vector<2x32xf32>
    %935 = arith.mulf %929, %934 : vector<2x32xf32>
    %cst_274 = arith.constant dense<0.000000e+00> : vector<2x32xf32>
    %936 = tpu.matmul %935, %247, %cst_274 {dimension_numbers = #tpu.dot_dimension_numbers<[1], [0], [0], [1], [0, 0, 1, 1], [], []>} : vector<2x32xf32>, vector<32x32xf32>, vector<2x32xf32> -> vector<2x32xf32>
    %937 = vector.broadcast %248 : vector<1x32xf32> to vector<2x32xf32>
    %938 = arith.addf %936, %937 : vector<2x32xf32>
    %939 = vector.shape_cast %938 : vector<2x32xf32> to vector<2x1x32xf32>
    %940 = vector.broadcast %939 : vector<2x1x32xf32> to vector<2x8x32xf32>
    %941 = arith.addf %940, %245 : vector<2x8x32xf32>
    %942 = math.tanh %941 : vector<2x8x32xf32>
    %943 = vector.broadcast %252 : vector<1x1x32xf32> to vector<2x8x32xf32>
    %944 = arith.mulf %942, %943 : vector<2x8x32xf32>
    %cst_275 = arith.constant dense<0.000000e+00> : vector<2x8xf32>
    %945 = vector.multi_reduction <add>, %944, %cst_275 [2] : vector<2x8x32xf32> to vector<2x8xf32>
    %cst_276 = arith.constant 1.000000e+08 : f32
    %946 = vector.broadcast %cst_276 : f32 to vector<2x8xf32>
    %947 = arith.mulf %946, %911 : vector<2x8xf32>
    %948 = arith.subf %945, %947 : vector<2x8xf32>
    %cst_277 = arith.constant 1.000000e+00 : f32
    %949 = vector.broadcast %cst_277 : f32 to vector<2x8xf32>
    %950 = arith.mulf %948, %949 : vector<2x8xf32>
    %cst_278 = arith.constant dense<0xFF800000> : vector<2xf32>
    %951 = vector.multi_reduction <maximumf>, %950, %cst_278 [1] : vector<2x8xf32> to vector<2xf32>
    %952 = vector.shape_cast %951 : vector<2xf32> to vector<2x1xf32>
    %953 = vector.broadcast %952 : vector<2x1xf32> to vector<2x8xf32>
    %954 = arith.subf %950, %953 : vector<2x8xf32>
    %955 = math.exp %954 : vector<2x8xf32>
    %cst_279 = arith.constant dense<0.000000e+00> : vector<2xf32>
    %956 = vector.multi_reduction <add>, %955, %cst_279 [1] : vector<2x8xf32> to vector<2xf32>
    %957 = vector.shape_cast %956 : vector<2xf32> to vector<2x1xf32>
    %958 = vector.broadcast %957 : vector<2x1xf32> to vector<2x8xf32>
    %959 = arith.divf %955, %958 : vector<2x8xf32>
    %960 = vector.shape_cast %959 : vector<2x8xf32> to vector<2x8x1xf32>
    %961 = vector.broadcast %960 : vector<2x8x1xf32> to vector<2x8x32xf32>
    %962 = arith.mulf %961, %245 : vector<2x8x32xf32>
    %cst_280 = arith.constant dense<0.000000e+00> : vector<2x32xf32>
    %963 = vector.multi_reduction <add>, %962, %cst_280 [1] : vector<2x8x32xf32> to vector<2x32xf32>
    %cst_281 = arith.constant dense<0.000000e+00> : vector<2x32xf32>
    %964 = tpu.matmul %963, %249, %cst_281 {dimension_numbers = #tpu.dot_dimension_numbers<[1], [0], [0], [1], [0, 0, 1, 1], [], []>} : vector<2x32xf32>, vector<32x32xf32>, vector<2x32xf32> -> vector<2x32xf32>
    %965 = vector.broadcast %250 : vector<1x32xf32> to vector<2x32xf32>
    %966 = arith.addf %964, %965 : vector<2x32xf32>
    %967 = vector.shape_cast %966 : vector<2x32xf32> to vector<2x1x32xf32>
    %968 = vector.broadcast %967 : vector<2x1x32xf32> to vector<2x8x32xf32>
    %969 = arith.addf %968, %246 : vector<2x8x32xf32>
    %970 = math.tanh %969 : vector<2x8x32xf32>
    %cst_282 = arith.constant 1.000000e+01 : f32
    %971 = vector.broadcast %cst_282 : f32 to vector<2x8x32xf32>
    %972 = arith.mulf %971, %970 : vector<2x8x32xf32>
    %973 = vector.broadcast %254 : vector<1x1x32xf32> to vector<2x8x32xf32>
    %974 = arith.mulf %972, %973 : vector<2x8x32xf32>
    %cst_283 = arith.constant dense<0.000000e+00> : vector<2x8xf32>
    %975 = vector.multi_reduction <add>, %974, %cst_283 [2] : vector<2x8x32xf32> to vector<2x8xf32>
    %cst_284 = arith.constant 1.000000e+08 : f32
    %976 = vector.broadcast %cst_284 : f32 to vector<2x8xf32>
    %977 = arith.mulf %976, %911 : vector<2x8xf32>
    %978 = arith.subf %975, %977 : vector<2x8xf32>
    %cst_285 = arith.constant dense<0xFF800000> : vector<2xf32>
    %979 = vector.multi_reduction <maximumf>, %978, %cst_285 [1] : vector<2x8xf32> to vector<2xf32>
    %980 = vector.shape_cast %979 : vector<2xf32> to vector<2x1xf32>
    %981 = vector.broadcast %980 : vector<2x1xf32> to vector<2x8xf32>
    %982 = arith.subf %978, %981 : vector<2x8xf32>
    %983 = math.exp %982 : vector<2x8xf32>
    %cst_286 = arith.constant dense<0.000000e+00> : vector<2xf32>
    %984 = vector.multi_reduction <add>, %983, %cst_286 [1] : vector<2x8xf32> to vector<2xf32>
    %985 = vector.shape_cast %984 : vector<2xf32> to vector<2x1xf32>
    %986 = math.log %985 : vector<2x1xf32>
    %987 = vector.broadcast %986 : vector<2x1xf32> to vector<2x8xf32>
    %988 = arith.subf %982, %987 : vector<2x8xf32>
    %cst_287 = arith.constant dense<0xFF800000> : vector<2xf32>
    %989 = vector.multi_reduction <maximumf>, %988, %cst_287 [1] : vector<2x8xf32> to vector<2xf32>
    %990 = vector.shape_cast %989 : vector<2xf32> to vector<2x1xf32>
    %991 = vector.broadcast %990 : vector<2x1xf32> to vector<2x8xf32>
    %992 = arith.cmpf oeq, %988, %991 : vector<2x8xf32>
    %cst_288 = arith.constant 8.000000e+00 : f32
    %993 = vector.broadcast %cst_288 : f32 to vector<2x8xf32>
    %994 = arith.select %992, %256, %993 : vector<2x8xi1>, vector<2x8xf32>
    %cst_289 = arith.constant dense<0x7F800000> : vector<2xf32>
    %995 = vector.multi_reduction <minimumf>, %994, %cst_289 [1] : vector<2x8xf32> to vector<2xf32>
    %996 = vector.shape_cast %995 : vector<2xf32> to vector<2x1xf32>
    %997 = vector.broadcast %996 : vector<2x1xf32> to vector<2x8xf32>
    %998 = arith.cmpf oeq, %256, %997 : vector<2x8xf32>
    %999 = arith.extui %998 : vector<2x8xi1> to vector<2x8xi32>
    %1000 = arith.sitofp %999 : vector<2x8xi32> to vector<2x8xf32>
    %1001 = arith.mulf %1000, %988 : vector<2x8xf32>
    %cst_290 = arith.constant dense<0.000000e+00> : vector<2xf32>
    %1002 = vector.multi_reduction <add>, %1001, %cst_290 [1] : vector<2x8xf32> to vector<2xf32>
    %1003 = vector.shape_cast %1002 : vector<2xf32> to vector<2x1xf32>
    %1004 = arith.addf %910, %1003 : vector<2x1xf32>
    %c0_291 = arith.constant 0 : index
    %c7_292 = arith.constant 7 : index
    %1005 = vector.load %arg19[%c0_291, %c7_292] : memref<2x8xf32, #tpu.memory_space<vmem>>, vector<2x1xf32>
    tpu.vector_store %arg19[%c0_291, %c7_292], %996 {strides = array<i32>} : memref<2x8xf32, #tpu.memory_space<vmem>>, vector<2x1xf32>,
    %c0_293 = arith.constant 0 : index
    %c0_294 = arith.constant 0 : index
    %1006 = vector.load %arg20[%c0_293, %c0_294] : memref<2x1xf32, #tpu.memory_space<vmem>>, vector<2x1xf32>
    tpu.vector_store %arg20[%c0_293, %c0_294], %1004 {strides = array<i32>} : memref<2x1xf32, #tpu.memory_space<vmem>>, vector<2x1xf32>,
    return
  }
}

</mosaic_0001>

<llo_original>
// kernel: tpu_custom_call.1
$region0: #{tpu_custom_call.1}
  #allocation0 [shape = 'u32[]', space=smem, size = 0x4, offset = 0x4, fixed_abs, tag = 'smem constant byte address 0x4 - core index']
  #allocation1 [shape = 'u32[144,128]{1,0:T(1,128)}', space=vmem, size = 0x12000, scoped, tag = 'internal scratch']
  #allocation2 [shape = 'f32[2,8,32]{2,1,0:T(8,128)}', space=vmem, size = 0x2000, scoped, tag = 'scratch operand']
  %s0 = inlined_call_operand.vmem [shape: f32[2,8,2], index: 0, kind: input, shape index: {}]
  %s1 = inlined_call_operand.hbm [shape: f32[2,8], index: 1, kind: input, shape index: {}]
  %s2 = inlined_call_operand.hbm [shape: f32[2,32], index: 2, kind: input, shape index: {}]
  %s3 = inlined_call_operand.hbm [shape: f32[8,32], index: 3, kind: input, shape index: {}]
  %s4 = inlined_call_operand.vmem [shape: f32[32,128], index: 4, kind: input, shape index: {}]
  %s5 = inlined_call_operand.hbm [shape: f32[32,128], index: 5, kind: input, shape index: {}]
  %s6 = inlined_call_operand.vmem [shape: f32[1,128], index: 6, kind: input, shape index: {}]
  %s7 = inlined_call_operand.hbm [shape: f32[32,128], index: 7, kind: input, shape index: {}]
  %s8 = inlined_call_operand.hbm [shape: f32[32,128], index: 8, kind: input, shape index: {}]
  %s9 = inlined_call_operand.hbm [shape: f32[1,128], index: 9, kind: input, shape index: {}]
  %s10 = inlined_call_operand.hbm [shape: f32[32,32], index: 10, kind: input, shape index: {}]
  %s11 = inlined_call_operand.hbm [shape: f32[1,32], index: 11, kind: input, shape index: {}]
  %s12 = inlined_call_operand.vmem [shape: f32[32,64], index: 12, kind: input, shape index: {}]
  %s13 = inlined_call_operand.vmem [shape: f32[1,64], index: 13, kind: input, shape index: {}]
  %s14 = inlined_call_operand.hbm [shape: f32[32,32], index: 14, kind: input, shape index: {}]
  %s15 = inlined_call_operand.vmem [shape: f32[1,32], index: 15, kind: input, shape index: {}]
  %s16 = inlined_call_operand.vmem [shape: f32[1,32], index: 16, kind: input, shape index: {}]
  %s17 = inlined_call_operand.vmem [shape: f32[1,32], index: 17, kind: input, shape index: {}]
  %s18 = inlined_call_operand.vmem [shape: f32[1,32], index: 18, kind: input, shape index: {}]
  %s19 = inlined_call_operand.hbm [shape: f32[2,8], index: 19, kind: output, shape index: {0}]
  %s20 = inlined_call_operand.vmem [shape: f32[2,1], index: 20, kind: output, shape index: {1}]
  %21 = xla_tuple %s19, %s20
  %s22 = sld [smem:[#allocation0]]
  $region134: #{tpu_custom_call.1} parent=0
    _
  %s24 = ssub.s32 1, %s22
  %s25 = scalar_select 0, %s24, %s22
  $region1: #{tpu_custom_call.1} parent=0
    #allocation3 [shape = 'u8[1024]{0}', space=vmem, size = 0x400, scoped, tag = 'input window, operand 1, single buffered']
    #allocation4 [shape = 's32[1]{0}', space=sflag, size = 0x4, scoped, tag = 'scoped memory for tpu_custom_call.1']
    #allocation5 [shape = 's32[1]{0}', space=sflag, size = 0x4, scoped, tag = 'scoped memory for tpu_custom_call.1']
    #allocation6 [shape = 'u8[1024]{0}', space=vmem, size = 0x400, scoped, tag = 'input window, operand 2, single buffered']
    #allocation7 [shape = 's32[1]{0}', space=sflag, size = 0x4, scoped, tag = 'scoped memory for tpu_custom_call.1']
    #allocation8 [shape = 'u8[4096]{0}', space=vmem, size = 0x1000, scoped, tag = 'input window, operand 3, single buffered']
    #allocation9 [shape = 'u8[16384]{0}', space=vmem, size = 0x4000, scoped, tag = 'input window, operand 5, single buffered']
    #allocation10 [shape = 's32[1]{0}', space=sflag, size = 0x4, scoped, tag = 'scoped memory for tpu_custom_call.1']
    #allocation11 [shape = 'u8[16384]{0}', space=vmem, size = 0x4000, scoped, tag = 'input window, operand 7, single buffered']
    #allocation12 [shape = 'u8[16384]{0}', space=vmem, size = 0x4000, scoped, tag = 'input window, operand 8, single buffered']
    #allocation13 [shape = 's32[1]{0}', space=sflag, size = 0x4, scoped, tag = 'scoped memory for tpu_custom_call.1']
    #allocation14 [shape = 'u8[512]{0}', space=vmem, size = 0x400, scoped, tag = 'input window, operand 9, single buffered']
    #allocation15 [shape = 'u8[16384]{0}', space=vmem, size = 0x4000, scoped, tag = 'input window, operand 10, single buffered']
    #allocation16 [shape = 's32[1]{0}', space=sflag, size = 0x4, scoped, tag = 'scoped memory for tpu_custom_call.1']
    #allocation17 [shape = 'u8[512]{0}', space=vmem, size = 0x400, scoped, tag = 'input window, operand 11, single buffered']
    #allocation18 [shape = 'u8[16384]{0}', space=vmem, size = 0x4000, scoped, tag = 'input window, operand 14, single buffered']
    #allocation19 [shape = 's32[1]{0}', space=sflag, size = 0x4, scoped, tag = 'scoped memory for tpu_custom_call.1']
    #allocation20 [shape = 'u8[1024]{0}', space=vmem, size = 0x400, scoped, tag = 'output window, operand 0, single buffered']
    %26 = vsyncpa [#allocation4], 0
    %27 = vsyncpa [#allocation7], 0
    %28 = vsyncpa [#allocation10], 0
    %29 = vsyncpa [#allocation13], 0
    %30 = vsyncpa [#allocation16], 0
    %31 = vsyncpa [#allocation19], 0
    %32 = vsyncpa [#allocation5], 0
    // Predicated region
    $region2: #{tpu_custom_call.1} parent=1 // pred_check
      _
    $region3: #{tpu_custom_call.1} parent=1 // pred_check_branch
      %34 = sbr.rel (0) target = $region5
    $region4: #{tpu_custom_call.1} parent=1 // pred_region
      _
    $region5: #{tpu_custom_call.1} parent=1 // pred_fallthru
      _
    // Predicated region
    $region6: #{tpu_custom_call.1} parent=1 // pred_check
      _
    $region7: #{tpu_custom_call.1} parent=1 // pred_check_branch
      %36 = sbr.rel (0) target = $region9
    $region8: #{tpu_custom_call.1} parent=1 // pred_region
      %s38 = ssub.s32 32, 32
      %39 = vsyncadd [#allocation4], %s38
      %s41 = sshll.u32 [#allocation3], 4
      %s42 = int_to_ptr.vmem [resolvable:$true] %s41
      %44 = dma.hbm_to_vmem [thread:$0]  %s1, 32, %s42, [#allocation4]
    $region9: #{tpu_custom_call.1} parent=1 // pred_fallthru
      _
    // Predicated region
    $region10: #{tpu_custom_call.1} parent=1 // pred_check
      _
    $region11: #{tpu_custom_call.1} parent=1 // pred_check_branch
      %46 = sbr.rel (0) target = $region13
    $region12: #{tpu_custom_call.1} parent=1 // pred_region
      %s48 = ssub.s32 32, 32
      %49 = vsyncadd [#allocation7], %s48
      %s51 = sshll.u32 [#allocation6], 4
      %s52 = int_to_ptr.vmem [resolvable:$true] %s51
      %54 = dma.hbm_to_vmem [thread:$0]  %s2, 32, %s52, [#allocation7]
    $region13: #{tpu_custom_call.1} parent=1 // pred_fallthru
      _
    // Predicated region
    $region14: #{tpu_custom_call.1} parent=1 // pred_check
      _
    $region15: #{tpu_custom_call.1} parent=1 // pred_check_branch
      %56 = sbr.rel (0) target = $region17
    $region16: #{tpu_custom_call.1} parent=1 // pred_region
      %s58 = ssub.s32 128, 128
      %59 = vsyncadd [#allocation7], %s58
      %s61 = sshll.u32 [#allocation8], 4
      %s62 = int_to_ptr.vmem [resolvable:$true] %s61
      %64 = dma.hbm_to_vmem [thread:$0]  %s3, 128, %s62, [#allocation7]
    $region17: #{tpu_custom_call.1} parent=1 // pred_fallthru
      _
    // Predicated region
    $region18: #{tpu_custom_call.1} parent=1 // pred_check
      _
    $region19: #{tpu_custom_call.1} parent=1 // pred_check_branch
      %66 = sbr.rel (0) target = $region21
    $region20: #{tpu_custom_call.1} parent=1 // pred_region
      _
    $region21: #{tpu_custom_call.1} parent=1 // pred_fallthru
      _
    // Predicated region
    $region22: #{tpu_custom_call.1} parent=1 // pred_check
      _
    $region23: #{tpu_custom_call.1} parent=1 // pred_check_branch
      %68 = sbr.rel (0) target = $region25
    $region24: #{tpu_custom_call.1} parent=1 // pred_region
      %s70 = ssub.s32 512, 512
      %71 = vsyncadd [#allocation10], %s70
      %s72 = sshll.u32 [#allocation9], 4
      %s73 = int_to_ptr.vmem [resolvable:$true] %s72
      %78 = dma.hbm_to_vmem [thread:$0]  %s5, 512, %s73, [#allocation10], 128, 128, 8
    $region25: #{tpu_custom_call.1} parent=1 // pred_fallthru
      _
    // Predicated region
    $region26: #{tpu_custom_call.1} parent=1 // pred_check
      _
    $region27: #{tpu_custom_call.1} parent=1 // pred_check_branch
      %80 = sbr.rel (0) target = $region29
    $region28: #{tpu_custom_call.1} parent=1 // pred_region
      _
    $region29: #{tpu_custom_call.1} parent=1 // pred_fallthru
      _
    // Predicated region
    $region30: #{tpu_custom_call.1} parent=1 // pred_check
      _
    $region31: #{tpu_custom_call.1} parent=1 // pred_check_branch
      %82 = sbr.rel (0) target = $region33
    $region32: #{tpu_custom_call.1} parent=1 // pred_region
      %s84 = ssub.s32 512, 512
      %85 = vsyncadd [#allocation10], %s84
      %s86 = sshll.u32 [#allocation11], 4
      %s87 = int_to_ptr.vmem [resolvable:$true] %s86
      %92 = dma.hbm_to_vmem [thread:$0]  %s7, 512, %s87, [#allocation10], 128, 128, 8
    $region33: #{tpu_custom_call.1} parent=1 // pred_fallthru
      _
    // Predicated region
    $region34: #{tpu_custom_call.1} parent=1 // pred_check
      _
    $region35: #{tpu_custom_call.1} parent=1 // pred_check_branch
      %94 = sbr.rel (0) target = $region37
    $region36: #{tpu_custom_call.1} parent=1 // pred_region
      %s96 = ssub.s32 512, 512
      %97 = vsyncadd [#allocation13], %s96
      %s98 = sshll.u32 [#allocation12], 4
      %s99 = int_to_ptr.vmem [resolvable:$true] %s98
      %104 = dma.hbm_to_vmem [thread:$0]  %s8, 512, %s99, [#allocation13], 128, 128, 8
    $region37: #{tpu_custom_call.1} parent=1 // pred_fallthru
      _
    // Predicated region
    $region38: #{tpu_custom_call.1} parent=1 // pred_check
      _
    $region39: #{tpu_custom_call.1} parent=1 // pred_check_branch
      %106 = sbr.rel (0) target = $region41
    $region40: #{tpu_custom_call.1} parent=1 // pred_region
      %s108 = ssub.s32 16, 16
      %109 = vsyncadd [#allocation13], %s108
      %s111 = sshll.u32 [#allocation14], 4
      %s112 = int_to_ptr.vmem [resolvable:$true] %s111
      %114 = dma.hbm_to_vmem [thread:$0]  %s9, 16, %s112, [#allocation13]
    $region41: #{tpu_custom_call.1} parent=1 // pred_fallthru
      _
    // Predicated region
    $region42: #{tpu_custom_call.1} parent=1 // pred_check
      _
    $region43: #{tpu_custom_call.1} parent=1 // pred_check_branch
      %116 = sbr.rel (0) target = $region45
    $region44: #{tpu_custom_call.1} parent=1 // pred_region
      %s118 = ssub.s32 512, 512
      %119 = vsyncadd [#allocation16], %s118
      %s120 = sshll.u32 [#allocation15], 4
      %s121 = int_to_ptr.vmem [resolvable:$true] %s120
      %126 = dma.hbm_to_vmem [thread:$0]  %s10, 512, %s121, [#allocation16], 128, 128, 8
    $region45: #{tpu_custom_call.1} parent=1 // pred_fallthru
      _
    // Predicated region
    $region46: #{tpu_custom_call.1} parent=1 // pred_check
      _
    $region47: #{tpu_custom_call.1} parent=1 // pred_check_branch
      %128 = sbr.rel (0) target = $region49
    $region48: #{tpu_custom_call.1} parent=1 // pred_region
      %s130 = ssub.s32 16, 16
      %131 = vsyncadd [#allocation16], %s130
      %s133 = sshll.u32 [#allocation17], 4
      %s134 = int_to_ptr.vmem [resolvable:$true] %s133
      %136 = dma.hbm_to_vmem [thread:$0]  %s11, 16, %s134, [#allocation16]
    $region49: #{tpu_custom_call.1} parent=1 // pred_fallthru
      _
    // Predicated region
    $region50: #{tpu_custom_call.1} parent=1 // pred_check
      _
    $region51: #{tpu_custom_call.1} parent=1 // pred_check_branch
      %138 = sbr.rel (0) target = $region53
    $region52: #{tpu_custom_call.1} parent=1 // pred_region
      _
    $region53: #{tpu_custom_call.1} parent=1 // pred_fallthru
      _
    // Predicated region
    $region54: #{tpu_custom_call.1} parent=1 // pred_check
      _
    $region55: #{tpu_custom_call.1} parent=1 // pred_check_branch
      %140 = sbr.rel (0) target = $region57
    $region56: #{tpu_custom_call.1} parent=1 // pred_region
      _
    $region57: #{tpu_custom_call.1} parent=1 // pred_fallthru
      _
    // Predicated region
    $region58: #{tpu_custom_call.1} parent=1 // pred_check
      _
    $region59: #{tpu_custom_call.1} parent=1 // pred_check_branch
      %142 = sbr.rel (0) target = $region61
    $region60: #{tpu_custom_call.1} parent=1 // pred_region
      %s144 = ssub.s32 512, 512
      %145 = vsyncadd [#allocation19], %s144
      %s146 = sshll.u32 [#allocation18], 4
      %s147 = int_to_ptr.vmem [resolvable:$true] %s146
      %152 = dma.hbm_to_vmem [thread:$0]  %s14, 512, %s147, [#allocation19], 128, 128, 8
    $region61: #{tpu_custom_call.1} parent=1 // pred_fallthru
      _
    // Predicated region
    $region62: #{tpu_custom_call.1} parent=1 // pred_check
      _
    $region63: #{tpu_custom_call.1} parent=1 // pred_check_branch
      %154 = sbr.rel (0) target = $region65
    $region64: #{tpu_custom_call.1} parent=1 // pred_region
      _
    $region65: #{tpu_custom_call.1} parent=1 // pred_fallthru
      _
    // Predicated region
    $region66: #{tpu_custom_call.1} parent=1 // pred_check
      _
    $region67: #{tpu_custom_call.1} parent=1 // pred_check_branch
      %156 = sbr.rel (0) target = $region69
    $region68: #{tpu_custom_call.1} parent=1 // pred_region
      _
    $region69: #{tpu_custom_call.1} parent=1 // pred_fallthru
      _
    // Predicated region
    $region70: #{tpu_custom_call.1} parent=1 // pred_check
      _
    $region71: #{tpu_custom_call.1} parent=1 // pred_check_branch
      %158 = sbr.rel (0) target = $region73
    $region72: #{tpu_custom_call.1} parent=1 // pred_region
      _
    $region73: #{tpu_custom_call.1} parent=1 // pred_fallthru
      _
    // Predicated region
    $region74: #{tpu_custom_call.1} parent=1 // pred_check
      _
    $region75: #{tpu_custom_call.1} parent=1 // pred_check_branch
      %160 = sbr.rel (0) target = $region77
    $region76: #{tpu_custom_call.1} parent=1 // pred_region
      _
    $region77: #{tpu_custom_call.1} parent=1 // pred_fallthru
      _
    // Predicated region
    $region78: #{tpu_custom_call.1} parent=1 // pred_check
      _
    $region79: #{tpu_custom_call.1} parent=1 // pred_check_branch
      %162 = sbr.rel (0) target = $region81
    $region80: #{tpu_custom_call.1} parent=1 // pred_region
      %163 = dma.done [#allocation4], 32
    $region81: #{tpu_custom_call.1} parent=1 // pred_fallthru
      _
    // Predicated region
    $region82: #{tpu_custom_call.1} parent=1 // pred_check
      _
    $region83: #{tpu_custom_call.1} parent=1 // pred_check_branch
      %165 = sbr.rel (0) target = $region85
    $region84: #{tpu_custom_call.1} parent=1 // pred_region
      %166 = dma.done [#allocation7], 32
    $region85: #{tpu_custom_call.1} parent=1 // pred_fallthru
      _
    // Predicated region
    $region86: #{tpu_custom_call.1} parent=1 // pred_check
      _
    $region87: #{tpu_custom_call.1} parent=1 // pred_check_branch
      %168 = sbr.rel (0) target = $region89
    $region88: #{tpu_custom_call.1} parent=1 // pred_region
      %169 = dma.done [#allocation7], 128
    $region89: #{tpu_custom_call.1} parent=1 // pred_fallthru
      _
    // Predicated region
    $region90: #{tpu_custom_call.1} parent=1 // pred_check
      _
    $region91: #{tpu_custom_call.1} parent=1 // pred_check_branch
      %171 = sbr.rel (0) target = $region93
    $region92: #{tpu_custom_call.1} parent=1 // pred_region
      %172 = dma.done [#allocation10], 512
    $region93: #{tpu_custom_call.1} parent=1 // pred_fallthru
      _
    // Predicated region
    $region94: #{tpu_custom_call.1} parent=1 // pred_check
      _
    $region95: #{tpu_custom_call.1} parent=1 // pred_check_branch
      %174 = sbr.rel (0) target = $region97
    $region96: #{tpu_custom_call.1} parent=1 // pred_region
      %175 = dma.done [#allocation10], 512
    $region97: #{tpu_custom_call.1} parent=1 // pred_fallthru
      _
    // Predicated region
    $region98: #{tpu_custom_call.1} parent=1 // pred_check
      _
    $region99: #{tpu_custom_call.1} parent=1 // pred_check_branch
      %177 = sbr.rel (0) target = $region101
    $region100: #{tpu_custom_call.1} parent=1 // pred_region
      %178 = dma.done [#allocation13], 512
    $region101: #{tpu_custom_call.1} parent=1 // pred_fallthru
      _
    // Predicated region
    $region102: #{tpu_custom_call.1} parent=1 // pred_check
      _
    $region103: #{tpu_custom_call.1} parent=1 // pred_check_branch
      %180 = sbr.rel (0) target = $region105
    $region104: #{tpu_custom_call.1} parent=1 // pred_region
      %181 = dma.done [#allocation13], 16
    $region105: #{tpu_custom_call.1} parent=1 // pred_fallthru
      _
    // Predicated region
    $region106: #{tpu_custom_call.1} parent=1 // pred_check
      _
    $region107: #{tpu_custom_call.1} parent=1 // pred_check_branch
      %183 = sbr.rel (0) target = $region109
    $region108: #{tpu_custom_call.1} parent=1 // pred_region
      %184 = dma.done [#allocation16], 512
    $region109: #{tpu_custom_call.1} parent=1 // pred_fallthru
      _
    // Predicated region
    $region110: #{tpu_custom_call.1} parent=1 // pred_check
      _
    $region111: #{tpu_custom_call.1} parent=1 // pred_check_branch
      %186 = sbr.rel (0) target = $region113
    $region112: #{tpu_custom_call.1} parent=1 // pred_region
      %187 = dma.done [#allocation16], 16
    $region113: #{tpu_custom_call.1} parent=1 // pred_fallthru
      _
    // Predicated region
    $region114: #{tpu_custom_call.1} parent=1 // pred_check
      _
    $region115: #{tpu_custom_call.1} parent=1 // pred_check_branch
      %189 = sbr.rel (0) target = $region117
    $region116: #{tpu_custom_call.1} parent=1 // pred_region
      %190 = dma.done [#allocation19], 512
    $region117: #{tpu_custom_call.1} parent=1 // pred_fallthru
      _
    %v191 = vld [vmem:[%s0] sm:$0xff]
    %v192 = vld [vmem:[%s0 + $0x8] sm:$0xff]
    %v193 = vld [vmem:[#allocation6] sm:$0x3]
    %195 = vset.pattern.permute.xlu0 0
    %196 = vperm.xlu0 %195, %v191
    %v197 = vpop.permute.xlu0 %196
    %200 = vset.pattern.permute.xlu0 0
    %201 = vperm.xlu0 %200, %v192
    %v202 = vpop.permute.xlu0 %201
    %v204 = vlaneseq
    %v205 = vshrl.u32 %v204, 7
    %v206 = vsub.s32 0, %v205
    %v207 = vrot.slane %v193, %v206
    %v208 = vmul.f32 %v197, %v207
    %v209 = vmul.f32 %v202, %v207
    %210 = vset.pattern.permute.xlu0 1
    %211 = vperm.xlu0 %210, %v191
    %v212 = vpop.permute.xlu0 %211
    %214 = vset.pattern.permute.xlu0 1
    %215 = vperm.xlu0 %214, %v192
    %v216 = vpop.permute.xlu0 %215
    %v218 = vlaneseq
    %v219 = vshrl.u32 %v218, 7
    %v220 = vsub.s32 1, %v219
    %v221 = vrot.slane %v193, %v220
    %v222 = vmul.f32 %v212, %v221
    %v223 = vmul.f32 %v216, %v221
    %v224 = vadd.f32 %v208, %v222
    %v225 = vadd.f32 %v209, %v223
    %v226 = vld [vmem:[#allocation3] sm:$0x3]
    %v227 = vld [vmem:[#allocation8] sm:$0xff]
    %vm228 = vcmask 64512
    %v230 = vsel %vm228, %v226, 0
    %232 = vmatprep.subr.mxu0 0.0
    %233 = vmatpush1.msra.mxu0 %v227
    %234 = vmatprep.subr.mxu0 0.0
    %235 = vmatpush1.msra.mxu0 0.0
    %236 = vmatprep.subr.mxu0 0.0
    %237 = vmatpush1.msra.mxu0 0.0
    %238 = vmatprep.subr.mxu0 0.0
    %239 = vmatpush1.msra.mxu0 0.0
    %240 = vmatprep.subr.mxu0 0.0
    %241 = vmatpush1.msra.mxu0 0.0
    %242 = vmatprep.subr.mxu0 0.0
    %243 = vmatpush1.msra.mxu0 0.0
    %244 = vmatprep.subr.mxu0 0.0
    %245 = vmatpush1.msra.mxu0 0.0
    %246 = vmatprep.subr.mxu0 0.0
    %247 = vmatpush1.msra.mxu0 0.0
    %248 = vmatprep.subr.mxu0 0.0
    %249 = vmatpush1.msra.mxu0 0.0
    %250 = vmatprep.subr.mxu0 0.0
    %251 = vmatpush1.msra.mxu0 0.0
    %252 = vmatprep.subr.mxu0 0.0
    %253 = vmatpush1.msra.mxu0 0.0
    %254 = vmatprep.subr.mxu0 0.0
    %255 = vmatpush1.msra.mxu0 0.0
    %256 = vmatprep.subr.mxu0 0.0
    %257 = vmatpush1.msra.mxu0 0.0
    %258 = vmatprep.subr.mxu0 0.0
    %259 = vmatpush1.msra.mxu0 0.0
    %260 = vmatprep.subr.mxu0 0.0
    %261 = vmatpush1.msra.mxu0 0.0
    %262 = vmatprep.subr.mxu0 0.0
    %263 = vmatpush1.msra.mxu0 0.0
    %264 = vmatprep.subr.mxu0 0.0
    %265 = vmatpush1.msra.mxu0 0.0
    %266 = vmatprep.subr.mxu0 0.0
    %267 = vmatpush1.msra.mxu0 0.0
    %268 = vmatprep.subr.mxu0 0.0
    %269 = vmatpush1.msra.mxu0 0.0
    %270 = vmatprep.subr.mxu0 0.0
    %271 = vmatpush1.msra.mxu0 0.0
    %272 = vmatprep.subr.mxu0 0.0
    %273 = vmatpush1.msra.mxu0 0.0
    %274 = vmatprep.subr.mxu0 0.0
    %275 = vmatpush1.msra.mxu0 0.0
    %276 = vmatprep.subr.mxu0 0.0
    %277 = vmatpush1.msra.mxu0 0.0
    %278 = vmatprep.subr.mxu0 0.0
    %279 = vmatpush1.msra.mxu0 0.0
    %280 = vmatprep.subr.mxu0 0.0
    %281 = vmatpush1.msra.mxu0 0.0
    %282 = vmatprep.subr.mxu0 0.0
    %283 = vmatpush1.msra.mxu0 0.0
    %284 = vmatprep.subr.mxu0 0.0
    %285 = vmatpush1.msra.mxu0 0.0
    %286 = vmatprep.subr.mxu0 0.0
    %287 = vmatpush1.msra.mxu0 0.0
    %288 = vmatprep.subr.mxu0 0.0
    %289 = vmatpush1.msra.mxu0 0.0
    %290 = vmatprep.subr.mxu0 0.0
    %291 = vmatpush1.msra.mxu0 0.0
    %292 = vmatprep.subr.mxu0 0.0
    %293 = vmatpush1.msra.mxu0 0.0
    %294 = vmatprep.subr.mxu0 0.0
    %295 = vmatpush1.msra.mxu0 0.0
    %296 = vmatprep.mubr.f32.mxu0 0.0
    %297 = vmatmul.mubr.f32.gmra.mrb[0].mxu0 %v230
    %v298 = vpop.f32.mrb[0].mxu0
    %v299 = vadd.f32 0.0, %v298
    %v300 = vpop.f32.mrb[0].mxu0
    %301 = vdwg.mxu0
    %v304 = vunpack.c.l.s4 1966171168
    %v305 = vunpack.c.0.s8 %v304
    %v306 = vlaneseq
    %v307 = vshrl.u32 %v306, 7
    %v308 = vsub.s32 %v305, %v307
    %v309 = vrot.slane %v299, %v308
    %v310 = vcombine.high %v309, %v309
    %v312 = vunpack.c.l.s4 1966171168
    %v313 = vunpack.c.0.s8 %v312
    %v314 = vlaneseq
    %v315 = vshrl.u32 %v314, 7
    %v316 = vsub.s32 %v313, %v315
    %v317 = vrot.slane %v309, %v316
    %v319 = vunpack.c.l.s4 1966171168
    %v320 = vunpack.c.0.s8 %v319
    %v321 = vlaneseq
    %v322 = vshrl.u32 %v321, 7
    %v323 = vsub.s32 %v320, %v322
    %v324 = vrot.slane %v310, %v323
    %v325 = vlaneseq
    %v326 = vshrl.u32 %v325, 7
    %v327 = vsub.s32 0, %v326
    %v328 = vrot.slane %v317, %v327
    %v329 = vlaneseq
    %v330 = vshrl.u32 %v329, 7
    %v331 = vsub.s32 0, %v330
    %v332 = vrot.slane %v324, %v331
    %v335 = vadd.f32 %v224, %v328
    %v336 = vadd.f32 %v225, %v332
    %v337 = vld [vmem:[#allocation9] sm:$0xff]
    %v338 = vld [vmem:[#allocation9 + $0x8] sm:$0xff]
    %v339 = vld [vmem:[#allocation9 + $0x10] sm:$0xff]
    %v340 = vld [vmem:[#allocation9 + $0x18] sm:$0xff]
    %v341 = vld [vmem:[#allocation12] sm:$0xff]
    %v342 = vld [vmem:[#allocation12 + $0x8] sm:$0xff]
    %v343 = vld [vmem:[#allocation12 + $0x10] sm:$0xff]
    %v344 = vld [vmem:[#allocation12 + $0x18] sm:$0xff]
    %v345 = vld [vmem:[%s4] sm:$0xff]
    %v346 = vld [vmem:[%s4 + $0x8] sm:$0xff]
    %v347 = vld [vmem:[%s4 + $0x10] sm:$0xff]
    %v348 = vld [vmem:[%s4 + $0x18] sm:$0xff]
    %v349 = vld [vmem:[%s6] sm:$0x1]
    %v351 = vlaneseq
    %v352 = vshrl.u32 %v351, 7
    %v353 = vsub.s32 0, %v352
    %v354 = vrot.slane %v349, %v353
    %vm356 = vcmask 261120
    %v358 = vsel %vm356, %v335, 0
    %v361 = vsel %vm356, %v336, 0
    %363 = vmatprep.subr.mxu0 0.0
    %364 = vmatpush1.msra.mxu0 %v345
    %365 = vmatprep.subr.mxu0 0.0
    %366 = vmatpush1.msra.mxu0 %v346
    %367 = vmatprep.subr.mxu0 0.0
    %368 = vmatpush1.msra.mxu0 %v347
    %369 = vmatprep.subr.mxu0 0.0
    %370 = vmatpush1.msra.mxu0 %v348
    %371 = vmatprep.subr.mxu0 0.0
    %372 = vmatpush1.msra.mxu0 0.0
    %373 = vmatprep.subr.mxu0 0.0
    %374 = vmatpush1.msra.mxu0 0.0
    %375 = vmatprep.subr.mxu0 0.0
    %376 = vmatpush1.msra.mxu0 0.0
    %377 = vmatprep.subr.mxu0 0.0
    %378 = vmatpush1.msra.mxu0 0.0
    %379 = vmatprep.subr.mxu0 0.0
    %380 = vmatpush1.msra.mxu0 0.0
    %381 = vmatprep.subr.mxu0 0.0
    %382 = vmatpush1.msra.mxu0 0.0
    %383 = vmatprep.subr.mxu0 0.0
    %384 = vmatpush1.msra.mxu0 0.0
    %385 = vmatprep.subr.mxu0 0.0
    %386 = vmatpush1.msra.mxu0 0.0
    %387 = vmatprep.subr.mxu0 0.0
    %388 = vmatpush1.msra.mxu0 0.0
    %389 = vmatprep.subr.mxu0 0.0
    %390 = vmatpush1.msra.mxu0 0.0
    %391 = vmatprep.subr.mxu0 0.0
    %392 = vmatpush1.msra.mxu0 0.0
    %393 = vmatprep.subr.mxu0 0.0
    %394 = vmatpush1.msra.mxu0 0.0
    %395 = vmatprep.subr.mxu0 0.0
    %396 = vmatpush1.msra.mxu0 0.0
    %397 = vmatprep.subr.mxu0 0.0
    %398 = vmatpush1.msra.mxu0 0.0
    %399 = vmatprep.subr.mxu0 0.0
    %400 = vmatpush1.msra.mxu0 0.0
    %401 = vmatprep.subr.mxu0 0.0
    %402 = vmatpush1.msra.mxu0 0.0
    %403 = vmatprep.subr.mxu0 0.0
    %404 = vmatpush1.msra.mxu0 0.0
    %405 = vmatprep.subr.mxu0 0.0
    %406 = vmatpush1.msra.mxu0 0.0
    %407 = vmatprep.subr.mxu0 0.0
    %408 = vmatpush1.msra.mxu0 0.0
    %409 = vmatprep.subr.mxu0 0.0
    %410 = vmatpush1.msra.mxu0 0.0
    %411 = vmatprep.subr.mxu0 0.0
    %412 = vmatpush1.msra.mxu0 0.0
    %413 = vmatprep.subr.mxu0 0.0
    %414 = vmatpush1.msra.mxu0 0.0
    %415 = vmatprep.subr.mxu0 0.0
    %416 = vmatpush1.msra.mxu0 0.0
    %417 = vmatprep.subr.mxu0 0.0
    %418 = vmatpush1.msra.mxu0 0.0
    %419 = vmatprep.subr.mxu0 0.0
    %420 = vmatpush1.msra.mxu0 0.0
    %421 = vmatprep.subr.mxu0 0.0
    %422 = vmatpush1.msra.mxu0 0.0
    %423 = vmatprep.subr.mxu0 0.0
    %424 = vmatpush1.msra.mxu0 0.0
    %425 = vmatprep.subr.mxu0 0.0
    %426 = vmatpush1.msra.mxu0 0.0
    %427 = vmatprep.mubr.f32.mxu0 0.0
    %428 = vmatmul.mubr.f32.gmra.mrb[0].mxu0 %v358
    %v429 = vpop.f32.mrb[0].mxu0
    %v430 = vadd.f32 %v354, %v429
    %v431 = vpop.f32.mrb[0].mxu0
    %432 = vmatprep.mubr.f32.mxu0 0.0
    %433 = vmatmul.mubr.f32.gmra.mrb[0].mxu0 %v361
    %v434 = vpop.f32.mrb[0].mxu0
    %v435 = vadd.f32 %v354, %v434
    %v436 = vpop.f32.mrb[0].mxu0
    %437 = vdwg.mxu0
    %v438 = vld [vmem:[#allocation11] sm:$0xff]
    %v439 = vld [vmem:[#allocation11 + $0x8] sm:$0xff]
    %v440 = vld [vmem:[#allocation11 + $0x10] sm:$0xff]
    %v441 = vld [vmem:[#allocation11 + $0x18] sm:$0xff]
    %v442 = vld [vmem:[#allocation14] sm:$0x1]
    %v444 = vlaneseq
    %v445 = vshrl.u32 %v444, 7
    %v446 = vsub.s32 0, %v445
    %v447 = vrot.slane %v442, %v446
    %449 = vmatprep.subr.mxu0 0.0
    %450 = vmatpush1.msra.mxu0 %v438
    %451 = vmatprep.subr.mxu0 0.0
    %452 = vmatpush1.msra.mxu0 %v439
    %453 = vmatprep.subr.mxu0 0.0
    %454 = vmatpush1.msra.mxu0 %v440
    %455 = vmatprep.subr.mxu0 0.0
    %456 = vmatpush1.msra.mxu0 %v441
    %457 = vmatprep.subr.mxu0 0.0
    %458 = vmatpush1.msra.mxu0 0.0
    %459 = vmatprep.subr.mxu0 0.0
    %460 = vmatpush1.msra.mxu0 0.0
    %461 = vmatprep.subr.mxu0 0.0
    %462 = vmatpush1.msra.mxu0 0.0
    %463 = vmatprep.subr.mxu0 0.0
    %464 = vmatpush1.msra.mxu0 0.0
    %465 = vmatprep.subr.mxu0 0.0
    %466 = vmatpush1.msra.mxu0 0.0
    %467 = vmatprep.subr.mxu0 0.0
    %468 = vmatpush1.msra.mxu0 0.0
    %469 = vmatprep.subr.mxu0 0.0
    %470 = vmatpush1.msra.mxu0 0.0
    %471 = vmatprep.subr.mxu0 0.0
    %472 = vmatpush1.msra.mxu0 0.0
    %473 = vmatprep.subr.mxu0 0.0
    %474 = vmatpush1.msra.mxu0 0.0
    %475 = vmatprep.subr.mxu0 0.0
    %476 = vmatpush1.msra.mxu0 0.0
    %477 = vmatprep.subr.mxu0 0.0
    %478 = vmatpush1.msra.mxu0 0.0
    %479 = vmatprep.subr.mxu0 0.0
    %480 = vmatpush1.msra.mxu0 0.0
    %481 = vmatprep.subr.mxu0 0.0
    %482 = vmatpush1.msra.mxu0 0.0
    %483 = vmatprep.subr.mxu0 0.0
    %484 = vmatpush1.msra.mxu0 0.0
    %485 = vmatprep.subr.mxu0 0.0
    %486 = vmatpush1.msra.mxu0 0.0
    %487 = vmatprep.subr.mxu0 0.0
    %488 = vmatpush1.msra.mxu0 0.0
    %489 = vmatprep.subr.mxu0 0.0
    %490 = vmatpush1.msra.mxu0 0.0
    %491 = vmatprep.subr.mxu0 0.0
    %492 = vmatpush1.msra.mxu0 0.0
    %493 = vmatprep.subr.mxu0 0.0
    %494 = vmatpush1.msra.mxu0 0.0
    %495 = vmatprep.subr.mxu0 0.0
    %496 = vmatpush1.msra.mxu0 0.0
    %497 = vmatprep.subr.mxu0 0.0
    %498 = vmatpush1.msra.mxu0 0.0
    %499 = vmatprep.subr.mxu0 0.0
    %500 = vmatpush1.msra.mxu0 0.0
    %501 = vmatprep.subr.mxu0 0.0
    %502 = vmatpush1.msra.mxu0 0.0
    %503 = vmatprep.subr.mxu0 0.0
    %504 = vmatpush1.msra.mxu0 0.0
    %505 = vmatprep.subr.mxu0 0.0
    %506 = vmatpush1.msra.mxu0 0.0
    %507 = vmatprep.subr.mxu0 0.0
    %508 = vmatpush1.msra.mxu0 0.0
    %509 = vmatprep.subr.mxu0 0.0
    %510 = vmatpush1.msra.mxu0 0.0
    %511 = vmatprep.subr.mxu0 0.0
    %512 = vmatpush1.msra.mxu0 0.0
    %513 = vmatprep.mubr.f32.mxu0 0.0
    %514 = vmatmul.mubr.f32.gmra.mrb[0].mxu0 %v358
    %v515 = vpop.f32.mrb[0].mxu0
    %v516 = vadd.f32 %v447, %v515
    %v517 = vpop.f32.mrb[0].mxu0
    %518 = vmatprep.mubr.f32.mxu0 0.0
    %519 = vmatmul.mubr.f32.gmra.mrb[0].mxu0 %v361
    %v520 = vpop.f32.mrb[0].mxu0
    %v521 = vadd.f32 %v447, %v520
    %v522 = vpop.f32.mrb[0].mxu0
    %523 = vdwg.mxu0
    %v524 = vld [vmem:[%s18] sm:$0x1]
    %v526 = vsel %vm356, %v524, 0
    %528 = vmatprep.subr.mxu0 0.0
    %529 = vmatpush1.msra.mxu0 %v438
    %530 = vmatprep.subr.mxu0 0.0
    %531 = vmatpush1.msra.mxu0 %v439
    %532 = vmatprep.subr.mxu0 0.0
    %533 = vmatpush1.msra.mxu0 %v440
    %534 = vmatprep.subr.mxu0 0.0
    %535 = vmatpush1.msra.mxu0 %v441
    %536 = vmatprep.subr.mxu0 0.0
    %537 = vmatpush1.msra.mxu0 0.0
    %538 = vmatprep.subr.mxu0 0.0
    %539 = vmatpush1.msra.mxu0 0.0
    %540 = vmatprep.subr.mxu0 0.0
    %541 = vmatpush1.msra.mxu0 0.0
    %542 = vmatprep.subr.mxu0 0.0
    %543 = vmatpush1.msra.mxu0 0.0
    %544 = vmatprep.subr.mxu0 0.0
    %545 = vmatpush1.msra.mxu0 0.0
    %546 = vmatprep.subr.mxu0 0.0
    %547 = vmatpush1.msra.mxu0 0.0
    %548 = vmatprep.subr.mxu0 0.0
    %549 = vmatpush1.msra.mxu0 0.0
    %550 = vmatprep.subr.mxu0 0.0
    %551 = vmatpush1.msra.mxu0 0.0
    %552 = vmatprep.subr.mxu0 0.0
    %553 = vmatpush1.msra.mxu0 0.0
    %554 = vmatprep.subr.mxu0 0.0
    %555 = vmatpush1.msra.mxu0 0.0
    %556 = vmatprep.subr.mxu0 0.0
    %557 = vmatpush1.msra.mxu0 0.0
    %558 = vmatprep.subr.mxu0 0.0
    %559 = vmatpush1.msra.mxu0 0.0
    %560 = vmatprep.subr.mxu0 0.0
    %561 = vmatpush1.msra.mxu0 0.0
    %562 = vmatprep.subr.mxu0 0.0
    %563 = vmatpush1.msra.mxu0 0.0
    %564 = vmatprep.subr.mxu0 0.0
    %565 = vmatpush1.msra.mxu0 0.0
    %566 = vmatprep.subr.mxu0 0.0
    %567 = vmatpush1.msra.mxu0 0.0
    %568 = vmatprep.subr.mxu0 0.0
    %569 = vmatpush1.msra.mxu0 0.0
    %570 = vmatprep.subr.mxu0 0.0
    %571 = vmatpush1.msra.mxu0 0.0
    %572 = vmatprep.subr.mxu0 0.0
    %573 = vmatpush1.msra.mxu0 0.0
    %574 = vmatprep.subr.mxu0 0.0
    %575 = vmatpush1.msra.mxu0 0.0
    %576 = vmatprep.subr.mxu0 0.0
    %577 = vmatpush1.msra.mxu0 0.0
    %578 = vmatprep.subr.mxu0 0.0
    %579 = vmatpush1.msra.mxu0 0.0
    %580 = vmatprep.subr.mxu0 0.0
    %581 = vmatpush1.msra.mxu0 0.0
    %582 = vmatprep.subr.mxu0 0.0
    %583 = vmatpush1.msra.mxu0 0.0
    %584 = vmatprep.subr.mxu0 0.0
    %585 = vmatpush1.msra.mxu0 0.0
    %586 = vmatprep.subr.mxu0 0.0
    %587 = vmatpush1.msra.mxu0 0.0
    %588 = vmatprep.subr.mxu0 0.0
    %589 = vmatpush1.msra.mxu0 0.0
    %590 = vmatprep.subr.mxu0 0.0
    %591 = vmatpush1.msra.mxu0 0.0
    %592 = vmatprep.mubr.f32.mxu0 0.0
    %593 = vmatmul.mubr.f32.gmra.mrb[0].mxu0 %v526
    %v594 = vpop.f32.mrb[0].mxu0
    %v595 = vadd.f32 %v442, %v594
    %v596 = vpop.f32.mrb[0].mxu0
    %597 = vdwg.mxu0
    %v598 = vlaneseq
    %v599 = vshrl.u32 %v598, 7
    %v600 = vsub.s32 0, %v599
    %v601 = vrot.slane %v595, %v600
    %v603 = vsel %vm356, 0.0, 0
    %605 = vmatprep.subr.mxu0 0.0
    %606 = vmatpush1.msra.mxu0 %v337
    %607 = vmatprep.subr.mxu0 0.0
    %608 = vmatpush1.msra.mxu0 %v338
    %609 = vmatprep.subr.mxu0 0.0
    %610 = vmatpush1.msra.mxu0 %v339
    %611 = vmatprep.subr.mxu0 0.0
    %612 = vmatpush1.msra.mxu0 %v340
    %613 = vmatprep.subr.mxu0 0.0
    %614 = vmatpush1.msra.mxu0 0.0
    %615 = vmatprep.subr.mxu0 0.0
    %616 = vmatpush1.msra.mxu0 0.0
    %617 = vmatprep.subr.mxu0 0.0
    %618 = vmatpush1.msra.mxu0 0.0
    %619 = vmatprep.subr.mxu0 0.0
    %620 = vmatpush1.msra.mxu0 0.0
    %621 = vmatprep.subr.mxu0 0.0
    %622 = vmatpush1.msra.mxu0 0.0
    %623 = vmatprep.subr.mxu0 0.0
    %624 = vmatpush1.msra.mxu0 0.0
    %625 = vmatprep.subr.mxu0 0.0
    %626 = vmatpush1.msra.mxu0 0.0
    %627 = vmatprep.subr.mxu0 0.0
    %628 = vmatpush1.msra.mxu0 0.0
    %629 = vmatprep.subr.mxu0 0.0
    %630 = vmatpush1.msra.mxu0 0.0
    %631 = vmatprep.subr.mxu0 0.0
    %632 = vmatpush1.msra.mxu0 0.0
    %633 = vmatprep.subr.mxu0 0.0
    %634 = vmatpush1.msra.mxu0 0.0
    %635 = vmatprep.subr.mxu0 0.0
    %636 = vmatpush1.msra.mxu0 0.0
    %637 = vmatprep.subr.mxu0 0.0
    %638 = vmatpush1.msra.mxu0 0.0
    %639 = vmatprep.subr.mxu0 0.0
    %640 = vmatpush1.msra.mxu0 0.0
    %641 = vmatprep.subr.mxu0 0.0
    %642 = vmatpush1.msra.mxu0 0.0
    %643 = vmatprep.subr.mxu0 0.0
    %644 = vmatpush1.msra.mxu0 0.0
    %645 = vmatprep.subr.mxu0 0.0
    %646 = vmatpush1.msra.mxu0 0.0
    %647 = vmatprep.subr.mxu0 0.0
    %648 = vmatpush1.msra.mxu0 0.0
    %649 = vmatprep.subr.mxu0 0.0
    %650 = vmatpush1.msra.mxu0 0.0
    %651 = vmatprep.subr.mxu0 0.0
    %652 = vmatpush1.msra.mxu0 0.0
    %653 = vmatprep.subr.mxu0 0.0
    %654 = vmatpush1.msra.mxu0 0.0
    %655 = vmatprep.subr.mxu0 0.0
    %656 = vmatpush1.msra.mxu0 0.0
    %657 = vmatprep.subr.mxu0 0.0
    %658 = vmatpush1.msra.mxu0 0.0
    %659 = vmatprep.subr.mxu0 0.0
    %660 = vmatpush1.msra.mxu0 0.0
    %661 = vmatprep.subr.mxu0 0.0
    %662 = vmatpush1.msra.mxu0 0.0
    %663 = vmatprep.subr.mxu0 0.0
    %664 = vmatpush1.msra.mxu0 0.0
    %665 = vmatprep.subr.mxu0 0.0
    %666 = vmatpush1.msra.mxu0 0.0
    %667 = vmatprep.subr.mxu0 0.0
    %668 = vmatpush1.msra.mxu0 0.0
    %669 = vmatprep.mubr.f32.mxu0 0.0
    %670 = vmatmul.mubr.f32.gmra.mrb[0].mxu0 %v603
    %v671 = vpop.f32.mrb[0].mxu0
    %v672 = vadd.f32 0.0, %v671
    %v673 = vpop.f32.mrb[0].mxu0
    %674 = vdwg.mxu0
    %v676 = vrot.slane %v672, 1
    %v679 = vadd.f32 %v430, %v672
    %v680 = vadd.f32 %v435, %v676
    %v681 = vmul.f32 %v679, 0.5
    %v682 = vmul.f32 %v680, 0.5
    %v683 = vtanh.pop %v681
    %v684 = vtanh.pop %v682
    %v685 = vmul.f32 %v683, 0.5
    %v686 = vmul.f32 %v684, 0.5
    %v687 = vadd.f32 %v685, 0.5
    %v688 = vadd.f32 %v686, 0.5
    %v689 = vtanh.pop %v679
    %v690 = vtanh.pop %v680
    %v691 = vmul.f32 %v687, 0.0
    %v692 = vmul.f32 %v688, 0.0
    %695 = vrot.lane.b32.xlu0 %v689, 64
    %v696 = vpop.permute.xlu0 %695
    %697 = vrot.lane.b32.xlu0 %v690, 64
    %v698 = vpop.permute.xlu0 %697
    %v701 = vmul.f32 %v687, %v696
    %v702 = vmul.f32 %v688, %v698
    %705 = vrot.lane.b32.xlu0 %v701, 32
    %v706 = vpop.permute.xlu0 %705
    %707 = vrot.lane.b32.xlu0 %v702, 32
    %v708 = vpop.permute.xlu0 %707
    %v711 = vadd.f32 %v691, %v706
    %v712 = vadd.f32 %v692, %v708
    %v713 = vtanh.pop %v711
    %v714 = vtanh.pop %v712
    %717 = vrot.lane.b32.xlu0 %v713, 64
    %v718 = vpop.permute.xlu0 %717
    %719 = vrot.lane.b32.xlu0 %v714, 64
    %v720 = vpop.permute.xlu0 %719
    %v723 = vmul.f32 %v687, %v718
    %v724 = vmul.f32 %v688, %v720
    %727 = vrot.lane.b32.xlu0 %v723, 32
    %v728 = vpop.permute.xlu0 %727
    %729 = vrot.lane.b32.xlu0 %v724, 32
    %v730 = vpop.permute.xlu0 %729
    %vm733 = vcmask 253952
    %734 = vst.msk [vmem:[#allocation2] sm:$0x1] %vm733, %v728
    %735 = vst.msk [vmem:[#allocation2 + $0x8] sm:$0x1] %vm733, %v730
    %v736 = vrot.slane %v724, 7
    %vm737 = vcmask 1041409
    %v738 = vsel %vm737, %v736, %v723
    %739 = vrot.lane.b32.xlu0 %v738, 32
    %v740 = vpop.permute.xlu0 %739
    %v741 = vsel %vm356, %v740, 0
    %743 = vmatprep.subr.mxu0 0.0
    %744 = vmatpush1.msra.mxu0 %v337
    %745 = vmatprep.subr.mxu0 0.0
    %746 = vmatpush1.msra.mxu0 %v338
    %747 = vmatprep.subr.mxu0 0.0
    %748 = vmatpush1.msra.mxu0 %v339
    %749 = vmatprep.subr.mxu0 0.0
    %750 = vmatpush1.msra.mxu0 %v340
    %751 = vmatprep.subr.mxu0 0.0
    %752 = vmatpush1.msra.mxu0 0.0
    %753 = vmatprep.subr.mxu0 0.0
    %754 = vmatpush1.msra.mxu0 0.0
    %755 = vmatprep.subr.mxu0 0.0
    %756 = vmatpush1.msra.mxu0 0.0
    %757 = vmatprep.subr.mxu0 0.0
    %758 = vmatpush1.msra.mxu0 0.0
    %759 = vmatprep.subr.mxu0 0.0
    %760 = vmatpush1.msra.mxu0 0.0
    %761 = vmatprep.subr.mxu0 0.0
    %762 = vmatpush1.msra.mxu0 0.0
    %763 = vmatprep.subr.mxu0 0.0
    %764 = vmatpush1.msra.mxu0 0.0
    %765 = vmatprep.subr.mxu0 0.0
    %766 = vmatpush1.msra.mxu0 0.0
    %767 = vmatprep.subr.mxu0 0.0
    %768 = vmatpush1.msra.mxu0 0.0
    %769 = vmatprep.subr.mxu0 0.0
    %770 = vmatpush1.msra.mxu0 0.0
    %771 = vmatprep.subr.mxu0 0.0
    %772 = vmatpush1.msra.mxu0 0.0
    %773 = vmatprep.subr.mxu0 0.0
    %774 = vmatpush1.msra.mxu0 0.0
    %775 = vmatprep.subr.mxu0 0.0
    %776 = vmatpush1.msra.mxu0 0.0
    %777 = vmatprep.subr.mxu0 0.0
    %778 = vmatpush1.msra.mxu0 0.0
    %779 = vmatprep.subr.mxu0 0.0
    %780 = vmatpush1.msra.mxu0 0.0
    %781 = vmatprep.subr.mxu0 0.0
    %782 = vmatpush1.msra.mxu0 0.0
    %783 = vmatprep.subr.mxu0 0.0
    %784 = vmatpush1.msra.mxu0 0.0
    %785 = vmatprep.subr.mxu0 0.0
    %786 = vmatpush1.msra.mxu0 0.0
    %787 = vmatprep.subr.mxu0 0.0
    %788 = vmatpush1.msra.mxu0 0.0
    %789 = vmatprep.subr.mxu0 0.0
    %790 = vmatpush1.msra.mxu0 0.0
    %791 = vmatprep.subr.mxu0 0.0
    %792 = vmatpush1.msra.mxu0 0.0
    %793 = vmatprep.subr.mxu0 0.0
    %794 = vmatpush1.msra.mxu0 0.0
    %795 = vmatprep.subr.mxu0 0.0
    %796 = vmatpush1.msra.mxu0 0.0
    %797 = vmatprep.subr.mxu0 0.0
    %798 = vmatpush1.msra.mxu0 0.0
    %799 = vmatprep.subr.mxu0 0.0
    %800 = vmatpush1.msra.mxu0 0.0
    %801 = vmatprep.subr.mxu0 0.0
    %802 = vmatpush1.msra.mxu0 0.0
    %803 = vmatprep.subr.mxu0 0.0
    %804 = vmatpush1.msra.mxu0 0.0
    %805 = vmatprep.subr.mxu0 0.0
    %806 = vmatpush1.msra.mxu0 0.0
    %807 = vmatprep.mubr.f32.mxu0 0.0
    %808 = vmatmul.mubr.f32.gmra.mrb[0].mxu0 %v741
    %v809 = vpop.f32.mrb[0].mxu0
    %v810 = vadd.f32 0.0, %v809
    %v811 = vpop.f32.mrb[0].mxu0
    %812 = vdwg.mxu0
    %v814 = vrot.slane %v810, 7
    %v817 = vadd.f32 %v430, %v814
    %v818 = vadd.f32 %v435, %v810
    %v819 = vmul.f32 %v817, 0.5
    %v820 = vmul.f32 %v818, 0.5
    %v821 = vtanh.pop %v819
    %v822 = vtanh.pop %v820
    %v823 = vmul.f32 %v821, 0.5
    %v824 = vmul.f32 %v822, 0.5
    %v825 = vadd.f32 %v823, 0.5
    %v826 = vadd.f32 %v824, 0.5
    %v827 = vtanh.pop %v817
    %v828 = vtanh.pop %v818
    %v831 = vrot.slane %v711, 7
    %v832 = vrot.slane %v712, 7
    %v835 = vmul.f32 %v825, %v831
    %v836 = vmul.f32 %v826, %v832
    %839 = vrot.lane.b32.xlu0 %v827, 64
    %v840 = vpop.permute.xlu0 %839
    %841 = vrot.lane.b32.xlu0 %v828, 64
    %v842 = vpop.permute.xlu0 %841
    %v845 = vmul.f32 %v825, %v840
    %v846 = vmul.f32 %v826, %v842
    %849 = vrot.lane.b32.xlu0 %v845, 32
    %v850 = vpop.permute.xlu0 %849
    %851 = vrot.lane.b32.xlu0 %v846, 32
    %v852 = vpop.permute.xlu0 %851
    %v855 = vadd.f32 %v835, %v850
    %v856 = vadd.f32 %v836, %v852
    %v857 = vtanh.pop %v855
    %v858 = vtanh.pop %v856
    %861 = vrot.lane.b32.xlu0 %v857, 64
    %v862 = vpop.permute.xlu0 %861
    %863 = vrot.lane.b32.xlu0 %v858, 64
    %v864 = vpop.permute.xlu0 %863
    %v867 = vmul.f32 %v825, %v862
    %v868 = vmul.f32 %v826, %v864
    %871 = vrot.lane.b32.xlu0 %v867, 32
    %v872 = vpop.permute.xlu0 %871
    %873 = vrot.lane.b32.xlu0 %v868, 32
    %v874 = vpop.permute.xlu0 %873
    %vm877 = vcmask 254977
    %878 = vst.msk [vmem:[#allocation2] sm:$0x2] %vm877, %v872
    %879 = vst.msk [vmem:[#allocation2 + $0x8] sm:$0x2] %vm877, %v874
    %v880 = vrot.slane %v867, 1
    %v881 = vsel %vm737, %v868, %v880
    %882 = vrot.lane.b32.xlu0 %v881, 32
    %v883 = vpop.permute.xlu0 %882
    %v884 = vsel %vm356, %v883, 0
    %886 = vmatprep.subr.mxu0 0.0
    %887 = vmatpush1.msra.mxu0 %v337
    %888 = vmatprep.subr.mxu0 0.0
    %889 = vmatpush1.msra.mxu0 %v338
    %890 = vmatprep.subr.mxu0 0.0
    %891 = vmatpush1.msra.mxu0 %v339
    %892 = vmatprep.subr.mxu0 0.0
    %893 = vmatpush1.msra.mxu0 %v340
    %894 = vmatprep.subr.mxu0 0.0
    %895 = vmatpush1.msra.mxu0 0.0
    %896 = vmatprep.subr.mxu0 0.0
    %897 = vmatpush1.msra.mxu0 0.0
    %898 = vmatprep.subr.mxu0 0.0
    %899 = vmatpush1.msra.mxu0 0.0
    %900 = vmatprep.subr.mxu0 0.0
    %901 = vmatpush1.msra.mxu0 0.0
    %902 = vmatprep.subr.mxu0 0.0
    %903 = vmatpush1.msra.mxu0 0.0
    %904 = vmatprep.subr.mxu0 0.0
    %905 = vmatpush1.msra.mxu0 0.0
    %906 = vmatprep.subr.mxu0 0.0
    %907 = vmatpush1.msra.mxu0 0.0
    %908 = vmatprep.subr.mxu0 0.0
    %909 = vmatpush1.msra.mxu0 0.0
    %910 = vmatprep.subr.mxu0 0.0
    %911 = vmatpush1.msra.mxu0 0.0
    %912 = vmatprep.subr.mxu0 0.0
    %913 = vmatpush1.msra.mxu0 0.0
    %914 = vmatprep.subr.mxu0 0.0
    %915 = vmatpush1.msra.mxu0 0.0
    %916 = vmatprep.subr.mxu0 0.0
    %917 = vmatpush1.msra.mxu0 0.0
    %918 = vmatprep.subr.mxu0 0.0
    %919 = vmatpush1.msra.mxu0 0.0
    %920 = vmatprep.subr.mxu0 0.0
    %921 = vmatpush1.msra.mxu0 0.0
    %922 = vmatprep.subr.mxu0 0.0
    %923 = vmatpush1.msra.mxu0 0.0
    %924 = vmatprep.subr.mxu0 0.0
    %925 = vmatpush1.msra.mxu0 0.0
    %926 = vmatprep.subr.mxu0 0.0
    %927 = vmatpush1.msra.mxu0 0.0
    %928 = vmatprep.subr.mxu0 0.0
    %929 = vmatpush1.msra.mxu0 0.0
    %930 = vmatprep.subr.mxu0 0.0
    %931 = vmatpush1.msra.mxu0 0.0
    %932 = vmatprep.subr.mxu0 0.0
    %933 = vmatpush1.msra.mxu0 0.0
    %934 = vmatprep.subr.mxu0 0.0
    %935 = vmatpush1.msra.mxu0 0.0
    %936 = vmatprep.subr.mxu0 0.0
    %937 = vmatpush1.msra.mxu0 0.0
    %938 = vmatprep.subr.mxu0 0.0
    %939 = vmatpush1.msra.mxu0 0.0
    %940 = vmatprep.subr.mxu0 0.0
    %941 = vmatpush1.msra.mxu0 0.0
    %942 = vmatprep.subr.mxu0 0.0
    %943 = vmatpush1.msra.mxu0 0.0
    %944 = vmatprep.subr.mxu0 0.0
    %945 = vmatpush1.msra.mxu0 0.0
    %946 = vmatprep.subr.mxu0 0.0
    %947 = vmatpush1.msra.mxu0 0.0
    %948 = vmatprep.subr.mxu0 0.0
    %949 = vmatpush1.msra.mxu0 0.0
    %950 = vmatprep.mubr.f32.mxu0 0.0
    %951 = vmatmul.mubr.f32.gmra.mrb[0].mxu0 %v884
    %v952 = vpop.f32.mrb[0].mxu0
    %v953 = vadd.f32 0.0, %v952
    %v954 = vpop.f32.mrb[0].mxu0
    %955 = vdwg.mxu0
    %v957 = vrot.slane %v953, 6
    %v958 = vrot.slane %v953, 7
    %v961 = vadd.f32 %v430, %v957
    %v962 = vadd.f32 %v435, %v958
    %v963 = vmul.f32 %v961, 0.5
    %v964 = vmul.f32 %v962, 0.5
    %v965 = vtanh.pop %v963
    %v966 = vtanh.pop %v964
    %v967 = vmul.f32 %v965, 0.5
    %v968 = vmul.f32 %v966, 0.5
    %v969 = vadd.f32 %v967, 0.5
    %v970 = vadd.f32 %v968, 0.5
    %v971 = vtanh.pop %v961
    %v972 = vtanh.pop %v962
    %v975 = vrot.slane %v855, 7
    %v976 = vrot.slane %v856, 7
    %v979 = vmul.f32 %v969, %v975
    %v980 = vmul.f32 %v970, %v976
    %983 = vrot.lane.b32.xlu0 %v971, 64
    %v984 = vpop.permute.xlu0 %983
    %985 = vrot.lane.b32.xlu0 %v972, 64
    %v986 = vpop.permute.xlu0 %985
    %v989 = vmul.f32 %v969, %v984
    %v990 = vmul.f32 %v970, %v986
    %993 = vrot.lane.b32.xlu0 %v989, 32
    %v994 = vpop.permute.xlu0 %993
    %995 = vrot.lane.b32.xlu0 %v990, 32
    %v996 = vpop.permute.xlu0 %995
    %v999 = vadd.f32 %v979, %v994
    %v1000 = vadd.f32 %v980, %v996
    %v1001 = vtanh.pop %v999
    %v1002 = vtanh.pop %v1000
    %1005 = vrot.lane.b32.xlu0 %v1001, 64
    %v1006 = vpop.permute.xlu0 %1005
    %1007 = vrot.lane.b32.xlu0 %v1002, 64
    %v1008 = vpop.permute.xlu0 %1007
    %v1011 = vmul.f32 %v969, %v1006
    %v1012 = vmul.f32 %v970, %v1008
    %1015 = vrot.lane.b32.xlu0 %v1011, 32
    %v1016 = vpop.permute.xlu0 %1015
    %1017 = vrot.lane.b32.xlu0 %v1012, 32
    %v1018 = vpop.permute.xlu0 %1017
    %vm1021 = vcmask 256002
    %1022 = vst.msk [vmem:[#allocation2] sm:$0x4] %vm1021, %v1016
    %1023 = vst.msk [vmem:[#allocation2 + $0x8] sm:$0x4] %vm1021, %v1018
    %v1024 = vrot.slane %v1011, 2
    %v1025 = vrot.slane %v1012, 1
    %v1026 = vsel %vm737, %v1025, %v1024
    %1027 = vrot.lane.b32.xlu0 %v1026, 32
    %v1028 = vpop.permute.xlu0 %1027
    %v1029 = vsel %vm356, %v1028, 0
    %1031 = vmatprep.subr.mxu0 0.0
    %1032 = vmatpush1.msra.mxu0 %v337
    %1033 = vmatprep.subr.mxu0 0.0
    %1034 = vmatpush1.msra.mxu0 %v338
    %1035 = vmatprep.subr.mxu0 0.0
    %1036 = vmatpush1.msra.mxu0 %v339
    %1037 = vmatprep.subr.mxu0 0.0
    %1038 = vmatpush1.msra.mxu0 %v340
    %1039 = vmatprep.subr.mxu0 0.0
    %1040 = vmatpush1.msra.mxu0 0.0
    %1041 = vmatprep.subr.mxu0 0.0
    %1042 = vmatpush1.msra.mxu0 0.0
    %1043 = vmatprep.subr.mxu0 0.0
    %1044 = vmatpush1.msra.mxu0 0.0
    %1045 = vmatprep.subr.mxu0 0.0
    %1046 = vmatpush1.msra.mxu0 0.0
    %1047 = vmatprep.subr.mxu0 0.0
    %1048 = vmatpush1.msra.mxu0 0.0
    %1049 = vmatprep.subr.mxu0 0.0
    %1050 = vmatpush1.msra.mxu0 0.0
    %1051 = vmatprep.subr.mxu0 0.0
    %1052 = vmatpush1.msra.mxu0 0.0
    %1053 = vmatprep.subr.mxu0 0.0
    %1054 = vmatpush1.msra.mxu0 0.0
    %1055 = vmatprep.subr.mxu0 0.0
    %1056 = vmatpush1.msra.mxu0 0.0
    %1057 = vmatprep.subr.mxu0 0.0
    %1058 = vmatpush1.msra.mxu0 0.0
    %1059 = vmatprep.subr.mxu0 0.0
    %1060 = vmatpush1.msra.mxu0 0.0
    %1061 = vmatprep.subr.mxu0 0.0
    %1062 = vmatpush1.msra.mxu0 0.0
    %1063 = vmatprep.subr.mxu0 0.0
    %1064 = vmatpush1.msra.mxu0 0.0
    %1065 = vmatprep.subr.mxu0 0.0
    %1066 = vmatpush1.msra.mxu0 0.0
    %1067 = vmatprep.subr.mxu0 0.0
    %1068 = vmatpush1.msra.mxu0 0.0
    %1069 = vmatprep.subr.mxu0 0.0
    %1070 = vmatpush1.msra.mxu0 0.0
    %1071 = vmatprep.subr.mxu0 0.0
    %1072 = vmatpush1.msra.mxu0 0.0
    %1073 = vmatprep.subr.mxu0 0.0
    %1074 = vmatpush1.msra.mxu0 0.0
    %1075 = vmatprep.subr.mxu0 0.0
    %1076 = vmatpush1.msra.mxu0 0.0
    %1077 = vmatprep.subr.mxu0 0.0
    %1078 = vmatpush1.msra.mxu0 0.0
    %1079 = vmatprep.subr.mxu0 0.0
    %1080 = vmatpush1.msra.mxu0 0.0
    %1081 = vmatprep.subr.mxu0 0.0
    %1082 = vmatpush1.msra.mxu0 0.0
    %1083 = vmatprep.subr.mxu0 0.0
    %1084 = vmatpush1.msra.mxu0 0.0
    %1085 = vmatprep.subr.mxu0 0.0
    %1086 = vmatpush1.msra.mxu0 0.0
    %1087 = vmatprep.subr.mxu0 0.0
    %1088 = vmatpush1.msra.mxu0 0.0
    %1089 = vmatprep.subr.mxu0 0.0
    %1090 = vmatpush1.msra.mxu0 0.0
    %1091 = vmatprep.subr.mxu0 0.0
    %1092 = vmatpush1.msra.mxu0 0.0
    %1093 = vmatprep.subr.mxu0 0.0
    %1094 = vmatpush1.msra.mxu0 0.0
    %1095 = vmatprep.mubr.f32.mxu0 0.0
    %1096 = vmatmul.mubr.f32.gmra.mrb[0].mxu0 %v1029
    %v1097 = vpop.f32.mrb[0].mxu0
    %v1098 = vadd.f32 0.0, %v1097
    %v1099 = vpop.f32.mrb[0].mxu0
    %1100 = vdwg.mxu0
    %v1102 = vrot.slane %v1098, 5
    %v1103 = vrot.slane %v1098, 6
    %v1106 = vadd.f32 %v430, %v1102
    %v1107 = vadd.f32 %v435, %v1103
    %v1108 = vmul.f32 %v1106, 0.5
    %v1109 = vmul.f32 %v1107, 0.5
    %v1110 = vtanh.pop %v1108
    %v1111 = vtanh.pop %v1109
    %v1112 = vmul.f32 %v1110, 0.5
    %v1113 = vmul.f32 %v1111, 0.5
    %v1114 = vadd.f32 %v1112, 0.5
    %v1115 = vadd.f32 %v1113, 0.5
    %v1116 = vtanh.pop %v1106
    %v1117 = vtanh.pop %v1107
    %v1120 = vrot.slane %v999, 7
    %v1121 = vrot.slane %v1000, 7
    %v1124 = vmul.f32 %v1114, %v1120
    %v1125 = vmul.f32 %v1115, %v1121
    %1128 = vrot.lane.b32.xlu0 %v1116, 64
    %v1129 = vpop.permute.xlu0 %1128
    %1130 = vrot.lane.b32.xlu0 %v1117, 64
    %v1131 = vpop.permute.xlu0 %1130
    %v1134 = vmul.f32 %v1114, %v1129
    %v1135 = vmul.f32 %v1115, %v1131
    %1138 = vrot.lane.b32.xlu0 %v1134, 32
    %v1139 = vpop.permute.xlu0 %1138
    %1140 = vrot.lane.b32.xlu0 %v1135, 32
    %v1141 = vpop.permute.xlu0 %1140
    %v1144 = vadd.f32 %v1124, %v1139
    %v1145 = vadd.f32 %v1125, %v1141
    %v1146 = vtanh.pop %v1144
    %v1147 = vtanh.pop %v1145
    %1150 = vrot.lane.b32.xlu0 %v1146, 64
    %v1151 = vpop.permute.xlu0 %1150
    %1152 = vrot.lane.b32.xlu0 %v1147, 64
    %v1153 = vpop.permute.xlu0 %1152
    %v1156 = vmul.f32 %v1114, %v1151
    %v1157 = vmul.f32 %v1115, %v1153
    %1160 = vrot.lane.b32.xlu0 %v1156, 32
    %v1161 = vpop.permute.xlu0 %1160
    %1162 = vrot.lane.b32.xlu0 %v1157, 32
    %v1163 = vpop.permute.xlu0 %1162
    %vm1166 = vcmask 257027
    %1167 = vst.msk [vmem:[#allocation2] sm:$0x8] %vm1166, %v1161
    %1168 = vst.msk [vmem:[#allocation2 + $0x8] sm:$0x8] %vm1166, %v1163
    %v1169 = vrot.slane %v1156, 3
    %v1170 = vrot.slane %v1157, 2
    %v1171 = vsel %vm737, %v1170, %v1169
    %1172 = vrot.lane.b32.xlu0 %v1171, 32
    %v1173 = vpop.permute.xlu0 %1172
    %v1174 = vsel %vm356, %v1173, 0
    %1176 = vmatprep.subr.mxu0 0.0
    %1177 = vmatpush1.msra.mxu0 %v337
    %1178 = vmatprep.subr.mxu0 0.0
    %1179 = vmatpush1.msra.mxu0 %v338
    %1180 = vmatprep.subr.mxu0 0.0
    %1181 = vmatpush1.msra.mxu0 %v339
    %1182 = vmatprep.subr.mxu0 0.0
    %1183 = vmatpush1.msra.mxu0 %v340
    %1184 = vmatprep.subr.mxu0 0.0
    %1185 = vmatpush1.msra.mxu0 0.0
    %1186 = vmatprep.subr.mxu0 0.0
    %1187 = vmatpush1.msra.mxu0 0.0
    %1188 = vmatprep.subr.mxu0 0.0
    %1189 = vmatpush1.msra.mxu0 0.0
    %1190 = vmatprep.subr.mxu0 0.0
    %1191 = vmatpush1.msra.mxu0 0.0
    %1192 = vmatprep.subr.mxu0 0.0
    %1193 = vmatpush1.msra.mxu0 0.0
    %1194 = vmatprep.subr.mxu0 0.0
    %1195 = vmatpush1.msra.mxu0 0.0
    %1196 = vmatprep.subr.mxu0 0.0
    %1197 = vmatpush1.msra.mxu0 0.0
    %1198 = vmatprep.subr.mxu0 0.0
    %1199 = vmatpush1.msra.mxu0 0.0
    %1200 = vmatprep.subr.mxu0 0.0
    %1201 = vmatpush1.msra.mxu0 0.0
    %1202 = vmatprep.subr.mxu0 0.0
    %1203 = vmatpush1.msra.mxu0 0.0
    %1204 = vmatprep.subr.mxu0 0.0
    %1205 = vmatpush1.msra.mxu0 0.0
    %1206 = vmatprep.subr.mxu0 0.0
    %1207 = vmatpush1.msra.mxu0 0.0
    %1208 = vmatprep.subr.mxu0 0.0
    %1209 = vmatpush1.msra.mxu0 0.0
    %1210 = vmatprep.subr.mxu0 0.0
    %1211 = vmatpush1.msra.mxu0 0.0
    %1212 = vmatprep.subr.mxu0 0.0
    %1213 = vmatpush1.msra.mxu0 0.0
    %1214 = vmatprep.subr.mxu0 0.0
    %1215 = vmatpush1.msra.mxu0 0.0
    %1216 = vmatprep.subr.mxu0 0.0
    %1217 = vmatpush1.msra.mxu0 0.0
    %1218 = vmatprep.subr.mxu0 0.0
    %1219 = vmatpush1.msra.mxu0 0.0
    %1220 = vmatprep.subr.mxu0 0.0
    %1221 = vmatpush1.msra.mxu0 0.0
    %1222 = vmatprep.subr.mxu0 0.0
    %1223 = vmatpush1.msra.mxu0 0.0
    %1224 = vmatprep.subr.mxu0 0.0
    %1225 = vmatpush1.msra.mxu0 0.0
    %1226 = vmatprep.subr.mxu0 0.0
    %1227 = vmatpush1.msra.mxu0 0.0
    %1228 = vmatprep.subr.mxu0 0.0
    %1229 = vmatpush1.msra.mxu0 0.0
    %1230 = vmatprep.subr.mxu0 0.0
    %1231 = vmatpush1.msra.mxu0 0.0
    %1232 = vmatprep.subr.mxu0 0.0
    %1233 = vmatpush1.msra.mxu0 0.0
    %1234 = vmatprep.subr.mxu0 0.0
    %1235 = vmatpush1.msra.mxu0 0.0
    %1236 = vmatprep.subr.mxu0 0.0
    %1237 = vmatpush1.msra.mxu0 0.0
    %1238 = vmatprep.subr.mxu0 0.0
    %1239 = vmatpush1.msra.mxu0 0.0
    %1240 = vmatprep.mubr.f32.mxu0 0.0
    %1241 = vmatmul.mubr.f32.gmra.mrb[0].mxu0 %v1174
    %v1242 = vpop.f32.mrb[0].mxu0
    %v1243 = vadd.f32 0.0, %v1242
    %v1244 = vpop.f32.mrb[0].mxu0
    %1245 = vdwg.mxu0
    %v1247 = vrot.slane %v1243, 4
    %v1248 = vrot.slane %v1243, 5
    %v1251 = vadd.f32 %v430, %v1247
    %v1252 = vadd.f32 %v435, %v1248
    %v1253 = vmul.f32 %v1251, 0.5
    %v1254 = vmul.f32 %v1252, 0.5
    %v1255 = vtanh.pop %v1253
    %v1256 = vtanh.pop %v1254
    %v1257 = vmul.f32 %v1255, 0.5
    %v1258 = vmul.f32 %v1256, 0.5
    %v1259 = vadd.f32 %v1257, 0.5
    %v1260 = vadd.f32 %v1258, 0.5
    %v1261 = vtanh.pop %v1251
    %v1262 = vtanh.pop %v1252
    %v1265 = vrot.slane %v1144, 7
    %v1266 = vrot.slane %v1145, 7
    %v1269 = vmul.f32 %v1259, %v1265
    %v1270 = vmul.f32 %v1260, %v1266
    %1273 = vrot.lane.b32.xlu0 %v1261, 64
    %v1274 = vpop.permute.xlu0 %1273
    %1275 = vrot.lane.b32.xlu0 %v1262, 64
    %v1276 = vpop.permute.xlu0 %1275
    %v1279 = vmul.f32 %v1259, %v1274
    %v1280 = vmul.f32 %v1260, %v1276
    %1283 = vrot.lane.b32.xlu0 %v1279, 32
    %v1284 = vpop.permute.xlu0 %1283
    %1285 = vrot.lane.b32.xlu0 %v1280, 32
    %v1286 = vpop.permute.xlu0 %1285
    %v1289 = vadd.f32 %v1269, %v1284
    %v1290 = vadd.f32 %v1270, %v1286
    %v1291 = vtanh.pop %v1289
    %v1292 = vtanh.pop %v1290
    %1295 = vrot.lane.b32.xlu0 %v1291, 64
    %v1296 = vpop.permute.xlu0 %1295
    %1297 = vrot.lane.b32.xlu0 %v1292, 64
    %v1298 = vpop.permute.xlu0 %1297
    %v1301 = vmul.f32 %v1259, %v1296
    %v1302 = vmul.f32 %v1260, %v1298
    %1305 = vrot.lane.b32.xlu0 %v1301, 32
    %v1306 = vpop.permute.xlu0 %1305
    %1307 = vrot.lane.b32.xlu0 %v1302, 32
    %v1308 = vpop.permute.xlu0 %1307
    %vm1311 = vcmask 258052
    %1312 = vst.msk [vmem:[#allocation2] sm:$0x10] %vm1311, %v1306
    %1313 = vst.msk [vmem:[#allocation2 + $0x8] sm:$0x10] %vm1311, %v1308
    %v1314 = vrot.slane %v1301, 4
    %v1315 = vrot.slane %v1302, 3
    %v1316 = vsel %vm737, %v1315, %v1314
    %1317 = vrot.lane.b32.xlu0 %v1316, 32
    %v1318 = vpop.permute.xlu0 %1317
    %v1319 = vsel %vm356, %v1318, 0
    %1321 = vmatprep.subr.mxu0 0.0
    %1322 = vmatpush1.msra.mxu0 %v337
    %1323 = vmatprep.subr.mxu0 0.0
    %1324 = vmatpush1.msra.mxu0 %v338
    %1325 = vmatprep.subr.mxu0 0.0
    %1326 = vmatpush1.msra.mxu0 %v339
    %1327 = vmatprep.subr.mxu0 0.0
    %1328 = vmatpush1.msra.mxu0 %v340
    %1329 = vmatprep.subr.mxu0 0.0
    %1330 = vmatpush1.msra.mxu0 0.0
    %1331 = vmatprep.subr.mxu0 0.0
    %1332 = vmatpush1.msra.mxu0 0.0
    %1333 = vmatprep.subr.mxu0 0.0
    %1334 = vmatpush1.msra.mxu0 0.0
    %1335 = vmatprep.subr.mxu0 0.0
    %1336 = vmatpush1.msra.mxu0 0.0
    %1337 = vmatprep.subr.mxu0 0.0
    %1338 = vmatpush1.msra.mxu0 0.0
    %1339 = vmatprep.subr.mxu0 0.0
    %1340 = vmatpush1.msra.mxu0 0.0
    %1341 = vmatprep.subr.mxu0 0.0
    %1342 = vmatpush1.msra.mxu0 0.0
    %1343 = vmatprep.subr.mxu0 0.0
    %1344 = vmatpush1.msra.mxu0 0.0
    %1345 = vmatprep.subr.mxu0 0.0
    %1346 = vmatpush1.msra.mxu0 0.0
    %1347 = vmatprep.subr.mxu0 0.0
    %1348 = vmatpush1.msra.mxu0 0.0
    %1349 = vmatprep.subr.mxu0 0.0
    %1350 = vmatpush1.msra.mxu0 0.0
    %1351 = vmatprep.subr.mxu0 0.0
    %1352 = vmatpush1.msra.mxu0 0.0
    %1353 = vmatprep.subr.mxu0 0.0
    %1354 = vmatpush1.msra.mxu0 0.0
    %1355 = vmatprep.subr.mxu0 0.0
    %1356 = vmatpush1.msra.mxu0 0.0
    %1357 = vmatprep.subr.mxu0 0.0
    %1358 = vmatpush1.msra.mxu0 0.0
    %1359 = vmatprep.subr.mxu0 0.0
    %1360 = vmatpush1.msra.mxu0 0.0
    %1361 = vmatprep.subr.mxu0 0.0
    %1362 = vmatpush1.msra.mxu0 0.0
    %1363 = vmatprep.subr.mxu0 0.0
    %1364 = vmatpush1.msra.mxu0 0.0
    %1365 = vmatprep.subr.mxu0 0.0
    %1366 = vmatpush1.msra.mxu0 0.0
    %1367 = vmatprep.subr.mxu0 0.0
    %1368 = vmatpush1.msra.mxu0 0.0
    %1369 = vmatprep.subr.mxu0 0.0
    %1370 = vmatpush1.msra.mxu0 0.0
    %1371 = vmatprep.subr.mxu0 0.0
    %1372 = vmatpush1.msra.mxu0 0.0
    %1373 = vmatprep.subr.mxu0 0.0
    %1374 = vmatpush1.msra.mxu0 0.0
    %1375 = vmatprep.subr.mxu0 0.0
    %1376 = vmatpush1.msra.mxu0 0.0
    %1377 = vmatprep.subr.mxu0 0.0
    %1378 = vmatpush1.msra.mxu0 0.0
    %1379 = vmatprep.subr.mxu0 0.0
    %1380 = vmatpush1.msra.mxu0 0.0
    %1381 = vmatprep.subr.mxu0 0.0
    %1382 = vmatpush1.msra.mxu0 0.0
    %1383 = vmatprep.subr.mxu0 0.0
    %1384 = vmatpush1.msra.mxu0 0.0
    %1385 = vmatprep.mubr.f32.mxu0 0.0
    %1386 = vmatmul.mubr.f32.gmra.mrb[0].mxu0 %v1319
    %v1387 = vpop.f32.mrb[0].mxu0
    %v1388 = vadd.f32 0.0, %v1387
    %v1389 = vpop.f32.mrb[0].mxu0
    %1390 = vdwg.mxu0
    %v1392 = vrot.slane %v1388, 3
    %v1393 = vrot.slane %v1388, 4
    %v1396 = vadd.f32 %v430, %v1392
    %v1397 = vadd.f32 %v435, %v1393
    %v1398 = vmul.f32 %v1396, 0.5
    %v1399 = vmul.f32 %v1397, 0.5
    %v1400 = vtanh.pop %v1398
    %v1401 = vtanh.pop %v1399
    %v1402 = vmul.f32 %v1400, 0.5
    %v1403 = vmul.f32 %v1401, 0.5
    %v1404 = vadd.f32 %v1402, 0.5
    %v1405 = vadd.f32 %v1403, 0.5
    %v1406 = vtanh.pop %v1396
    %v1407 = vtanh.pop %v1397
    %v1410 = vrot.slane %v1289, 7
    %v1411 = vrot.slane %v1290, 7
    %v1414 = vmul.f32 %v1404, %v1410
    %v1415 = vmul.f32 %v1405, %v1411
    %1418 = vrot.lane.b32.xlu0 %v1406, 64
    %v1419 = vpop.permute.xlu0 %1418
    %1420 = vrot.lane.b32.xlu0 %v1407, 64
    %v1421 = vpop.permute.xlu0 %1420
    %v1424 = vmul.f32 %v1404, %v1419
    %v1425 = vmul.f32 %v1405, %v1421
    %1428 = vrot.lane.b32.xlu0 %v1424, 32
    %v1429 = vpop.permute.xlu0 %1428
    %1430 = vrot.lane.b32.xlu0 %v1425, 32
    %v1431 = vpop.permute.xlu0 %1430
    %v1434 = vadd.f32 %v1414, %v1429
    %v1435 = vadd.f32 %v1415, %v1431
    %v1436 = vtanh.pop %v1434
    %v1437 = vtanh.pop %v1435
    %1440 = vrot.lane.b32.xlu0 %v1436, 64
    %v1441 = vpop.permute.xlu0 %1440
    %1442 = vrot.lane.b32.xlu0 %v1437, 64
    %v1443 = vpop.permute.xlu0 %1442
    %v1446 = vmul.f32 %v1404, %v1441
    %v1447 = vmul.f32 %v1405, %v1443
    %1450 = vrot.lane.b32.xlu0 %v1446, 32
    %v1451 = vpop.permute.xlu0 %1450
    %1452 = vrot.lane.b32.xlu0 %v1447, 32
    %v1453 = vpop.permute.xlu0 %1452
    %vm1456 = vcmask 259077
    %1457 = vst.msk [vmem:[#allocation2] sm:$0x20] %vm1456, %v1451
    %1458 = vst.msk [vmem:[#allocation2 + $0x8] sm:$0x20] %vm1456, %v1453
    %v1459 = vrot.slane %v1446, 5
    %v1460 = vrot.slane %v1447, 4
    %v1461 = vsel %vm737, %v1460, %v1459
    %1462 = vrot.lane.b32.xlu0 %v1461, 32
    %v1463 = vpop.permute.xlu0 %1462
    %v1464 = vsel %vm356, %v1463, 0
    %1466 = vmatprep.subr.mxu0 0.0
    %1467 = vmatpush1.msra.mxu0 %v337
    %1468 = vmatprep.subr.mxu0 0.0
    %1469 = vmatpush1.msra.mxu0 %v338
    %1470 = vmatprep.subr.mxu0 0.0
    %1471 = vmatpush1.msra.mxu0 %v339
    %1472 = vmatprep.subr.mxu0 0.0
    %1473 = vmatpush1.msra.mxu0 %v340
    %1474 = vmatprep.subr.mxu0 0.0
    %1475 = vmatpush1.msra.mxu0 0.0
    %1476 = vmatprep.subr.mxu0 0.0
    %1477 = vmatpush1.msra.mxu0 0.0
    %1478 = vmatprep.subr.mxu0 0.0
    %1479 = vmatpush1.msra.mxu0 0.0
    %1480 = vmatprep.subr.mxu0 0.0
    %1481 = vmatpush1.msra.mxu0 0.0
    %1482 = vmatprep.subr.mxu0 0.0
    %1483 = vmatpush1.msra.mxu0 0.0
    %1484 = vmatprep.subr.mxu0 0.0
    %1485 = vmatpush1.msra.mxu0 0.0
    %1486 = vmatprep.subr.mxu0 0.0
    %1487 = vmatpush1.msra.mxu0 0.0
    %1488 = vmatprep.subr.mxu0 0.0
    %1489 = vmatpush1.msra.mxu0 0.0
    %1490 = vmatprep.subr.mxu0 0.0
    %1491 = vmatpush1.msra.mxu0 0.0
    %1492 = vmatprep.subr.mxu0 0.0
    %1493 = vmatpush1.msra.mxu0 0.0
    %1494 = vmatprep.subr.mxu0 0.0
    %1495 = vmatpush1.msra.mxu0 0.0
    %1496 = vmatprep.subr.mxu0 0.0
    %1497 = vmatpush1.msra.mxu0 0.0
    %1498 = vmatprep.subr.mxu0 0.0
    %1499 = vmatpush1.msra.mxu0 0.0
    %1500 = vmatprep.subr.mxu0 0.0
    %1501 = vmatpush1.msra.mxu0 0.0
    %1502 = vmatprep.subr.mxu0 0.0
    %1503 = vmatpush1.msra.mxu0 0.0
    %1504 = vmatprep.subr.mxu0 0.0
    %1505 = vmatpush1.msra.mxu0 0.0
    %1506 = vmatprep.subr.mxu0 0.0
    %1507 = vmatpush1.msra.mxu0 0.0
    %1508 = vmatprep.subr.mxu0 0.0
    %1509 = vmatpush1.msra.mxu0 0.0
    %1510 = vmatprep.subr.mxu0 0.0
    %1511 = vmatpush1.msra.mxu0 0.0
    %1512 = vmatprep.subr.mxu0 0.0
    %1513 = vmatpush1.msra.mxu0 0.0
    %1514 = vmatprep.subr.mxu0 0.0
    %1515 = vmatpush1.msra.mxu0 0.0
    %1516 = vmatprep.subr.mxu0 0.0
    %1517 = vmatpush1.msra.mxu0 0.0
    %1518 = vmatprep.subr.mxu0 0.0
    %1519 = vmatpush1.msra.mxu0 0.0
    %1520 = vmatprep.subr.mxu0 0.0
    %1521 = vmatpush1.msra.mxu0 0.0
    %1522 = vmatprep.subr.mxu0 0.0
    %1523 = vmatpush1.msra.mxu0 0.0
    %1524 = vmatprep.subr.mxu0 0.0
    %1525 = vmatpush1.msra.mxu0 0.0
    %1526 = vmatprep.subr.mxu0 0.0
    %1527 = vmatpush1.msra.mxu0 0.0
    %1528 = vmatprep.subr.mxu0 0.0
    %1529 = vmatpush1.msra.mxu0 0.0
    %1530 = vmatprep.mubr.f32.mxu0 0.0
    %1531 = vmatmul.mubr.f32.gmra.mrb[0].mxu0 %v1464
    %v1532 = vpop.f32.mrb[0].mxu0
    %v1533 = vadd.f32 0.0, %v1532
    %v1534 = vpop.f32.mrb[0].mxu0
    %1535 = vdwg.mxu0
    %v1537 = vrot.slane %v1533, 2
    %v1538 = vrot.slane %v1533, 3
    %v1541 = vadd.f32 %v430, %v1537
    %v1542 = vadd.f32 %v435, %v1538
    %v1543 = vmul.f32 %v1541, 0.5
    %v1544 = vmul.f32 %v1542, 0.5
    %v1545 = vtanh.pop %v1543
    %v1546 = vtanh.pop %v1544
    %v1547 = vmul.f32 %v1545, 0.5
    %v1548 = vmul.f32 %v1546, 0.5
    %v1549 = vadd.f32 %v1547, 0.5
    %v1550 = vadd.f32 %v1548, 0.5
    %v1551 = vtanh.pop %v1541
    %v1552 = vtanh.pop %v1542
    %v1555 = vrot.slane %v1434, 7
    %v1556 = vrot.slane %v1435, 7
    %v1559 = vmul.f32 %v1549, %v1555
    %v1560 = vmul.f32 %v1550, %v1556
    %1563 = vrot.lane.b32.xlu0 %v1551, 64
    %v1564 = vpop.permute.xlu0 %1563
    %1565 = vrot.lane.b32.xlu0 %v1552, 64
    %v1566 = vpop.permute.xlu0 %1565
    %v1569 = vmul.f32 %v1549, %v1564
    %v1570 = vmul.f32 %v1550, %v1566
    %1573 = vrot.lane.b32.xlu0 %v1569, 32
    %v1574 = vpop.permute.xlu0 %1573
    %1575 = vrot.lane.b32.xlu0 %v1570, 32
    %v1576 = vpop.permute.xlu0 %1575
    %v1579 = vadd.f32 %v1559, %v1574
    %v1580 = vadd.f32 %v1560, %v1576
    %v1581 = vtanh.pop %v1579
    %v1582 = vtanh.pop %v1580
    %1585 = vrot.lane.b32.xlu0 %v1581, 64
    %v1586 = vpop.permute.xlu0 %1585
    %1587 = vrot.lane.b32.xlu0 %v1582, 64
    %v1588 = vpop.permute.xlu0 %1587
    %v1591 = vmul.f32 %v1549, %v1586
    %v1592 = vmul.f32 %v1550, %v1588
    %1595 = vrot.lane.b32.xlu0 %v1591, 32
    %v1596 = vpop.permute.xlu0 %1595
    %1597 = vrot.lane.b32.xlu0 %v1592, 32
    %v1598 = vpop.permute.xlu0 %1597
    %vm1601 = vcmask 260102
    %1602 = vst.msk [vmem:[#allocation2] sm:$0x40] %vm1601, %v1596
    %1603 = vst.msk [vmem:[#allocation2 + $0x8] sm:$0x40] %vm1601, %v1598
    %v1604 = vrot.slane %v1591, 6
    %v1605 = vrot.slane %v1592, 5
    %v1606 = vsel %vm737, %v1605, %v1604
    %1607 = vrot.lane.b32.xlu0 %v1606, 32
    %v1608 = vpop.permute.xlu0 %1607
    %v1609 = vsel %vm356, %v1608, 0
    %1611 = vmatprep.subr.mxu0 0.0
    %1612 = vmatpush1.msra.mxu0 %v337
    %1613 = vmatprep.subr.mxu0 0.0
    %1614 = vmatpush1.msra.mxu0 %v338
    %1615 = vmatprep.subr.mxu0 0.0
    %1616 = vmatpush1.msra.mxu0 %v339
    %1617 = vmatprep.subr.mxu0 0.0
    %1618 = vmatpush1.msra.mxu0 %v340
    %1619 = vmatprep.subr.mxu0 0.0
    %1620 = vmatpush1.msra.mxu0 0.0
    %1621 = vmatprep.subr.mxu0 0.0
    %1622 = vmatpush1.msra.mxu0 0.0
    %1623 = vmatprep.subr.mxu0 0.0
    %1624 = vmatpush1.msra.mxu0 0.0
    %1625 = vmatprep.subr.mxu0 0.0
    %1626 = vmatpush1.msra.mxu0 0.0
    %1627 = vmatprep.subr.mxu0 0.0
    %1628 = vmatpush1.msra.mxu0 0.0
    %1629 = vmatprep.subr.mxu0 0.0
    %1630 = vmatpush1.msra.mxu0 0.0
    %1631 = vmatprep.subr.mxu0 0.0
    %1632 = vmatpush1.msra.mxu0 0.0
    %1633 = vmatprep.subr.mxu0 0.0
    %1634 = vmatpush1.msra.mxu0 0.0
    %1635 = vmatprep.subr.mxu0 0.0
    %1636 = vmatpush1.msra.mxu0 0.0
    %1637 = vmatprep.subr.mxu0 0.0
    %1638 = vmatpush1.msra.mxu0 0.0
    %1639 = vmatprep.subr.mxu0 0.0
    %1640 = vmatpush1.msra.mxu0 0.0
    %1641 = vmatprep.subr.mxu0 0.0
    %1642 = vmatpush1.msra.mxu0 0.0
    %1643 = vmatprep.subr.mxu0 0.0
    %1644 = vmatpush1.msra.mxu0 0.0
    %1645 = vmatprep.subr.mxu0 0.0
    %1646 = vmatpush1.msra.mxu0 0.0
    %1647 = vmatprep.subr.mxu0 0.0
    %1648 = vmatpush1.msra.mxu0 0.0
    %1649 = vmatprep.subr.mxu0 0.0
    %1650 = vmatpush1.msra.mxu0 0.0
    %1651 = vmatprep.subr.mxu0 0.0
    %1652 = vmatpush1.msra.mxu0 0.0
    %1653 = vmatprep.subr.mxu0 0.0
    %1654 = vmatpush1.msra.mxu0 0.0
    %1655 = vmatprep.subr.mxu0 0.0
    %1656 = vmatpush1.msra.mxu0 0.0
    %1657 = vmatprep.subr.mxu0 0.0
    %1658 = vmatpush1.msra.mxu0 0.0
    %1659 = vmatprep.subr.mxu0 0.0
    %1660 = vmatpush1.msra.mxu0 0.0
    %1661 = vmatprep.subr.mxu0 0.0
    %1662 = vmatpush1.msra.mxu0 0.0
    %1663 = vmatprep.subr.mxu0 0.0
    %1664 = vmatpush1.msra.mxu0 0.0
    %1665 = vmatprep.subr.mxu0 0.0
    %1666 = vmatpush1.msra.mxu0 0.0
    %1667 = vmatprep.subr.mxu0 0.0
    %1668 = vmatpush1.msra.mxu0 0.0
    %1669 = vmatprep.subr.mxu0 0.0
    %1670 = vmatpush1.msra.mxu0 0.0
    %1671 = vmatprep.subr.mxu0 0.0
    %1672 = vmatpush1.msra.mxu0 0.0
    %1673 = vmatprep.subr.mxu0 0.0
    %1674 = vmatpush1.msra.mxu0 0.0
    %1675 = vmatprep.mubr.f32.mxu0 0.0
    %1676 = vmatmul.mubr.f32.gmra.mrb[0].mxu0 %v1609
    %v1677 = vpop.f32.mrb[0].mxu0
    %v1678 = vadd.f32 0.0, %v1677
    %v1679 = vpop.f32.mrb[0].mxu0
    %1680 = vdwg.mxu0
    %v1682 = vrot.slane %v1678, 1
    %v1683 = vrot.slane %v1678, 2
    %v1686 = vadd.f32 %v430, %v1682
    %v1687 = vadd.f32 %v435, %v1683
    %v1688 = vmul.f32 %v1686, 0.5
    %v1689 = vmul.f32 %v1687, 0.5
    %v1690 = vtanh.pop %v1688
    %v1691 = vtanh.pop %v1689
    %v1692 = vmul.f32 %v1690, 0.5
    %v1693 = vmul.f32 %v1691, 0.5
    %v1694 = vadd.f32 %v1692, 0.5
    %v1695 = vadd.f32 %v1693, 0.5
    %v1696 = vtanh.pop %v1686
    %v1697 = vtanh.pop %v1687
    %v1700 = vrot.slane %v1579, 7
    %v1701 = vrot.slane %v1580, 7
    %v1704 = vmul.f32 %v1694, %v1700
    %v1705 = vmul.f32 %v1695, %v1701
    %1708 = vrot.lane.b32.xlu0 %v1696, 64
    %v1709 = vpop.permute.xlu0 %1708
    %1710 = vrot.lane.b32.xlu0 %v1697, 64
    %v1711 = vpop.permute.xlu0 %1710
    %v1714 = vmul.f32 %v1694, %v1709
    %v1715 = vmul.f32 %v1695, %v1711
    %1718 = vrot.lane.b32.xlu0 %v1714, 32
    %v1719 = vpop.permute.xlu0 %1718
    %1720 = vrot.lane.b32.xlu0 %v1715, 32
    %v1721 = vpop.permute.xlu0 %1720
    %v1724 = vadd.f32 %v1704, %v1719
    %v1725 = vadd.f32 %v1705, %v1721
    %v1726 = vtanh.pop %v1724
    %v1727 = vtanh.pop %v1725
    %1730 = vrot.lane.b32.xlu0 %v1726, 64
    %v1731 = vpop.permute.xlu0 %1730
    %1732 = vrot.lane.b32.xlu0 %v1727, 64
    %v1733 = vpop.permute.xlu0 %1732
    %v1736 = vmul.f32 %v1694, %v1731
    %v1737 = vmul.f32 %v1695, %v1733
    %1740 = vrot.lane.b32.xlu0 %v1736, 32
    %v1741 = vpop.permute.xlu0 %1740
    %1742 = vrot.lane.b32.xlu0 %v1737, 32
    %v1743 = vpop.permute.xlu0 %1742
    %vm1746 = vcmask 261127
    %1747 = vst.msk [vmem:[#allocation2] sm:$0x80] %vm1746, %v1741
    %1748 = vst.msk [vmem:[#allocation2 + $0x8] sm:$0x80] %vm1746, %v1743
    %v1749 = vld [vmem:[#allocation2] sm:$0xff]
    %v1750 = vld [vmem:[#allocation2 + $0x8] sm:$0xff]
    %v1751 = vld [vmem:[%s12] sm:$0xff]
    %v1752 = vld [vmem:[%s12 + $0x8] sm:$0xff]
    %v1753 = vld [vmem:[%s12 + $0x10] sm:$0xff]
    %v1754 = vld [vmem:[%s12 + $0x18] sm:$0xff]
    %v1755 = vld [vmem:[%s13] sm:$0x1]
    %v1757 = vlaneseq
    %v1758 = vshrl.u32 %v1757, 7
    %v1759 = vsub.s32 0, %v1758
    %v1760 = vrot.slane %v1755, %v1759
    %v1763 = vsel %vm356, %v1749, 0
    %v1766 = vsel %vm356, %v1750, 0
    %1768 = vmatprep.subr.mxu0 0.0
    %1769 = vmatpush1.msra.mxu0 %v1751
    %1770 = vmatprep.subr.mxu0 0.0
    %1771 = vmatpush1.msra.mxu0 %v1752
    %1772 = vmatprep.subr.mxu0 0.0
    %1773 = vmatpush1.msra.mxu0 %v1753
    %1774 = vmatprep.subr.mxu0 0.0
    %1775 = vmatpush1.msra.mxu0 %v1754
    %1776 = vmatprep.subr.mxu0 0.0
    %1777 = vmatpush1.msra.mxu0 0.0
    %1778 = vmatprep.subr.mxu0 0.0
    %1779 = vmatpush1.msra.mxu0 0.0
    %1780 = vmatprep.subr.mxu0 0.0
    %1781 = vmatpush1.msra.mxu0 0.0
    %1782 = vmatprep.subr.mxu0 0.0
    %1783 = vmatpush1.msra.mxu0 0.0
    %1784 = vmatprep.subr.mxu0 0.0
    %1785 = vmatpush1.msra.mxu0 0.0
    %1786 = vmatprep.subr.mxu0 0.0
    %1787 = vmatpush1.msra.mxu0 0.0
    %1788 = vmatprep.subr.mxu0 0.0
    %1789 = vmatpush1.msra.mxu0 0.0
    %1790 = vmatprep.subr.mxu0 0.0
    %1791 = vmatpush1.msra.mxu0 0.0
    %1792 = vmatprep.subr.mxu0 0.0
    %1793 = vmatpush1.msra.mxu0 0.0
    %1794 = vmatprep.subr.mxu0 0.0
    %1795 = vmatpush1.msra.mxu0 0.0
    %1796 = vmatprep.subr.mxu0 0.0
    %1797 = vmatpush1.msra.mxu0 0.0
    %1798 = vmatprep.subr.mxu0 0.0
    %1799 = vmatpush1.msra.mxu0 0.0
    %1800 = vmatprep.subr.mxu0 0.0
    %1801 = vmatpush1.msra.mxu0 0.0
    %1802 = vmatprep.subr.mxu0 0.0
    %1803 = vmatpush1.msra.mxu0 0.0
    %1804 = vmatprep.subr.mxu0 0.0
    %1805 = vmatpush1.msra.mxu0 0.0
    %1806 = vmatprep.subr.mxu0 0.0
    %1807 = vmatpush1.msra.mxu0 0.0
    %1808 = vmatprep.subr.mxu0 0.0
    %1809 = vmatpush1.msra.mxu0 0.0
    %1810 = vmatprep.subr.mxu0 0.0
    %1811 = vmatpush1.msra.mxu0 0.0
    %1812 = vmatprep.subr.mxu0 0.0
    %1813 = vmatpush1.msra.mxu0 0.0
    %1814 = vmatprep.subr.mxu0 0.0
    %1815 = vmatpush1.msra.mxu0 0.0
    %1816 = vmatprep.subr.mxu0 0.0
    %1817 = vmatpush1.msra.mxu0 0.0
    %1818 = vmatprep.subr.mxu0 0.0
    %1819 = vmatpush1.msra.mxu0 0.0
    %1820 = vmatprep.subr.mxu0 0.0
    %1821 = vmatpush1.msra.mxu0 0.0
    %1822 = vmatprep.subr.mxu0 0.0
    %1823 = vmatpush1.msra.mxu0 0.0
    %1824 = vmatprep.subr.mxu0 0.0
    %1825 = vmatpush1.msra.mxu0 0.0
    %1826 = vmatprep.subr.mxu0 0.0
    %1827 = vmatpush1.msra.mxu0 0.0
    %1828 = vmatprep.subr.mxu0 0.0
    %1829 = vmatpush1.msra.mxu0 0.0
    %1830 = vmatprep.subr.mxu0 0.0
    %1831 = vmatpush1.msra.mxu0 0.0
    %1832 = vmatprep.mubr.f32.mxu0 0.0
    %1833 = vmatmul.mubr.f32.gmra.mrb[0].mxu0 %v1763
    %v1834 = vpop.f32.mrb[0].mxu0
    %v1835 = vadd.f32 %v1760, %v1834
    %v1836 = vpop.f32.mrb[0].mxu0
    %1837 = vmatprep.mubr.f32.mxu0 0.0
    %1838 = vmatmul.mubr.f32.gmra.mrb[0].mxu0 %v1766
    %v1839 = vpop.f32.mrb[0].mxu0
    %v1840 = vadd.f32 %v1760, %v1839
    %v1841 = vpop.f32.mrb[0].mxu0
    %1842 = vdwg.mxu0
    %v1843 = vld [vmem:[#allocation15] sm:$0xff]
    %v1844 = vld [vmem:[#allocation15 + $0x8] sm:$0xff]
    %v1845 = vld [vmem:[#allocation15 + $0x10] sm:$0xff]
    %v1846 = vld [vmem:[#allocation15 + $0x18] sm:$0xff]
    %v1847 = vld [vmem:[#allocation17] sm:$0x1]
    %v1848 = vld [vmem:[#allocation18] sm:$0xff]
    %v1849 = vld [vmem:[#allocation18 + $0x8] sm:$0xff]
    %v1850 = vld [vmem:[#allocation18 + $0x10] sm:$0xff]
    %v1851 = vld [vmem:[#allocation18 + $0x18] sm:$0xff]
    %v1852 = vld [vmem:[%s15] sm:$0x1]
    %v1853 = vld [vmem:[%s16] sm:$0x1]
    %v1854 = vld [vmem:[%s17] sm:$0x1]
    %v1855 = vlaneseq
    %v1856 = vand.u32 %v1855, 127
    %v1857 = vcvt.s32.f32 %v1856
    %v1858 = vrot.slane %v1736, 7
    %v1859 = vrot.slane %v1737, 6
    %v1860 = vsel %vm737, %v1859, %v1858
    %1861 = vrot.lane.b32.xlu0 %v1860, 32
    %v1862 = vpop.permute.xlu0 %1861
    %v1863 = vsel %vm356, %v1862, 0
    %1865 = vmatprep.subr.mxu0 0.0
    %1866 = vmatpush1.msra.mxu0 %v341
    %1867 = vmatprep.subr.mxu0 0.0
    %1868 = vmatpush1.msra.mxu0 %v342
    %1869 = vmatprep.subr.mxu0 0.0
    %1870 = vmatpush1.msra.mxu0 %v343
    %1871 = vmatprep.subr.mxu0 0.0
    %1872 = vmatpush1.msra.mxu0 %v344
    %1873 = vmatprep.subr.mxu0 0.0
    %1874 = vmatpush1.msra.mxu0 0.0
    %1875 = vmatprep.subr.mxu0 0.0
    %1876 = vmatpush1.msra.mxu0 0.0
    %1877 = vmatprep.subr.mxu0 0.0
    %1878 = vmatpush1.msra.mxu0 0.0
    %1879 = vmatprep.subr.mxu0 0.0
    %1880 = vmatpush1.msra.mxu0 0.0
    %1881 = vmatprep.subr.mxu0 0.0
    %1882 = vmatpush1.msra.mxu0 0.0
    %1883 = vmatprep.subr.mxu0 0.0
    %1884 = vmatpush1.msra.mxu0 0.0
    %1885 = vmatprep.subr.mxu0 0.0
    %1886 = vmatpush1.msra.mxu0 0.0
    %1887 = vmatprep.subr.mxu0 0.0
    %1888 = vmatpush1.msra.mxu0 0.0
    %1889 = vmatprep.subr.mxu0 0.0
    %1890 = vmatpush1.msra.mxu0 0.0
    %1891 = vmatprep.subr.mxu0 0.0
    %1892 = vmatpush1.msra.mxu0 0.0
    %1893 = vmatprep.subr.mxu0 0.0
    %1894 = vmatpush1.msra.mxu0 0.0
    %1895 = vmatprep.subr.mxu0 0.0
    %1896 = vmatpush1.msra.mxu0 0.0
    %1897 = vmatprep.subr.mxu0 0.0
    %1898 = vmatpush1.msra.mxu0 0.0
    %1899 = vmatprep.subr.mxu0 0.0
    %1900 = vmatpush1.msra.mxu0 0.0
    %1901 = vmatprep.subr.mxu0 0.0
    %1902 = vmatpush1.msra.mxu0 0.0
    %1903 = vmatprep.subr.mxu0 0.0
    %1904 = vmatpush1.msra.mxu0 0.0
    %1905 = vmatprep.subr.mxu0 0.0
    %1906 = vmatpush1.msra.mxu0 0.0
    %1907 = vmatprep.subr.mxu0 0.0
    %1908 = vmatpush1.msra.mxu0 0.0
    %1909 = vmatprep.subr.mxu0 0.0
    %1910 = vmatpush1.msra.mxu0 0.0
    %1911 = vmatprep.subr.mxu0 0.0
    %1912 = vmatpush1.msra.mxu0 0.0
    %1913 = vmatprep.subr.mxu0 0.0
    %1914 = vmatpush1.msra.mxu0 0.0
    %1915 = vmatprep.subr.mxu0 0.0
    %1916 = vmatpush1.msra.mxu0 0.0
    %1917 = vmatprep.subr.mxu0 0.0
    %1918 = vmatpush1.msra.mxu0 0.0
    %1919 = vmatprep.subr.mxu0 0.0
    %1920 = vmatpush1.msra.mxu0 0.0
    %1921 = vmatprep.subr.mxu0 0.0
    %1922 = vmatpush1.msra.mxu0 0.0
    %1923 = vmatprep.subr.mxu0 0.0
    %1924 = vmatpush1.msra.mxu0 0.0
    %1925 = vmatprep.subr.mxu0 0.0
    %1926 = vmatpush1.msra.mxu0 0.0
    %1927 = vmatprep.subr.mxu0 0.0
    %1928 = vmatpush1.msra.mxu0 0.0
    %1929 = vmatprep.mubr.f32.mxu0 0.0
    %1930 = vmatmul.mubr.f32.gmra.mrb[0].mxu0 %v1863
    %v1931 = vpop.f32.mrb[0].mxu0
    %v1932 = vadd.f32 0.0, %v1931
    %v1933 = vpop.f32.mrb[0].mxu0
    %1934 = vdwg.mxu0
    %v1935 = vadd.f32 %v601, %v1932
    %v1936 = vmul.f32 %v1935, 0.5
    %v1937 = vtanh.pop %v1936
    %v1938 = vmul.f32 %v1937, 0.5
    %v1939 = vadd.f32 %v1938, 0.5
    %v1940 = vtanh.pop %v1935
    %v1943 = vrot.slane %v1724, 7
    %v1944 = vrot.slane %v1725, 6
    %v1945 = vsel %vm737, %v1944, %v1943
    %v1947 = vmul.f32 %v1939, %v1945
    %1949 = vrot.lane.b32.xlu0 %v1940, 64
    %v1950 = vpop.permute.xlu0 %1949
    %v1952 = vmul.f32 %v1939, %v1950
    %1954 = vrot.lane.b32.xlu0 %v1952, 32
    %v1955 = vpop.permute.xlu0 %1954
    %v1957 = vadd.f32 %v1947, %v1955
    %v1958 = vtanh.pop %v1957
    %1960 = vrot.lane.b32.xlu0 %v1958, 64
    %v1961 = vpop.permute.xlu0 %1960
    %v1963 = vmul.f32 %v1939, %v1961
    %v1965 = vlaneseq
    %v1966 = vshrl.u32 %v1965, 7
    %v1967 = vsub.s32 0, %v1966
    %v1968 = vrot.slane %v1847, %v1967
    %1971 = vrot.lane.b32.xlu0 %v1963, 32
    %v1972 = vpop.permute.xlu0 %1971
    %v1973 = vsel %vm356, %v1972, 0
    %1975 = vmatprep.subr.mxu0 0.0
    %1976 = vmatpush1.msra.mxu0 %v1843
    %1977 = vmatprep.subr.mxu0 0.0
    %1978 = vmatpush1.msra.mxu0 %v1844
    %1979 = vmatprep.subr.mxu0 0.0
    %1980 = vmatpush1.msra.mxu0 %v1845
    %1981 = vmatprep.subr.mxu0 0.0
    %1982 = vmatpush1.msra.mxu0 %v1846
    %1983 = vmatprep.subr.mxu0 0.0
    %1984 = vmatpush1.msra.mxu0 0.0
    %1985 = vmatprep.subr.mxu0 0.0
    %1986 = vmatpush1.msra.mxu0 0.0
    %1987 = vmatprep.subr.mxu0 0.0
    %1988 = vmatpush1.msra.mxu0 0.0
    %1989 = vmatprep.subr.mxu0 0.0
    %1990 = vmatpush1.msra.mxu0 0.0
    %1991 = vmatprep.subr.mxu0 0.0
    %1992 = vmatpush1.msra.mxu0 0.0
    %1993 = vmatprep.subr.mxu0 0.0
    %1994 = vmatpush1.msra.mxu0 0.0
    %1995 = vmatprep.subr.mxu0 0.0
    %1996 = vmatpush1.msra.mxu0 0.0
    %1997 = vmatprep.subr.mxu0 0.0
    %1998 = vmatpush1.msra.mxu0 0.0
    %1999 = vmatprep.subr.mxu0 0.0
    %2000 = vmatpush1.msra.mxu0 0.0
    %2001 = vmatprep.subr.mxu0 0.0
    %2002 = vmatpush1.msra.mxu0 0.0
    %2003 = vmatprep.subr.mxu0 0.0
    %2004 = vmatpush1.msra.mxu0 0.0
    %2005 = vmatprep.subr.mxu0 0.0
    %2006 = vmatpush1.msra.mxu0 0.0
    %2007 = vmatprep.subr.mxu0 0.0
    %2008 = vmatpush1.msra.mxu0 0.0
    %2009 = vmatprep.subr.mxu0 0.0
    %2010 = vmatpush1.msra.mxu0 0.0
    %2011 = vmatprep.subr.mxu0 0.0
    %2012 = vmatpush1.msra.mxu0 0.0
    %2013 = vmatprep.subr.mxu0 0.0
    %2014 = vmatpush1.msra.mxu0 0.0
    %2015 = vmatprep.subr.mxu0 0.0
    %2016 = vmatpush1.msra.mxu0 0.0
    %2017 = vmatprep.subr.mxu0 0.0
    %2018 = vmatpush1.msra.mxu0 0.0
    %2019 = vmatprep.subr.mxu0 0.0
    %2020 = vmatpush1.msra.mxu0 0.0
    %2021 = vmatprep.subr.mxu0 0.0
    %2022 = vmatpush1.msra.mxu0 0.0
    %2023 = vmatprep.subr.mxu0 0.0
    %2024 = vmatpush1.msra.mxu0 0.0
    %2025 = vmatprep.subr.mxu0 0.0
    %2026 = vmatpush1.msra.mxu0 0.0
    %2027 = vmatprep.subr.mxu0 0.0
    %2028 = vmatpush1.msra.mxu0 0.0
    %2029 = vmatprep.subr.mxu0 0.0
    %2030 = vmatpush1.msra.mxu0 0.0
    %2031 = vmatprep.subr.mxu0 0.0
    %2032 = vmatpush1.msra.mxu0 0.0
    %2033 = vmatprep.subr.mxu0 0.0
    %2034 = vmatpush1.msra.mxu0 0.0
    %2035 = vmatprep.subr.mxu0 0.0
    %2036 = vmatpush1.msra.mxu0 0.0
    %2037 = vmatprep.subr.mxu0 0.0
    %2038 = vmatpush1.msra.mxu0 0.0
    %2039 = vmatprep.mubr.f32.mxu0 0.0
    %2040 = vmatmul.mubr.f32.gmra.mrb[0].mxu0 %v1973
    %v2041 = vpop.f32.mrb[0].mxu0
    %v2042 = vadd.f32 %v1968, %v2041
    %v2043 = vpop.f32.mrb[0].mxu0
    %2044 = vdwg.mxu0
    %v2047 = vunpack.c.l.s4 1966171168
    %v2048 = vunpack.c.0.s8 %v2047
    %v2049 = vlaneseq
    %v2050 = vshrl.u32 %v2049, 7
    %v2051 = vsub.s32 %v2048, %v2050
    %v2052 = vrot.slane %v2042, %v2051
    %v2053 = vcombine.high %v2052, %v2052
    %v2055 = vunpack.c.l.s4 1966171168
    %v2056 = vunpack.c.0.s8 %v2055
    %v2057 = vlaneseq
    %v2058 = vshrl.u32 %v2057, 7
    %v2059 = vsub.s32 %v2056, %v2058
    %v2060 = vrot.slane %v2052, %v2059
    %v2062 = vunpack.c.l.s4 1966171168
    %v2063 = vunpack.c.0.s8 %v2062
    %v2064 = vlaneseq
    %v2065 = vshrl.u32 %v2064, 7
    %v2066 = vsub.s32 %v2063, %v2065
    %v2067 = vrot.slane %v2053, %v2066
    %v2068 = vlaneseq
    %v2069 = vshrl.u32 %v2068, 7
    %v2070 = vsub.s32 0, %v2069
    %v2071 = vrot.slane %v2060, %v2070
    %v2072 = vlaneseq
    %v2073 = vshrl.u32 %v2072, 7
    %v2074 = vsub.s32 0, %v2073
    %v2075 = vrot.slane %v2067, %v2074
    %v2078 = vadd.f32 %v2071, %v1835
    %v2079 = vadd.f32 %v2075, %v1840
    %v2080 = vtanh.pop %v2078
    %v2081 = vtanh.pop %v2079
    %v2083 = vlaneseq
    %v2084 = vshrl.u32 %v2083, 7
    %v2085 = vsub.s32 0, %v2084
    %v2086 = vrot.slane %v1853, %v2085
    %v2088 = vmul.f32 %v2080, %v2086
    %v2089 = vmul.f32 %v2081, %v2086
    %v2090 = vsel %vm356, %v2088, 0.0
    %2091 = vadd.xlane.f32.xlu0 %v2090
    %v2092 = vpop.xlane.xlu0 %2091
    %v2093 = vsel %vm356, %v2089, 0.0
    %2094 = vadd.xlane.f32.xlu0 %v2093
    %v2095 = vpop.xlane.xlu0 %2094
    %v2098 = vlaneseq
    %v2099 = vshrl.u32 %v2098, 7
    %v2100 = vsub.s32 %v1856, %v2099
    %v2101 = vrot.slane %v2092, %v2100
    %v2102 = vlaneseq
    %v2103 = vshrl.u32 %v2102, 7
    %v2104 = vsub.s32 %v1856, %v2103
    %v2105 = vrot.slane %v2095, %v2104
    %v2106 = vsel %vm737, %v2105, %v2101
    %vm2108 = vcmask 58368
    %v2109 = vsel %vm2108, %v2106, -inf
    %2110 = vmax.xlane.f32.xlu0 %v2109
    %v2111 = vpop.xlane.xlu0 %2110
    %v2113 = vlaneseq
    %v2114 = vshrl.u32 %v2113, 7
    %v2115 = vsub.s32 0, %v2114
    %v2116 = vrot.slane %v2111, %v2115
    %v2117 = vlaneseq
    %v2118 = vshrl.u32 %v2117, 7
    %v2119 = vsub.s32 1, %v2118
    %v2120 = vrot.slane %v2111, %v2119
    %v2123 = vsub.f32 %v2092, %v2116
    %v2124 = vsub.f32 %v2095, %v2120
    %v2125 = vmul.f32 %v2123, 1.442695
    %v2126 = vpow.pop %v2125
    %v2127 = vmul.f32 %v2124, 1.442695
    %v2128 = vpow.pop %v2127
    %2131 = vset.pattern.permute.xlu0 0
    %2132 = vperm.xlu0 %2131, %v2126
    %v2133 = vpop.permute.xlu0 %2132
    %2134 = vset.pattern.permute.xlu0 0
    %2135 = vperm.xlu0 %2134, %v2128
    %v2136 = vpop.permute.xlu0 %2135
    %v2137 = vlaneseq
    %v2138 = vshrl.u32 %v2137, 7
    %v2139 = vsub.s32 %v1856, %v2138
    %v2140 = vrot.slane %v2133, %v2139
    %v2141 = vlaneseq
    %v2142 = vshrl.u32 %v2141, 7
    %v2143 = vsub.s32 %v1856, %v2142
    %v2144 = vrot.slane %v2136, %v2143
    %v2145 = vsel %vm737, %v2144, %v2140
    %v2147 = vsel %vm2108, %v2145, 0.0
    %2148 = vadd.xlane.f32.xlu0 %v2147
    %v2149 = vpop.xlane.xlu0 %2148
    %v2151 = vlaneseq
    %v2152 = vshrl.u32 %v2151, 7
    %v2153 = vsub.s32 0, %v2152
    %v2154 = vrot.slane %v2149, %v2153
    %v2155 = vlaneseq
    %v2156 = vshrl.u32 %v2155, 7
    %v2157 = vsub.s32 1, %v2156
    %v2158 = vrot.slane %v2149, %v2157
    %v2161 = vrcp.pop %v2154
    %v2162 = vmul.f32 %v2126, %v2161
    %v2163 = vrcp.pop %v2158
    %v2164 = vmul.f32 %v2128, %v2163
    %2166 = vset.pattern.permute.xlu0 0
    %2167 = vperm.xlu0 %2166, %v2162
    %v2168 = vpop.permute.xlu0 %2167
    %2171 = vset.pattern.permute.xlu0 0
    %2172 = vperm.xlu0 %2171, %v2164
    %v2173 = vpop.permute.xlu0 %2172
    %v2175 = vmul.f32 %v2168, %v1835
    %v2176 = vmul.f32 %v2173, %v1840
    %v2177 = vsel %vm356, %v2175, 0.0
    %v2178 = vrot.slane %v2177, 4
    %v2179 = vadd.f32 %v2177, %v2178
    %v2180 = vrot.slane %v2179, 2
    %v2181 = vadd.f32 %v2179, %v2180
    %v2182 = vrot.slane %v2181, 1
    %v2183 = vadd.f32 %v2181, %v2182
    %v2184 = vsel %vm356, %v2176, 0.0
    %v2185 = vrot.slane %v2184, 4
    %v2186 = vadd.f32 %v2184, %v2185
    %v2187 = vrot.slane %v2186, 2
    %v2188 = vadd.f32 %v2186, %v2187
    %v2189 = vrot.slane %v2188, 1
    %v2190 = vadd.f32 %v2188, %v2189
    %v2192 = vlaneseq
    %v2193 = vshrl.u32 %v2192, 7
    %v2194 = vsub.s32 0, %v2193
    %v2195 = vrot.slane %v1852, %v2194
    %v2199 = vsel %vm737, %v2190, %v2183
    %v2200 = vsel %vm356, %v2199, 0
    %2202 = vmatprep.subr.mxu0 0.0
    %2203 = vmatpush1.msra.mxu0 %v1848
    %2204 = vmatprep.subr.mxu0 0.0
    %2205 = vmatpush1.msra.mxu0 %v1849
    %2206 = vmatprep.subr.mxu0 0.0
    %2207 = vmatpush1.msra.mxu0 %v1850
    %2208 = vmatprep.subr.mxu0 0.0
    %2209 = vmatpush1.msra.mxu0 %v1851
    %2210 = vmatprep.subr.mxu0 0.0
    %2211 = vmatpush1.msra.mxu0 0.0
    %2212 = vmatprep.subr.mxu0 0.0
    %2213 = vmatpush1.msra.mxu0 0.0
    %2214 = vmatprep.subr.mxu0 0.0
    %2215 = vmatpush1.msra.mxu0 0.0
    %2216 = vmatprep.subr.mxu0 0.0
    %2217 = vmatpush1.msra.mxu0 0.0
    %2218 = vmatprep.subr.mxu0 0.0
    %2219 = vmatpush1.msra.mxu0 0.0
    %2220 = vmatprep.subr.mxu0 0.0
    %2221 = vmatpush1.msra.mxu0 0.0
    %2222 = vmatprep.subr.mxu0 0.0
    %2223 = vmatpush1.msra.mxu0 0.0
    %2224 = vmatprep.subr.mxu0 0.0
    %2225 = vmatpush1.msra.mxu0 0.0
    %2226 = vmatprep.subr.mxu0 0.0
    %2227 = vmatpush1.msra.mxu0 0.0
    %2228 = vmatprep.subr.mxu0 0.0
    %2229 = vmatpush1.msra.mxu0 0.0
    %2230 = vmatprep.subr.mxu0 0.0
    %2231 = vmatpush1.msra.mxu0 0.0
    %2232 = vmatprep.subr.mxu0 0.0
    %2233 = vmatpush1.msra.mxu0 0.0
    %2234 = vmatprep.subr.mxu0 0.0
    %2235 = vmatpush1.msra.mxu0 0.0
    %2236 = vmatprep.subr.mxu0 0.0
    %2237 = vmatpush1.msra.mxu0 0.0
    %2238 = vmatprep.subr.mxu0 0.0
    %2239 = vmatpush1.msra.mxu0 0.0
    %2240 = vmatprep.subr.mxu0 0.0
    %2241 = vmatpush1.msra.mxu0 0.0
    %2242 = vmatprep.subr.mxu0 0.0
    %2243 = vmatpush1.msra.mxu0 0.0
    %2244 = vmatprep.subr.mxu0 0.0
    %2245 = vmatpush1.msra.mxu0 0.0
    %2246 = vmatprep.subr.mxu0 0.0
    %2247 = vmatpush1.msra.mxu0 0.0
    %2248 = vmatprep.subr.mxu0 0.0
    %2249 = vmatpush1.msra.mxu0 0.0
    %2250 = vmatprep.subr.mxu0 0.0
    %2251 = vmatpush1.msra.mxu0 0.0
    %2252 = vmatprep.subr.mxu0 0.0
    %2253 = vmatpush1.msra.mxu0 0.0
    %2254 = vmatprep.subr.mxu0 0.0
    %2255 = vmatpush1.msra.mxu0 0.0
    %2256 = vmatprep.subr.mxu0 0.0
    %2257 = vmatpush1.msra.mxu0 0.0
    %2258 = vmatprep.subr.mxu0 0.0
    %2259 = vmatpush1.msra.mxu0 0.0
    %2260 = vmatprep.subr.mxu0 0.0
    %2261 = vmatpush1.msra.mxu0 0.0
    %2262 = vmatprep.subr.mxu0 0.0
    %2263 = vmatpush1.msra.mxu0 0.0
    %2264 = vmatprep.subr.mxu0 0.0
    %2265 = vmatpush1.msra.mxu0 0.0
    %2266 = vmatprep.mubr.f32.mxu0 0.0
    %2267 = vmatmul.mubr.f32.gmra.mrb[0].mxu0 %v2200
    %v2268 = vpop.f32.mrb[0].mxu0
    %v2269 = vadd.f32 %v2195, %v2268
    %v2270 = vpop.f32.mrb[0].mxu0
    %2271 = vdwg.mxu0
    %v2274 = vunpack.c.l.s4 1966171168
    %v2275 = vunpack.c.0.s8 %v2274
    %v2276 = vlaneseq
    %v2277 = vshrl.u32 %v2276, 7
    %v2278 = vsub.s32 %v2275, %v2277
    %v2279 = vrot.slane %v2269, %v2278
    %v2280 = vcombine.high %v2279, %v2279
    %v2282 = vunpack.c.l.s4 1966171168
    %v2283 = vunpack.c.0.s8 %v2282
    %v2284 = vlaneseq
    %v2285 = vshrl.u32 %v2284, 7
    %v2286 = vsub.s32 %v2283, %v2285
    %v2287 = vrot.slane %v2279, %v2286
    %v2289 = vunpack.c.l.s4 1966171168
    %v2290 = vunpack.c.0.s8 %v2289
    %v2291 = vlaneseq
    %v2292 = vshrl.u32 %v2291, 7
    %v2293 = vsub.s32 %v2290, %v2292
    %v2294 = vrot.slane %v2280, %v2293
    %v2295 = vlaneseq
    %v2296 = vshrl.u32 %v2295, 7
    %v2297 = vsub.s32 0, %v2296
    %v2298 = vrot.slane %v2287, %v2297
    %v2299 = vlaneseq
    %v2300 = vshrl.u32 %v2299, 7
    %v2301 = vsub.s32 0, %v2300
    %v2302 = vrot.slane %v2294, %v2301
    %2307 = vrot.lane.b32.xlu0 %v1835, 96
    %v2308 = vpop.permute.xlu0 %2307
    %2309 = vrot.lane.b32.xlu0 %v1840, 96
    %v2310 = vpop.permute.xlu0 %2309
    %v2313 = vadd.f32 %v2298, %v2308
    %v2314 = vadd.f32 %v2302, %v2310
    %v2315 = vtanh.pop %v2313
    %v2316 = vtanh.pop %v2314
    %v2317 = vmul.f32 %v2315, 10.0
    %v2318 = vmul.f32 %v2316, 10.0
    %v2320 = vlaneseq
    %v2321 = vshrl.u32 %v2320, 7
    %v2322 = vsub.s32 0, %v2321
    %v2323 = vrot.slane %v1854, %v2322
    %v2325 = vmul.f32 %v2317, %v2323
    %v2326 = vmul.f32 %v2318, %v2323
    %v2327 = vsel %vm356, %v2325, 0.0
    %2328 = vadd.xlane.f32.xlu0 %v2327
    %v2329 = vpop.xlane.xlu0 %2328
    %v2330 = vsel %vm356, %v2326, 0.0
    %2331 = vadd.xlane.f32.xlu0 %v2330
    %v2332 = vpop.xlane.xlu0 %2331
    %v2335 = vlaneseq
    %v2336 = vshrl.u32 %v2335, 7
    %v2337 = vsub.s32 %v1856, %v2336
    %v2338 = vrot.slane %v2329, %v2337
    %v2339 = vlaneseq
    %v2340 = vshrl.u32 %v2339, 7
    %v2341 = vsub.s32 %v1856, %v2340
    %v2342 = vrot.slane %v2332, %v2341
    %v2343 = vsel %vm737, %v2342, %v2338
    %v2345 = vsel %vm2108, %v2343, -inf
    %2346 = vmax.xlane.f32.xlu0 %v2345
    %v2347 = vpop.xlane.xlu0 %2346
    %v2349 = vlaneseq
    %v2350 = vshrl.u32 %v2349, 7
    %v2351 = vsub.s32 0, %v2350
    %v2352 = vrot.slane %v2347, %v2351
    %v2353 = vlaneseq
    %v2354 = vshrl.u32 %v2353, 7
    %v2355 = vsub.s32 1, %v2354
    %v2356 = vrot.slane %v2347, %v2355
    %v2359 = vsub.f32 %v2329, %v2352
    %v2360 = vsub.f32 %v2332, %v2356
    %v2361 = vmul.f32 %v2359, 1.442695
    %v2362 = vpow.pop %v2361
    %v2363 = vmul.f32 %v2360, 1.442695
    %v2364 = vpow.pop %v2363
    %2367 = vset.pattern.permute.xlu0 0
    %2368 = vperm.xlu0 %2367, %v2362
    %v2369 = vpop.permute.xlu0 %2368
    %2370 = vset.pattern.permute.xlu0 0
    %2371 = vperm.xlu0 %2370, %v2364
    %v2372 = vpop.permute.xlu0 %2371
    %v2373 = vlaneseq
    %v2374 = vshrl.u32 %v2373, 7
    %v2375 = vsub.s32 %v1856, %v2374
    %v2376 = vrot.slane %v2369, %v2375
    %v2377 = vlaneseq
    %v2378 = vshrl.u32 %v2377, 7
    %v2379 = vsub.s32 %v1856, %v2378
    %v2380 = vrot.slane %v2372, %v2379
    %v2381 = vsel %vm737, %v2380, %v2376
    %v2383 = vsel %vm2108, %v2381, 0.0
    %2384 = vadd.xlane.f32.xlu0 %v2383
    %v2385 = vpop.xlane.xlu0 %2384
    %v2386 = vlog2.pop %v2385
    %v2387 = vmul.f32 %v2386, 0.6931472
    %v2389 = vlaneseq
    %v2390 = vshrl.u32 %v2389, 7
    %v2391 = vsub.s32 0, %v2390
    %v2392 = vrot.slane %v2387, %v2391
    %v2393 = vlaneseq
    %v2394 = vshrl.u32 %v2393, 7
    %v2395 = vsub.s32 1, %v2394
    %v2396 = vrot.slane %v2387, %v2395
    %v2399 = vsub.f32 %v2359, %v2392
    %v2400 = vsub.f32 %v2360, %v2396
    %2403 = vset.pattern.permute.xlu0 0
    %2404 = vperm.xlu0 %2403, %v2399
    %v2405 = vpop.permute.xlu0 %2404
    %2406 = vset.pattern.permute.xlu0 0
    %2407 = vperm.xlu0 %2406, %v2400
    %v2408 = vpop.permute.xlu0 %2407
    %v2409 = vlaneseq
    %v2410 = vshrl.u32 %v2409, 7
    %v2411 = vsub.s32 %v1856, %v2410
    %v2412 = vrot.slane %v2405, %v2411
    %v2413 = vlaneseq
    %v2414 = vshrl.u32 %v2413, 7
    %v2415 = vsub.s32 %v1856, %v2414
    %v2416 = vrot.slane %v2408, %v2415
    %v2417 = vsel %vm737, %v2416, %v2412
    %v2419 = vsel %vm2108, %v2417, -inf
    %2420 = vmax.xlane.f32.xlu0 %v2419
    %v2421 = vpop.xlane.xlu0 %2420
    %v2423 = vlaneseq
    %v2424 = vshrl.u32 %v2423, 7
    %v2425 = vsub.s32 0, %v2424
    %v2426 = vrot.slane %v2421, %v2425
    %v2427 = vlaneseq
    %v2428 = vshrl.u32 %v2427, 7
    %v2429 = vsub.s32 1, %v2428
    %v2430 = vrot.slane %v2421, %v2429
    %vm2433 = vcmp.eq.f32.partialorder %v2399, %v2426
    %vm2434 = vcmp.eq.f32.partialorder %v2400, %v2430
    %2437 = vbcast.lane.b32.xlu0 %v1857, 256
    %v2438 = vpop.permute.xlu0 %2437
    %v2440 = vsel %vm2433, %v2438, 8.0
    %v2441 = vsel %vm2434, %v2438, 8.0
    %2444 = vset.pattern.permute.xlu0 0
    %2445 = vperm.xlu0 %2444, %v2440
    %v2446 = vpop.permute.xlu0 %2445
    %2447 = vset.pattern.permute.xlu0 0
    %2448 = vperm.xlu0 %2447, %v2441
    %v2449 = vpop.permute.xlu0 %2448
    %v2450 = vlaneseq
    %v2451 = vshrl.u32 %v2450, 7
    %v2452 = vsub.s32 %v1856, %v2451
    %v2453 = vrot.slane %v2446, %v2452
    %v2454 = vlaneseq
    %v2455 = vshrl.u32 %v2454, 7
    %v2456 = vsub.s32 %v1856, %v2455
    %v2457 = vrot.slane %v2449, %v2456
    %v2458 = vsel %vm737, %v2457, %v2453
    %v2460 = vsel %vm2108, %v2458, inf
    %2461 = vmin.xlane.f32.xlu0 %v2460
    %v2462 = vpop.xlane.xlu0 %2461
    %vm2463 = vcmp.eq.f32.partialorder %v1857, %v2462
    %v2464 = vsel %vm2463, 1, 0
    %v2465 = vcvt.s32.f32 %v2464
    %v2466 = vmul.f32 %v2465, %v2417
    %v2467 = vsel %vm2108, %v2466, 0.0
    %2468 = vadd.xlane.f32.xlu0 %v2467
    %v2469 = vpop.xlane.xlu0 %2468
    %v2470 = vadd.f32 %v2469, 0.0
    %v2471 = vadd.f32 %v2465, 0.0
    %vm2472 = vcmask 1024
    %2473 = vst.msk [vmem:[#allocation20] sm:$0x3] %vm2472, %v2462
    %v2474 = vlaneseq
    %v2475 = vshrl.u32 %v2474, 7
    %v2476 = vsub.s32 0, %v2475
    %v2477 = vrot.slane %v2465, %v2476
    %2479 = vbcast.lane.b32.xlu0 %v2477, 256
    %v2480 = vpop.permute.xlu0 %2479
    %v2481 = vlaneseq
    %v2482 = vshrl.u32 %v2481, 7
    %v2483 = vsub.s32 1, %v2482
    %v2484 = vrot.slane %v2465, %v2483
    %2486 = vbcast.lane.b32.xlu0 %v2484, 256
    %v2487 = vpop.permute.xlu0 %2486
    %v2488 = vmul.f32 %v2480, %v516
    %v2489 = vmul.f32 %v2487, %v521
    %v2490 = vrot.slane %v2488, 4
    %v2491 = vadd.f32 %v2488, %v2490
    %v2492 = vrot.slane %v2491, 2
    %v2493 = vadd.f32 %v2491, %v2492
    %v2494 = vrot.slane %v2493, 1
    %v2495 = vadd.f32 %v2493, %v2494
    %v2496 = vrot.slane %v2489, 4
    %v2497 = vadd.f32 %v2489, %v2496
    %v2498 = vrot.slane %v2497, 2
    %v2499 = vadd.f32 %v2497, %v2498
    %v2500 = vrot.slane %v2499, 1
    %v2501 = vadd.f32 %v2499, %v2500
    %2502 = vmatprep.subr.mxu0 0.0
    %2503 = vmatpush1.msra.mxu0 %v341
    %2504 = vmatprep.subr.mxu0 0.0
    %2505 = vmatpush1.msra.mxu0 %v342
    %2506 = vmatprep.subr.mxu0 0.0
    %2507 = vmatpush1.msra.mxu0 %v343
    %2508 = vmatprep.subr.mxu0 0.0
    %2509 = vmatpush1.msra.mxu0 %v344
    %2510 = vmatprep.subr.mxu0 0.0
    %2511 = vmatpush1.msra.mxu0 0.0
    %2512 = vmatprep.subr.mxu0 0.0
    %2513 = vmatpush1.msra.mxu0 0.0
    %2514 = vmatprep.subr.mxu0 0.0
    %2515 = vmatpush1.msra.mxu0 0.0
    %2516 = vmatprep.subr.mxu0 0.0
    %2517 = vmatpush1.msra.mxu0 0.0
    %2518 = vmatprep.subr.mxu0 0.0
    %2519 = vmatpush1.msra.mxu0 0.0
    %2520 = vmatprep.subr.mxu0 0.0
    %2521 = vmatpush1.msra.mxu0 0.0
    %2522 = vmatprep.subr.mxu0 0.0
    %2523 = vmatpush1.msra.mxu0 0.0
    %2524 = vmatprep.subr.mxu0 0.0
    %2525 = vmatpush1.msra.mxu0 0.0
    %2526 = vmatprep.subr.mxu0 0.0
    %2527 = vmatpush1.msra.mxu0 0.0
    %2528 = vmatprep.subr.mxu0 0.0
    %2529 = vmatpush1.msra.mxu0 0.0
    %2530 = vmatprep.subr.mxu0 0.0
    %2531 = vmatpush1.msra.mxu0 0.0
    %2532 = vmatprep.subr.mxu0 0.0
    %2533 = vmatpush1.msra.mxu0 0.0
    %2534 = vmatprep.subr.mxu0 0.0
    %2535 = vmatpush1.msra.mxu0 0.0
    %2536 = vmatprep.subr.mxu0 0.0
    %2537 = vmatpush1.msra.mxu0 0.0
    %2538 = vmatprep.subr.mxu0 0.0
    %2539 = vmatpush1.msra.mxu0 0.0
    %2540 = vmatprep.subr.mxu0 0.0
    %2541 = vmatpush1.msra.mxu0 0.0
    %2542 = vmatprep.subr.mxu0 0.0
    %2543 = vmatpush1.msra.mxu0 0.0
    %2544 = vmatprep.subr.mxu0 0.0
    %2545 = vmatpush1.msra.mxu0 0.0
    %2546 = vmatprep.subr.mxu0 0.0
    %2547 = vmatpush1.msra.mxu0 0.0
    %2548 = vmatprep.subr.mxu0 0.0
    %2549 = vmatpush1.msra.mxu0 0.0
    %2550 = vmatprep.subr.mxu0 0.0
    %2551 = vmatpush1.msra.mxu0 0.0
    %2552 = vmatprep.subr.mxu0 0.0
    %2553 = vmatpush1.msra.mxu0 0.0
    %2554 = vmatprep.subr.mxu0 0.0
    %2555 = vmatpush1.msra.mxu0 0.0
    %2556 = vmatprep.subr.mxu0 0.0
    %2557 = vmatpush1.msra.mxu0 0.0
    %2558 = vmatprep.subr.mxu0 0.0
    %2559 = vmatpush1.msra.mxu0 0.0
    %2560 = vmatprep.subr.mxu0 0.0
    %2561 = vmatpush1.msra.mxu0 0.0
    %2562 = vmatprep.subr.mxu0 0.0
    %2563 = vmatpush1.msra.mxu0 0.0
    %2564 = vmatprep.subr.mxu0 0.0
    %2565 = vmatpush1.msra.mxu0 0.0
    %2566 = vmatprep.mubr.f32.mxu0 0.0
    %2567 = vmatmul.mubr.f32.gmra.mrb[0].mxu0 %v1973
    %v2568 = vpop.f32.mrb[0].mxu0
    %v2569 = vadd.f32 0.0, %v2568
    %v2570 = vpop.f32.mrb[0].mxu0
    %2571 = vdwg.mxu0
    %v2573 = vrot.slane %v2569, 1
    %v2576 = vadd.f32 %v2495, %v2569
    %v2577 = vadd.f32 %v2501, %v2573
    %v2578 = vmul.f32 %v2576, 0.5
    %v2579 = vmul.f32 %v2577, 0.5
    %v2580 = vtanh.pop %v2578
    %v2581 = vtanh.pop %v2579
    %v2582 = vmul.f32 %v2580, 0.5
    %v2583 = vmul.f32 %v2581, 0.5
    %v2584 = vadd.f32 %v2582, 0.5
    %v2585 = vadd.f32 %v2583, 0.5
    %v2586 = vtanh.pop %v2576
    %v2587 = vtanh.pop %v2577
    %v2589 = vrot.slane %v1957, 1
    %v2592 = vmul.f32 %v2584, %v1957
    %v2593 = vmul.f32 %v2585, %v2589
    %2596 = vrot.lane.b32.xlu0 %v2586, 64
    %v2597 = vpop.permute.xlu0 %2596
    %2598 = vrot.lane.b32.xlu0 %v2587, 64
    %v2599 = vpop.permute.xlu0 %2598
    %v2602 = vmul.f32 %v2584, %v2597
    %v2603 = vmul.f32 %v2585, %v2599
    %2606 = vrot.lane.b32.xlu0 %v2602, 32
    %v2607 = vpop.permute.xlu0 %2606
    %2608 = vrot.lane.b32.xlu0 %v2603, 32
    %v2609 = vpop.permute.xlu0 %2608
    %v2612 = vadd.f32 %v2592, %v2607
    %v2613 = vadd.f32 %v2593, %v2609
    %v2614 = vtanh.pop %v2612
    %v2615 = vtanh.pop %v2613
    %2618 = vrot.lane.b32.xlu0 %v2614, 64
    %v2619 = vpop.permute.xlu0 %2618
    %2620 = vrot.lane.b32.xlu0 %v2615, 64
    %v2621 = vpop.permute.xlu0 %2620
    %v2624 = vmul.f32 %v2584, %v2619
    %v2625 = vmul.f32 %v2585, %v2621
    %v2628 = vrot.slane %v2625, 7
    %v2629 = vsel %vm737, %v2628, %v2624
    %2630 = vrot.lane.b32.xlu0 %v2629, 32
    %v2631 = vpop.permute.xlu0 %2630
    %v2632 = vsel %vm356, %v2631, 0
    %2634 = vmatprep.subr.mxu0 0.0
    %2635 = vmatpush1.msra.mxu0 %v1843
    %2636 = vmatprep.subr.mxu0 0.0
    %2637 = vmatpush1.msra.mxu0 %v1844
    %2638 = vmatprep.subr.mxu0 0.0
    %2639 = vmatpush1.msra.mxu0 %v1845
    %2640 = vmatprep.subr.mxu0 0.0
    %2641 = vmatpush1.msra.mxu0 %v1846
    %2642 = vmatprep.subr.mxu0 0.0
    %2643 = vmatpush1.msra.mxu0 0.0
    %2644 = vmatprep.subr.mxu0 0.0
    %2645 = vmatpush1.msra.mxu0 0.0
    %2646 = vmatprep.subr.mxu0 0.0
    %2647 = vmatpush1.msra.mxu0 0.0
    %2648 = vmatprep.subr.mxu0 0.0
    %2649 = vmatpush1.msra.mxu0 0.0
    %2650 = vmatprep.subr.mxu0 0.0
    %2651 = vmatpush1.msra.mxu0 0.0
    %2652 = vmatprep.subr.mxu0 0.0
    %2653 = vmatpush1.msra.mxu0 0.0
    %2654 = vmatprep.subr.mxu0 0.0
    %2655 = vmatpush1.msra.mxu0 0.0
    %2656 = vmatprep.subr.mxu0 0.0
    %2657 = vmatpush1.msra.mxu0 0.0
    %2658 = vmatprep.subr.mxu0 0.0
    %2659 = vmatpush1.msra.mxu0 0.0
    %2660 = vmatprep.subr.mxu0 0.0
    %2661 = vmatpush1.msra.mxu0 0.0
    %2662 = vmatprep.subr.mxu0 0.0
    %2663 = vmatpush1.msra.mxu0 0.0
    %2664 = vmatprep.subr.mxu0 0.0
    %2665 = vmatpush1.msra.mxu0 0.0
    %2666 = vmatprep.subr.mxu0 0.0
    %2667 = vmatpush1.msra.mxu0 0.0
    %2668 = vmatprep.subr.mxu0 0.0
    %2669 = vmatpush1.msra.mxu0 0.0
    %2670 = vmatprep.subr.mxu0 0.0
    %2671 = vmatpush1.msra.mxu0 0.0
    %2672 = vmatprep.subr.mxu0 0.0
    %2673 = vmatpush1.msra.mxu0 0.0
    %2674 = vmatprep.subr.mxu0 0.0
    %2675 = vmatpush1.msra.mxu0 0.0
    %2676 = vmatprep.subr.mxu0 0.0
    %2677 = vmatpush1.msra.mxu0 0.0
    %2678 = vmatprep.subr.mxu0 0.0
    %2679 = vmatpush1.msra.mxu0 0.0
    %2680 = vmatprep.subr.mxu0 0.0
    %2681 = vmatpush1.msra.mxu0 0.0
    %2682 = vmatprep.subr.mxu0 0.0
    %2683 = vmatpush1.msra.mxu0 0.0
    %2684 = vmatprep.subr.mxu0 0.0
    %2685 = vmatpush1.msra.mxu0 0.0
    %2686 = vmatprep.subr.mxu0 0.0
    %2687 = vmatpush1.msra.mxu0 0.0
    %2688 = vmatprep.subr.mxu0 0.0
    %2689 = vmatpush1.msra.mxu0 0.0
    %2690 = vmatprep.subr.mxu0 0.0
    %2691 = vmatpush1.msra.mxu0 0.0
    %2692 = vmatprep.subr.mxu0 0.0
    %2693 = vmatpush1.msra.mxu0 0.0
    %2694 = vmatprep.subr.mxu0 0.0
    %2695 = vmatpush1.msra.mxu0 0.0
    %2696 = vmatprep.subr.mxu0 0.0
    %2697 = vmatpush1.msra.mxu0 0.0
    %2698 = vmatprep.mubr.f32.mxu0 0.0
    %2699 = vmatmul.mubr.f32.gmra.mrb[0].mxu0 %v2632
    %v2700 = vpop.f32.mrb[0].mxu0
    %v2701 = vadd.f32 %v1968, %v2700
    %v2702 = vpop.f32.mrb[0].mxu0
    %2703 = vdwg.mxu0
    %v2706 = vunpack.c.l.s4 1966171168
    %v2707 = vunpack.c.0.s8 %v2706
    %v2708 = vlaneseq
    %v2709 = vshrl.u32 %v2708, 7
    %v2710 = vsub.s32 %v2707, %v2709
    %v2711 = vrot.slane %v2701, %v2710
    %v2712 = vcombine.high %v2711, %v2711
    %v2714 = vunpack.c.l.s4 1966171168
    %v2715 = vunpack.c.0.s8 %v2714
    %v2716 = vlaneseq
    %v2717 = vshrl.u32 %v2716, 7
    %v2718 = vsub.s32 %v2715, %v2717
    %v2719 = vrot.slane %v2711, %v2718
    %v2721 = vunpack.c.l.s4 1966171168
    %v2722 = vunpack.c.0.s8 %v2721
    %v2723 = vlaneseq
    %v2724 = vshrl.u32 %v2723, 7
    %v2725 = vsub.s32 %v2722, %v2724
    %v2726 = vrot.slane %v2712, %v2725
    %v2727 = vlaneseq
    %v2728 = vshrl.u32 %v2727, 7
    %v2729 = vsub.s32 0, %v2728
    %v2730 = vrot.slane %v2719, %v2729
    %v2731 = vlaneseq
    %v2732 = vshrl.u32 %v2731, 7
    %v2733 = vsub.s32 0, %v2732
    %v2734 = vrot.slane %v2726, %v2733
    %v2737 = vadd.f32 %v2730, %v1835
    %v2738 = vadd.f32 %v2734, %v1840
    %v2739 = vtanh.pop %v2737
    %v2740 = vtanh.pop %v2738
    %v2741 = vmul.f32 %v2739, %v2086
    %v2742 = vmul.f32 %v2740, %v2086
    %v2743 = vsel %vm356, %v2741, 0.0
    %2744 = vadd.xlane.f32.xlu0 %v2743
    %v2745 = vpop.xlane.xlu0 %2744
    %v2746 = vsel %vm356, %v2742, 0.0
    %2747 = vadd.xlane.f32.xlu0 %v2746
    %v2748 = vpop.xlane.xlu0 %2747
    %v2749 = vmul.f32 %v2471, 1e+08
    %v2751 = vlaneseq
    %v2752 = vshrl.u32 %v2751, 7
    %v2753 = vsub.s32 0, %v2752
    %v2754 = vrot.slane %v2749, %v2753
    %2756 = vbcast.lane.b32.xlu0 %v2754, 256
    %v2757 = vpop.permute.xlu0 %2756
    %v2758 = vlaneseq
    %v2759 = vshrl.u32 %v2758, 7
    %v2760 = vsub.s32 1, %v2759
    %v2761 = vrot.slane %v2749, %v2760
    %2763 = vbcast.lane.b32.xlu0 %v2761, 256
    %v2764 = vpop.permute.xlu0 %2763
    %v2767 = vsub.f32 %v2745, %v2757
    %v2768 = vsub.f32 %v2748, %v2764
    %2771 = vset.pattern.permute.xlu0 0
    %2772 = vperm.xlu0 %2771, %v2767
    %v2773 = vpop.permute.xlu0 %2772
    %2774 = vset.pattern.permute.xlu0 0
    %2775 = vperm.xlu0 %2774, %v2768
    %v2776 = vpop.permute.xlu0 %2775
    %v2777 = vlaneseq
    %v2778 = vshrl.u32 %v2777, 7
    %v2779 = vsub.s32 %v1856, %v2778
    %v2780 = vrot.slane %v2773, %v2779
    %v2781 = vlaneseq
    %v2782 = vshrl.u32 %v2781, 7
    %v2783 = vsub.s32 %v1856, %v2782
    %v2784 = vrot.slane %v2776, %v2783
    %v2785 = vsel %vm737, %v2784, %v2780
    %v2787 = vsel %vm2108, %v2785, -inf
    %2788 = vmax.xlane.f32.xlu0 %v2787
    %v2789 = vpop.xlane.xlu0 %2788
    %v2791 = vlaneseq
    %v2792 = vshrl.u32 %v2791, 7
    %v2793 = vsub.s32 0, %v2792
    %v2794 = vrot.slane %v2789, %v2793
    %v2795 = vlaneseq
    %v2796 = vshrl.u32 %v2795, 7
    %v2797 = vsub.s32 1, %v2796
    %v2798 = vrot.slane %v2789, %v2797
    %v2801 = vsub.f32 %v2767, %v2794
    %v2802 = vsub.f32 %v2768, %v2798
    %v2803 = vmul.f32 %v2801, 1.442695
    %v2804 = vpow.pop %v2803
    %v2805 = vmul.f32 %v2802, 1.442695
    %v2806 = vpow.pop %v2805
    %2809 = vset.pattern.permute.xlu0 0
    %2810 = vperm.xlu0 %2809, %v2804
    %v2811 = vpop.permute.xlu0 %2810
    %2812 = vset.pattern.permute.xlu0 0
    %2813 = vperm.xlu0 %2812, %v2806
    %v2814 = vpop.permute.xlu0 %2813
    %v2815 = vlaneseq
    %v2816 = vshrl.u32 %v2815, 7
    %v2817 = vsub.s32 %v1856, %v2816
    %v2818 = vrot.slane %v2811, %v2817
    %v2819 = vlaneseq
    %v2820 = vshrl.u32 %v2819, 7
    %v2821 = vsub.s32 %v1856, %v2820
    %v2822 = vrot.slane %v2814, %v2821
    %v2823 = vsel %vm737, %v2822, %v2818
    %v2825 = vsel %vm2108, %v2823, 0.0
    %2826 = vadd.xlane.f32.xlu0 %v2825
    %v2827 = vpop.xlane.xlu0 %2826
    %v2829 = vlaneseq
    %v2830 = vshrl.u32 %v2829, 7
    %v2831 = vsub.s32 0, %v2830
    %v2832 = vrot.slane %v2827, %v2831
    %v2833 = vlaneseq
    %v2834 = vshrl.u32 %v2833, 7
    %v2835 = vsub.s32 1, %v2834
    %v2836 = vrot.slane %v2827, %v2835
    %v2839 = vrcp.pop %v2832
    %v2840 = vmul.f32 %v2804, %v2839
    %v2841 = vrcp.pop %v2836
    %v2842 = vmul.f32 %v2806, %v2841
    %2844 = vset.pattern.permute.xlu0 0
    %2845 = vperm.xlu0 %2844, %v2840
    %v2846 = vpop.permute.xlu0 %2845
    %2849 = vset.pattern.permute.xlu0 0
    %2850 = vperm.xlu0 %2849, %v2842
    %v2851 = vpop.permute.xlu0 %2850
    %v2853 = vmul.f32 %v2846, %v1835
    %v2854 = vmul.f32 %v2851, %v1840
    %v2855 = vsel %vm356, %v2853, 0.0
    %v2856 = vrot.slane %v2855, 4
    %v2857 = vadd.f32 %v2855, %v2856
    %v2858 = vrot.slane %v2857, 2
    %v2859 = vadd.f32 %v2857, %v2858
    %v2860 = vrot.slane %v2859, 1
    %v2861 = vadd.f32 %v2859, %v2860
    %v2862 = vsel %vm356, %v2854, 0.0
    %v2863 = vrot.slane %v2862, 4
    %v2864 = vadd.f32 %v2862, %v2863
    %v2865 = vrot.slane %v2864, 2
    %v2866 = vadd.f32 %v2864, %v2865
    %v2867 = vrot.slane %v2866, 1
    %v2868 = vadd.f32 %v2866, %v2867
    %v2871 = vsel %vm737, %v2868, %v2861
    %v2872 = vsel %vm356, %v2871, 0
    %2874 = vmatprep.subr.mxu0 0.0
    %2875 = vmatpush1.msra.mxu0 %v1848
    %2876 = vmatprep.subr.mxu0 0.0
    %2877 = vmatpush1.msra.mxu0 %v1849
    %2878 = vmatprep.subr.mxu0 0.0
    %2879 = vmatpush1.msra.mxu0 %v1850
    %2880 = vmatprep.subr.mxu0 0.0
    %2881 = vmatpush1.msra.mxu0 %v1851
    %2882 = vmatprep.subr.mxu0 0.0
    %2883 = vmatpush1.msra.mxu0 0.0
    %2884 = vmatprep.subr.mxu0 0.0
    %2885 = vmatpush1.msra.mxu0 0.0
    %2886 = vmatprep.subr.mxu0 0.0
    %2887 = vmatpush1.msra.mxu0 0.0
    %2888 = vmatprep.subr.mxu0 0.0
    %2889 = vmatpush1.msra.mxu0 0.0
    %2890 = vmatprep.subr.mxu0 0.0
    %2891 = vmatpush1.msra.mxu0 0.0
    %2892 = vmatprep.subr.mxu0 0.0
    %2893 = vmatpush1.msra.mxu0 0.0
    %2894 = vmatprep.subr.mxu0 0.0
    %2895 = vmatpush1.msra.mxu0 0.0
    %2896 = vmatprep.subr.mxu0 0.0
    %2897 = vmatpush1.msra.mxu0 0.0
    %2898 = vmatprep.subr.mxu0 0.0
    %2899 = vmatpush1.msra.mxu0 0.0
    %2900 = vmatprep.subr.mxu0 0.0
    %2901 = vmatpush1.msra.mxu0 0.0
    %2902 = vmatprep.subr.mxu0 0.0
    %2903 = vmatpush1.msra.mxu0 0.0
    %2904 = vmatprep.subr.mxu0 0.0
    %2905 = vmatpush1.msra.mxu0 0.0
    %2906 = vmatprep.subr.mxu0 0.0
    %2907 = vmatpush1.msra.mxu0 0.0
    %2908 = vmatprep.subr.mxu0 0.0
    %2909 = vmatpush1.msra.mxu0 0.0
    %2910 = vmatprep.subr.mxu0 0.0
    %2911 = vmatpush1.msra.mxu0 0.0
    %2912 = vmatprep.subr.mxu0 0.0
    %2913 = vmatpush1.msra.mxu0 0.0
    %2914 = vmatprep.subr.mxu0 0.0
    %2915 = vmatpush1.msra.mxu0 0.0
    %2916 = vmatprep.subr.mxu0 0.0
    %2917 = vmatpush1.msra.mxu0 0.0
    %2918 = vmatprep.subr.mxu0 0.0
    %2919 = vmatpush1.msra.mxu0 0.0
    %2920 = vmatprep.subr.mxu0 0.0
    %2921 = vmatpush1.msra.mxu0 0.0
    %2922 = vmatprep.subr.mxu0 0.0
    %2923 = vmatpush1.msra.mxu0 0.0
    %2924 = vmatprep.subr.mxu0 0.0
    %2925 = vmatpush1.msra.mxu0 0.0
    %2926 = vmatprep.subr.mxu0 0.0
    %2927 = vmatpush1.msra.mxu0 0.0
    %2928 = vmatprep.subr.mxu0 0.0
    %2929 = vmatpush1.msra.mxu0 0.0
    %2930 = vmatprep.subr.mxu0 0.0
    %2931 = vmatpush1.msra.mxu0 0.0
    %2932 = vmatprep.subr.mxu0 0.0
    %2933 = vmatpush1.msra.mxu0 0.0
    %2934 = vmatprep.subr.mxu0 0.0
    %2935 = vmatpush1.msra.mxu0 0.0
    %2936 = vmatprep.subr.mxu0 0.0
    %2937 = vmatpush1.msra.mxu0 0.0
    %2938 = vmatprep.mubr.f32.mxu0 0.0
    %2939 = vmatmul.mubr.f32.gmra.mrb[0].mxu0 %v2872
    %v2940 = vpop.f32.mrb[0].mxu0
    %v2941 = vadd.f32 %v2195, %v2940
    %v2942 = vpop.f32.mrb[0].mxu0
    %2943 = vdwg.mxu0
    %v2946 = vunpack.c.l.s4 1966171168
    %v2947 = vunpack.c.0.s8 %v2946
    %v2948 = vlaneseq
    %v2949 = vshrl.u32 %v2948, 7
    %v2950 = vsub.s32 %v2947, %v2949
    %v2951 = vrot.slane %v2941, %v2950
    %v2952 = vcombine.high %v2951, %v2951
    %v2954 = vunpack.c.l.s4 1966171168
    %v2955 = vunpack.c.0.s8 %v2954
    %v2956 = vlaneseq
    %v2957 = vshrl.u32 %v2956, 7
    %v2958 = vsub.s32 %v2955, %v2957
    %v2959 = vrot.slane %v2951, %v2958
    %v2961 = vunpack.c.l.s4 1966171168
    %v2962 = vunpack.c.0.s8 %v2961
    %v2963 = vlaneseq
    %v2964 = vshrl.u32 %v2963, 7
    %v2965 = vsub.s32 %v2962, %v2964
    %v2966 = vrot.slane %v2952, %v2965
    %v2967 = vlaneseq
    %v2968 = vshrl.u32 %v2967, 7
    %v2969 = vsub.s32 0, %v2968
    %v2970 = vrot.slane %v2959, %v2969
    %v2971 = vlaneseq
    %v2972 = vshrl.u32 %v2971, 7
    %v2973 = vsub.s32 0, %v2972
    %v2974 = vrot.slane %v2966, %v2973
    %v2977 = vadd.f32 %v2970, %v2308
    %v2978 = vadd.f32 %v2974, %v2310
    %v2979 = vtanh.pop %v2977
    %v2980 = vtanh.pop %v2978
    %v2981 = vmul.f32 %v2979, 10.0
    %v2982 = vmul.f32 %v2980, 10.0
    %v2983 = vmul.f32 %v2981, %v2323
    %v2984 = vmul.f32 %v2982, %v2323
    %v2985 = vsel %vm356, %v2983, 0.0
    %2986 = vadd.xlane.f32.xlu0 %v2985
    %v2987 = vpop.xlane.xlu0 %2986
    %v2988 = vsel %vm356, %v2984, 0.0
    %2989 = vadd.xlane.f32.xlu0 %v2988
    %v2990 = vpop.xlane.xlu0 %2989
    %v2991 = vsub.f32 %v2987, %v2757
    %v2992 = vsub.f32 %v2990, %v2764
    %2995 = vset.pattern.permute.xlu0 0
    %2996 = vperm.xlu0 %2995, %v2991
    %v2997 = vpop.permute.xlu0 %2996
    %2998 = vset.pattern.permute.xlu0 0
    %2999 = vperm.xlu0 %2998, %v2992
    %v3000 = vpop.permute.xlu0 %2999
    %v3001 = vlaneseq
    %v3002 = vshrl.u32 %v3001, 7
    %v3003 = vsub.s32 %v1856, %v3002
    %v3004 = vrot.slane %v2997, %v3003
    %v3005 = vlaneseq
    %v3006 = vshrl.u32 %v3005, 7
    %v3007 = vsub.s32 %v1856, %v3006
    %v3008 = vrot.slane %v3000, %v3007
    %v3009 = vsel %vm737, %v3008, %v3004
    %v3011 = vsel %vm2108, %v3009, -inf
    %3012 = vmax.xlane.f32.xlu0 %v3011
    %v3013 = vpop.xlane.xlu0 %3012
    %v3015 = vlaneseq
    %v3016 = vshrl.u32 %v3015, 7
    %v3017 = vsub.s32 0, %v3016
    %v3018 = vrot.slane %v3013, %v3017
    %v3019 = vlaneseq
    %v3020 = vshrl.u32 %v3019, 7
    %v3021 = vsub.s32 1, %v3020
    %v3022 = vrot.slane %v3013, %v3021
    %v3025 = vsub.f32 %v2991, %v3018
    %v3026 = vsub.f32 %v2992, %v3022
    %v3027 = vmul.f32 %v3025, 1.442695
    %v3028 = vpow.pop %v3027
    %v3029 = vmul.f32 %v3026, 1.442695
    %v3030 = vpow.pop %v3029
    %3033 = vset.pattern.permute.xlu0 0
    %3034 = vperm.xlu0 %3033, %v3028
    %v3035 = vpop.permute.xlu0 %3034
    %3036 = vset.pattern.permute.xlu0 0
    %3037 = vperm.xlu0 %3036, %v3030
    %v3038 = vpop.permute.xlu0 %3037
    %v3039 = vlaneseq
    %v3040 = vshrl.u32 %v3039, 7
    %v3041 = vsub.s32 %v1856, %v3040
    %v3042 = vrot.slane %v3035, %v3041
    %v3043 = vlaneseq
    %v3044 = vshrl.u32 %v3043, 7
    %v3045 = vsub.s32 %v1856, %v3044
    %v3046 = vrot.slane %v3038, %v3045
    %v3047 = vsel %vm737, %v3046, %v3042
    %v3049 = vsel %vm2108, %v3047, 0.0
    %3050 = vadd.xlane.f32.xlu0 %v3049
    %v3051 = vpop.xlane.xlu0 %3050
    %v3052 = vlog2.pop %v3051
    %v3053 = vmul.f32 %v3052, 0.6931472
    %v3055 = vlaneseq
    %v3056 = vshrl.u32 %v3055, 7
    %v3057 = vsub.s32 0, %v3056
    %v3058 = vrot.slane %v3053, %v3057
    %v3059 = vlaneseq
    %v3060 = vshrl.u32 %v3059, 7
    %v3061 = vsub.s32 1, %v3060
    %v3062 = vrot.slane %v3053, %v3061
    %v3065 = vsub.f32 %v3025, %v3058
    %v3066 = vsub.f32 %v3026, %v3062
    %3069 = vset.pattern.permute.xlu0 0
    %3070 = vperm.xlu0 %3069, %v3065
    %v3071 = vpop.permute.xlu0 %3070
    %3072 = vset.pattern.permute.xlu0 0
    %3073 = vperm.xlu0 %3072, %v3066
    %v3074 = vpop.permute.xlu0 %3073
    %v3075 = vlaneseq
    %v3076 = vshrl.u32 %v3075, 7
    %v3077 = vsub.s32 %v1856, %v3076
    %v3078 = vrot.slane %v3071, %v3077
    %v3079 = vlaneseq
    %v3080 = vshrl.u32 %v3079, 7
    %v3081 = vsub.s32 %v1856, %v3080
    %v3082 = vrot.slane %v3074, %v3081
    %v3083 = vsel %vm737, %v3082, %v3078
    %v3085 = vsel %vm2108, %v3083, -inf
    %3086 = vmax.xlane.f32.xlu0 %v3085
    %v3087 = vpop.xlane.xlu0 %3086
    %v3089 = vlaneseq
    %v3090 = vshrl.u32 %v3089, 7
    %v3091 = vsub.s32 0, %v3090
    %v3092 = vrot.slane %v3087, %v3091
    %v3093 = vlaneseq
    %v3094 = vshrl.u32 %v3093, 7
    %v3095 = vsub.s32 1, %v3094
    %v3096 = vrot.slane %v3087, %v3095
    %vm3099 = vcmp.eq.f32.partialorder %v3065, %v3092
    %vm3100 = vcmp.eq.f32.partialorder %v3066, %v3096
    %v3101 = vsel %vm3099, %v2438, 8.0
    %v3102 = vsel %vm3100, %v2438, 8.0
    %3105 = vset.pattern.permute.xlu0 0
    %3106 = vperm.xlu0 %3105, %v3101
    %v3107 = vpop.permute.xlu0 %3106
    %3108 = vset.pattern.permute.xlu0 0
    %3109 = vperm.xlu0 %3108, %v3102
    %v3110 = vpop.permute.xlu0 %3109
    %v3111 = vlaneseq
    %v3112 = vshrl.u32 %v3111, 7
    %v3113 = vsub.s32 %v1856, %v3112
    %v3114 = vrot.slane %v3107, %v3113
    %v3115 = vlaneseq
    %v3116 = vshrl.u32 %v3115, 7
    %v3117 = vsub.s32 %v1856, %v3116
    %v3118 = vrot.slane %v3110, %v3117
    %v3119 = vsel %vm737, %v3118, %v3114
    %v3121 = vsel %vm2108, %v3119, inf
    %3122 = vmin.xlane.f32.xlu0 %v3121
    %v3123 = vpop.xlane.xlu0 %3122
    %vm3124 = vcmp.eq.f32.partialorder %v1857, %v3123
    %v3125 = vsel %vm3124, 1, 0
    %v3126 = vcvt.s32.f32 %v3125
    %v3127 = vmul.f32 %v3126, %v3083
    %v3128 = vsel %vm2108, %v3127, 0.0
    %3129 = vadd.xlane.f32.xlu0 %v3128
    %v3130 = vpop.xlane.xlu0 %3129
    %v3131 = vadd.f32 %v2470, %v3130
    %v3132 = vadd.f32 %v2471, %v3126
    %vm3133 = vcmask 9224
    %3134 = vst.msk [vmem:[#allocation20] sm:$0x3] %vm3133, %v3123
    %v3135 = vlaneseq
    %v3136 = vshrl.u32 %v3135, 7
    %v3137 = vsub.s32 0, %v3136
    %v3138 = vrot.slane %v3126, %v3137
    %3140 = vbcast.lane.b32.xlu0 %v3138, 256
    %v3141 = vpop.permute.xlu0 %3140
    %v3142 = vlaneseq
    %v3143 = vshrl.u32 %v3142, 7
    %v3144 = vsub.s32 1, %v3143
    %v3145 = vrot.slane %v3126, %v3144
    %3147 = vbcast.lane.b32.xlu0 %v3145, 256
    %v3148 = vpop.permute.xlu0 %3147
    %v3149 = vmul.f32 %v3141, %v516
    %v3150 = vmul.f32 %v3148, %v521
    %v3151 = vrot.slane %v3149, 4
    %v3152 = vadd.f32 %v3149, %v3151
    %v3153 = vrot.slane %v3152, 2
    %v3154 = vadd.f32 %v3152, %v3153
    %v3155 = vrot.slane %v3154, 1
    %v3156 = vadd.f32 %v3154, %v3155
    %v3157 = vrot.slane %v3150, 4
    %v3158 = vadd.f32 %v3150, %v3157
    %v3159 = vrot.slane %v3158, 2
    %v3160 = vadd.f32 %v3158, %v3159
    %v3161 = vrot.slane %v3160, 1
    %v3162 = vadd.f32 %v3160, %v3161
    %3163 = vmatprep.subr.mxu0 0.0
    %3164 = vmatpush1.msra.mxu0 %v341
    %3165 = vmatprep.subr.mxu0 0.0
    %3166 = vmatpush1.msra.mxu0 %v342
    %3167 = vmatprep.subr.mxu0 0.0
    %3168 = vmatpush1.msra.mxu0 %v343
    %3169 = vmatprep.subr.mxu0 0.0
    %3170 = vmatpush1.msra.mxu0 %v344
    %3171 = vmatprep.subr.mxu0 0.0
    %3172 = vmatpush1.msra.mxu0 0.0
    %3173 = vmatprep.subr.mxu0 0.0
    %3174 = vmatpush1.msra.mxu0 0.0
    %3175 = vmatprep.subr.mxu0 0.0
    %3176 = vmatpush1.msra.mxu0 0.0
    %3177 = vmatprep.subr.mxu0 0.0
    %3178 = vmatpush1.msra.mxu0 0.0
    %3179 = vmatprep.subr.mxu0 0.0
    %3180 = vmatpush1.msra.mxu0 0.0
    %3181 = vmatprep.subr.mxu0 0.0
    %3182 = vmatpush1.msra.mxu0 0.0
    %3183 = vmatprep.subr.mxu0 0.0
    %3184 = vmatpush1.msra.mxu0 0.0
    %3185 = vmatprep.subr.mxu0 0.0
    %3186 = vmatpush1.msra.mxu0 0.0
    %3187 = vmatprep.subr.mxu0 0.0
    %3188 = vmatpush1.msra.mxu0 0.0
    %3189 = vmatprep.subr.mxu0 0.0
    %3190 = vmatpush1.msra.mxu0 0.0
    %3191 = vmatprep.subr.mxu0 0.0
    %3192 = vmatpush1.msra.mxu0 0.0
    %3193 = vmatprep.subr.mxu0 0.0
    %3194 = vmatpush1.msra.mxu0 0.0
    %3195 = vmatprep.subr.mxu0 0.0
    %3196 = vmatpush1.msra.mxu0 0.0
    %3197 = vmatprep.subr.mxu0 0.0
    %3198 = vmatpush1.msra.mxu0 0.0
    %3199 = vmatprep.subr.mxu0 0.0
    %3200 = vmatpush1.msra.mxu0 0.0
    %3201 = vmatprep.subr.mxu0 0.0
    %3202 = vmatpush1.msra.mxu0 0.0
    %3203 = vmatprep.subr.mxu0 0.0
    %3204 = vmatpush1.msra.mxu0 0.0
    %3205 = vmatprep.subr.mxu0 0.0
    %3206 = vmatpush1.msra.mxu0 0.0
    %3207 = vmatprep.subr.mxu0 0.0
    %3208 = vmatpush1.msra.mxu0 0.0
    %3209 = vmatprep.subr.mxu0 0.0
    %3210 = vmatpush1.msra.mxu0 0.0
    %3211 = vmatprep.subr.mxu0 0.0
    %3212 = vmatpush1.msra.mxu0 0.0
    %3213 = vmatprep.subr.mxu0 0.0
    %3214 = vmatpush1.msra.mxu0 0.0
    %3215 = vmatprep.subr.mxu0 0.0
    %3216 = vmatpush1.msra.mxu0 0.0
    %3217 = vmatprep.subr.mxu0 0.0
    %3218 = vmatpush1.msra.mxu0 0.0
    %3219 = vmatprep.subr.mxu0 0.0
    %3220 = vmatpush1.msra.mxu0 0.0
    %3221 = vmatprep.subr.mxu0 0.0
    %3222 = vmatpush1.msra.mxu0 0.0
    %3223 = vmatprep.subr.mxu0 0.0
    %3224 = vmatpush1.msra.mxu0 0.0
    %3225 = vmatprep.subr.mxu0 0.0
    %3226 = vmatpush1.msra.mxu0 0.0
    %3227 = vmatprep.mubr.f32.mxu0 0.0
    %3228 = vmatmul.mubr.f32.gmra.mrb[0].mxu0 %v2632
    %v3229 = vpop.f32.mrb[0].mxu0
    %v3230 = vadd.f32 0.0, %v3229
    %v3231 = vpop.f32.mrb[0].mxu0
    %3232 = vdwg.mxu0
    %v3234 = vrot.slane %v3230, 1
    %v3237 = vadd.f32 %v3156, %v3230
    %v3238 = vadd.f32 %v3162, %v3234
    %v3239 = vmul.f32 %v3237, 0.5
    %v3240 = vmul.f32 %v3238, 0.5
    %v3241 = vtanh.pop %v3239
    %v3242 = vtanh.pop %v3240
    %v3243 = vmul.f32 %v3241, 0.5
    %v3244 = vmul.f32 %v3242, 0.5
    %v3245 = vadd.f32 %v3243, 0.5
    %v3246 = vadd.f32 %v3244, 0.5
    %v3247 = vtanh.pop %v3237
    %v3248 = vtanh.pop %v3238
    %v3249 = vmul.f32 %v3245, %v2612
    %v3250 = vmul.f32 %v3246, %v2613
    %3253 = vrot.lane.b32.xlu0 %v3247, 64
    %v3254 = vpop.permute.xlu0 %3253
    %3255 = vrot.lane.b32.xlu0 %v3248, 64
    %v3256 = vpop.permute.xlu0 %3255
    %v3259 = vmul.f32 %v3245, %v3254
    %v3260 = vmul.f32 %v3246, %v3256
    %3263 = vrot.lane.b32.xlu0 %v3259, 32
    %v3264 = vpop.permute.xlu0 %3263
    %3265 = vrot.lane.b32.xlu0 %v3260, 32
    %v3266 = vpop.permute.xlu0 %3265
    %v3269 = vadd.f32 %v3249, %v3264
    %v3270 = vadd.f32 %v3250, %v3266
    %v3271 = vtanh.pop %v3269
    %v3272 = vtanh.pop %v3270
    %3275 = vrot.lane.b32.xlu0 %v3271, 64
    %v3276 = vpop.permute.xlu0 %3275
    %3277 = vrot.lane.b32.xlu0 %v3272, 64
    %v3278 = vpop.permute.xlu0 %3277
    %v3281 = vmul.f32 %v3245, %v3276
    %v3282 = vmul.f32 %v3246, %v3278
    %v3285 = vrot.slane %v3282, 7
    %v3286 = vsel %vm737, %v3285, %v3281
    %3287 = vrot.lane.b32.xlu0 %v3286, 32
    %v3288 = vpop.permute.xlu0 %3287
    %v3289 = vsel %vm356, %v3288, 0
    %3291 = vmatprep.subr.mxu0 0.0
    %3292 = vmatpush1.msra.mxu0 %v1843
    %3293 = vmatprep.subr.mxu0 0.0
    %3294 = vmatpush1.msra.mxu0 %v1844
    %3295 = vmatprep.subr.mxu0 0.0
    %3296 = vmatpush1.msra.mxu0 %v1845
    %3297 = vmatprep.subr.mxu0 0.0
    %3298 = vmatpush1.msra.mxu0 %v1846
    %3299 = vmatprep.subr.mxu0 0.0
    %3300 = vmatpush1.msra.mxu0 0.0
    %3301 = vmatprep.subr.mxu0 0.0
    %3302 = vmatpush1.msra.mxu0 0.0
    %3303 = vmatprep.subr.mxu0 0.0
    %3304 = vmatpush1.msra.mxu0 0.0
    %3305 = vmatprep.subr.mxu0 0.0
    %3306 = vmatpush1.msra.mxu0 0.0
    %3307 = vmatprep.subr.mxu0 0.0
    %3308 = vmatpush1.msra.mxu0 0.0
    %3309 = vmatprep.subr.mxu0 0.0
    %3310 = vmatpush1.msra.mxu0 0.0
    %3311 = vmatprep.subr.mxu0 0.0
    %3312 = vmatpush1.msra.mxu0 0.0
    %3313 = vmatprep.subr.mxu0 0.0
    %3314 = vmatpush1.msra.mxu0 0.0
    %3315 = vmatprep.subr.mxu0 0.0
    %3316 = vmatpush1.msra.mxu0 0.0
    %3317 = vmatprep.subr.mxu0 0.0
    %3318 = vmatpush1.msra.mxu0 0.0
    %3319 = vmatprep.subr.mxu0 0.0
    %3320 = vmatpush1.msra.mxu0 0.0
    %3321 = vmatprep.subr.mxu0 0.0
    %3322 = vmatpush1.msra.mxu0 0.0
    %3323 = vmatprep.subr.mxu0 0.0
    %3324 = vmatpush1.msra.mxu0 0.0
    %3325 = vmatprep.subr.mxu0 0.0
    %3326 = vmatpush1.msra.mxu0 0.0
    %3327 = vmatprep.subr.mxu0 0.0
    %3328 = vmatpush1.msra.mxu0 0.0
    %3329 = vmatprep.subr.mxu0 0.0
    %3330 = vmatpush1.msra.mxu0 0.0
    %3331 = vmatprep.subr.mxu0 0.0
    %3332 = vmatpush1.msra.mxu0 0.0
    %3333 = vmatprep.subr.mxu0 0.0
    %3334 = vmatpush1.msra.mxu0 0.0
    %3335 = vmatprep.subr.mxu0 0.0
    %3336 = vmatpush1.msra.mxu0 0.0
    %3337 = vmatprep.subr.mxu0 0.0
    %3338 = vmatpush1.msra.mxu0 0.0
    %3339 = vmatprep.subr.mxu0 0.0
    %3340 = vmatpush1.msra.mxu0 0.0
    %3341 = vmatprep.subr.mxu0 0.0
    %3342 = vmatpush1.msra.mxu0 0.0
    %3343 = vmatprep.subr.mxu0 0.0
    %3344 = vmatpush1.msra.mxu0 0.0
    %3345 = vmatprep.subr.mxu0 0.0
    %3346 = vmatpush1.msra.mxu0 0.0
    %3347 = vmatprep.subr.mxu0 0.0
    %3348 = vmatpush1.msra.mxu0 0.0
    %3349 = vmatprep.subr.mxu0 0.0
    %3350 = vmatpush1.msra.mxu0 0.0
    %3351 = vmatprep.subr.mxu0 0.0
    %3352 = vmatpush1.msra.mxu0 0.0
    %3353 = vmatprep.subr.mxu0 0.0
    %3354 = vmatpush1.msra.mxu0 0.0
    %3355 = vmatprep.mubr.f32.mxu0 0.0
    %3356 = vmatmul.mubr.f32.gmra.mrb[0].mxu0 %v3289
    %v3357 = vpop.f32.mrb[0].mxu0
    %v3358 = vadd.f32 %v1968, %v3357
    %v3359 = vpop.f32.mrb[0].mxu0
    %3360 = vdwg.mxu0
    %v3363 = vunpack.c.l.s4 1966171168
    %v3364 = vunpack.c.0.s8 %v3363
    %v3365 = vlaneseq
    %v3366 = vshrl.u32 %v3365, 7
    %v3367 = vsub.s32 %v3364, %v3366
    %v3368 = vrot.slane %v3358, %v3367
    %v3369 = vcombine.high %v3368, %v3368
    %v3371 = vunpack.c.l.s4 1966171168
    %v3372 = vunpack.c.0.s8 %v3371
    %v3373 = vlaneseq
    %v3374 = vshrl.u32 %v3373, 7
    %v3375 = vsub.s32 %v3372, %v3374
    %v3376 = vrot.slane %v3368, %v3375
    %v3378 = vunpack.c.l.s4 1966171168
    %v3379 = vunpack.c.0.s8 %v3378
    %v3380 = vlaneseq
    %v3381 = vshrl.u32 %v3380, 7
    %v3382 = vsub.s32 %v3379, %v3381
    %v3383 = vrot.slane %v3369, %v3382
    %v3384 = vlaneseq
    %v3385 = vshrl.u32 %v3384, 7
    %v3386 = vsub.s32 0, %v3385
    %v3387 = vrot.slane %v3376, %v3386
    %v3388 = vlaneseq
    %v3389 = vshrl.u32 %v3388, 7
    %v3390 = vsub.s32 0, %v3389
    %v3391 = vrot.slane %v3383, %v3390
    %v3394 = vadd.f32 %v3387, %v1835
    %v3395 = vadd.f32 %v3391, %v1840
    %v3396 = vtanh.pop %v3394
    %v3397 = vtanh.pop %v3395
    %v3398 = vmul.f32 %v3396, %v2086
    %v3399 = vmul.f32 %v3397, %v2086
    %v3400 = vsel %vm356, %v3398, 0.0
    %3401 = vadd.xlane.f32.xlu0 %v3400
    %v3402 = vpop.xlane.xlu0 %3401
    %v3403 = vsel %vm356, %v3399, 0.0
    %3404 = vadd.xlane.f32.xlu0 %v3403
    %v3405 = vpop.xlane.xlu0 %3404
    %v3406 = vmul.f32 %v3132, 1e+08
    %v3408 = vlaneseq
    %v3409 = vshrl.u32 %v3408, 7
    %v3410 = vsub.s32 0, %v3409
    %v3411 = vrot.slane %v3406, %v3410
    %3413 = vbcast.lane.b32.xlu0 %v3411, 256
    %v3414 = vpop.permute.xlu0 %3413
    %v3415 = vlaneseq
    %v3416 = vshrl.u32 %v3415, 7
    %v3417 = vsub.s32 1, %v3416
    %v3418 = vrot.slane %v3406, %v3417
    %3420 = vbcast.lane.b32.xlu0 %v3418, 256
    %v3421 = vpop.permute.xlu0 %3420
    %v3424 = vsub.f32 %v3402, %v3414
    %v3425 = vsub.f32 %v3405, %v3421
    %3428 = vset.pattern.permute.xlu0 0
    %3429 = vperm.xlu0 %3428, %v3424
    %v3430 = vpop.permute.xlu0 %3429
    %3431 = vset.pattern.permute.xlu0 0
    %3432 = vperm.xlu0 %3431, %v3425
    %v3433 = vpop.permute.xlu0 %3432
    %v3434 = vlaneseq
    %v3435 = vshrl.u32 %v3434, 7
    %v3436 = vsub.s32 %v1856, %v3435
    %v3437 = vrot.slane %v3430, %v3436
    %v3438 = vlaneseq
    %v3439 = vshrl.u32 %v3438, 7
    %v3440 = vsub.s32 %v1856, %v3439
    %v3441 = vrot.slane %v3433, %v3440
    %v3442 = vsel %vm737, %v3441, %v3437
    %v3444 = vsel %vm2108, %v3442, -inf
    %3445 = vmax.xlane.f32.xlu0 %v3444
    %v3446 = vpop.xlane.xlu0 %3445
    %v3448 = vlaneseq
    %v3449 = vshrl.u32 %v3448, 7
    %v3450 = vsub.s32 0, %v3449
    %v3451 = vrot.slane %v3446, %v3450
    %v3452 = vlaneseq
    %v3453 = vshrl.u32 %v3452, 7
    %v3454 = vsub.s32 1, %v3453
    %v3455 = vrot.slane %v3446, %v3454
    %v3458 = vsub.f32 %v3424, %v3451
    %v3459 = vsub.f32 %v3425, %v3455
    %v3460 = vmul.f32 %v3458, 1.442695
    %v3461 = vpow.pop %v3460
    %v3462 = vmul.f32 %v3459, 1.442695
    %v3463 = vpow.pop %v3462
    %3466 = vset.pattern.permute.xlu0 0
    %3467 = vperm.xlu0 %3466, %v3461
    %v3468 = vpop.permute.xlu0 %3467
    %3469 = vset.pattern.permute.xlu0 0
    %3470 = vperm.xlu0 %3469, %v3463
    %v3471 = vpop.permute.xlu0 %3470
    %v3472 = vlaneseq
    %v3473 = vshrl.u32 %v3472, 7
    %v3474 = vsub.s32 %v1856, %v3473
    %v3475 = vrot.slane %v3468, %v3474
    %v3476 = vlaneseq
    %v3477 = vshrl.u32 %v3476, 7
    %v3478 = vsub.s32 %v1856, %v3477
    %v3479 = vrot.slane %v3471, %v3478
    %v3480 = vsel %vm737, %v3479, %v3475
    %v3482 = vsel %vm2108, %v3480, 0.0
    %3483 = vadd.xlane.f32.xlu0 %v3482
    %v3484 = vpop.xlane.xlu0 %3483
    %v3486 = vlaneseq
    %v3487 = vshrl.u32 %v3486, 7
    %v3488 = vsub.s32 0, %v3487
    %v3489 = vrot.slane %v3484, %v3488
    %v3490 = vlaneseq
    %v3491 = vshrl.u32 %v3490, 7
    %v3492 = vsub.s32 1, %v3491
    %v3493 = vrot.slane %v3484, %v3492
    %v3496 = vrcp.pop %v3489
    %v3497 = vmul.f32 %v3461, %v3496
    %v3498 = vrcp.pop %v3493
    %v3499 = vmul.f32 %v3463, %v3498
    %3501 = vset.pattern.permute.xlu0 0
    %3502 = vperm.xlu0 %3501, %v3497
    %v3503 = vpop.permute.xlu0 %3502
    %3506 = vset.pattern.permute.xlu0 0
    %3507 = vperm.xlu0 %3506, %v3499
    %v3508 = vpop.permute.xlu0 %3507
    %v3510 = vmul.f32 %v3503, %v1835
    %v3511 = vmul.f32 %v3508, %v1840
    %v3512 = vsel %vm356, %v3510, 0.0
    %v3513 = vrot.slane %v3512, 4
    %v3514 = vadd.f32 %v3512, %v3513
    %v3515 = vrot.slane %v3514, 2
    %v3516 = vadd.f32 %v3514, %v3515
    %v3517 = vrot.slane %v3516, 1
    %v3518 = vadd.f32 %v3516, %v3517
    %v3519 = vsel %vm356, %v3511, 0.0
    %v3520 = vrot.slane %v3519, 4
    %v3521 = vadd.f32 %v3519, %v3520
    %v3522 = vrot.slane %v3521, 2
    %v3523 = vadd.f32 %v3521, %v3522
    %v3524 = vrot.slane %v3523, 1
    %v3525 = vadd.f32 %v3523, %v3524
    %v3528 = vsel %vm737, %v3525, %v3518
    %v3529 = vsel %vm356, %v3528, 0
    %3531 = vmatprep.subr.mxu0 0.0
    %3532 = vmatpush1.msra.mxu0 %v1848
    %3533 = vmatprep.subr.mxu0 0.0
    %3534 = vmatpush1.msra.mxu0 %v1849
    %3535 = vmatprep.subr.mxu0 0.0
    %3536 = vmatpush1.msra.mxu0 %v1850
    %3537 = vmatprep.subr.mxu0 0.0
    %3538 = vmatpush1.msra.mxu0 %v1851
    %3539 = vmatprep.subr.mxu0 0.0
    %3540 = vmatpush1.msra.mxu0 0.0
    %3541 = vmatprep.subr.mxu0 0.0
    %3542 = vmatpush1.msra.mxu0 0.0
    %3543 = vmatprep.subr.mxu0 0.0
    %3544 = vmatpush1.msra.mxu0 0.0
    %3545 = vmatprep.subr.mxu0 0.0
    %3546 = vmatpush1.msra.mxu0 0.0
    %3547 = vmatprep.subr.mxu0 0.0
    %3548 = vmatpush1.msra.mxu0 0.0
    %3549 = vmatprep.subr.mxu0 0.0
    %3550 = vmatpush1.msra.mxu0 0.0
    %3551 = vmatprep.subr.mxu0 0.0
    %3552 = vmatpush1.msra.mxu0 0.0
    %3553 = vmatprep.subr.mxu0 0.0
    %3554 = vmatpush1.msra.mxu0 0.0
    %3555 = vmatprep.subr.mxu0 0.0
    %3556 = vmatpush1.msra.mxu0 0.0
    %3557 = vmatprep.subr.mxu0 0.0
    %3558 = vmatpush1.msra.mxu0 0.0
    %3559 = vmatprep.subr.mxu0 0.0
    %3560 = vmatpush1.msra.mxu0 0.0
    %3561 = vmatprep.subr.mxu0 0.0
    %3562 = vmatpush1.msra.mxu0 0.0
    %3563 = vmatprep.subr.mxu0 0.0
    %3564 = vmatpush1.msra.mxu0 0.0
    %3565 = vmatprep.subr.mxu0 0.0
    %3566 = vmatpush1.msra.mxu0 0.0
    %3567 = vmatprep.subr.mxu0 0.0
    %3568 = vmatpush1.msra.mxu0 0.0
    %3569 = vmatprep.subr.mxu0 0.0
    %3570 = vmatpush1.msra.mxu0 0.0
    %3571 = vmatprep.subr.mxu0 0.0
    %3572 = vmatpush1.msra.mxu0 0.0
    %3573 = vmatprep.subr.mxu0 0.0
    %3574 = vmatpush1.msra.mxu0 0.0
    %3575 = vmatprep.subr.mxu0 0.0
    %3576 = vmatpush1.msra.mxu0 0.0
    %3577 = vmatprep.subr.mxu0 0.0
    %3578 = vmatpush1.msra.mxu0 0.0
    %3579 = vmatprep.subr.mxu0 0.0
    %3580 = vmatpush1.msra.mxu0 0.0
    %3581 = vmatprep.subr.mxu0 0.0
    %3582 = vmatpush1.msra.mxu0 0.0
    %3583 = vmatprep.subr.mxu0 0.0
    %3584 = vmatpush1.msra.mxu0 0.0
    %3585 = vmatprep.subr.mxu0 0.0
    %3586 = vmatpush1.msra.mxu0 0.0
    %3587 = vmatprep.subr.mxu0 0.0
    %3588 = vmatpush1.msra.mxu0 0.0
    %3589 = vmatprep.subr.mxu0 0.0
    %3590 = vmatpush1.msra.mxu0 0.0
    %3591 = vmatprep.subr.mxu0 0.0
    %3592 = vmatpush1.msra.mxu0 0.0
    %3593 = vmatprep.subr.mxu0 0.0
    %3594 = vmatpush1.msra.mxu0 0.0
    %3595 = vmatprep.mubr.f32.mxu0 0.0
    %3596 = vmatmul.mubr.f32.gmra.mrb[0].mxu0 %v3529
    %v3597 = vpop.f32.mrb[0].mxu0
    %v3598 = vadd.f32 %v2195, %v3597
    %v3599 = vpop.f32.mrb[0].mxu0
    %3600 = vdwg.mxu0
    %v3603 = vunpack.c.l.s4 1966171168
    %v3604 = vunpack.c.0.s8 %v3603
    %v3605 = vlaneseq
    %v3606 = vshrl.u32 %v3605, 7
    %v3607 = vsub.s32 %v3604, %v3606
    %v3608 = vrot.slane %v3598, %v3607
    %v3609 = vcombine.high %v3608, %v3608
    %v3611 = vunpack.c.l.s4 1966171168
    %v3612 = vunpack.c.0.s8 %v3611
    %v3613 = vlaneseq
    %v3614 = vshrl.u32 %v3613, 7
    %v3615 = vsub.s32 %v3612, %v3614
    %v3616 = vrot.slane %v3608, %v3615
    %v3618 = vunpack.c.l.s4 1966171168
    %v3619 = vunpack.c.0.s8 %v3618
    %v3620 = vlaneseq
    %v3621 = vshrl.u32 %v3620, 7
    %v3622 = vsub.s32 %v3619, %v3621
    %v3623 = vrot.slane %v3609, %v3622
    %v3624 = vlaneseq
    %v3625 = vshrl.u32 %v3624, 7
    %v3626 = vsub.s32 0, %v3625
    %v3627 = vrot.slane %v3616, %v3626
    %v3628 = vlaneseq
    %v3629 = vshrl.u32 %v3628, 7
    %v3630 = vsub.s32 0, %v3629
    %v3631 = vrot.slane %v3623, %v3630
    %v3634 = vadd.f32 %v3627, %v2308
    %v3635 = vadd.f32 %v3631, %v2310
    %v3636 = vtanh.pop %v3634
    %v3637 = vtanh.pop %v3635
    %v3638 = vmul.f32 %v3636, 10.0
    %v3639 = vmul.f32 %v3637, 10.0
    %v3640 = vmul.f32 %v3638, %v2323
    %v3641 = vmul.f32 %v3639, %v2323
    %v3642 = vsel %vm356, %v3640, 0.0
    %3643 = vadd.xlane.f32.xlu0 %v3642
    %v3644 = vpop.xlane.xlu0 %3643
    %v3645 = vsel %vm356, %v3641, 0.0
    %3646 = vadd.xlane.f32.xlu0 %v3645
    %v3647 = vpop.xlane.xlu0 %3646
    %v3648 = vsub.f32 %v3644, %v3414
    %v3649 = vsub.f32 %v3647, %v3421
    %3652 = vset.pattern.permute.xlu0 0
    %3653 = vperm.xlu0 %3652, %v3648
    %v3654 = vpop.permute.xlu0 %3653
    %3655 = vset.pattern.permute.xlu0 0
    %3656 = vperm.xlu0 %3655, %v3649
    %v3657 = vpop.permute.xlu0 %3656
    %v3658 = vlaneseq
    %v3659 = vshrl.u32 %v3658, 7
    %v3660 = vsub.s32 %v1856, %v3659
    %v3661 = vrot.slane %v3654, %v3660
    %v3662 = vlaneseq
    %v3663 = vshrl.u32 %v3662, 7
    %v3664 = vsub.s32 %v1856, %v3663
    %v3665 = vrot.slane %v3657, %v3664
    %v3666 = vsel %vm737, %v3665, %v3661
    %v3668 = vsel %vm2108, %v3666, -inf
    %3669 = vmax.xlane.f32.xlu0 %v3668
    %v3670 = vpop.xlane.xlu0 %3669
    %v3672 = vlaneseq
    %v3673 = vshrl.u32 %v3672, 7
    %v3674 = vsub.s32 0, %v3673
    %v3675 = vrot.slane %v3670, %v3674
    %v3676 = vlaneseq
    %v3677 = vshrl.u32 %v3676, 7
    %v3678 = vsub.s32 1, %v3677
    %v3679 = vrot.slane %v3670, %v3678
    %v3682 = vsub.f32 %v3648, %v3675
    %v3683 = vsub.f32 %v3649, %v3679
    %v3684 = vmul.f32 %v3682, 1.442695
    %v3685 = vpow.pop %v3684
    %v3686 = vmul.f32 %v3683, 1.442695
    %v3687 = vpow.pop %v3686
    %3690 = vset.pattern.permute.xlu0 0
    %3691 = vperm.xlu0 %3690, %v3685
    %v3692 = vpop.permute.xlu0 %3691
    %3693 = vset.pattern.permute.xlu0 0
    %3694 = vperm.xlu0 %3693, %v3687
    %v3695 = vpop.permute.xlu0 %3694
    %v3696 = vlaneseq
    %v3697 = vshrl.u32 %v3696, 7
    %v3698 = vsub.s32 %v1856, %v3697
    %v3699 = vrot.slane %v3692, %v3698
    %v3700 = vlaneseq
    %v3701 = vshrl.u32 %v3700, 7
    %v3702 = vsub.s32 %v1856, %v3701
    %v3703 = vrot.slane %v3695, %v3702
    %v3704 = vsel %vm737, %v3703, %v3699
    %v3706 = vsel %vm2108, %v3704, 0.0
    %3707 = vadd.xlane.f32.xlu0 %v3706
    %v3708 = vpop.xlane.xlu0 %3707
    %v3709 = vlog2.pop %v3708
    %v3710 = vmul.f32 %v3709, 0.6931472
    %v3712 = vlaneseq
    %v3713 = vshrl.u32 %v3712, 7
    %v3714 = vsub.s32 0, %v3713
    %v3715 = vrot.slane %v3710, %v3714
    %v3716 = vlaneseq
    %v3717 = vshrl.u32 %v3716, 7
    %v3718 = vsub.s32 1, %v3717
    %v3719 = vrot.slane %v3710, %v3718
    %v3722 = vsub.f32 %v3682, %v3715
    %v3723 = vsub.f32 %v3683, %v3719
    %3726 = vset.pattern.permute.xlu0 0
    %3727 = vperm.xlu0 %3726, %v3722
    %v3728 = vpop.permute.xlu0 %3727
    %3729 = vset.pattern.permute.xlu0 0
    %3730 = vperm.xlu0 %3729, %v3723
    %v3731 = vpop.permute.xlu0 %3730
    %v3732 = vlaneseq
    %v3733 = vshrl.u32 %v3732, 7
    %v3734 = vsub.s32 %v1856, %v3733
    %v3735 = vrot.slane %v3728, %v3734
    %v3736 = vlaneseq
    %v3737 = vshrl.u32 %v3736, 7
    %v3738 = vsub.s32 %v1856, %v3737
    %v3739 = vrot.slane %v3731, %v3738
    %v3740 = vsel %vm737, %v3739, %v3735
    %v3742 = vsel %vm2108, %v3740, -inf
    %3743 = vmax.xlane.f32.xlu0 %v3742
    %v3744 = vpop.xlane.xlu0 %3743
    %v3746 = vlaneseq
    %v3747 = vshrl.u32 %v3746, 7
    %v3748 = vsub.s32 0, %v3747
    %v3749 = vrot.slane %v3744, %v3748
    %v3750 = vlaneseq
    %v3751 = vshrl.u32 %v3750, 7
    %v3752 = vsub.s32 1, %v3751
    %v3753 = vrot.slane %v3744, %v3752
    %vm3756 = vcmp.eq.f32.partialorder %v3722, %v3749
    %vm3757 = vcmp.eq.f32.partialorder %v3723, %v3753
    %v3758 = vsel %vm3756, %v2438, 8.0
    %v3759 = vsel %vm3757, %v2438, 8.0
    %3762 = vset.pattern.permute.xlu0 0
    %3763 = vperm.xlu0 %3762, %v3758
    %v3764 = vpop.permute.xlu0 %3763
    %3765 = vset.pattern.permute.xlu0 0
    %3766 = vperm.xlu0 %3765, %v3759
    %v3767 = vpop.permute.xlu0 %3766
    %v3768 = vlaneseq
    %v3769 = vshrl.u32 %v3768, 7
    %v3770 = vsub.s32 %v1856, %v3769
    %v3771 = vrot.slane %v3764, %v3770
    %v3772 = vlaneseq
    %v3773 = vshrl.u32 %v3772, 7
    %v3774 = vsub.s32 %v1856, %v3773
    %v3775 = vrot.slane %v3767, %v3774
    %v3776 = vsel %vm737, %v3775, %v3771
    %v3778 = vsel %vm2108, %v3776, inf
    %3779 = vmin.xlane.f32.xlu0 %v3778
    %v3780 = vpop.xlane.xlu0 %3779
    %vm3781 = vcmp.eq.f32.partialorder %v1857, %v3780
    %v3782 = vsel %vm3781, 1, 0
    %v3783 = vcvt.s32.f32 %v3782
    %v3784 = vmul.f32 %v3783, %v3740
    %v3785 = vsel %vm2108, %v3784, 0.0
    %3786 = vadd.xlane.f32.xlu0 %v3785
    %v3787 = vpop.xlane.xlu0 %3786
    %v3788 = vadd.f32 %v3131, %v3787
    %v3789 = vadd.f32 %v3132, %v3783
    %vm3790 = vcmask 17424
    %3791 = vst.msk [vmem:[#allocation20] sm:$0x3] %vm3790, %v3780
    %v3792 = vlaneseq
    %v3793 = vshrl.u32 %v3792, 7
    %v3794 = vsub.s32 0, %v3793
    %v3795 = vrot.slane %v3783, %v3794
    %3797 = vbcast.lane.b32.xlu0 %v3795, 256
    %v3798 = vpop.permute.xlu0 %3797
    %v3799 = vlaneseq
    %v3800 = vshrl.u32 %v3799, 7
    %v3801 = vsub.s32 1, %v3800
    %v3802 = vrot.slane %v3783, %v3801
    %3804 = vbcast.lane.b32.xlu0 %v3802, 256
    %v3805 = vpop.permute.xlu0 %3804
    %v3806 = vmul.f32 %v3798, %v516
    %v3807 = vmul.f32 %v3805, %v521
    %v3808 = vrot.slane %v3806, 4
    %v3809 = vadd.f32 %v3806, %v3808
    %v3810 = vrot.slane %v3809, 2
    %v3811 = vadd.f32 %v3809, %v3810
    %v3812 = vrot.slane %v3811, 1
    %v3813 = vadd.f32 %v3811, %v3812
    %v3814 = vrot.slane %v3807, 4
    %v3815 = vadd.f32 %v3807, %v3814
    %v3816 = vrot.slane %v3815, 2
    %v3817 = vadd.f32 %v3815, %v3816
    %v3818 = vrot.slane %v3817, 1
    %v3819 = vadd.f32 %v3817, %v3818
    %3820 = vmatprep.subr.mxu0 0.0
    %3821 = vmatpush1.msra.mxu0 %v341
    %3822 = vmatprep.subr.mxu0 0.0
    %3823 = vmatpush1.msra.mxu0 %v342
    %3824 = vmatprep.subr.mxu0 0.0
    %3825 = vmatpush1.msra.mxu0 %v343
    %3826 = vmatprep.subr.mxu0 0.0
    %3827 = vmatpush1.msra.mxu0 %v344
    %3828 = vmatprep.subr.mxu0 0.0
    %3829 = vmatpush1.msra.mxu0 0.0
    %3830 = vmatprep.subr.mxu0 0.0
    %3831 = vmatpush1.msra.mxu0 0.0
    %3832 = vmatprep.subr.mxu0 0.0
    %3833 = vmatpush1.msra.mxu0 0.0
    %3834 = vmatprep.subr.mxu0 0.0
    %3835 = vmatpush1.msra.mxu0 0.0
    %3836 = vmatprep.subr.mxu0 0.0
    %3837 = vmatpush1.msra.mxu0 0.0
    %3838 = vmatprep.subr.mxu0 0.0
    %3839 = vmatpush1.msra.mxu0 0.0
    %3840 = vmatprep.subr.mxu0 0.0
    %3841 = vmatpush1.msra.mxu0 0.0
    %3842 = vmatprep.subr.mxu0 0.0
    %3843 = vmatpush1.msra.mxu0 0.0
    %3844 = vmatprep.subr.mxu0 0.0
    %3845 = vmatpush1.msra.mxu0 0.0
    %3846 = vmatprep.subr.mxu0 0.0
    %3847 = vmatpush1.msra.mxu0 0.0
    %3848 = vmatprep.subr.mxu0 0.0
    %3849 = vmatpush1.msra.mxu0 0.0
    %3850 = vmatprep.subr.mxu0 0.0
    %3851 = vmatpush1.msra.mxu0 0.0
    %3852 = vmatprep.subr.mxu0 0.0
    %3853 = vmatpush1.msra.mxu0 0.0
    %3854 = vmatprep.subr.mxu0 0.0
    %3855 = vmatpush1.msra.mxu0 0.0
    %3856 = vmatprep.subr.mxu0 0.0
    %3857 = vmatpush1.msra.mxu0 0.0
    %3858 = vmatprep.subr.mxu0 0.0
    %3859 = vmatpush1.msra.mxu0 0.0
    %3860 = vmatprep.subr.mxu0 0.0
    %3861 = vmatpush1.msra.mxu0 0.0
    %3862 = vmatprep.subr.mxu0 0.0
    %3863 = vmatpush1.msra.mxu0 0.0
    %3864 = vmatprep.subr.mxu0 0.0
    %3865 = vmatpush1.msra.mxu0 0.0
    %3866 = vmatprep.subr.mxu0 0.0
    %3867 = vmatpush1.msra.mxu0 0.0
    %3868 = vmatprep.subr.mxu0 0.0
    %3869 = vmatpush1.msra.mxu0 0.0
    %3870 = vmatprep.subr.mxu0 0.0
    %3871 = vmatpush1.msra.mxu0 0.0
    %3872 = vmatprep.subr.mxu0 0.0
    %3873 = vmatpush1.msra.mxu0 0.0
    %3874 = vmatprep.subr.mxu0 0.0
    %3875 = vmatpush1.msra.mxu0 0.0
    %3876 = vmatprep.subr.mxu0 0.0
    %3877 = vmatpush1.msra.mxu0 0.0
    %3878 = vmatprep.subr.mxu0 0.0
    %3879 = vmatpush1.msra.mxu0 0.0
    %3880 = vmatprep.subr.mxu0 0.0
    %3881 = vmatpush1.msra.mxu0 0.0
    %3882 = vmatprep.subr.mxu0 0.0
    %3883 = vmatpush1.msra.mxu0 0.0
    %3884 = vmatprep.mubr.f32.mxu0 0.0
    %3885 = vmatmul.mubr.f32.gmra.mrb[0].mxu0 %v3289
    %v3886 = vpop.f32.mrb[0].mxu0
    %v3887 = vadd.f32 0.0, %v3886
    %v3888 = vpop.f32.mrb[0].mxu0
    %3889 = vdwg.mxu0
    %v3891 = vrot.slane %v3887, 1
    %v3894 = vadd.f32 %v3813, %v3887
    %v3895 = vadd.f32 %v3819, %v3891
    %v3896 = vmul.f32 %v3894, 0.5
    %v3897 = vmul.f32 %v3895, 0.5
    %v3898 = vtanh.pop %v3896
    %v3899 = vtanh.pop %v3897
    %v3900 = vmul.f32 %v3898, 0.5
    %v3901 = vmul.f32 %v3899, 0.5
    %v3902 = vadd.f32 %v3900, 0.5
    %v3903 = vadd.f32 %v3901, 0.5
    %v3904 = vtanh.pop %v3894
    %v3905 = vtanh.pop %v3895
    %v3906 = vmul.f32 %v3902, %v3269
    %v3907 = vmul.f32 %v3903, %v3270
    %3910 = vrot.lane.b32.xlu0 %v3904, 64
    %v3911 = vpop.permute.xlu0 %3910
    %3912 = vrot.lane.b32.xlu0 %v3905, 64
    %v3913 = vpop.permute.xlu0 %3912
    %v3916 = vmul.f32 %v3902, %v3911
    %v3917 = vmul.f32 %v3903, %v3913
    %3920 = vrot.lane.b32.xlu0 %v3916, 32
    %v3921 = vpop.permute.xlu0 %3920
    %3922 = vrot.lane.b32.xlu0 %v3917, 32
    %v3923 = vpop.permute.xlu0 %3922
    %v3926 = vadd.f32 %v3906, %v3921
    %v3927 = vadd.f32 %v3907, %v3923
    %v3928 = vtanh.pop %v3926
    %v3929 = vtanh.pop %v3927
    %3932 = vrot.lane.b32.xlu0 %v3928, 64
    %v3933 = vpop.permute.xlu0 %3932
    %3934 = vrot.lane.b32.xlu0 %v3929, 64
    %v3935 = vpop.permute.xlu0 %3934
    %v3938 = vmul.f32 %v3902, %v3933
    %v3939 = vmul.f32 %v3903, %v3935
    %v3942 = vrot.slane %v3939, 7
    %v3943 = vsel %vm737, %v3942, %v3938
    %3944 = vrot.lane.b32.xlu0 %v3943, 32
    %v3945 = vpop.permute.xlu0 %3944
    %v3946 = vsel %vm356, %v3945, 0
    %3948 = vmatprep.subr.mxu0 0.0
    %3949 = vmatpush1.msra.mxu0 %v1843
    %3950 = vmatprep.subr.mxu0 0.0
    %3951 = vmatpush1.msra.mxu0 %v1844
    %3952 = vmatprep.subr.mxu0 0.0
    %3953 = vmatpush1.msra.mxu0 %v1845
    %3954 = vmatprep.subr.mxu0 0.0
    %3955 = vmatpush1.msra.mxu0 %v1846
    %3956 = vmatprep.subr.mxu0 0.0
    %3957 = vmatpush1.msra.mxu0 0.0
    %3958 = vmatprep.subr.mxu0 0.0
    %3959 = vmatpush1.msra.mxu0 0.0
    %3960 = vmatprep.subr.mxu0 0.0
    %3961 = vmatpush1.msra.mxu0 0.0
    %3962 = vmatprep.subr.mxu0 0.0
    %3963 = vmatpush1.msra.mxu0 0.0
    %3964 = vmatprep.subr.mxu0 0.0
    %3965 = vmatpush1.msra.mxu0 0.0
    %3966 = vmatprep.subr.mxu0 0.0
    %3967 = vmatpush1.msra.mxu0 0.0
    %3968 = vmatprep.subr.mxu0 0.0
    %3969 = vmatpush1.msra.mxu0 0.0
    %3970 = vmatprep.subr.mxu0 0.0
    %3971 = vmatpush1.msra.mxu0 0.0
    %3972 = vmatprep.subr.mxu0 0.0
    %3973 = vmatpush1.msra.mxu0 0.0
    %3974 = vmatprep.subr.mxu0 0.0
    %3975 = vmatpush1.msra.mxu0 0.0
    %3976 = vmatprep.subr.mxu0 0.0
    %3977 = vmatpush1.msra.mxu0 0.0
    %3978 = vmatprep.subr.mxu0 0.0
    %3979 = vmatpush1.msra.mxu0 0.0
    %3980 = vmatprep.subr.mxu0 0.0
    %3981 = vmatpush1.msra.mxu0 0.0
    %3982 = vmatprep.subr.mxu0 0.0
    %3983 = vmatpush1.msra.mxu0 0.0
    %3984 = vmatprep.subr.mxu0 0.0
    %3985 = vmatpush1.msra.mxu0 0.0
    %3986 = vmatprep.subr.mxu0 0.0
    %3987 = vmatpush1.msra.mxu0 0.0
    %3988 = vmatprep.subr.mxu0 0.0
    %3989 = vmatpush1.msra.mxu0 0.0
    %3990 = vmatprep.subr.mxu0 0.0
    %3991 = vmatpush1.msra.mxu0 0.0
    %3992 = vmatprep.subr.mxu0 0.0
    %3993 = vmatpush1.msra.mxu0 0.0
    %3994 = vmatprep.subr.mxu0 0.0
    %3995 = vmatpush1.msra.mxu0 0.0
    %3996 = vmatprep.subr.mxu0 0.0
    %3997 = vmatpush1.msra.mxu0 0.0
    %3998 = vmatprep.subr.mxu0 0.0
    %3999 = vmatpush1.msra.mxu0 0.0
    %4000 = vmatprep.subr.mxu0 0.0
    %4001 = vmatpush1.msra.mxu0 0.0
    %4002 = vmatprep.subr.mxu0 0.0
    %4003 = vmatpush1.msra.mxu0 0.0
    %4004 = vmatprep.subr.mxu0 0.0
    %4005 = vmatpush1.msra.mxu0 0.0
    %4006 = vmatprep.subr.mxu0 0.0
    %4007 = vmatpush1.msra.mxu0 0.0
    %4008 = vmatprep.subr.mxu0 0.0
    %4009 = vmatpush1.msra.mxu0 0.0
    %4010 = vmatprep.subr.mxu0 0.0
    %4011 = vmatpush1.msra.mxu0 0.0
    %4012 = vmatprep.mubr.f32.mxu0 0.0
    %4013 = vmatmul.mubr.f32.gmra.mrb[0].mxu0 %v3946
    %v4014 = vpop.f32.mrb[0].mxu0
    %v4015 = vadd.f32 %v1968, %v4014
    %v4016 = vpop.f32.mrb[0].mxu0
    %4017 = vdwg.mxu0
    %v4020 = vunpack.c.l.s4 1966171168
    %v4021 = vunpack.c.0.s8 %v4020
    %v4022 = vlaneseq
    %v4023 = vshrl.u32 %v4022, 7
    %v4024 = vsub.s32 %v4021, %v4023
    %v4025 = vrot.slane %v4015, %v4024
    %v4026 = vcombine.high %v4025, %v4025
    %v4028 = vunpack.c.l.s4 1966171168
    %v4029 = vunpack.c.0.s8 %v4028
    %v4030 = vlaneseq
    %v4031 = vshrl.u32 %v4030, 7
    %v4032 = vsub.s32 %v4029, %v4031
    %v4033 = vrot.slane %v4025, %v4032
    %v4035 = vunpack.c.l.s4 1966171168
    %v4036 = vunpack.c.0.s8 %v4035
    %v4037 = vlaneseq
    %v4038 = vshrl.u32 %v4037, 7
    %v4039 = vsub.s32 %v4036, %v4038
    %v4040 = vrot.slane %v4026, %v4039
    %v4041 = vlaneseq
    %v4042 = vshrl.u32 %v4041, 7
    %v4043 = vsub.s32 0, %v4042
    %v4044 = vrot.slane %v4033, %v4043
    %v4045 = vlaneseq
    %v4046 = vshrl.u32 %v4045, 7
    %v4047 = vsub.s32 0, %v4046
    %v4048 = vrot.slane %v4040, %v4047
    %v4051 = vadd.f32 %v4044, %v1835
    %v4052 = vadd.f32 %v4048, %v1840
    %v4053 = vtanh.pop %v4051
    %v4054 = vtanh.pop %v4052
    %v4055 = vmul.f32 %v4053, %v2086
    %v4056 = vmul.f32 %v4054, %v2086
    %v4057 = vsel %vm356, %v4055, 0.0
    %4058 = vadd.xlane.f32.xlu0 %v4057
    %v4059 = vpop.xlane.xlu0 %4058
    %v4060 = vsel %vm356, %v4056, 0.0
    %4061 = vadd.xlane.f32.xlu0 %v4060
    %v4062 = vpop.xlane.xlu0 %4061
    %v4063 = vmul.f32 %v3789, 1e+08
    %v4065 = vlaneseq
    %v4066 = vshrl.u32 %v4065, 7
    %v4067 = vsub.s32 0, %v4066
    %v4068 = vrot.slane %v4063, %v4067
    %4070 = vbcast.lane.b32.xlu0 %v4068, 256
    %v4071 = vpop.permute.xlu0 %4070
    %v4072 = vlaneseq
    %v4073 = vshrl.u32 %v4072, 7
    %v4074 = vsub.s32 1, %v4073
    %v4075 = vrot.slane %v4063, %v4074
    %4077 = vbcast.lane.b32.xlu0 %v4075, 256
    %v4078 = vpop.permute.xlu0 %4077
    %v4081 = vsub.f32 %v4059, %v4071
    %v4082 = vsub.f32 %v4062, %v4078
    %4085 = vset.pattern.permute.xlu0 0
    %4086 = vperm.xlu0 %4085, %v4081
    %v4087 = vpop.permute.xlu0 %4086
    %4088 = vset.pattern.permute.xlu0 0
    %4089 = vperm.xlu0 %4088, %v4082
    %v4090 = vpop.permute.xlu0 %4089
    %v4091 = vlaneseq
    %v4092 = vshrl.u32 %v4091, 7
    %v4093 = vsub.s32 %v1856, %v4092
    %v4094 = vrot.slane %v4087, %v4093
    %v4095 = vlaneseq
    %v4096 = vshrl.u32 %v4095, 7
    %v4097 = vsub.s32 %v1856, %v4096
    %v4098 = vrot.slane %v4090, %v4097
    %v4099 = vsel %vm737, %v4098, %v4094
    %v4101 = vsel %vm2108, %v4099, -inf
    %4102 = vmax.xlane.f32.xlu0 %v4101
    %v4103 = vpop.xlane.xlu0 %4102
    %v4105 = vlaneseq
    %v4106 = vshrl.u32 %v4105, 7
    %v4107 = vsub.s32 0, %v4106
    %v4108 = vrot.slane %v4103, %v4107
    %v4109 = vlaneseq
    %v4110 = vshrl.u32 %v4109, 7
    %v4111 = vsub.s32 1, %v4110
    %v4112 = vrot.slane %v4103, %v4111
    %v4115 = vsub.f32 %v4081, %v4108
    %v4116 = vsub.f32 %v4082, %v4112
    %v4117 = vmul.f32 %v4115, 1.442695
    %v4118 = vpow.pop %v4117
    %v4119 = vmul.f32 %v4116, 1.442695
    %v4120 = vpow.pop %v4119
    %4123 = vset.pattern.permute.xlu0 0
    %4124 = vperm.xlu0 %4123, %v4118
    %v4125 = vpop.permute.xlu0 %4124
    %4126 = vset.pattern.permute.xlu0 0
    %4127 = vperm.xlu0 %4126, %v4120
    %v4128 = vpop.permute.xlu0 %4127
    %v4129 = vlaneseq
    %v4130 = vshrl.u32 %v4129, 7
    %v4131 = vsub.s32 %v1856, %v4130
    %v4132 = vrot.slane %v4125, %v4131
    %v4133 = vlaneseq
    %v4134 = vshrl.u32 %v4133, 7
    %v4135 = vsub.s32 %v1856, %v4134
    %v4136 = vrot.slane %v4128, %v4135
    %v4137 = vsel %vm737, %v4136, %v4132
    %v4139 = vsel %vm2108, %v4137, 0.0
    %4140 = vadd.xlane.f32.xlu0 %v4139
    %v4141 = vpop.xlane.xlu0 %4140
    %v4143 = vlaneseq
    %v4144 = vshrl.u32 %v4143, 7
    %v4145 = vsub.s32 0, %v4144
    %v4146 = vrot.slane %v4141, %v4145
    %v4147 = vlaneseq
    %v4148 = vshrl.u32 %v4147, 7
    %v4149 = vsub.s32 1, %v4148
    %v4150 = vrot.slane %v4141, %v4149
    %v4153 = vrcp.pop %v4146
    %v4154 = vmul.f32 %v4118, %v4153
    %v4155 = vrcp.pop %v4150
    %v4156 = vmul.f32 %v4120, %v4155
    %4158 = vset.pattern.permute.xlu0 0
    %4159 = vperm.xlu0 %4158, %v4154
    %v4160 = vpop.permute.xlu0 %4159
    %4163 = vset.pattern.permute.xlu0 0
    %4164 = vperm.xlu0 %4163, %v4156
    %v4165 = vpop.permute.xlu0 %4164
    %v4167 = vmul.f32 %v4160, %v1835
    %v4168 = vmul.f32 %v4165, %v1840
    %v4169 = vsel %vm356, %v4167, 0.0
    %v4170 = vrot.slane %v4169, 4
    %v4171 = vadd.f32 %v4169, %v4170
    %v4172 = vrot.slane %v4171, 2
    %v4173 = vadd.f32 %v4171, %v4172
    %v4174 = vrot.slane %v4173, 1
    %v4175 = vadd.f32 %v4173, %v4174
    %v4176 = vsel %vm356, %v4168, 0.0
    %v4177 = vrot.slane %v4176, 4
    %v4178 = vadd.f32 %v4176, %v4177
    %v4179 = vrot.slane %v4178, 2
    %v4180 = vadd.f32 %v4178, %v4179
    %v4181 = vrot.slane %v4180, 1
    %v4182 = vadd.f32 %v4180, %v4181
    %v4185 = vsel %vm737, %v4182, %v4175
    %v4186 = vsel %vm356, %v4185, 0
    %4188 = vmatprep.subr.mxu0 0.0
    %4189 = vmatpush1.msra.mxu0 %v1848
    %4190 = vmatprep.subr.mxu0 0.0
    %4191 = vmatpush1.msra.mxu0 %v1849
    %4192 = vmatprep.subr.mxu0 0.0
    %4193 = vmatpush1.msra.mxu0 %v1850
    %4194 = vmatprep.subr.mxu0 0.0
    %4195 = vmatpush1.msra.mxu0 %v1851
    %4196 = vmatprep.subr.mxu0 0.0
    %4197 = vmatpush1.msra.mxu0 0.0
    %4198 = vmatprep.subr.mxu0 0.0
    %4199 = vmatpush1.msra.mxu0 0.0
    %4200 = vmatprep.subr.mxu0 0.0
    %4201 = vmatpush1.msra.mxu0 0.0
    %4202 = vmatprep.subr.mxu0 0.0
    %4203 = vmatpush1.msra.mxu0 0.0
    %4204 = vmatprep.subr.mxu0 0.0
    %4205 = vmatpush1.msra.mxu0 0.0
    %4206 = vmatprep.subr.mxu0 0.0
    %4207 = vmatpush1.msra.mxu0 0.0
    %4208 = vmatprep.subr.mxu0 0.0
    %4209 = vmatpush1.msra.mxu0 0.0
    %4210 = vmatprep.subr.mxu0 0.0
    %4211 = vmatpush1.msra.mxu0 0.0
    %4212 = vmatprep.subr.mxu0 0.0
    %4213 = vmatpush1.msra.mxu0 0.0
    %4214 = vmatprep.subr.mxu0 0.0
    %4215 = vmatpush1.msra.mxu0 0.0
    %4216 = vmatprep.subr.mxu0 0.0
    %4217 = vmatpush1.msra.mxu0 0.0
    %4218 = vmatprep.subr.mxu0 0.0
    %4219 = vmatpush1.msra.mxu0 0.0
    %4220 = vmatprep.subr.mxu0 0.0
    %4221 = vmatpush1.msra.mxu0 0.0
    %4222 = vmatprep.subr.mxu0 0.0
    %4223 = vmatpush1.msra.mxu0 0.0
    %4224 = vmatprep.subr.mxu0 0.0
    %4225 = vmatpush1.msra.mxu0 0.0
    %4226 = vmatprep.subr.mxu0 0.0
    %4227 = vmatpush1.msra.mxu0 0.0
    %4228 = vmatprep.subr.mxu0 0.0
    %4229 = vmatpush1.msra.mxu0 0.0
    %4230 = vmatprep.subr.mxu0 0.0
    %4231 = vmatpush1.msra.mxu0 0.0
    %4232 = vmatprep.subr.mxu0 0.0
    %4233 = vmatpush1.msra.mxu0 0.0
    %4234 = vmatprep.subr.mxu0 0.0
    %4235 = vmatpush1.msra.mxu0 0.0
    %4236 = vmatprep.subr.mxu0 0.0
    %4237 = vmatpush1.msra.mxu0 0.0
    %4238 = vmatprep.subr.mxu0 0.0
    %4239 = vmatpush1.msra.mxu0 0.0
    %4240 = vmatprep.subr.mxu0 0.0
    %4241 = vmatpush1.msra.mxu0 0.0
    %4242 = vmatprep.subr.mxu0 0.0
    %4243 = vmatpush1.msra.mxu0 0.0
    %4244 = vmatprep.subr.mxu0 0.0
    %4245 = vmatpush1.msra.mxu0 0.0
    %4246 = vmatprep.subr.mxu0 0.0
    %4247 = vmatpush1.msra.mxu0 0.0
    %4248 = vmatprep.subr.mxu0 0.0
    %4249 = vmatpush1.msra.mxu0 0.0
    %4250 = vmatprep.subr.mxu0 0.0
    %4251 = vmatpush1.msra.mxu0 0.0
    %4252 = vmatprep.mubr.f32.mxu0 0.0
    %4253 = vmatmul.mubr.f32.gmra.mrb[0].mxu0 %v4186
    %v4254 = vpop.f32.mrb[0].mxu0
    %v4255 = vadd.f32 %v2195, %v4254
    %v4256 = vpop.f32.mrb[0].mxu0
    %4257 = vdwg.mxu0
    %v4260 = vunpack.c.l.s4 1966171168
    %v4261 = vunpack.c.0.s8 %v4260
    %v4262 = vlaneseq
    %v4263 = vshrl.u32 %v4262, 7
    %v4264 = vsub.s32 %v4261, %v4263
    %v4265 = vrot.slane %v4255, %v4264
    %v4266 = vcombine.high %v4265, %v4265
    %v4268 = vunpack.c.l.s4 1966171168
    %v4269 = vunpack.c.0.s8 %v4268
    %v4270 = vlaneseq
    %v4271 = vshrl.u32 %v4270, 7
    %v4272 = vsub.s32 %v4269, %v4271
    %v4273 = vrot.slane %v4265, %v4272
    %v4275 = vunpack.c.l.s4 1966171168
    %v4276 = vunpack.c.0.s8 %v4275
    %v4277 = vlaneseq
    %v4278 = vshrl.u32 %v4277, 7
    %v4279 = vsub.s32 %v4276, %v4278
    %v4280 = vrot.slane %v4266, %v4279
    %v4281 = vlaneseq
    %v4282 = vshrl.u32 %v4281, 7
    %v4283 = vsub.s32 0, %v4282
    %v4284 = vrot.slane %v4273, %v4283
    %v4285 = vlaneseq
    %v4286 = vshrl.u32 %v4285, 7
    %v4287 = vsub.s32 0, %v4286
    %v4288 = vrot.slane %v4280, %v4287
    %v4291 = vadd.f32 %v4284, %v2308
    %v4292 = vadd.f32 %v4288, %v2310
    %v4293 = vtanh.pop %v4291
    %v4294 = vtanh.pop %v4292
    %v4295 = vmul.f32 %v4293, 10.0
    %v4296 = vmul.f32 %v4294, 10.0
    %v4297 = vmul.f32 %v4295, %v2323
    %v4298 = vmul.f32 %v4296, %v2323
    %v4299 = vsel %vm356, %v4297, 0.0
    %4300 = vadd.xlane.f32.xlu0 %v4299
    %v4301 = vpop.xlane.xlu0 %4300
    %v4302 = vsel %vm356, %v4298, 0.0
    %4303 = vadd.xlane.f32.xlu0 %v4302
    %v4304 = vpop.xlane.xlu0 %4303
    %v4305 = vsub.f32 %v4301, %v4071
    %v4306 = vsub.f32 %v4304, %v4078
    %4309 = vset.pattern.permute.xlu0 0
    %4310 = vperm.xlu0 %4309, %v4305
    %v4311 = vpop.permute.xlu0 %4310
    %4312 = vset.pattern.permute.xlu0 0
    %4313 = vperm.xlu0 %4312, %v4306
    %v4314 = vpop.permute.xlu0 %4313
    %v4315 = vlaneseq
    %v4316 = vshrl.u32 %v4315, 7
    %v4317 = vsub.s32 %v1856, %v4316
    %v4318 = vrot.slane %v4311, %v4317
    %v4319 = vlaneseq
    %v4320 = vshrl.u32 %v4319, 7
    %v4321 = vsub.s32 %v1856, %v4320
    %v4322 = vrot.slane %v4314, %v4321
    %v4323 = vsel %vm737, %v4322, %v4318
    %v4325 = vsel %vm2108, %v4323, -inf
    %4326 = vmax.xlane.f32.xlu0 %v4325
    %v4327 = vpop.xlane.xlu0 %4326
    %v4329 = vlaneseq
    %v4330 = vshrl.u32 %v4329, 7
    %v4331 = vsub.s32 0, %v4330
    %v4332 = vrot.slane %v4327, %v4331
    %v4333 = vlaneseq
    %v4334 = vshrl.u32 %v4333, 7
    %v4335 = vsub.s32 1, %v4334
    %v4336 = vrot.slane %v4327, %v4335
    %v4339 = vsub.f32 %v4305, %v4332
    %v4340 = vsub.f32 %v4306, %v4336
    %v4341 = vmul.f32 %v4339, 1.442695
    %v4342 = vpow.pop %v4341
    %v4343 = vmul.f32 %v4340, 1.442695
    %v4344 = vpow.pop %v4343
    %4347 = vset.pattern.permute.xlu0 0
    %4348 = vperm.xlu0 %4347, %v4342
    %v4349 = vpop.permute.xlu0 %4348
    %4350 = vset.pattern.permute.xlu0 0
    %4351 = vperm.xlu0 %4350, %v4344
    %v4352 = vpop.permute.xlu0 %4351
    %v4353 = vlaneseq
    %v4354 = vshrl.u32 %v4353, 7
    %v4355 = vsub.s32 %v1856, %v4354
    %v4356 = vrot.slane %v4349, %v4355
    %v4357 = vlaneseq
    %v4358 = vshrl.u32 %v4357, 7
    %v4359 = vsub.s32 %v1856, %v4358
    %v4360 = vrot.slane %v4352, %v4359
    %v4361 = vsel %vm737, %v4360, %v4356
    %v4363 = vsel %vm2108, %v4361, 0.0
    %4364 = vadd.xlane.f32.xlu0 %v4363
    %v4365 = vpop.xlane.xlu0 %4364
    %v4366 = vlog2.pop %v4365
    %v4367 = vmul.f32 %v4366, 0.6931472
    %v4369 = vlaneseq
    %v4370 = vshrl.u32 %v4369, 7
    %v4371 = vsub.s32 0, %v4370
    %v4372 = vrot.slane %v4367, %v4371
    %v4373 = vlaneseq
    %v4374 = vshrl.u32 %v4373, 7
    %v4375 = vsub.s32 1, %v4374
    %v4376 = vrot.slane %v4367, %v4375
    %v4379 = vsub.f32 %v4339, %v4372
    %v4380 = vsub.f32 %v4340, %v4376
    %4383 = vset.pattern.permute.xlu0 0
    %4384 = vperm.xlu0 %4383, %v4379
    %v4385 = vpop.permute.xlu0 %4384
    %4386 = vset.pattern.permute.xlu0 0
    %4387 = vperm.xlu0 %4386, %v4380
    %v4388 = vpop.permute.xlu0 %4387
    %v4389 = vlaneseq
    %v4390 = vshrl.u32 %v4389, 7
    %v4391 = vsub.s32 %v1856, %v4390
    %v4392 = vrot.slane %v4385, %v4391
    %v4393 = vlaneseq
    %v4394 = vshrl.u32 %v4393, 7
    %v4395 = vsub.s32 %v1856, %v4394
    %v4396 = vrot.slane %v4388, %v4395
    %v4397 = vsel %vm737, %v4396, %v4392
    %v4399 = vsel %vm2108, %v4397, -inf
    %4400 = vmax.xlane.f32.xlu0 %v4399
    %v4401 = vpop.xlane.xlu0 %4400
    %v4403 = vlaneseq
    %v4404 = vshrl.u32 %v4403, 7
    %v4405 = vsub.s32 0, %v4404
    %v4406 = vrot.slane %v4401, %v4405
    %v4407 = vlaneseq
    %v4408 = vshrl.u32 %v4407, 7
    %v4409 = vsub.s32 1, %v4408
    %v4410 = vrot.slane %v4401, %v4409
    %vm4413 = vcmp.eq.f32.partialorder %v4379, %v4406
    %vm4414 = vcmp.eq.f32.partialorder %v4380, %v4410
    %v4415 = vsel %vm4413, %v2438, 8.0
    %v4416 = vsel %vm4414, %v2438, 8.0
    %4419 = vset.pattern.permute.xlu0 0
    %4420 = vperm.xlu0 %4419, %v4415
    %v4421 = vpop.permute.xlu0 %4420
    %4422 = vset.pattern.permute.xlu0 0
    %4423 = vperm.xlu0 %4422, %v4416
    %v4424 = vpop.permute.xlu0 %4423
    %v4425 = vlaneseq
    %v4426 = vshrl.u32 %v4425, 7
    %v4427 = vsub.s32 %v1856, %v4426
    %v4428 = vrot.slane %v4421, %v4427
    %v4429 = vlaneseq
    %v4430 = vshrl.u32 %v4429, 7
    %v4431 = vsub.s32 %v1856, %v4430
    %v4432 = vrot.slane %v4424, %v4431
    %v4433 = vsel %vm737, %v4432, %v4428
    %v4435 = vsel %vm2108, %v4433, inf
    %4436 = vmin.xlane.f32.xlu0 %v4435
    %v4437 = vpop.xlane.xlu0 %4436
    %vm4438 = vcmp.eq.f32.partialorder %v1857, %v4437
    %v4439 = vsel %vm4438, 1, 0
    %v4440 = vcvt.s32.f32 %v4439
    %v4441 = vmul.f32 %v4440, %v4397
    %v4442 = vsel %vm2108, %v4441, 0.0
    %4443 = vadd.xlane.f32.xlu0 %v4442
    %v4444 = vpop.xlane.xlu0 %4443
    %v4445 = vadd.f32 %v3788, %v4444
    %v4446 = vadd.f32 %v3789, %v4440
    %vm4447 = vcmask 25624
    %4448 = vst.msk [vmem:[#allocation20] sm:$0x3] %vm4447, %v4437
    %v4449 = vlaneseq
    %v4450 = vshrl.u32 %v4449, 7
    %v4451 = vsub.s32 0, %v4450
    %v4452 = vrot.slane %v4440, %v4451
    %4454 = vbcast.lane.b32.xlu0 %v4452, 256
    %v4455 = vpop.permute.xlu0 %4454
    %v4456 = vlaneseq
    %v4457 = vshrl.u32 %v4456, 7
    %v4458 = vsub.s32 1, %v4457
    %v4459 = vrot.slane %v4440, %v4458
    %4461 = vbcast.lane.b32.xlu0 %v4459, 256
    %v4462 = vpop.permute.xlu0 %4461
    %v4463 = vmul.f32 %v4455, %v516
    %v4464 = vmul.f32 %v4462, %v521
    %v4465 = vrot.slane %v4463, 4
    %v4466 = vadd.f32 %v4463, %v4465
    %v4467 = vrot.slane %v4466, 2
    %v4468 = vadd.f32 %v4466, %v4467
    %v4469 = vrot.slane %v4468, 1
    %v4470 = vadd.f32 %v4468, %v4469
    %v4471 = vrot.slane %v4464, 4
    %v4472 = vadd.f32 %v4464, %v4471
    %v4473 = vrot.slane %v4472, 2
    %v4474 = vadd.f32 %v4472, %v4473
    %v4475 = vrot.slane %v4474, 1
    %v4476 = vadd.f32 %v4474, %v4475
    %4477 = vmatprep.subr.mxu0 0.0
    %4478 = vmatpush1.msra.mxu0 %v341
    %4479 = vmatprep.subr.mxu0 0.0
    %4480 = vmatpush1.msra.mxu0 %v342
    %4481 = vmatprep.subr.mxu0 0.0
    %4482 = vmatpush1.msra.mxu0 %v343
    %4483 = vmatprep.subr.mxu0 0.0
    %4484 = vmatpush1.msra.mxu0 %v344
    %4485 = vmatprep.subr.mxu0 0.0
    %4486 = vmatpush1.msra.mxu0 0.0
    %4487 = vmatprep.subr.mxu0 0.0
    %4488 = vmatpush1.msra.mxu0 0.0
    %4489 = vmatprep.subr.mxu0 0.0
    %4490 = vmatpush1.msra.mxu0 0.0
    %4491 = vmatprep.subr.mxu0 0.0
    %4492 = vmatpush1.msra.mxu0 0.0
    %4493 = vmatprep.subr.mxu0 0.0
    %4494 = vmatpush1.msra.mxu0 0.0
    %4495 = vmatprep.subr.mxu0 0.0
    %4496 = vmatpush1.msra.mxu0 0.0
    %4497 = vmatprep.subr.mxu0 0.0
    %4498 = vmatpush1.msra.mxu0 0.0
    %4499 = vmatprep.subr.mxu0 0.0
    %4500 = vmatpush1.msra.mxu0 0.0
    %4501 = vmatprep.subr.mxu0 0.0
    %4502 = vmatpush1.msra.mxu0 0.0
    %4503 = vmatprep.subr.mxu0 0.0
    %4504 = vmatpush1.msra.mxu0 0.0
    %4505 = vmatprep.subr.mxu0 0.0
    %4506 = vmatpush1.msra.mxu0 0.0
    %4507 = vmatprep.subr.mxu0 0.0
    %4508 = vmatpush1.msra.mxu0 0.0
    %4509 = vmatprep.subr.mxu0 0.0
    %4510 = vmatpush1.msra.mxu0 0.0
    %4511 = vmatprep.subr.mxu0 0.0
    %4512 = vmatpush1.msra.mxu0 0.0
    %4513 = vmatprep.subr.mxu0 0.0
    %4514 = vmatpush1.msra.mxu0 0.0
    %4515 = vmatprep.subr.mxu0 0.0
    %4516 = vmatpush1.msra.mxu0 0.0
    %4517 = vmatprep.subr.mxu0 0.0
    %4518 = vmatpush1.msra.mxu0 0.0
    %4519 = vmatprep.subr.mxu0 0.0
    %4520 = vmatpush1.msra.mxu0 0.0
    %4521 = vmatprep.subr.mxu0 0.0
    %4522 = vmatpush1.msra.mxu0 0.0
    %4523 = vmatprep.subr.mxu0 0.0
    %4524 = vmatpush1.msra.mxu0 0.0
    %4525 = vmatprep.subr.mxu0 0.0
    %4526 = vmatpush1.msra.mxu0 0.0
    %4527 = vmatprep.subr.mxu0 0.0
    %4528 = vmatpush1.msra.mxu0 0.0
    %4529 = vmatprep.subr.mxu0 0.0
    %4530 = vmatpush1.msra.mxu0 0.0
    %4531 = vmatprep.subr.mxu0 0.0
    %4532 = vmatpush1.msra.mxu0 0.0
    %4533 = vmatprep.subr.mxu0 0.0
    %4534 = vmatpush1.msra.mxu0 0.0
    %4535 = vmatprep.subr.mxu0 0.0
    %4536 = vmatpush1.msra.mxu0 0.0
    %4537 = vmatprep.subr.mxu0 0.0
    %4538 = vmatpush1.msra.mxu0 0.0
    %4539 = vmatprep.subr.mxu0 0.0
    %4540 = vmatpush1.msra.mxu0 0.0
    %4541 = vmatprep.mubr.f32.mxu0 0.0
    %4542 = vmatmul.mubr.f32.gmra.mrb[0].mxu0 %v3946
    %v4543 = vpop.f32.mrb[0].mxu0
    %v4544 = vadd.f32 0.0, %v4543
    %v4545 = vpop.f32.mrb[0].mxu0
    %4546 = vdwg.mxu0
    %v4548 = vrot.slane %v4544, 1
    %v4551 = vadd.f32 %v4470, %v4544
    %v4552 = vadd.f32 %v4476, %v4548
    %v4553 = vmul.f32 %v4551, 0.5
    %v4554 = vmul.f32 %v4552, 0.5
    %v4555 = vtanh.pop %v4553
    %v4556 = vtanh.pop %v4554
    %v4557 = vmul.f32 %v4555, 0.5
    %v4558 = vmul.f32 %v4556, 0.5
    %v4559 = vadd.f32 %v4557, 0.5
    %v4560 = vadd.f32 %v4558, 0.5
    %v4561 = vtanh.pop %v4551
    %v4562 = vtanh.pop %v4552
    %v4563 = vmul.f32 %v4559, %v3926
    %v4564 = vmul.f32 %v4560, %v3927
    %4567 = vrot.lane.b32.xlu0 %v4561, 64
    %v4568 = vpop.permute.xlu0 %4567
    %4569 = vrot.lane.b32.xlu0 %v4562, 64
    %v4570 = vpop.permute.xlu0 %4569
    %v4573 = vmul.f32 %v4559, %v4568
    %v4574 = vmul.f32 %v4560, %v4570
    %4577 = vrot.lane.b32.xlu0 %v4573, 32
    %v4578 = vpop.permute.xlu0 %4577
    %4579 = vrot.lane.b32.xlu0 %v4574, 32
    %v4580 = vpop.permute.xlu0 %4579
    %v4583 = vadd.f32 %v4563, %v4578
    %v4584 = vadd.f32 %v4564, %v4580
    %v4585 = vtanh.pop %v4583
    %v4586 = vtanh.pop %v4584
    %4589 = vrot.lane.b32.xlu0 %v4585, 64
    %v4590 = vpop.permute.xlu0 %4589
    %4591 = vrot.lane.b32.xlu0 %v4586, 64
    %v4592 = vpop.permute.xlu0 %4591
    %v4595 = vmul.f32 %v4559, %v4590
    %v4596 = vmul.f32 %v4560, %v4592
    %v4599 = vrot.slane %v4596, 7
    %v4600 = vsel %vm737, %v4599, %v4595
    %4601 = vrot.lane.b32.xlu0 %v4600, 32
    %v4602 = vpop.permute.xlu0 %4601
    %v4603 = vsel %vm356, %v4602, 0
    %4605 = vmatprep.subr.mxu0 0.0
    %4606 = vmatpush1.msra.mxu0 %v1843
    %4607 = vmatprep.subr.mxu0 0.0
    %4608 = vmatpush1.msra.mxu0 %v1844
    %4609 = vmatprep.subr.mxu0 0.0
    %4610 = vmatpush1.msra.mxu0 %v1845
    %4611 = vmatprep.subr.mxu0 0.0
    %4612 = vmatpush1.msra.mxu0 %v1846
    %4613 = vmatprep.subr.mxu0 0.0
    %4614 = vmatpush1.msra.mxu0 0.0
    %4615 = vmatprep.subr.mxu0 0.0
    %4616 = vmatpush1.msra.mxu0 0.0
    %4617 = vmatprep.subr.mxu0 0.0
    %4618 = vmatpush1.msra.mxu0 0.0
    %4619 = vmatprep.subr.mxu0 0.0
    %4620 = vmatpush1.msra.mxu0 0.0
    %4621 = vmatprep.subr.mxu0 0.0
    %4622 = vmatpush1.msra.mxu0 0.0
    %4623 = vmatprep.subr.mxu0 0.0
    %4624 = vmatpush1.msra.mxu0 0.0
    %4625 = vmatprep.subr.mxu0 0.0
    %4626 = vmatpush1.msra.mxu0 0.0
    %4627 = vmatprep.subr.mxu0 0.0
    %4628 = vmatpush1.msra.mxu0 0.0
    %4629 = vmatprep.subr.mxu0 0.0
    %4630 = vmatpush1.msra.mxu0 0.0
    %4631 = vmatprep.subr.mxu0 0.0
    %4632 = vmatpush1.msra.mxu0 0.0
    %4633 = vmatprep.subr.mxu0 0.0
    %4634 = vmatpush1.msra.mxu0 0.0
    %4635 = vmatprep.subr.mxu0 0.0
    %4636 = vmatpush1.msra.mxu0 0.0
    %4637 = vmatprep.subr.mxu0 0.0
    %4638 = vmatpush1.msra.mxu0 0.0
    %4639 = vmatprep.subr.mxu0 0.0
    %4640 = vmatpush1.msra.mxu0 0.0
    %4641 = vmatprep.subr.mxu0 0.0
    %4642 = vmatpush1.msra.mxu0 0.0
    %4643 = vmatprep.subr.mxu0 0.0
    %4644 = vmatpush1.msra.mxu0 0.0
    %4645 = vmatprep.subr.mxu0 0.0
    %4646 = vmatpush1.msra.mxu0 0.0
    %4647 = vmatprep.subr.mxu0 0.0
    %4648 = vmatpush1.msra.mxu0 0.0
    %4649 = vmatprep.subr.mxu0 0.0
    %4650 = vmatpush1.msra.mxu0 0.0
    %4651 = vmatprep.subr.mxu0 0.0
    %4652 = vmatpush1.msra.mxu0 0.0
    %4653 = vmatprep.subr.mxu0 0.0
    %4654 = vmatpush1.msra.mxu0 0.0
    %4655 = vmatprep.subr.mxu0 0.0
    %4656 = vmatpush1.msra.mxu0 0.0
    %4657 = vmatprep.subr.mxu0 0.0
    %4658 = vmatpush1.msra.mxu0 0.0
    %4659 = vmatprep.subr.mxu0 0.0
    %4660 = vmatpush1.msra.mxu0 0.0
    %4661 = vmatprep.subr.mxu0 0.0
    %4662 = vmatpush1.msra.mxu0 0.0
    %4663 = vmatprep.subr.mxu0 0.0
    %4664 = vmatpush1.msra.mxu0 0.0
    %4665 = vmatprep.subr.mxu0 0.0
    %4666 = vmatpush1.msra.mxu0 0.0
    %4667 = vmatprep.subr.mxu0 0.0
    %4668 = vmatpush1.msra.mxu0 0.0
    %4669 = vmatprep.mubr.f32.mxu0 0.0
    %4670 = vmatmul.mubr.f32.gmra.mrb[0].mxu0 %v4603
    %v4671 = vpop.f32.mrb[0].mxu0
    %v4672 = vadd.f32 %v1968, %v4671
    %v4673 = vpop.f32.mrb[0].mxu0
    %4674 = vdwg.mxu0
    %v4677 = vunpack.c.l.s4 1966171168
    %v4678 = vunpack.c.0.s8 %v4677
    %v4679 = vlaneseq
    %v4680 = vshrl.u32 %v4679, 7
    %v4681 = vsub.s32 %v4678, %v4680
    %v4682 = vrot.slane %v4672, %v4681
    %v4683 = vcombine.high %v4682, %v4682
    %v4685 = vunpack.c.l.s4 1966171168
    %v4686 = vunpack.c.0.s8 %v4685
    %v4687 = vlaneseq
    %v4688 = vshrl.u32 %v4687, 7
    %v4689 = vsub.s32 %v4686, %v4688
    %v4690 = vrot.slane %v4682, %v4689
    %v4692 = vunpack.c.l.s4 1966171168
    %v4693 = vunpack.c.0.s8 %v4692
    %v4694 = vlaneseq
    %v4695 = vshrl.u32 %v4694, 7
    %v4696 = vsub.s32 %v4693, %v4695
    %v4697 = vrot.slane %v4683, %v4696
    %v4698 = vlaneseq
    %v4699 = vshrl.u32 %v4698, 7
    %v4700 = vsub.s32 0, %v4699
    %v4701 = vrot.slane %v4690, %v4700
    %v4702 = vlaneseq
    %v4703 = vshrl.u32 %v4702, 7
    %v4704 = vsub.s32 0, %v4703
    %v4705 = vrot.slane %v4697, %v4704
    %v4708 = vadd.f32 %v4701, %v1835
    %v4709 = vadd.f32 %v4705, %v1840
    %v4710 = vtanh.pop %v4708
    %v4711 = vtanh.pop %v4709
    %v4712 = vmul.f32 %v4710, %v2086
    %v4713 = vmul.f32 %v4711, %v2086
    %v4714 = vsel %vm356, %v4712, 0.0
    %4715 = vadd.xlane.f32.xlu0 %v4714
    %v4716 = vpop.xlane.xlu0 %4715
    %v4717 = vsel %vm356, %v4713, 0.0
    %4718 = vadd.xlane.f32.xlu0 %v4717
    %v4719 = vpop.xlane.xlu0 %4718
    %v4720 = vmul.f32 %v4446, 1e+08
    %v4722 = vlaneseq
    %v4723 = vshrl.u32 %v4722, 7
    %v4724 = vsub.s32 0, %v4723
    %v4725 = vrot.slane %v4720, %v4724
    %4727 = vbcast.lane.b32.xlu0 %v4725, 256
    %v4728 = vpop.permute.xlu0 %4727
    %v4729 = vlaneseq
    %v4730 = vshrl.u32 %v4729, 7
    %v4731 = vsub.s32 1, %v4730
    %v4732 = vrot.slane %v4720, %v4731
    %4734 = vbcast.lane.b32.xlu0 %v4732, 256
    %v4735 = vpop.permute.xlu0 %4734
    %v4738 = vsub.f32 %v4716, %v4728
    %v4739 = vsub.f32 %v4719, %v4735
    %4742 = vset.pattern.permute.xlu0 0
    %4743 = vperm.xlu0 %4742, %v4738
    %v4744 = vpop.permute.xlu0 %4743
    %4745 = vset.pattern.permute.xlu0 0
    %4746 = vperm.xlu0 %4745, %v4739
    %v4747 = vpop.permute.xlu0 %4746
    %v4748 = vlaneseq
    %v4749 = vshrl.u32 %v4748, 7
    %v4750 = vsub.s32 %v1856, %v4749
    %v4751 = vrot.slane %v4744, %v4750
    %v4752 = vlaneseq
    %v4753 = vshrl.u32 %v4752, 7
    %v4754 = vsub.s32 %v1856, %v4753
    %v4755 = vrot.slane %v4747, %v4754
    %v4756 = vsel %vm737, %v4755, %v4751
    %v4758 = vsel %vm2108, %v4756, -inf
    %4759 = vmax.xlane.f32.xlu0 %v4758
    %v4760 = vpop.xlane.xlu0 %4759
    %v4762 = vlaneseq
    %v4763 = vshrl.u32 %v4762, 7
    %v4764 = vsub.s32 0, %v4763
    %v4765 = vrot.slane %v4760, %v4764
    %v4766 = vlaneseq
    %v4767 = vshrl.u32 %v4766, 7
    %v4768 = vsub.s32 1, %v4767
    %v4769 = vrot.slane %v4760, %v4768
    %v4772 = vsub.f32 %v4738, %v4765
    %v4773 = vsub.f32 %v4739, %v4769
    %v4774 = vmul.f32 %v4772, 1.442695
    %v4775 = vpow.pop %v4774
    %v4776 = vmul.f32 %v4773, 1.442695
    %v4777 = vpow.pop %v4776
    %4780 = vset.pattern.permute.xlu0 0
    %4781 = vperm.xlu0 %4780, %v4775
    %v4782 = vpop.permute.xlu0 %4781
    %4783 = vset.pattern.permute.xlu0 0
    %4784 = vperm.xlu0 %4783, %v4777
    %v4785 = vpop.permute.xlu0 %4784
    %v4786 = vlaneseq
    %v4787 = vshrl.u32 %v4786, 7
    %v4788 = vsub.s32 %v1856, %v4787
    %v4789 = vrot.slane %v4782, %v4788
    %v4790 = vlaneseq
    %v4791 = vshrl.u32 %v4790, 7
    %v4792 = vsub.s32 %v1856, %v4791
    %v4793 = vrot.slane %v4785, %v4792
    %v4794 = vsel %vm737, %v4793, %v4789
    %v4796 = vsel %vm2108, %v4794, 0.0
    %4797 = vadd.xlane.f32.xlu0 %v4796
    %v4798 = vpop.xlane.xlu0 %4797
    %v4800 = vlaneseq
    %v4801 = vshrl.u32 %v4800, 7
    %v4802 = vsub.s32 0, %v4801
    %v4803 = vrot.slane %v4798, %v4802
    %v4804 = vlaneseq
    %v4805 = vshrl.u32 %v4804, 7
    %v4806 = vsub.s32 1, %v4805
    %v4807 = vrot.slane %v4798, %v4806
    %v4810 = vrcp.pop %v4803
    %v4811 = vmul.f32 %v4775, %v4810
    %v4812 = vrcp.pop %v4807
    %v4813 = vmul.f32 %v4777, %v4812
    %4815 = vset.pattern.permute.xlu0 0
    %4816 = vperm.xlu0 %4815, %v4811
    %v4817 = vpop.permute.xlu0 %4816
    %4820 = vset.pattern.permute.xlu0 0
    %4821 = vperm.xlu0 %4820, %v4813
    %v4822 = vpop.permute.xlu0 %4821
    %v4824 = vmul.f32 %v4817, %v1835
    %v4825 = vmul.f32 %v4822, %v1840
    %v4826 = vsel %vm356, %v4824, 0.0
    %v4827 = vrot.slane %v4826, 4
    %v4828 = vadd.f32 %v4826, %v4827
    %v4829 = vrot.slane %v4828, 2
    %v4830 = vadd.f32 %v4828, %v4829
    %v4831 = vrot.slane %v4830, 1
    %v4832 = vadd.f32 %v4830, %v4831
    %v4833 = vsel %vm356, %v4825, 0.0
    %v4834 = vrot.slane %v4833, 4
    %v4835 = vadd.f32 %v4833, %v4834
    %v4836 = vrot.slane %v4835, 2
    %v4837 = vadd.f32 %v4835, %v4836
    %v4838 = vrot.slane %v4837, 1
    %v4839 = vadd.f32 %v4837, %v4838
    %v4842 = vsel %vm737, %v4839, %v4832
    %v4843 = vsel %vm356, %v4842, 0
    %4845 = vmatprep.subr.mxu0 0.0
    %4846 = vmatpush1.msra.mxu0 %v1848
    %4847 = vmatprep.subr.mxu0 0.0
    %4848 = vmatpush1.msra.mxu0 %v1849
    %4849 = vmatprep.subr.mxu0 0.0
    %4850 = vmatpush1.msra.mxu0 %v1850
    %4851 = vmatprep.subr.mxu0 0.0
    %4852 = vmatpush1.msra.mxu0 %v1851
    %4853 = vmatprep.subr.mxu0 0.0
    %4854 = vmatpush1.msra.mxu0 0.0
    %4855 = vmatprep.subr.mxu0 0.0
    %4856 = vmatpush1.msra.mxu0 0.0
    %4857 = vmatprep.subr.mxu0 0.0
    %4858 = vmatpush1.msra.mxu0 0.0
    %4859 = vmatprep.subr.mxu0 0.0
    %4860 = vmatpush1.msra.mxu0 0.0
    %4861 = vmatprep.subr.mxu0 0.0
    %4862 = vmatpush1.msra.mxu0 0.0
    %4863 = vmatprep.subr.mxu0 0.0
    %4864 = vmatpush1.msra.mxu0 0.0
    %4865 = vmatprep.subr.mxu0 0.0
    %4866 = vmatpush1.msra.mxu0 0.0
    %4867 = vmatprep.subr.mxu0 0.0
    %4868 = vmatpush1.msra.mxu0 0.0
    %4869 = vmatprep.subr.mxu0 0.0
    %4870 = vmatpush1.msra.mxu0 0.0
    %4871 = vmatprep.subr.mxu0 0.0
    %4872 = vmatpush1.msra.mxu0 0.0
    %4873 = vmatprep.subr.mxu0 0.0
    %4874 = vmatpush1.msra.mxu0 0.0
    %4875 = vmatprep.subr.mxu0 0.0
    %4876 = vmatpush1.msra.mxu0 0.0
    %4877 = vmatprep.subr.mxu0 0.0
    %4878 = vmatpush1.msra.mxu0 0.0
    %4879 = vmatprep.subr.mxu0 0.0
    %4880 = vmatpush1.msra.mxu0 0.0
    %4881 = vmatprep.subr.mxu0 0.0
    %4882 = vmatpush1.msra.mxu0 0.0
    %4883 = vmatprep.subr.mxu0 0.0
    %4884 = vmatpush1.msra.mxu0 0.0
    %4885 = vmatprep.subr.mxu0 0.0
    %4886 = vmatpush1.msra.mxu0 0.0
    %4887 = vmatprep.subr.mxu0 0.0
    %4888 = vmatpush1.msra.mxu0 0.0
    %4889 = vmatprep.subr.mxu0 0.0
    %4890 = vmatpush1.msra.mxu0 0.0
    %4891 = vmatprep.subr.mxu0 0.0
    %4892 = vmatpush1.msra.mxu0 0.0
    %4893 = vmatprep.subr.mxu0 0.0
    %4894 = vmatpush1.msra.mxu0 0.0
    %4895 = vmatprep.subr.mxu0 0.0
    %4896 = vmatpush1.msra.mxu0 0.0
    %4897 = vmatprep.subr.mxu0 0.0
    %4898 = vmatpush1.msra.mxu0 0.0
    %4899 = vmatprep.subr.mxu0 0.0
    %4900 = vmatpush1.msra.mxu0 0.0
    %4901 = vmatprep.subr.mxu0 0.0
    %4902 = vmatpush1.msra.mxu0 0.0
    %4903 = vmatprep.subr.mxu0 0.0
    %4904 = vmatpush1.msra.mxu0 0.0
    %4905 = vmatprep.subr.mxu0 0.0
    %4906 = vmatpush1.msra.mxu0 0.0
    %4907 = vmatprep.subr.mxu0 0.0
    %4908 = vmatpush1.msra.mxu0 0.0
    %4909 = vmatprep.mubr.f32.mxu0 0.0
    %4910 = vmatmul.mubr.f32.gmra.mrb[0].mxu0 %v4843
    %v4911 = vpop.f32.mrb[0].mxu0
    %v4912 = vadd.f32 %v2195, %v4911
    %v4913 = vpop.f32.mrb[0].mxu0
    %4914 = vdwg.mxu0
    %v4917 = vunpack.c.l.s4 1966171168
    %v4918 = vunpack.c.0.s8 %v4917
    %v4919 = vlaneseq
    %v4920 = vshrl.u32 %v4919, 7
    %v4921 = vsub.s32 %v4918, %v4920
    %v4922 = vrot.slane %v4912, %v4921
    %v4923 = vcombine.high %v4922, %v4922
    %v4925 = vunpack.c.l.s4 1966171168
    %v4926 = vunpack.c.0.s8 %v4925
    %v4927 = vlaneseq
    %v4928 = vshrl.u32 %v4927, 7
    %v4929 = vsub.s32 %v4926, %v4928
    %v4930 = vrot.slane %v4922, %v4929
    %v4932 = vunpack.c.l.s4 1966171168
    %v4933 = vunpack.c.0.s8 %v4932
    %v4934 = vlaneseq
    %v4935 = vshrl.u32 %v4934, 7
    %v4936 = vsub.s32 %v4933, %v4935
    %v4937 = vrot.slane %v4923, %v4936
    %v4938 = vlaneseq
    %v4939 = vshrl.u32 %v4938, 7
    %v4940 = vsub.s32 0, %v4939
    %v4941 = vrot.slane %v4930, %v4940
    %v4942 = vlaneseq
    %v4943 = vshrl.u32 %v4942, 7
    %v4944 = vsub.s32 0, %v4943
    %v4945 = vrot.slane %v4937, %v4944
    %v4948 = vadd.f32 %v4941, %v2308
    %v4949 = vadd.f32 %v4945, %v2310
    %v4950 = vtanh.pop %v4948
    %v4951 = vtanh.pop %v4949
    %v4952 = vmul.f32 %v4950, 10.0
    %v4953 = vmul.f32 %v4951, 10.0
    %v4954 = vmul.f32 %v4952, %v2323
    %v4955 = vmul.f32 %v4953, %v2323
    %v4956 = vsel %vm356, %v4954, 0.0
    %4957 = vadd.xlane.f32.xlu0 %v4956
    %v4958 = vpop.xlane.xlu0 %4957
    %v4959 = vsel %vm356, %v4955, 0.0
    %4960 = vadd.xlane.f32.xlu0 %v4959
    %v4961 = vpop.xlane.xlu0 %4960
    %v4962 = vsub.f32 %v4958, %v4728
    %v4963 = vsub.f32 %v4961, %v4735
    %4966 = vset.pattern.permute.xlu0 0
    %4967 = vperm.xlu0 %4966, %v4962
    %v4968 = vpop.permute.xlu0 %4967
    %4969 = vset.pattern.permute.xlu0 0
    %4970 = vperm.xlu0 %4969, %v4963
    %v4971 = vpop.permute.xlu0 %4970
    %v4972 = vlaneseq
    %v4973 = vshrl.u32 %v4972, 7
    %v4974 = vsub.s32 %v1856, %v4973
    %v4975 = vrot.slane %v4968, %v4974
    %v4976 = vlaneseq
    %v4977 = vshrl.u32 %v4976, 7
    %v4978 = vsub.s32 %v1856, %v4977
    %v4979 = vrot.slane %v4971, %v4978
    %v4980 = vsel %vm737, %v4979, %v4975
    %v4982 = vsel %vm2108, %v4980, -inf
    %4983 = vmax.xlane.f32.xlu0 %v4982
    %v4984 = vpop.xlane.xlu0 %4983
    %v4986 = vlaneseq
    %v4987 = vshrl.u32 %v4986, 7
    %v4988 = vsub.s32 0, %v4987
    %v4989 = vrot.slane %v4984, %v4988
    %v4990 = vlaneseq
    %v4991 = vshrl.u32 %v4990, 7
    %v4992 = vsub.s32 1, %v4991
    %v4993 = vrot.slane %v4984, %v4992
    %v4996 = vsub.f32 %v4962, %v4989
    %v4997 = vsub.f32 %v4963, %v4993
    %v4998 = vmul.f32 %v4996, 1.442695
    %v4999 = vpow.pop %v4998
    %v5000 = vmul.f32 %v4997, 1.442695
    %v5001 = vpow.pop %v5000
    %5004 = vset.pattern.permute.xlu0 0
    %5005 = vperm.xlu0 %5004, %v4999
    %v5006 = vpop.permute.xlu0 %5005
    %5007 = vset.pattern.permute.xlu0 0
    %5008 = vperm.xlu0 %5007, %v5001
    %v5009 = vpop.permute.xlu0 %5008
    %v5010 = vlaneseq
    %v5011 = vshrl.u32 %v5010, 7
    %v5012 = vsub.s32 %v1856, %v5011
    %v5013 = vrot.slane %v5006, %v5012
    %v5014 = vlaneseq
    %v5015 = vshrl.u32 %v5014, 7
    %v5016 = vsub.s32 %v1856, %v5015
    %v5017 = vrot.slane %v5009, %v5016
    %v5018 = vsel %vm737, %v5017, %v5013
    %v5020 = vsel %vm2108, %v5018, 0.0
    %5021 = vadd.xlane.f32.xlu0 %v5020
    %v5022 = vpop.xlane.xlu0 %5021
    %v5023 = vlog2.pop %v5022
    %v5024 = vmul.f32 %v5023, 0.6931472
    %v5026 = vlaneseq
    %v5027 = vshrl.u32 %v5026, 7
    %v5028 = vsub.s32 0, %v5027
    %v5029 = vrot.slane %v5024, %v5028
    %v5030 = vlaneseq
    %v5031 = vshrl.u32 %v5030, 7
    %v5032 = vsub.s32 1, %v5031
    %v5033 = vrot.slane %v5024, %v5032
    %v5036 = vsub.f32 %v4996, %v5029
    %v5037 = vsub.f32 %v4997, %v5033
    %5040 = vset.pattern.permute.xlu0 0
    %5041 = vperm.xlu0 %5040, %v5036
    %v5042 = vpop.permute.xlu0 %5041
    %5043 = vset.pattern.permute.xlu0 0
    %5044 = vperm.xlu0 %5043, %v5037
    %v5045 = vpop.permute.xlu0 %5044
    %v5046 = vlaneseq
    %v5047 = vshrl.u32 %v5046, 7
    %v5048 = vsub.s32 %v1856, %v5047
    %v5049 = vrot.slane %v5042, %v5048
    %v5050 = vlaneseq
    %v5051 = vshrl.u32 %v5050, 7
    %v5052 = vsub.s32 %v1856, %v5051
    %v5053 = vrot.slane %v5045, %v5052
    %v5054 = vsel %vm737, %v5053, %v5049
    %v5056 = vsel %vm2108, %v5054, -inf
    %5057 = vmax.xlane.f32.xlu0 %v5056
    %v5058 = vpop.xlane.xlu0 %5057
    %v5060 = vlaneseq
    %v5061 = vshrl.u32 %v5060, 7
    %v5062 = vsub.s32 0, %v5061
    %v5063 = vrot.slane %v5058, %v5062
    %v5064 = vlaneseq
    %v5065 = vshrl.u32 %v5064, 7
    %v5066 = vsub.s32 1, %v5065
    %v5067 = vrot.slane %v5058, %v5066
    %vm5070 = vcmp.eq.f32.partialorder %v5036, %v5063
    %vm5071 = vcmp.eq.f32.partialorder %v5037, %v5067
    %v5072 = vsel %vm5070, %v2438, 8.0
    %v5073 = vsel %vm5071, %v2438, 8.0
    %5076 = vset.pattern.permute.xlu0 0
    %5077 = vperm.xlu0 %5076, %v5072
    %v5078 = vpop.permute.xlu0 %5077
    %5079 = vset.pattern.permute.xlu0 0
    %5080 = vperm.xlu0 %5079, %v5073
    %v5081 = vpop.permute.xlu0 %5080
    %v5082 = vlaneseq
    %v5083 = vshrl.u32 %v5082, 7
    %v5084 = vsub.s32 %v1856, %v5083
    %v5085 = vrot.slane %v5078, %v5084
    %v5086 = vlaneseq
    %v5087 = vshrl.u32 %v5086, 7
    %v5088 = vsub.s32 %v1856, %v5087
    %v5089 = vrot.slane %v5081, %v5088
    %v5090 = vsel %vm737, %v5089, %v5085
    %v5092 = vsel %vm2108, %v5090, inf
    %5093 = vmin.xlane.f32.xlu0 %v5092
    %v5094 = vpop.xlane.xlu0 %5093
    %vm5095 = vcmp.eq.f32.partialorder %v1857, %v5094
    %v5096 = vsel %vm5095, 1, 0
    %v5097 = vcvt.s32.f32 %v5096
    %v5098 = vmul.f32 %v5097, %v5054
    %v5099 = vsel %vm2108, %v5098, 0.0
    %5100 = vadd.xlane.f32.xlu0 %v5099
    %v5101 = vpop.xlane.xlu0 %5100
    %v5102 = vadd.f32 %v4445, %v5101
    %v5103 = vadd.f32 %v4446, %v5097
    %vm5104 = vcmask 33824
    %5105 = vst.msk [vmem:[#allocation20] sm:$0x3] %vm5104, %v5094
    %v5106 = vlaneseq
    %v5107 = vshrl.u32 %v5106, 7
    %v5108 = vsub.s32 0, %v5107
    %v5109 = vrot.slane %v5097, %v5108
    %5111 = vbcast.lane.b32.xlu0 %v5109, 256
    %v5112 = vpop.permute.xlu0 %5111
    %v5113 = vlaneseq
    %v5114 = vshrl.u32 %v5113, 7
    %v5115 = vsub.s32 1, %v5114
    %v5116 = vrot.slane %v5097, %v5115
    %5118 = vbcast.lane.b32.xlu0 %v5116, 256
    %v5119 = vpop.permute.xlu0 %5118
    %v5120 = vmul.f32 %v5112, %v516
    %v5121 = vmul.f32 %v5119, %v521
    %v5122 = vrot.slane %v5120, 4
    %v5123 = vadd.f32 %v5120, %v5122
    %v5124 = vrot.slane %v5123, 2
    %v5125 = vadd.f32 %v5123, %v5124
    %v5126 = vrot.slane %v5125, 1
    %v5127 = vadd.f32 %v5125, %v5126
    %v5128 = vrot.slane %v5121, 4
    %v5129 = vadd.f32 %v5121, %v5128
    %v5130 = vrot.slane %v5129, 2
    %v5131 = vadd.f32 %v5129, %v5130
    %v5132 = vrot.slane %v5131, 1
    %v5133 = vadd.f32 %v5131, %v5132
    %5134 = vmatprep.subr.mxu0 0.0
    %5135 = vmatpush1.msra.mxu0 %v341
    %5136 = vmatprep.subr.mxu0 0.0
    %5137 = vmatpush1.msra.mxu0 %v342
    %5138 = vmatprep.subr.mxu0 0.0
    %5139 = vmatpush1.msra.mxu0 %v343
    %5140 = vmatprep.subr.mxu0 0.0
    %5141 = vmatpush1.msra.mxu0 %v344
    %5142 = vmatprep.subr.mxu0 0.0
    %5143 = vmatpush1.msra.mxu0 0.0
    %5144 = vmatprep.subr.mxu0 0.0
    %5145 = vmatpush1.msra.mxu0 0.0
    %5146 = vmatprep.subr.mxu0 0.0
    %5147 = vmatpush1.msra.mxu0 0.0
    %5148 = vmatprep.subr.mxu0 0.0
    %5149 = vmatpush1.msra.mxu0 0.0
    %5150 = vmatprep.subr.mxu0 0.0
    %5151 = vmatpush1.msra.mxu0 0.0
    %5152 = vmatprep.subr.mxu0 0.0
    %5153 = vmatpush1.msra.mxu0 0.0
    %5154 = vmatprep.subr.mxu0 0.0
    %5155 = vmatpush1.msra.mxu0 0.0
    %5156 = vmatprep.subr.mxu0 0.0
    %5157 = vmatpush1.msra.mxu0 0.0
    %5158 = vmatprep.subr.mxu0 0.0
    %5159 = vmatpush1.msra.mxu0 0.0
    %5160 = vmatprep.subr.mxu0 0.0
    %5161 = vmatpush1.msra.mxu0 0.0
    %5162 = vmatprep.subr.mxu0 0.0
    %5163 = vmatpush1.msra.mxu0 0.0
    %5164 = vmatprep.subr.mxu0 0.0
    %5165 = vmatpush1.msra.mxu0 0.0
    %5166 = vmatprep.subr.mxu0 0.0
    %5167 = vmatpush1.msra.mxu0 0.0
    %5168 = vmatprep.subr.mxu0 0.0
    %5169 = vmatpush1.msra.mxu0 0.0
    %5170 = vmatprep.subr.mxu0 0.0
    %5171 = vmatpush1.msra.mxu0 0.0
    %5172 = vmatprep.subr.mxu0 0.0
    %5173 = vmatpush1.msra.mxu0 0.0
    %5174 = vmatprep.subr.mxu0 0.0
    %5175 = vmatpush1.msra.mxu0 0.0
    %5176 = vmatprep.subr.mxu0 0.0
    %5177 = vmatpush1.msra.mxu0 0.0
    %5178 = vmatprep.subr.mxu0 0.0
    %5179 = vmatpush1.msra.mxu0 0.0
    %5180 = vmatprep.subr.mxu0 0.0
    %5181 = vmatpush1.msra.mxu0 0.0
    %5182 = vmatprep.subr.mxu0 0.0
    %5183 = vmatpush1.msra.mxu0 0.0
    %5184 = vmatprep.subr.mxu0 0.0
    %5185 = vmatpush1.msra.mxu0 0.0
    %5186 = vmatprep.subr.mxu0 0.0
    %5187 = vmatpush1.msra.mxu0 0.0
    %5188 = vmatprep.subr.mxu0 0.0
    %5189 = vmatpush1.msra.mxu0 0.0
    %5190 = vmatprep.subr.mxu0 0.0
    %5191 = vmatpush1.msra.mxu0 0.0
    %5192 = vmatprep.subr.mxu0 0.0
    %5193 = vmatpush1.msra.mxu0 0.0
    %5194 = vmatprep.subr.mxu0 0.0
    %5195 = vmatpush1.msra.mxu0 0.0
    %5196 = vmatprep.subr.mxu0 0.0
    %5197 = vmatpush1.msra.mxu0 0.0
    %5198 = vmatprep.mubr.f32.mxu0 0.0
    %5199 = vmatmul.mubr.f32.gmra.mrb[0].mxu0 %v4603
    %v5200 = vpop.f32.mrb[0].mxu0
    %v5201 = vadd.f32 0.0, %v5200
    %v5202 = vpop.f32.mrb[0].mxu0
    %5203 = vdwg.mxu0
    %v5205 = vrot.slane %v5201, 1
    %v5208 = vadd.f32 %v5127, %v5201
    %v5209 = vadd.f32 %v5133, %v5205
    %v5210 = vmul.f32 %v5208, 0.5
    %v5211 = vmul.f32 %v5209, 0.5
    %v5212 = vtanh.pop %v5210
    %v5213 = vtanh.pop %v5211
    %v5214 = vmul.f32 %v5212, 0.5
    %v5215 = vmul.f32 %v5213, 0.5
    %v5216 = vadd.f32 %v5214, 0.5
    %v5217 = vadd.f32 %v5215, 0.5
    %v5218 = vtanh.pop %v5208
    %v5219 = vtanh.pop %v5209
    %v5220 = vmul.f32 %v5216, %v4583
    %v5221 = vmul.f32 %v5217, %v4584
    %5224 = vrot.lane.b32.xlu0 %v5218, 64
    %v5225 = vpop.permute.xlu0 %5224
    %5226 = vrot.lane.b32.xlu0 %v5219, 64
    %v5227 = vpop.permute.xlu0 %5226
    %v5230 = vmul.f32 %v5216, %v5225
    %v5231 = vmul.f32 %v5217, %v5227
    %5234 = vrot.lane.b32.xlu0 %v5230, 32
    %v5235 = vpop.permute.xlu0 %5234
    %5236 = vrot.lane.b32.xlu0 %v5231, 32
    %v5237 = vpop.permute.xlu0 %5236
    %v5240 = vadd.f32 %v5220, %v5235
    %v5241 = vadd.f32 %v5221, %v5237
    %v5242 = vtanh.pop %v5240
    %v5243 = vtanh.pop %v5241
    %5246 = vrot.lane.b32.xlu0 %v5242, 64
    %v5247 = vpop.permute.xlu0 %5246
    %5248 = vrot.lane.b32.xlu0 %v5243, 64
    %v5249 = vpop.permute.xlu0 %5248
    %v5252 = vmul.f32 %v5216, %v5247
    %v5253 = vmul.f32 %v5217, %v5249
    %v5256 = vrot.slane %v5253, 7
    %v5257 = vsel %vm737, %v5256, %v5252
    %5258 = vrot.lane.b32.xlu0 %v5257, 32
    %v5259 = vpop.permute.xlu0 %5258
    %v5260 = vsel %vm356, %v5259, 0
    %5262 = vmatprep.subr.mxu0 0.0
    %5263 = vmatpush1.msra.mxu0 %v1843
    %5264 = vmatprep.subr.mxu0 0.0
    %5265 = vmatpush1.msra.mxu0 %v1844
    %5266 = vmatprep.subr.mxu0 0.0
    %5267 = vmatpush1.msra.mxu0 %v1845
    %5268 = vmatprep.subr.mxu0 0.0
    %5269 = vmatpush1.msra.mxu0 %v1846
    %5270 = vmatprep.subr.mxu0 0.0
    %5271 = vmatpush1.msra.mxu0 0.0
    %5272 = vmatprep.subr.mxu0 0.0
    %5273 = vmatpush1.msra.mxu0 0.0
    %5274 = vmatprep.subr.mxu0 0.0
    %5275 = vmatpush1.msra.mxu0 0.0
    %5276 = vmatprep.subr.mxu0 0.0
    %5277 = vmatpush1.msra.mxu0 0.0
    %5278 = vmatprep.subr.mxu0 0.0
    %5279 = vmatpush1.msra.mxu0 0.0
    %5280 = vmatprep.subr.mxu0 0.0
    %5281 = vmatpush1.msra.mxu0 0.0
    %5282 = vmatprep.subr.mxu0 0.0
    %5283 = vmatpush1.msra.mxu0 0.0
    %5284 = vmatprep.subr.mxu0 0.0
    %5285 = vmatpush1.msra.mxu0 0.0
    %5286 = vmatprep.subr.mxu0 0.0
    %5287 = vmatpush1.msra.mxu0 0.0
    %5288 = vmatprep.subr.mxu0 0.0
    %5289 = vmatpush1.msra.mxu0 0.0
    %5290 = vmatprep.subr.mxu0 0.0
    %5291 = vmatpush1.msra.mxu0 0.0
    %5292 = vmatprep.subr.mxu0 0.0
    %5293 = vmatpush1.msra.mxu0 0.0
    %5294 = vmatprep.subr.mxu0 0.0
    %5295 = vmatpush1.msra.mxu0 0.0
    %5296 = vmatprep.subr.mxu0 0.0
    %5297 = vmatpush1.msra.mxu0 0.0
    %5298 = vmatprep.subr.mxu0 0.0
    %5299 = vmatpush1.msra.mxu0 0.0
    %5300 = vmatprep.subr.mxu0 0.0
    %5301 = vmatpush1.msra.mxu0 0.0
    %5302 = vmatprep.subr.mxu0 0.0
    %5303 = vmatpush1.msra.mxu0 0.0
    %5304 = vmatprep.subr.mxu0 0.0
    %5305 = vmatpush1.msra.mxu0 0.0
    %5306 = vmatprep.subr.mxu0 0.0
    %5307 = vmatpush1.msra.mxu0 0.0
    %5308 = vmatprep.subr.mxu0 0.0
    %5309 = vmatpush1.msra.mxu0 0.0
    %5310 = vmatprep.subr.mxu0 0.0
    %5311 = vmatpush1.msra.mxu0 0.0
    %5312 = vmatprep.subr.mxu0 0.0
    %5313 = vmatpush1.msra.mxu0 0.0
    %5314 = vmatprep.subr.mxu0 0.0
    %5315 = vmatpush1.msra.mxu0 0.0
    %5316 = vmatprep.subr.mxu0 0.0
    %5317 = vmatpush1.msra.mxu0 0.0
    %5318 = vmatprep.subr.mxu0 0.0
    %5319 = vmatpush1.msra.mxu0 0.0
    %5320 = vmatprep.subr.mxu0 0.0
    %5321 = vmatpush1.msra.mxu0 0.0
    %5322 = vmatprep.subr.mxu0 0.0
    %5323 = vmatpush1.msra.mxu0 0.0
    %5324 = vmatprep.subr.mxu0 0.0
    %5325 = vmatpush1.msra.mxu0 0.0
    %5326 = vmatprep.mubr.f32.mxu0 0.0
    %5327 = vmatmul.mubr.f32.gmra.mrb[0].mxu0 %v5260
    %v5328 = vpop.f32.mrb[0].mxu0
    %v5329 = vadd.f32 %v1968, %v5328
    %v5330 = vpop.f32.mrb[0].mxu0
    %5331 = vdwg.mxu0
    %v5334 = vunpack.c.l.s4 1966171168
    %v5335 = vunpack.c.0.s8 %v5334
    %v5336 = vlaneseq
    %v5337 = vshrl.u32 %v5336, 7
    %v5338 = vsub.s32 %v5335, %v5337
    %v5339 = vrot.slane %v5329, %v5338
    %v5340 = vcombine.high %v5339, %v5339
    %v5342 = vunpack.c.l.s4 1966171168
    %v5343 = vunpack.c.0.s8 %v5342
    %v5344 = vlaneseq
    %v5345 = vshrl.u32 %v5344, 7
    %v5346 = vsub.s32 %v5343, %v5345
    %v5347 = vrot.slane %v5339, %v5346
    %v5349 = vunpack.c.l.s4 1966171168
    %v5350 = vunpack.c.0.s8 %v5349
    %v5351 = vlaneseq
    %v5352 = vshrl.u32 %v5351, 7
    %v5353 = vsub.s32 %v5350, %v5352
    %v5354 = vrot.slane %v5340, %v5353
    %v5355 = vlaneseq
    %v5356 = vshrl.u32 %v5355, 7
    %v5357 = vsub.s32 0, %v5356
    %v5358 = vrot.slane %v5347, %v5357
    %v5359 = vlaneseq
    %v5360 = vshrl.u32 %v5359, 7
    %v5361 = vsub.s32 0, %v5360
    %v5362 = vrot.slane %v5354, %v5361
    %v5365 = vadd.f32 %v5358, %v1835
    %v5366 = vadd.f32 %v5362, %v1840
    %v5367 = vtanh.pop %v5365
    %v5368 = vtanh.pop %v5366
    %v5369 = vmul.f32 %v5367, %v2086
    %v5370 = vmul.f32 %v5368, %v2086
    %v5371 = vsel %vm356, %v5369, 0.0
    %5372 = vadd.xlane.f32.xlu0 %v5371
    %v5373 = vpop.xlane.xlu0 %5372
    %v5374 = vsel %vm356, %v5370, 0.0
    %5375 = vadd.xlane.f32.xlu0 %v5374
    %v5376 = vpop.xlane.xlu0 %5375
    %v5377 = vmul.f32 %v5103, 1e+08
    %v5379 = vlaneseq
    %v5380 = vshrl.u32 %v5379, 7
    %v5381 = vsub.s32 0, %v5380
    %v5382 = vrot.slane %v5377, %v5381
    %5384 = vbcast.lane.b32.xlu0 %v5382, 256
    %v5385 = vpop.permute.xlu0 %5384
    %v5386 = vlaneseq
    %v5387 = vshrl.u32 %v5386, 7
    %v5388 = vsub.s32 1, %v5387
    %v5389 = vrot.slane %v5377, %v5388
    %5391 = vbcast.lane.b32.xlu0 %v5389, 256
    %v5392 = vpop.permute.xlu0 %5391
    %v5395 = vsub.f32 %v5373, %v5385
    %v5396 = vsub.f32 %v5376, %v5392
    %5399 = vset.pattern.permute.xlu0 0
    %5400 = vperm.xlu0 %5399, %v5395
    %v5401 = vpop.permute.xlu0 %5400
    %5402 = vset.pattern.permute.xlu0 0
    %5403 = vperm.xlu0 %5402, %v5396
    %v5404 = vpop.permute.xlu0 %5403
    %v5405 = vlaneseq
    %v5406 = vshrl.u32 %v5405, 7
    %v5407 = vsub.s32 %v1856, %v5406
    %v5408 = vrot.slane %v5401, %v5407
    %v5409 = vlaneseq
    %v5410 = vshrl.u32 %v5409, 7
    %v5411 = vsub.s32 %v1856, %v5410
    %v5412 = vrot.slane %v5404, %v5411
    %v5413 = vsel %vm737, %v5412, %v5408
    %v5415 = vsel %vm2108, %v5413, -inf
    %5416 = vmax.xlane.f32.xlu0 %v5415
    %v5417 = vpop.xlane.xlu0 %5416
    %v5419 = vlaneseq
    %v5420 = vshrl.u32 %v5419, 7
    %v5421 = vsub.s32 0, %v5420
    %v5422 = vrot.slane %v5417, %v5421
    %v5423 = vlaneseq
    %v5424 = vshrl.u32 %v5423, 7
    %v5425 = vsub.s32 1, %v5424
    %v5426 = vrot.slane %v5417, %v5425
    %v5429 = vsub.f32 %v5395, %v5422
    %v5430 = vsub.f32 %v5396, %v5426
    %v5431 = vmul.f32 %v5429, 1.442695
    %v5432 = vpow.pop %v5431
    %v5433 = vmul.f32 %v5430, 1.442695
    %v5434 = vpow.pop %v5433
    %5437 = vset.pattern.permute.xlu0 0
    %5438 = vperm.xlu0 %5437, %v5432
    %v5439 = vpop.permute.xlu0 %5438
    %5440 = vset.pattern.permute.xlu0 0
    %5441 = vperm.xlu0 %5440, %v5434
    %v5442 = vpop.permute.xlu0 %5441
    %v5443 = vlaneseq
    %v5444 = vshrl.u32 %v5443, 7
    %v5445 = vsub.s32 %v1856, %v5444
    %v5446 = vrot.slane %v5439, %v5445
    %v5447 = vlaneseq
    %v5448 = vshrl.u32 %v5447, 7
    %v5449 = vsub.s32 %v1856, %v5448
    %v5450 = vrot.slane %v5442, %v5449
    %v5451 = vsel %vm737, %v5450, %v5446
    %v5453 = vsel %vm2108, %v5451, 0.0
    %5454 = vadd.xlane.f32.xlu0 %v5453
    %v5455 = vpop.xlane.xlu0 %5454
    %v5457 = vlaneseq
    %v5458 = vshrl.u32 %v5457, 7
    %v5459 = vsub.s32 0, %v5458
    %v5460 = vrot.slane %v5455, %v5459
    %v5461 = vlaneseq
    %v5462 = vshrl.u32 %v5461, 7
    %v5463 = vsub.s32 1, %v5462
    %v5464 = vrot.slane %v5455, %v5463
    %v5467 = vrcp.pop %v5460
    %v5468 = vmul.f32 %v5432, %v5467
    %v5469 = vrcp.pop %v5464
    %v5470 = vmul.f32 %v5434, %v5469
    %5472 = vset.pattern.permute.xlu0 0
    %5473 = vperm.xlu0 %5472, %v5468
    %v5474 = vpop.permute.xlu0 %5473
    %5477 = vset.pattern.permute.xlu0 0
    %5478 = vperm.xlu0 %5477, %v5470
    %v5479 = vpop.permute.xlu0 %5478
    %v5481 = vmul.f32 %v5474, %v1835
    %v5482 = vmul.f32 %v5479, %v1840
    %v5483 = vsel %vm356, %v5481, 0.0
    %v5484 = vrot.slane %v5483, 4
    %v5485 = vadd.f32 %v5483, %v5484
    %v5486 = vrot.slane %v5485, 2
    %v5487 = vadd.f32 %v5485, %v5486
    %v5488 = vrot.slane %v5487, 1
    %v5489 = vadd.f32 %v5487, %v5488
    %v5490 = vsel %vm356, %v5482, 0.0
    %v5491 = vrot.slane %v5490, 4
    %v5492 = vadd.f32 %v5490, %v5491
    %v5493 = vrot.slane %v5492, 2
    %v5494 = vadd.f32 %v5492, %v5493
    %v5495 = vrot.slane %v5494, 1
    %v5496 = vadd.f32 %v5494, %v5495
    %v5499 = vsel %vm737, %v5496, %v5489
    %v5500 = vsel %vm356, %v5499, 0
    %5502 = vmatprep.subr.mxu0 0.0
    %5503 = vmatpush1.msra.mxu0 %v1848
    %5504 = vmatprep.subr.mxu0 0.0
    %5505 = vmatpush1.msra.mxu0 %v1849
    %5506 = vmatprep.subr.mxu0 0.0
    %5507 = vmatpush1.msra.mxu0 %v1850
    %5508 = vmatprep.subr.mxu0 0.0
    %5509 = vmatpush1.msra.mxu0 %v1851
    %5510 = vmatprep.subr.mxu0 0.0
    %5511 = vmatpush1.msra.mxu0 0.0
    %5512 = vmatprep.subr.mxu0 0.0
    %5513 = vmatpush1.msra.mxu0 0.0
    %5514 = vmatprep.subr.mxu0 0.0
    %5515 = vmatpush1.msra.mxu0 0.0
    %5516 = vmatprep.subr.mxu0 0.0
    %5517 = vmatpush1.msra.mxu0 0.0
    %5518 = vmatprep.subr.mxu0 0.0
    %5519 = vmatpush1.msra.mxu0 0.0
    %5520 = vmatprep.subr.mxu0 0.0
    %5521 = vmatpush1.msra.mxu0 0.0
    %5522 = vmatprep.subr.mxu0 0.0
    %5523 = vmatpush1.msra.mxu0 0.0
    %5524 = vmatprep.subr.mxu0 0.0
    %5525 = vmatpush1.msra.mxu0 0.0
    %5526 = vmatprep.subr.mxu0 0.0
    %5527 = vmatpush1.msra.mxu0 0.0
    %5528 = vmatprep.subr.mxu0 0.0
    %5529 = vmatpush1.msra.mxu0 0.0
    %5530 = vmatprep.subr.mxu0 0.0
    %5531 = vmatpush1.msra.mxu0 0.0
    %5532 = vmatprep.subr.mxu0 0.0
    %5533 = vmatpush1.msra.mxu0 0.0
    %5534 = vmatprep.subr.mxu0 0.0
    %5535 = vmatpush1.msra.mxu0 0.0
    %5536 = vmatprep.subr.mxu0 0.0
    %5537 = vmatpush1.msra.mxu0 0.0
    %5538 = vmatprep.subr.mxu0 0.0
    %5539 = vmatpush1.msra.mxu0 0.0
    %5540 = vmatprep.subr.mxu0 0.0
    %5541 = vmatpush1.msra.mxu0 0.0
    %5542 = vmatprep.subr.mxu0 0.0
    %5543 = vmatpush1.msra.mxu0 0.0
    %5544 = vmatprep.subr.mxu0 0.0
    %5545 = vmatpush1.msra.mxu0 0.0
    %5546 = vmatprep.subr.mxu0 0.0
    %5547 = vmatpush1.msra.mxu0 0.0
    %5548 = vmatprep.subr.mxu0 0.0
    %5549 = vmatpush1.msra.mxu0 0.0
    %5550 = vmatprep.subr.mxu0 0.0
    %5551 = vmatpush1.msra.mxu0 0.0
    %5552 = vmatprep.subr.mxu0 0.0
    %5553 = vmatpush1.msra.mxu0 0.0
    %5554 = vmatprep.subr.mxu0 0.0
    %5555 = vmatpush1.msra.mxu0 0.0
    %5556 = vmatprep.subr.mxu0 0.0
    %5557 = vmatpush1.msra.mxu0 0.0
    %5558 = vmatprep.subr.mxu0 0.0
    %5559 = vmatpush1.msra.mxu0 0.0
    %5560 = vmatprep.subr.mxu0 0.0
    %5561 = vmatpush1.msra.mxu0 0.0
    %5562 = vmatprep.subr.mxu0 0.0
    %5563 = vmatpush1.msra.mxu0 0.0
    %5564 = vmatprep.subr.mxu0 0.0
    %5565 = vmatpush1.msra.mxu0 0.0
    %5566 = vmatprep.mubr.f32.mxu0 0.0
    %5567 = vmatmul.mubr.f32.gmra.mrb[0].mxu0 %v5500
    %v5568 = vpop.f32.mrb[0].mxu0
    %v5569 = vadd.f32 %v2195, %v5568
    %v5570 = vpop.f32.mrb[0].mxu0
    %5571 = vdwg.mxu0
    %v5574 = vunpack.c.l.s4 1966171168
    %v5575 = vunpack.c.0.s8 %v5574
    %v5576 = vlaneseq
    %v5577 = vshrl.u32 %v5576, 7
    %v5578 = vsub.s32 %v5575, %v5577
    %v5579 = vrot.slane %v5569, %v5578
    %v5580 = vcombine.high %v5579, %v5579
    %v5582 = vunpack.c.l.s4 1966171168
    %v5583 = vunpack.c.0.s8 %v5582
    %v5584 = vlaneseq
    %v5585 = vshrl.u32 %v5584, 7
    %v5586 = vsub.s32 %v5583, %v5585
    %v5587 = vrot.slane %v5579, %v5586
    %v5589 = vunpack.c.l.s4 1966171168
    %v5590 = vunpack.c.0.s8 %v5589
    %v5591 = vlaneseq
    %v5592 = vshrl.u32 %v5591, 7
    %v5593 = vsub.s32 %v5590, %v5592
    %v5594 = vrot.slane %v5580, %v5593
    %v5595 = vlaneseq
    %v5596 = vshrl.u32 %v5595, 7
    %v5597 = vsub.s32 0, %v5596
    %v5598 = vrot.slane %v5587, %v5597
    %v5599 = vlaneseq
    %v5600 = vshrl.u32 %v5599, 7
    %v5601 = vsub.s32 0, %v5600
    %v5602 = vrot.slane %v5594, %v5601
    %v5605 = vadd.f32 %v5598, %v2308
    %v5606 = vadd.f32 %v5602, %v2310
    %v5607 = vtanh.pop %v5605
    %v5608 = vtanh.pop %v5606
    %v5609 = vmul.f32 %v5607, 10.0
    %v5610 = vmul.f32 %v5608, 10.0
    %v5611 = vmul.f32 %v5609, %v2323
    %v5612 = vmul.f32 %v5610, %v2323
    %v5613 = vsel %vm356, %v5611, 0.0
    %5614 = vadd.xlane.f32.xlu0 %v5613
    %v5615 = vpop.xlane.xlu0 %5614
    %v5616 = vsel %vm356, %v5612, 0.0
    %5617 = vadd.xlane.f32.xlu0 %v5616
    %v5618 = vpop.xlane.xlu0 %5617
    %v5619 = vsub.f32 %v5615, %v5385
    %v5620 = vsub.f32 %v5618, %v5392
    %5623 = vset.pattern.permute.xlu0 0
    %5624 = vperm.xlu0 %5623, %v5619
    %v5625 = vpop.permute.xlu0 %5624
    %5626 = vset.pattern.permute.xlu0 0
    %5627 = vperm.xlu0 %5626, %v5620
    %v5628 = vpop.permute.xlu0 %5627
    %v5629 = vlaneseq
    %v5630 = vshrl.u32 %v5629, 7
    %v5631 = vsub.s32 %v1856, %v5630
    %v5632 = vrot.slane %v5625, %v5631
    %v5633 = vlaneseq
    %v5634 = vshrl.u32 %v5633, 7
    %v5635 = vsub.s32 %v1856, %v5634
    %v5636 = vrot.slane %v5628, %v5635
    %v5637 = vsel %vm737, %v5636, %v5632
    %v5639 = vsel %vm2108, %v5637, -inf
    %5640 = vmax.xlane.f32.xlu0 %v5639
    %v5641 = vpop.xlane.xlu0 %5640
    %v5643 = vlaneseq
    %v5644 = vshrl.u32 %v5643, 7
    %v5645 = vsub.s32 0, %v5644
    %v5646 = vrot.slane %v5641, %v5645
    %v5647 = vlaneseq
    %v5648 = vshrl.u32 %v5647, 7
    %v5649 = vsub.s32 1, %v5648
    %v5650 = vrot.slane %v5641, %v5649
    %v5653 = vsub.f32 %v5619, %v5646
    %v5654 = vsub.f32 %v5620, %v5650
    %v5655 = vmul.f32 %v5653, 1.442695
    %v5656 = vpow.pop %v5655
    %v5657 = vmul.f32 %v5654, 1.442695
    %v5658 = vpow.pop %v5657
    %5661 = vset.pattern.permute.xlu0 0
    %5662 = vperm.xlu0 %5661, %v5656
    %v5663 = vpop.permute.xlu0 %5662
    %5664 = vset.pattern.permute.xlu0 0
    %5665 = vperm.xlu0 %5664, %v5658
    %v5666 = vpop.permute.xlu0 %5665
    %v5667 = vlaneseq
    %v5668 = vshrl.u32 %v5667, 7
    %v5669 = vsub.s32 %v1856, %v5668
    %v5670 = vrot.slane %v5663, %v5669
    %v5671 = vlaneseq
    %v5672 = vshrl.u32 %v5671, 7
    %v5673 = vsub.s32 %v1856, %v5672
    %v5674 = vrot.slane %v5666, %v5673
    %v5675 = vsel %vm737, %v5674, %v5670
    %v5677 = vsel %vm2108, %v5675, 0.0
    %5678 = vadd.xlane.f32.xlu0 %v5677
    %v5679 = vpop.xlane.xlu0 %5678
    %v5680 = vlog2.pop %v5679
    %v5681 = vmul.f32 %v5680, 0.6931472
    %v5683 = vlaneseq
    %v5684 = vshrl.u32 %v5683, 7
    %v5685 = vsub.s32 0, %v5684
    %v5686 = vrot.slane %v5681, %v5685
    %v5687 = vlaneseq
    %v5688 = vshrl.u32 %v5687, 7
    %v5689 = vsub.s32 1, %v5688
    %v5690 = vrot.slane %v5681, %v5689
    %v5693 = vsub.f32 %v5653, %v5686
    %v5694 = vsub.f32 %v5654, %v5690
    %5697 = vset.pattern.permute.xlu0 0
    %5698 = vperm.xlu0 %5697, %v5693
    %v5699 = vpop.permute.xlu0 %5698
    %5700 = vset.pattern.permute.xlu0 0
    %5701 = vperm.xlu0 %5700, %v5694
    %v5702 = vpop.permute.xlu0 %5701
    %v5703 = vlaneseq
    %v5704 = vshrl.u32 %v5703, 7
    %v5705 = vsub.s32 %v1856, %v5704
    %v5706 = vrot.slane %v5699, %v5705
    %v5707 = vlaneseq
    %v5708 = vshrl.u32 %v5707, 7
    %v5709 = vsub.s32 %v1856, %v5708
    %v5710 = vrot.slane %v5702, %v5709
    %v5711 = vsel %vm737, %v5710, %v5706
    %v5713 = vsel %vm2108, %v5711, -inf
    %5714 = vmax.xlane.f32.xlu0 %v5713
    %v5715 = vpop.xlane.xlu0 %5714
    %v5717 = vlaneseq
    %v5718 = vshrl.u32 %v5717, 7
    %v5719 = vsub.s32 0, %v5718
    %v5720 = vrot.slane %v5715, %v5719
    %v5721 = vlaneseq
    %v5722 = vshrl.u32 %v5721, 7
    %v5723 = vsub.s32 1, %v5722
    %v5724 = vrot.slane %v5715, %v5723
    %vm5727 = vcmp.eq.f32.partialorder %v5693, %v5720
    %vm5728 = vcmp.eq.f32.partialorder %v5694, %v5724
    %v5729 = vsel %vm5727, %v2438, 8.0
    %v5730 = vsel %vm5728, %v2438, 8.0
    %5733 = vset.pattern.permute.xlu0 0
    %5734 = vperm.xlu0 %5733, %v5729
    %v5735 = vpop.permute.xlu0 %5734
    %5736 = vset.pattern.permute.xlu0 0
    %5737 = vperm.xlu0 %5736, %v5730
    %v5738 = vpop.permute.xlu0 %5737
    %v5739 = vlaneseq
    %v5740 = vshrl.u32 %v5739, 7
    %v5741 = vsub.s32 %v1856, %v5740
    %v5742 = vrot.slane %v5735, %v5741
    %v5743 = vlaneseq
    %v5744 = vshrl.u32 %v5743, 7
    %v5745 = vsub.s32 %v1856, %v5744
    %v5746 = vrot.slane %v5738, %v5745
    %v5747 = vsel %vm737, %v5746, %v5742
    %v5749 = vsel %vm2108, %v5747, inf
    %5750 = vmin.xlane.f32.xlu0 %v5749
    %v5751 = vpop.xlane.xlu0 %5750
    %vm5752 = vcmp.eq.f32.partialorder %v1857, %v5751
    %v5753 = vsel %vm5752, 1, 0
    %v5754 = vcvt.s32.f32 %v5753
    %v5755 = vmul.f32 %v5754, %v5711
    %v5756 = vsel %vm2108, %v5755, 0.0
    %5757 = vadd.xlane.f32.xlu0 %v5756
    %v5758 = vpop.xlane.xlu0 %5757
    %v5759 = vadd.f32 %v5102, %v5758
    %v5760 = vadd.f32 %v5103, %v5754
    %vm5761 = vcmask 42024
    %5762 = vst.msk [vmem:[#allocation20] sm:$0x3] %vm5761, %v5751
    %v5763 = vlaneseq
    %v5764 = vshrl.u32 %v5763, 7
    %v5765 = vsub.s32 0, %v5764
    %v5766 = vrot.slane %v5754, %v5765
    %5768 = vbcast.lane.b32.xlu0 %v5766, 256
    %v5769 = vpop.permute.xlu0 %5768
    %v5770 = vlaneseq
    %v5771 = vshrl.u32 %v5770, 7
    %v5772 = vsub.s32 1, %v5771
    %v5773 = vrot.slane %v5754, %v5772
    %5775 = vbcast.lane.b32.xlu0 %v5773, 256
    %v5776 = vpop.permute.xlu0 %5775
    %v5777 = vmul.f32 %v5769, %v516
    %v5778 = vmul.f32 %v5776, %v521
    %v5779 = vrot.slane %v5777, 4
    %v5780 = vadd.f32 %v5777, %v5779
    %v5781 = vrot.slane %v5780, 2
    %v5782 = vadd.f32 %v5780, %v5781
    %v5783 = vrot.slane %v5782, 1
    %v5784 = vadd.f32 %v5782, %v5783
    %v5785 = vrot.slane %v5778, 4
    %v5786 = vadd.f32 %v5778, %v5785
    %v5787 = vrot.slane %v5786, 2
    %v5788 = vadd.f32 %v5786, %v5787
    %v5789 = vrot.slane %v5788, 1
    %v5790 = vadd.f32 %v5788, %v5789
    %5791 = vmatprep.subr.mxu0 0.0
    %5792 = vmatpush1.msra.mxu0 %v341
    %5793 = vmatprep.subr.mxu0 0.0
    %5794 = vmatpush1.msra.mxu0 %v342
    %5795 = vmatprep.subr.mxu0 0.0
    %5796 = vmatpush1.msra.mxu0 %v343
    %5797 = vmatprep.subr.mxu0 0.0
    %5798 = vmatpush1.msra.mxu0 %v344
    %5799 = vmatprep.subr.mxu0 0.0
    %5800 = vmatpush1.msra.mxu0 0.0
    %5801 = vmatprep.subr.mxu0 0.0
    %5802 = vmatpush1.msra.mxu0 0.0
    %5803 = vmatprep.subr.mxu0 0.0
    %5804 = vmatpush1.msra.mxu0 0.0
    %5805 = vmatprep.subr.mxu0 0.0
    %5806 = vmatpush1.msra.mxu0 0.0
    %5807 = vmatprep.subr.mxu0 0.0
    %5808 = vmatpush1.msra.mxu0 0.0
    %5809 = vmatprep.subr.mxu0 0.0
    %5810 = vmatpush1.msra.mxu0 0.0
    %5811 = vmatprep.subr.mxu0 0.0
    %5812 = vmatpush1.msra.mxu0 0.0
    %5813 = vmatprep.subr.mxu0 0.0
    %5814 = vmatpush1.msra.mxu0 0.0
    %5815 = vmatprep.subr.mxu0 0.0
    %5816 = vmatpush1.msra.mxu0 0.0
    %5817 = vmatprep.subr.mxu0 0.0
    %5818 = vmatpush1.msra.mxu0 0.0
    %5819 = vmatprep.subr.mxu0 0.0
    %5820 = vmatpush1.msra.mxu0 0.0
    %5821 = vmatprep.subr.mxu0 0.0
    %5822 = vmatpush1.msra.mxu0 0.0
    %5823 = vmatprep.subr.mxu0 0.0
    %5824 = vmatpush1.msra.mxu0 0.0
    %5825 = vmatprep.subr.mxu0 0.0
    %5826 = vmatpush1.msra.mxu0 0.0
    %5827 = vmatprep.subr.mxu0 0.0
    %5828 = vmatpush1.msra.mxu0 0.0
    %5829 = vmatprep.subr.mxu0 0.0
    %5830 = vmatpush1.msra.mxu0 0.0
    %5831 = vmatprep.subr.mxu0 0.0
    %5832 = vmatpush1.msra.mxu0 0.0
    %5833 = vmatprep.subr.mxu0 0.0
    %5834 = vmatpush1.msra.mxu0 0.0
    %5835 = vmatprep.subr.mxu0 0.0
    %5836 = vmatpush1.msra.mxu0 0.0
    %5837 = vmatprep.subr.mxu0 0.0
    %5838 = vmatpush1.msra.mxu0 0.0
    %5839 = vmatprep.subr.mxu0 0.0
    %5840 = vmatpush1.msra.mxu0 0.0
    %5841 = vmatprep.subr.mxu0 0.0
    %5842 = vmatpush1.msra.mxu0 0.0
    %5843 = vmatprep.subr.mxu0 0.0
    %5844 = vmatpush1.msra.mxu0 0.0
    %5845 = vmatprep.subr.mxu0 0.0
    %5846 = vmatpush1.msra.mxu0 0.0
    %5847 = vmatprep.subr.mxu0 0.0
    %5848 = vmatpush1.msra.mxu0 0.0
    %5849 = vmatprep.subr.mxu0 0.0
    %5850 = vmatpush1.msra.mxu0 0.0
    %5851 = vmatprep.subr.mxu0 0.0
    %5852 = vmatpush1.msra.mxu0 0.0
    %5853 = vmatprep.subr.mxu0 0.0
    %5854 = vmatpush1.msra.mxu0 0.0
    %5855 = vmatprep.mubr.f32.mxu0 0.0
    %5856 = vmatmul.mubr.f32.gmra.mrb[0].mxu0 %v5260
    %v5857 = vpop.f32.mrb[0].mxu0
    %v5858 = vadd.f32 0.0, %v5857
    %v5859 = vpop.f32.mrb[0].mxu0
    %5860 = vdwg.mxu0
    %v5862 = vrot.slane %v5858, 1
    %v5865 = vadd.f32 %v5784, %v5858
    %v5866 = vadd.f32 %v5790, %v5862
    %v5867 = vmul.f32 %v5865, 0.5
    %v5868 = vmul.f32 %v5866, 0.5
    %v5869 = vtanh.pop %v5867
    %v5870 = vtanh.pop %v5868
    %v5871 = vmul.f32 %v5869, 0.5
    %v5872 = vmul.f32 %v5870, 0.5
    %v5873 = vadd.f32 %v5871, 0.5
    %v5874 = vadd.f32 %v5872, 0.5
    %v5875 = vtanh.pop %v5865
    %v5876 = vtanh.pop %v5866
    %v5877 = vmul.f32 %v5873, %v5240
    %v5878 = vmul.f32 %v5874, %v5241
    %5881 = vrot.lane.b32.xlu0 %v5875, 64
    %v5882 = vpop.permute.xlu0 %5881
    %5883 = vrot.lane.b32.xlu0 %v5876, 64
    %v5884 = vpop.permute.xlu0 %5883
    %v5887 = vmul.f32 %v5873, %v5882
    %v5888 = vmul.f32 %v5874, %v5884
    %5891 = vrot.lane.b32.xlu0 %v5887, 32
    %v5892 = vpop.permute.xlu0 %5891
    %5893 = vrot.lane.b32.xlu0 %v5888, 32
    %v5894 = vpop.permute.xlu0 %5893
    %v5897 = vadd.f32 %v5877, %v5892
    %v5898 = vadd.f32 %v5878, %v5894
    %v5899 = vtanh.pop %v5897
    %v5900 = vtanh.pop %v5898
    %5903 = vrot.lane.b32.xlu0 %v5899, 64
    %v5904 = vpop.permute.xlu0 %5903
    %5905 = vrot.lane.b32.xlu0 %v5900, 64
    %v5906 = vpop.permute.xlu0 %5905
    %v5909 = vmul.f32 %v5873, %v5904
    %v5910 = vmul.f32 %v5874, %v5906
    %v5913 = vrot.slane %v5910, 7
    %v5914 = vsel %vm737, %v5913, %v5909
    %5915 = vrot.lane.b32.xlu0 %v5914, 32
    %v5916 = vpop.permute.xlu0 %5915
    %v5917 = vsel %vm356, %v5916, 0
    %5919 = vmatprep.subr.mxu0 0.0
    %5920 = vmatpush1.msra.mxu0 %v1843
    %5921 = vmatprep.subr.mxu0 0.0
    %5922 = vmatpush1.msra.mxu0 %v1844
    %5923 = vmatprep.subr.mxu0 0.0
    %5924 = vmatpush1.msra.mxu0 %v1845
    %5925 = vmatprep.subr.mxu0 0.0
    %5926 = vmatpush1.msra.mxu0 %v1846
    %5927 = vmatprep.subr.mxu0 0.0
    %5928 = vmatpush1.msra.mxu0 0.0
    %5929 = vmatprep.subr.mxu0 0.0
    %5930 = vmatpush1.msra.mxu0 0.0
    %5931 = vmatprep.subr.mxu0 0.0
    %5932 = vmatpush1.msra.mxu0 0.0
    %5933 = vmatprep.subr.mxu0 0.0
    %5934 = vmatpush1.msra.mxu0 0.0
    %5935 = vmatprep.subr.mxu0 0.0
    %5936 = vmatpush1.msra.mxu0 0.0
    %5937 = vmatprep.subr.mxu0 0.0
    %5938 = vmatpush1.msra.mxu0 0.0
    %5939 = vmatprep.subr.mxu0 0.0
    %5940 = vmatpush1.msra.mxu0 0.0
    %5941 = vmatprep.subr.mxu0 0.0
    %5942 = vmatpush1.msra.mxu0 0.0
    %5943 = vmatprep.subr.mxu0 0.0
    %5944 = vmatpush1.msra.mxu0 0.0
    %5945 = vmatprep.subr.mxu0 0.0
    %5946 = vmatpush1.msra.mxu0 0.0
    %5947 = vmatprep.subr.mxu0 0.0
    %5948 = vmatpush1.msra.mxu0 0.0
    %5949 = vmatprep.subr.mxu0 0.0
    %5950 = vmatpush1.msra.mxu0 0.0
    %5951 = vmatprep.subr.mxu0 0.0
    %5952 = vmatpush1.msra.mxu0 0.0
    %5953 = vmatprep.subr.mxu0 0.0
    %5954 = vmatpush1.msra.mxu0 0.0
    %5955 = vmatprep.subr.mxu0 0.0
    %5956 = vmatpush1.msra.mxu0 0.0
    %5957 = vmatprep.subr.mxu0 0.0
    %5958 = vmatpush1.msra.mxu0 0.0
    %5959 = vmatprep.subr.mxu0 0.0
    %5960 = vmatpush1.msra.mxu0 0.0
    %5961 = vmatprep.subr.mxu0 0.0
    %5962 = vmatpush1.msra.mxu0 0.0
    %5963 = vmatprep.subr.mxu0 0.0
    %5964 = vmatpush1.msra.mxu0 0.0
    %5965 = vmatprep.subr.mxu0 0.0
    %5966 = vmatpush1.msra.mxu0 0.0
    %5967 = vmatprep.subr.mxu0 0.0
    %5968 = vmatpush1.msra.mxu0 0.0
    %5969 = vmatprep.subr.mxu0 0.0
    %5970 = vmatpush1.msra.mxu0 0.0
    %5971 = vmatprep.subr.mxu0 0.0
    %5972 = vmatpush1.msra.mxu0 0.0
    %5973 = vmatprep.subr.mxu0 0.0
    %5974 = vmatpush1.msra.mxu0 0.0
    %5975 = vmatprep.subr.mxu0 0.0
    %5976 = vmatpush1.msra.mxu0 0.0
    %5977 = vmatprep.subr.mxu0 0.0
    %5978 = vmatpush1.msra.mxu0 0.0
    %5979 = vmatprep.subr.mxu0 0.0
    %5980 = vmatpush1.msra.mxu0 0.0
    %5981 = vmatprep.subr.mxu0 0.0
    %5982 = vmatpush1.msra.mxu0 0.0
    %5983 = vmatprep.mubr.f32.mxu0 0.0
    %5984 = vmatmul.mubr.f32.gmra.mrb[0].mxu0 %v5917
    %v5985 = vpop.f32.mrb[0].mxu0
    %v5986 = vadd.f32 %v1968, %v5985
    %v5987 = vpop.f32.mrb[0].mxu0
    %5988 = vdwg.mxu0
    %v5991 = vunpack.c.l.s4 1966171168
    %v5992 = vunpack.c.0.s8 %v5991
    %v5993 = vlaneseq
    %v5994 = vshrl.u32 %v5993, 7
    %v5995 = vsub.s32 %v5992, %v5994
    %v5996 = vrot.slane %v5986, %v5995
    %v5997 = vcombine.high %v5996, %v5996
    %v5999 = vunpack.c.l.s4 1966171168
    %v6000 = vunpack.c.0.s8 %v5999
    %v6001 = vlaneseq
    %v6002 = vshrl.u32 %v6001, 7
    %v6003 = vsub.s32 %v6000, %v6002
    %v6004 = vrot.slane %v5996, %v6003
    %v6006 = vunpack.c.l.s4 1966171168
    %v6007 = vunpack.c.0.s8 %v6006
    %v6008 = vlaneseq
    %v6009 = vshrl.u32 %v6008, 7
    %v6010 = vsub.s32 %v6007, %v6009
    %v6011 = vrot.slane %v5997, %v6010
    %v6012 = vlaneseq
    %v6013 = vshrl.u32 %v6012, 7
    %v6014 = vsub.s32 0, %v6013
    %v6015 = vrot.slane %v6004, %v6014
    %v6016 = vlaneseq
    %v6017 = vshrl.u32 %v6016, 7
    %v6018 = vsub.s32 0, %v6017
    %v6019 = vrot.slane %v6011, %v6018
    %v6022 = vadd.f32 %v6015, %v1835
    %v6023 = vadd.f32 %v6019, %v1840
    %v6024 = vtanh.pop %v6022
    %v6025 = vtanh.pop %v6023
    %v6026 = vmul.f32 %v6024, %v2086
    %v6027 = vmul.f32 %v6025, %v2086
    %v6028 = vsel %vm356, %v6026, 0.0
    %6029 = vadd.xlane.f32.xlu0 %v6028
    %v6030 = vpop.xlane.xlu0 %6029
    %v6031 = vsel %vm356, %v6027, 0.0
    %6032 = vadd.xlane.f32.xlu0 %v6031
    %v6033 = vpop.xlane.xlu0 %6032
    %v6034 = vmul.f32 %v5760, 1e+08
    %v6036 = vlaneseq
    %v6037 = vshrl.u32 %v6036, 7
    %v6038 = vsub.s32 0, %v6037
    %v6039 = vrot.slane %v6034, %v6038
    %6041 = vbcast.lane.b32.xlu0 %v6039, 256
    %v6042 = vpop.permute.xlu0 %6041
    %v6043 = vlaneseq
    %v6044 = vshrl.u32 %v6043, 7
    %v6045 = vsub.s32 1, %v6044
    %v6046 = vrot.slane %v6034, %v6045
    %6048 = vbcast.lane.b32.xlu0 %v6046, 256
    %v6049 = vpop.permute.xlu0 %6048
    %v6052 = vsub.f32 %v6030, %v6042
    %v6053 = vsub.f32 %v6033, %v6049
    %6056 = vset.pattern.permute.xlu0 0
    %6057 = vperm.xlu0 %6056, %v6052
    %v6058 = vpop.permute.xlu0 %6057
    %6059 = vset.pattern.permute.xlu0 0
    %6060 = vperm.xlu0 %6059, %v6053
    %v6061 = vpop.permute.xlu0 %6060
    %v6062 = vlaneseq
    %v6063 = vshrl.u32 %v6062, 7
    %v6064 = vsub.s32 %v1856, %v6063
    %v6065 = vrot.slane %v6058, %v6064
    %v6066 = vlaneseq
    %v6067 = vshrl.u32 %v6066, 7
    %v6068 = vsub.s32 %v1856, %v6067
    %v6069 = vrot.slane %v6061, %v6068
    %v6070 = vsel %vm737, %v6069, %v6065
    %v6072 = vsel %vm2108, %v6070, -inf
    %6073 = vmax.xlane.f32.xlu0 %v6072
    %v6074 = vpop.xlane.xlu0 %6073
    %v6076 = vlaneseq
    %v6077 = vshrl.u32 %v6076, 7
    %v6078 = vsub.s32 0, %v6077
    %v6079 = vrot.slane %v6074, %v6078
    %v6080 = vlaneseq
    %v6081 = vshrl.u32 %v6080, 7
    %v6082 = vsub.s32 1, %v6081
    %v6083 = vrot.slane %v6074, %v6082
    %v6086 = vsub.f32 %v6052, %v6079
    %v6087 = vsub.f32 %v6053, %v6083
    %v6088 = vmul.f32 %v6086, 1.442695
    %v6089 = vpow.pop %v6088
    %v6090 = vmul.f32 %v6087, 1.442695
    %v6091 = vpow.pop %v6090
    %6094 = vset.pattern.permute.xlu0 0
    %6095 = vperm.xlu0 %6094, %v6089
    %v6096 = vpop.permute.xlu0 %6095
    %6097 = vset.pattern.permute.xlu0 0
    %6098 = vperm.xlu0 %6097, %v6091
    %v6099 = vpop.permute.xlu0 %6098
    %v6100 = vlaneseq
    %v6101 = vshrl.u32 %v6100, 7
    %v6102 = vsub.s32 %v1856, %v6101
    %v6103 = vrot.slane %v6096, %v6102
    %v6104 = vlaneseq
    %v6105 = vshrl.u32 %v6104, 7
    %v6106 = vsub.s32 %v1856, %v6105
    %v6107 = vrot.slane %v6099, %v6106
    %v6108 = vsel %vm737, %v6107, %v6103
    %v6110 = vsel %vm2108, %v6108, 0.0
    %6111 = vadd.xlane.f32.xlu0 %v6110
    %v6112 = vpop.xlane.xlu0 %6111
    %v6114 = vlaneseq
    %v6115 = vshrl.u32 %v6114, 7
    %v6116 = vsub.s32 0, %v6115
    %v6117 = vrot.slane %v6112, %v6116
    %v6118 = vlaneseq
    %v6119 = vshrl.u32 %v6118, 7
    %v6120 = vsub.s32 1, %v6119
    %v6121 = vrot.slane %v6112, %v6120
    %v6124 = vrcp.pop %v6117
    %v6125 = vmul.f32 %v6089, %v6124
    %v6126 = vrcp.pop %v6121
    %v6127 = vmul.f32 %v6091, %v6126
    %6129 = vset.pattern.permute.xlu0 0
    %6130 = vperm.xlu0 %6129, %v6125
    %v6131 = vpop.permute.xlu0 %6130
    %6134 = vset.pattern.permute.xlu0 0
    %6135 = vperm.xlu0 %6134, %v6127
    %v6136 = vpop.permute.xlu0 %6135
    %v6138 = vmul.f32 %v6131, %v1835
    %v6139 = vmul.f32 %v6136, %v1840
    %v6140 = vsel %vm356, %v6138, 0.0
    %v6141 = vrot.slane %v6140, 4
    %v6142 = vadd.f32 %v6140, %v6141
    %v6143 = vrot.slane %v6142, 2
    %v6144 = vadd.f32 %v6142, %v6143
    %v6145 = vrot.slane %v6144, 1
    %v6146 = vadd.f32 %v6144, %v6145
    %v6147 = vsel %vm356, %v6139, 0.0
    %v6148 = vrot.slane %v6147, 4
    %v6149 = vadd.f32 %v6147, %v6148
    %v6150 = vrot.slane %v6149, 2
    %v6151 = vadd.f32 %v6149, %v6150
    %v6152 = vrot.slane %v6151, 1
    %v6153 = vadd.f32 %v6151, %v6152
    %v6156 = vsel %vm737, %v6153, %v6146
    %v6157 = vsel %vm356, %v6156, 0
    %6159 = vmatprep.subr.mxu0 0.0
    %6160 = vmatpush1.msra.mxu0 %v1848
    %6161 = vmatprep.subr.mxu0 0.0
    %6162 = vmatpush1.msra.mxu0 %v1849
    %6163 = vmatprep.subr.mxu0 0.0
    %6164 = vmatpush1.msra.mxu0 %v1850
    %6165 = vmatprep.subr.mxu0 0.0
    %6166 = vmatpush1.msra.mxu0 %v1851
    %6167 = vmatprep.subr.mxu0 0.0
    %6168 = vmatpush1.msra.mxu0 0.0
    %6169 = vmatprep.subr.mxu0 0.0
    %6170 = vmatpush1.msra.mxu0 0.0
    %6171 = vmatprep.subr.mxu0 0.0
    %6172 = vmatpush1.msra.mxu0 0.0
    %6173 = vmatprep.subr.mxu0 0.0
    %6174 = vmatpush1.msra.mxu0 0.0
    %6175 = vmatprep.subr.mxu0 0.0
    %6176 = vmatpush1.msra.mxu0 0.0
    %6177 = vmatprep.subr.mxu0 0.0
    %6178 = vmatpush1.msra.mxu0 0.0
    %6179 = vmatprep.subr.mxu0 0.0
    %6180 = vmatpush1.msra.mxu0 0.0
    %6181 = vmatprep.subr.mxu0 0.0
    %6182 = vmatpush1.msra.mxu0 0.0
    %6183 = vmatprep.subr.mxu0 0.0
    %6184 = vmatpush1.msra.mxu0 0.0
    %6185 = vmatprep.subr.mxu0 0.0
    %6186 = vmatpush1.msra.mxu0 0.0
    %6187 = vmatprep.subr.mxu0 0.0
    %6188 = vmatpush1.msra.mxu0 0.0
    %6189 = vmatprep.subr.mxu0 0.0
    %6190 = vmatpush1.msra.mxu0 0.0
    %6191 = vmatprep.subr.mxu0 0.0
    %6192 = vmatpush1.msra.mxu0 0.0
    %6193 = vmatprep.subr.mxu0 0.0
    %6194 = vmatpush1.msra.mxu0 0.0
    %6195 = vmatprep.subr.mxu0 0.0
    %6196 = vmatpush1.msra.mxu0 0.0
    %6197 = vmatprep.subr.mxu0 0.0
    %6198 = vmatpush1.msra.mxu0 0.0
    %6199 = vmatprep.subr.mxu0 0.0
    %6200 = vmatpush1.msra.mxu0 0.0
    %6201 = vmatprep.subr.mxu0 0.0
    %6202 = vmatpush1.msra.mxu0 0.0
    %6203 = vmatprep.subr.mxu0 0.0
    %6204 = vmatpush1.msra.mxu0 0.0
    %6205 = vmatprep.subr.mxu0 0.0
    %6206 = vmatpush1.msra.mxu0 0.0
    %6207 = vmatprep.subr.mxu0 0.0
    %6208 = vmatpush1.msra.mxu0 0.0
    %6209 = vmatprep.subr.mxu0 0.0
    %6210 = vmatpush1.msra.mxu0 0.0
    %6211 = vmatprep.subr.mxu0 0.0
    %6212 = vmatpush1.msra.mxu0 0.0
    %6213 = vmatprep.subr.mxu0 0.0
    %6214 = vmatpush1.msra.mxu0 0.0
    %6215 = vmatprep.subr.mxu0 0.0
    %6216 = vmatpush1.msra.mxu0 0.0
    %6217 = vmatprep.subr.mxu0 0.0
    %6218 = vmatpush1.msra.mxu0 0.0
    %6219 = vmatprep.subr.mxu0 0.0
    %6220 = vmatpush1.msra.mxu0 0.0
    %6221 = vmatprep.subr.mxu0 0.0
    %6222 = vmatpush1.msra.mxu0 0.0
    %6223 = vmatprep.mubr.f32.mxu0 0.0
    %6224 = vmatmul.mubr.f32.gmra.mrb[0].mxu0 %v6157
    %v6225 = vpop.f32.mrb[0].mxu0
    %v6226 = vadd.f32 %v2195, %v6225
    %v6227 = vpop.f32.mrb[0].mxu0
    %6228 = vdwg.mxu0
    %v6231 = vunpack.c.l.s4 1966171168
    %v6232 = vunpack.c.0.s8 %v6231
    %v6233 = vlaneseq
    %v6234 = vshrl.u32 %v6233, 7
    %v6235 = vsub.s32 %v6232, %v6234
    %v6236 = vrot.slane %v6226, %v6235
    %v6237 = vcombine.high %v6236, %v6236
    %v6239 = vunpack.c.l.s4 1966171168
    %v6240 = vunpack.c.0.s8 %v6239
    %v6241 = vlaneseq
    %v6242 = vshrl.u32 %v6241, 7
    %v6243 = vsub.s32 %v6240, %v6242
    %v6244 = vrot.slane %v6236, %v6243
    %v6246 = vunpack.c.l.s4 1966171168
    %v6247 = vunpack.c.0.s8 %v6246
    %v6248 = vlaneseq
    %v6249 = vshrl.u32 %v6248, 7
    %v6250 = vsub.s32 %v6247, %v6249
    %v6251 = vrot.slane %v6237, %v6250
    %v6252 = vlaneseq
    %v6253 = vshrl.u32 %v6252, 7
    %v6254 = vsub.s32 0, %v6253
    %v6255 = vrot.slane %v6244, %v6254
    %v6256 = vlaneseq
    %v6257 = vshrl.u32 %v6256, 7
    %v6258 = vsub.s32 0, %v6257
    %v6259 = vrot.slane %v6251, %v6258
    %v6262 = vadd.f32 %v6255, %v2308
    %v6263 = vadd.f32 %v6259, %v2310
    %v6264 = vtanh.pop %v6262
    %v6265 = vtanh.pop %v6263
    %v6266 = vmul.f32 %v6264, 10.0
    %v6267 = vmul.f32 %v6265, 10.0
    %v6268 = vmul.f32 %v6266, %v2323
    %v6269 = vmul.f32 %v6267, %v2323
    %v6270 = vsel %vm356, %v6268, 0.0
    %6271 = vadd.xlane.f32.xlu0 %v6270
    %v6272 = vpop.xlane.xlu0 %6271
    %v6273 = vsel %vm356, %v6269, 0.0
    %6274 = vadd.xlane.f32.xlu0 %v6273
    %v6275 = vpop.xlane.xlu0 %6274
    %v6276 = vsub.f32 %v6272, %v6042
    %v6277 = vsub.f32 %v6275, %v6049
    %6280 = vset.pattern.permute.xlu0 0
    %6281 = vperm.xlu0 %6280, %v6276
    %v6282 = vpop.permute.xlu0 %6281
    %6283 = vset.pattern.permute.xlu0 0
    %6284 = vperm.xlu0 %6283, %v6277
    %v6285 = vpop.permute.xlu0 %6284
    %v6286 = vlaneseq
    %v6287 = vshrl.u32 %v6286, 7
    %v6288 = vsub.s32 %v1856, %v6287
    %v6289 = vrot.slane %v6282, %v6288
    %v6290 = vlaneseq
    %v6291 = vshrl.u32 %v6290, 7
    %v6292 = vsub.s32 %v1856, %v6291
    %v6293 = vrot.slane %v6285, %v6292
    %v6294 = vsel %vm737, %v6293, %v6289
    %v6296 = vsel %vm2108, %v6294, -inf
    %6297 = vmax.xlane.f32.xlu0 %v6296
    %v6298 = vpop.xlane.xlu0 %6297
    %v6300 = vlaneseq
    %v6301 = vshrl.u32 %v6300, 7
    %v6302 = vsub.s32 0, %v6301
    %v6303 = vrot.slane %v6298, %v6302
    %v6304 = vlaneseq
    %v6305 = vshrl.u32 %v6304, 7
    %v6306 = vsub.s32 1, %v6305
    %v6307 = vrot.slane %v6298, %v6306
    %v6310 = vsub.f32 %v6276, %v6303
    %v6311 = vsub.f32 %v6277, %v6307
    %v6312 = vmul.f32 %v6310, 1.442695
    %v6313 = vpow.pop %v6312
    %v6314 = vmul.f32 %v6311, 1.442695
    %v6315 = vpow.pop %v6314
    %6318 = vset.pattern.permute.xlu0 0
    %6319 = vperm.xlu0 %6318, %v6313
    %v6320 = vpop.permute.xlu0 %6319
    %6321 = vset.pattern.permute.xlu0 0
    %6322 = vperm.xlu0 %6321, %v6315
    %v6323 = vpop.permute.xlu0 %6322
    %v6324 = vlaneseq
    %v6325 = vshrl.u32 %v6324, 7
    %v6326 = vsub.s32 %v1856, %v6325
    %v6327 = vrot.slane %v6320, %v6326
    %v6328 = vlaneseq
    %v6329 = vshrl.u32 %v6328, 7
    %v6330 = vsub.s32 %v1856, %v6329
    %v6331 = vrot.slane %v6323, %v6330
    %v6332 = vsel %vm737, %v6331, %v6327
    %v6334 = vsel %vm2108, %v6332, 0.0
    %6335 = vadd.xlane.f32.xlu0 %v6334
    %v6336 = vpop.xlane.xlu0 %6335
    %v6337 = vlog2.pop %v6336
    %v6338 = vmul.f32 %v6337, 0.6931472
    %v6340 = vlaneseq
    %v6341 = vshrl.u32 %v6340, 7
    %v6342 = vsub.s32 0, %v6341
    %v6343 = vrot.slane %v6338, %v6342
    %v6344 = vlaneseq
    %v6345 = vshrl.u32 %v6344, 7
    %v6346 = vsub.s32 1, %v6345
    %v6347 = vrot.slane %v6338, %v6346
    %v6350 = vsub.f32 %v6310, %v6343
    %v6351 = vsub.f32 %v6311, %v6347
    %6354 = vset.pattern.permute.xlu0 0
    %6355 = vperm.xlu0 %6354, %v6350
    %v6356 = vpop.permute.xlu0 %6355
    %6357 = vset.pattern.permute.xlu0 0
    %6358 = vperm.xlu0 %6357, %v6351
    %v6359 = vpop.permute.xlu0 %6358
    %v6360 = vlaneseq
    %v6361 = vshrl.u32 %v6360, 7
    %v6362 = vsub.s32 %v1856, %v6361
    %v6363 = vrot.slane %v6356, %v6362
    %v6364 = vlaneseq
    %v6365 = vshrl.u32 %v6364, 7
    %v6366 = vsub.s32 %v1856, %v6365
    %v6367 = vrot.slane %v6359, %v6366
    %v6368 = vsel %vm737, %v6367, %v6363
    %v6370 = vsel %vm2108, %v6368, -inf
    %6371 = vmax.xlane.f32.xlu0 %v6370
    %v6372 = vpop.xlane.xlu0 %6371
    %v6374 = vlaneseq
    %v6375 = vshrl.u32 %v6374, 7
    %v6376 = vsub.s32 0, %v6375
    %v6377 = vrot.slane %v6372, %v6376
    %v6378 = vlaneseq
    %v6379 = vshrl.u32 %v6378, 7
    %v6380 = vsub.s32 1, %v6379
    %v6381 = vrot.slane %v6372, %v6380
    %vm6384 = vcmp.eq.f32.partialorder %v6350, %v6377
    %vm6385 = vcmp.eq.f32.partialorder %v6351, %v6381
    %v6386 = vsel %vm6384, %v2438, 8.0
    %v6387 = vsel %vm6385, %v2438, 8.0
    %6390 = vset.pattern.permute.xlu0 0
    %6391 = vperm.xlu0 %6390, %v6386
    %v6392 = vpop.permute.xlu0 %6391
    %6393 = vset.pattern.permute.xlu0 0
    %6394 = vperm.xlu0 %6393, %v6387
    %v6395 = vpop.permute.xlu0 %6394
    %v6396 = vlaneseq
    %v6397 = vshrl.u32 %v6396, 7
    %v6398 = vsub.s32 %v1856, %v6397
    %v6399 = vrot.slane %v6392, %v6398
    %v6400 = vlaneseq
    %v6401 = vshrl.u32 %v6400, 7
    %v6402 = vsub.s32 %v1856, %v6401
    %v6403 = vrot.slane %v6395, %v6402
    %v6404 = vsel %vm737, %v6403, %v6399
    %v6406 = vsel %vm2108, %v6404, inf
    %6407 = vmin.xlane.f32.xlu0 %v6406
    %v6408 = vpop.xlane.xlu0 %6407
    %vm6409 = vcmp.eq.f32.partialorder %v1857, %v6408
    %v6410 = vsel %vm6409, 1, 0
    %v6411 = vcvt.s32.f32 %v6410
    %v6412 = vmul.f32 %v6411, %v6368
    %v6413 = vsel %vm2108, %v6412, 0.0
    %6414 = vadd.xlane.f32.xlu0 %v6413
    %v6415 = vpop.xlane.xlu0 %6414
    %v6416 = vadd.f32 %v5759, %v6415
    %v6417 = vadd.f32 %v5760, %v6411
    %vm6418 = vcmask 50224
    %6419 = vst.msk [vmem:[#allocation20] sm:$0x3] %vm6418, %v6408
    %v6420 = vlaneseq
    %v6421 = vshrl.u32 %v6420, 7
    %v6422 = vsub.s32 0, %v6421
    %v6423 = vrot.slane %v6411, %v6422
    %6425 = vbcast.lane.b32.xlu0 %v6423, 256
    %v6426 = vpop.permute.xlu0 %6425
    %v6427 = vlaneseq
    %v6428 = vshrl.u32 %v6427, 7
    %v6429 = vsub.s32 1, %v6428
    %v6430 = vrot.slane %v6411, %v6429
    %6432 = vbcast.lane.b32.xlu0 %v6430, 256
    %v6433 = vpop.permute.xlu0 %6432
    %v6434 = vmul.f32 %v6426, %v516
    %v6435 = vmul.f32 %v6433, %v521
    %v6436 = vrot.slane %v6434, 4
    %v6437 = vadd.f32 %v6434, %v6436
    %v6438 = vrot.slane %v6437, 2
    %v6439 = vadd.f32 %v6437, %v6438
    %v6440 = vrot.slane %v6439, 1
    %v6441 = vadd.f32 %v6439, %v6440
    %v6442 = vrot.slane %v6435, 4
    %v6443 = vadd.f32 %v6435, %v6442
    %v6444 = vrot.slane %v6443, 2
    %v6445 = vadd.f32 %v6443, %v6444
    %v6446 = vrot.slane %v6445, 1
    %v6447 = vadd.f32 %v6445, %v6446
    %6448 = vmatprep.subr.mxu0 0.0
    %6449 = vmatpush1.msra.mxu0 %v341
    %6450 = vmatprep.subr.mxu0 0.0
    %6451 = vmatpush1.msra.mxu0 %v342
    %6452 = vmatprep.subr.mxu0 0.0
    %6453 = vmatpush1.msra.mxu0 %v343
    %6454 = vmatprep.subr.mxu0 0.0
    %6455 = vmatpush1.msra.mxu0 %v344
    %6456 = vmatprep.subr.mxu0 0.0
    %6457 = vmatpush1.msra.mxu0 0.0
    %6458 = vmatprep.subr.mxu0 0.0
    %6459 = vmatpush1.msra.mxu0 0.0
    %6460 = vmatprep.subr.mxu0 0.0
    %6461 = vmatpush1.msra.mxu0 0.0
    %6462 = vmatprep.subr.mxu0 0.0
    %6463 = vmatpush1.msra.mxu0 0.0
    %6464 = vmatprep.subr.mxu0 0.0
    %6465 = vmatpush1.msra.mxu0 0.0
    %6466 = vmatprep.subr.mxu0 0.0
    %6467 = vmatpush1.msra.mxu0 0.0
    %6468 = vmatprep.subr.mxu0 0.0
    %6469 = vmatpush1.msra.mxu0 0.0
    %6470 = vmatprep.subr.mxu0 0.0
    %6471 = vmatpush1.msra.mxu0 0.0
    %6472 = vmatprep.subr.mxu0 0.0
    %6473 = vmatpush1.msra.mxu0 0.0
    %6474 = vmatprep.subr.mxu0 0.0
    %6475 = vmatpush1.msra.mxu0 0.0
    %6476 = vmatprep.subr.mxu0 0.0
    %6477 = vmatpush1.msra.mxu0 0.0
    %6478 = vmatprep.subr.mxu0 0.0
    %6479 = vmatpush1.msra.mxu0 0.0
    %6480 = vmatprep.subr.mxu0 0.0
    %6481 = vmatpush1.msra.mxu0 0.0
    %6482 = vmatprep.subr.mxu0 0.0
    %6483 = vmatpush1.msra.mxu0 0.0
    %6484 = vmatprep.subr.mxu0 0.0
    %6485 = vmatpush1.msra.mxu0 0.0
    %6486 = vmatprep.subr.mxu0 0.0
    %6487 = vmatpush1.msra.mxu0 0.0
    %6488 = vmatprep.subr.mxu0 0.0
    %6489 = vmatpush1.msra.mxu0 0.0
    %6490 = vmatprep.subr.mxu0 0.0
    %6491 = vmatpush1.msra.mxu0 0.0
    %6492 = vmatprep.subr.mxu0 0.0
    %6493 = vmatpush1.msra.mxu0 0.0
    %6494 = vmatprep.subr.mxu0 0.0
    %6495 = vmatpush1.msra.mxu0 0.0
    %6496 = vmatprep.subr.mxu0 0.0
    %6497 = vmatpush1.msra.mxu0 0.0
    %6498 = vmatprep.subr.mxu0 0.0
    %6499 = vmatpush1.msra.mxu0 0.0
    %6500 = vmatprep.subr.mxu0 0.0
    %6501 = vmatpush1.msra.mxu0 0.0
    %6502 = vmatprep.subr.mxu0 0.0
    %6503 = vmatpush1.msra.mxu0 0.0
    %6504 = vmatprep.subr.mxu0 0.0
    %6505 = vmatpush1.msra.mxu0 0.0
    %6506 = vmatprep.subr.mxu0 0.0
    %6507 = vmatpush1.msra.mxu0 0.0
    %6508 = vmatprep.subr.mxu0 0.0
    %6509 = vmatpush1.msra.mxu0 0.0
    %6510 = vmatprep.subr.mxu0 0.0
    %6511 = vmatpush1.msra.mxu0 0.0
    %6512 = vmatprep.mubr.f32.mxu0 0.0
    %6513 = vmatmul.mubr.f32.gmra.mrb[0].mxu0 %v5917
    %v6514 = vpop.f32.mrb[0].mxu0
    %v6515 = vadd.f32 0.0, %v6514
    %v6516 = vpop.f32.mrb[0].mxu0
    %6517 = vdwg.mxu0
    %v6519 = vrot.slane %v6515, 1
    %v6522 = vadd.f32 %v6441, %v6515
    %v6523 = vadd.f32 %v6447, %v6519
    %v6524 = vmul.f32 %v6522, 0.5
    %v6525 = vmul.f32 %v6523, 0.5
    %v6526 = vtanh.pop %v6524
    %v6527 = vtanh.pop %v6525
    %v6528 = vmul.f32 %v6526, 0.5
    %v6529 = vmul.f32 %v6527, 0.5
    %v6530 = vadd.f32 %v6528, 0.5
    %v6531 = vadd.f32 %v6529, 0.5
    %v6532 = vtanh.pop %v6522
    %v6533 = vtanh.pop %v6523
    %v6534 = vmul.f32 %v6530, %v5897
    %v6535 = vmul.f32 %v6531, %v5898
    %6538 = vrot.lane.b32.xlu0 %v6532, 64
    %v6539 = vpop.permute.xlu0 %6538
    %6540 = vrot.lane.b32.xlu0 %v6533, 64
    %v6541 = vpop.permute.xlu0 %6540
    %v6544 = vmul.f32 %v6530, %v6539
    %v6545 = vmul.f32 %v6531, %v6541
    %6548 = vrot.lane.b32.xlu0 %v6544, 32
    %v6549 = vpop.permute.xlu0 %6548
    %6550 = vrot.lane.b32.xlu0 %v6545, 32
    %v6551 = vpop.permute.xlu0 %6550
    %v6554 = vadd.f32 %v6534, %v6549
    %v6555 = vadd.f32 %v6535, %v6551
    %v6556 = vtanh.pop %v6554
    %v6557 = vtanh.pop %v6555
    %6560 = vrot.lane.b32.xlu0 %v6556, 64
    %v6561 = vpop.permute.xlu0 %6560
    %6562 = vrot.lane.b32.xlu0 %v6557, 64
    %v6563 = vpop.permute.xlu0 %6562
    %v6566 = vmul.f32 %v6530, %v6561
    %v6567 = vmul.f32 %v6531, %v6563
    %v6570 = vrot.slane %v6567, 7
    %v6571 = vsel %vm737, %v6570, %v6566
    %6572 = vrot.lane.b32.xlu0 %v6571, 32
    %v6573 = vpop.permute.xlu0 %6572
    %v6574 = vsel %vm356, %v6573, 0
    %6576 = vmatprep.subr.mxu0 0.0
    %6577 = vmatpush1.msra.mxu0 %v1843
    %6578 = vmatprep.subr.mxu0 0.0
    %6579 = vmatpush1.msra.mxu0 %v1844
    %6580 = vmatprep.subr.mxu0 0.0
    %6581 = vmatpush1.msra.mxu0 %v1845
    %6582 = vmatprep.subr.mxu0 0.0
    %6583 = vmatpush1.msra.mxu0 %v1846
    %6584 = vmatprep.subr.mxu0 0.0
    %6585 = vmatpush1.msra.mxu0 0.0
    %6586 = vmatprep.subr.mxu0 0.0
    %6587 = vmatpush1.msra.mxu0 0.0
    %6588 = vmatprep.subr.mxu0 0.0
    %6589 = vmatpush1.msra.mxu0 0.0
    %6590 = vmatprep.subr.mxu0 0.0
    %6591 = vmatpush1.msra.mxu0 0.0
    %6592 = vmatprep.subr.mxu0 0.0
    %6593 = vmatpush1.msra.mxu0 0.0
    %6594 = vmatprep.subr.mxu0 0.0
    %6595 = vmatpush1.msra.mxu0 0.0
    %6596 = vmatprep.subr.mxu0 0.0
    %6597 = vmatpush1.msra.mxu0 0.0
    %6598 = vmatprep.subr.mxu0 0.0
    %6599 = vmatpush1.msra.mxu0 0.0
    %6600 = vmatprep.subr.mxu0 0.0
    %6601 = vmatpush1.msra.mxu0 0.0
    %6602 = vmatprep.subr.mxu0 0.0
    %6603 = vmatpush1.msra.mxu0 0.0
    %6604 = vmatprep.subr.mxu0 0.0
    %6605 = vmatpush1.msra.mxu0 0.0
    %6606 = vmatprep.subr.mxu0 0.0
    %6607 = vmatpush1.msra.mxu0 0.0
    %6608 = vmatprep.subr.mxu0 0.0
    %6609 = vmatpush1.msra.mxu0 0.0
    %6610 = vmatprep.subr.mxu0 0.0
    %6611 = vmatpush1.msra.mxu0 0.0
    %6612 = vmatprep.subr.mxu0 0.0
    %6613 = vmatpush1.msra.mxu0 0.0
    %6614 = vmatprep.subr.mxu0 0.0
    %6615 = vmatpush1.msra.mxu0 0.0
    %6616 = vmatprep.subr.mxu0 0.0
    %6617 = vmatpush1.msra.mxu0 0.0
    %6618 = vmatprep.subr.mxu0 0.0
    %6619 = vmatpush1.msra.mxu0 0.0
    %6620 = vmatprep.subr.mxu0 0.0
    %6621 = vmatpush1.msra.mxu0 0.0
    %6622 = vmatprep.subr.mxu0 0.0
    %6623 = vmatpush1.msra.mxu0 0.0
    %6624 = vmatprep.subr.mxu0 0.0
    %6625 = vmatpush1.msra.mxu0 0.0
    %6626 = vmatprep.subr.mxu0 0.0
    %6627 = vmatpush1.msra.mxu0 0.0
    %6628 = vmatprep.subr.mxu0 0.0
    %6629 = vmatpush1.msra.mxu0 0.0
    %6630 = vmatprep.subr.mxu0 0.0
    %6631 = vmatpush1.msra.mxu0 0.0
    %6632 = vmatprep.subr.mxu0 0.0
    %6633 = vmatpush1.msra.mxu0 0.0
    %6634 = vmatprep.subr.mxu0 0.0
    %6635 = vmatpush1.msra.mxu0 0.0
    %6636 = vmatprep.subr.mxu0 0.0
    %6637 = vmatpush1.msra.mxu0 0.0
    %6638 = vmatprep.subr.mxu0 0.0
    %6639 = vmatpush1.msra.mxu0 0.0
    %6640 = vmatprep.mubr.f32.mxu0 0.0
    %6641 = vmatmul.mubr.f32.gmra.mrb[0].mxu0 %v6574
    %v6642 = vpop.f32.mrb[0].mxu0
    %v6643 = vadd.f32 %v1968, %v6642
    %v6644 = vpop.f32.mrb[0].mxu0
    %6645 = vdwg.mxu0
    %v6648 = vunpack.c.l.s4 1966171168
    %v6649 = vunpack.c.0.s8 %v6648
    %v6650 = vlaneseq
    %v6651 = vshrl.u32 %v6650, 7
    %v6652 = vsub.s32 %v6649, %v6651
    %v6653 = vrot.slane %v6643, %v6652
    %v6654 = vcombine.high %v6653, %v6653
    %v6656 = vunpack.c.l.s4 1966171168
    %v6657 = vunpack.c.0.s8 %v6656
    %v6658 = vlaneseq
    %v6659 = vshrl.u32 %v6658, 7
    %v6660 = vsub.s32 %v6657, %v6659
    %v6661 = vrot.slane %v6653, %v6660
    %v6663 = vunpack.c.l.s4 1966171168
    %v6664 = vunpack.c.0.s8 %v6663
    %v6665 = vlaneseq
    %v6666 = vshrl.u32 %v6665, 7
    %v6667 = vsub.s32 %v6664, %v6666
    %v6668 = vrot.slane %v6654, %v6667
    %v6669 = vlaneseq
    %v6670 = vshrl.u32 %v6669, 7
    %v6671 = vsub.s32 0, %v6670
    %v6672 = vrot.slane %v6661, %v6671
    %v6673 = vlaneseq
    %v6674 = vshrl.u32 %v6673, 7
    %v6675 = vsub.s32 0, %v6674
    %v6676 = vrot.slane %v6668, %v6675
    %v6679 = vadd.f32 %v6672, %v1835
    %v6680 = vadd.f32 %v6676, %v1840
    %v6681 = vtanh.pop %v6679
    %v6682 = vtanh.pop %v6680
    %v6683 = vmul.f32 %v6681, %v2086
    %v6684 = vmul.f32 %v6682, %v2086
    %v6685 = vsel %vm356, %v6683, 0.0
    %6686 = vadd.xlane.f32.xlu0 %v6685
    %v6687 = vpop.xlane.xlu0 %6686
    %v6688 = vsel %vm356, %v6684, 0.0
    %6689 = vadd.xlane.f32.xlu0 %v6688
    %v6690 = vpop.xlane.xlu0 %6689
    %v6691 = vmul.f32 %v6417, 1e+08
    %v6693 = vlaneseq
    %v6694 = vshrl.u32 %v6693, 7
    %v6695 = vsub.s32 0, %v6694
    %v6696 = vrot.slane %v6691, %v6695
    %6698 = vbcast.lane.b32.xlu0 %v6696, 256
    %v6699 = vpop.permute.xlu0 %6698
    %v6700 = vlaneseq
    %v6701 = vshrl.u32 %v6700, 7
    %v6702 = vsub.s32 1, %v6701
    %v6703 = vrot.slane %v6691, %v6702
    %6705 = vbcast.lane.b32.xlu0 %v6703, 256
    %v6706 = vpop.permute.xlu0 %6705
    %v6709 = vsub.f32 %v6687, %v6699
    %v6710 = vsub.f32 %v6690, %v6706
    %6713 = vset.pattern.permute.xlu0 0
    %6714 = vperm.xlu0 %6713, %v6709
    %v6715 = vpop.permute.xlu0 %6714
    %6716 = vset.pattern.permute.xlu0 0
    %6717 = vperm.xlu0 %6716, %v6710
    %v6718 = vpop.permute.xlu0 %6717
    %v6719 = vlaneseq
    %v6720 = vshrl.u32 %v6719, 7
    %v6721 = vsub.s32 %v1856, %v6720
    %v6722 = vrot.slane %v6715, %v6721
    %v6723 = vlaneseq
    %v6724 = vshrl.u32 %v6723, 7
    %v6725 = vsub.s32 %v1856, %v6724
    %v6726 = vrot.slane %v6718, %v6725
    %v6727 = vsel %vm737, %v6726, %v6722
    %v6729 = vsel %vm2108, %v6727, -inf
    %6730 = vmax.xlane.f32.xlu0 %v6729
    %v6731 = vpop.xlane.xlu0 %6730
    %v6733 = vlaneseq
    %v6734 = vshrl.u32 %v6733, 7
    %v6735 = vsub.s32 0, %v6734
    %v6736 = vrot.slane %v6731, %v6735
    %v6737 = vlaneseq
    %v6738 = vshrl.u32 %v6737, 7
    %v6739 = vsub.s32 1, %v6738
    %v6740 = vrot.slane %v6731, %v6739
    %v6743 = vsub.f32 %v6709, %v6736
    %v6744 = vsub.f32 %v6710, %v6740
    %v6745 = vmul.f32 %v6743, 1.442695
    %v6746 = vpow.pop %v6745
    %v6747 = vmul.f32 %v6744, 1.442695
    %v6748 = vpow.pop %v6747
    %6751 = vset.pattern.permute.xlu0 0
    %6752 = vperm.xlu0 %6751, %v6746
    %v6753 = vpop.permute.xlu0 %6752
    %6754 = vset.pattern.permute.xlu0 0
    %6755 = vperm.xlu0 %6754, %v6748
    %v6756 = vpop.permute.xlu0 %6755
    %v6757 = vlaneseq
    %v6758 = vshrl.u32 %v6757, 7
    %v6759 = vsub.s32 %v1856, %v6758
    %v6760 = vrot.slane %v6753, %v6759
    %v6761 = vlaneseq
    %v6762 = vshrl.u32 %v6761, 7
    %v6763 = vsub.s32 %v1856, %v6762
    %v6764 = vrot.slane %v6756, %v6763
    %v6765 = vsel %vm737, %v6764, %v6760
    %v6767 = vsel %vm2108, %v6765, 0.0
    %6768 = vadd.xlane.f32.xlu0 %v6767
    %v6769 = vpop.xlane.xlu0 %6768
    %v6771 = vlaneseq
    %v6772 = vshrl.u32 %v6771, 7
    %v6773 = vsub.s32 0, %v6772
    %v6774 = vrot.slane %v6769, %v6773
    %v6775 = vlaneseq
    %v6776 = vshrl.u32 %v6775, 7
    %v6777 = vsub.s32 1, %v6776
    %v6778 = vrot.slane %v6769, %v6777
    %v6781 = vrcp.pop %v6774
    %v6782 = vmul.f32 %v6746, %v6781
    %v6783 = vrcp.pop %v6778
    %v6784 = vmul.f32 %v6748, %v6783
    %6786 = vset.pattern.permute.xlu0 0
    %6787 = vperm.xlu0 %6786, %v6782
    %v6788 = vpop.permute.xlu0 %6787
    %6791 = vset.pattern.permute.xlu0 0
    %6792 = vperm.xlu0 %6791, %v6784
    %v6793 = vpop.permute.xlu0 %6792
    %v6795 = vmul.f32 %v6788, %v1835
    %v6796 = vmul.f32 %v6793, %v1840
    %v6797 = vsel %vm356, %v6795, 0.0
    %v6798 = vrot.slane %v6797, 4
    %v6799 = vadd.f32 %v6797, %v6798
    %v6800 = vrot.slane %v6799, 2
    %v6801 = vadd.f32 %v6799, %v6800
    %v6802 = vrot.slane %v6801, 1
    %v6803 = vadd.f32 %v6801, %v6802
    %v6804 = vsel %vm356, %v6796, 0.0
    %v6805 = vrot.slane %v6804, 4
    %v6806 = vadd.f32 %v6804, %v6805
    %v6807 = vrot.slane %v6806, 2
    %v6808 = vadd.f32 %v6806, %v6807
    %v6809 = vrot.slane %v6808, 1
    %v6810 = vadd.f32 %v6808, %v6809
    %v6813 = vsel %vm737, %v6810, %v6803
    %v6814 = vsel %vm356, %v6813, 0
    %6816 = vmatprep.subr.mxu0 0.0
    %6817 = vmatpush1.msra.mxu0 %v1848
    %6818 = vmatprep.subr.mxu0 0.0
    %6819 = vmatpush1.msra.mxu0 %v1849
    %6820 = vmatprep.subr.mxu0 0.0
    %6821 = vmatpush1.msra.mxu0 %v1850
    %6822 = vmatprep.subr.mxu0 0.0
    %6823 = vmatpush1.msra.mxu0 %v1851
    %6824 = vmatprep.subr.mxu0 0.0
    %6825 = vmatpush1.msra.mxu0 0.0
    %6826 = vmatprep.subr.mxu0 0.0
    %6827 = vmatpush1.msra.mxu0 0.0
    %6828 = vmatprep.subr.mxu0 0.0
    %6829 = vmatpush1.msra.mxu0 0.0
    %6830 = vmatprep.subr.mxu0 0.0
    %6831 = vmatpush1.msra.mxu0 0.0
    %6832 = vmatprep.subr.mxu0 0.0
    %6833 = vmatpush1.msra.mxu0 0.0
    %6834 = vmatprep.subr.mxu0 0.0
    %6835 = vmatpush1.msra.mxu0 0.0
    %6836 = vmatprep.subr.mxu0 0.0
    %6837 = vmatpush1.msra.mxu0 0.0
    %6838 = vmatprep.subr.mxu0 0.0
    %6839 = vmatpush1.msra.mxu0 0.0
    %6840 = vmatprep.subr.mxu0 0.0
    %6841 = vmatpush1.msra.mxu0 0.0
    %6842 = vmatprep.subr.mxu0 0.0
    %6843 = vmatpush1.msra.mxu0 0.0
    %6844 = vmatprep.subr.mxu0 0.0
    %6845 = vmatpush1.msra.mxu0 0.0
    %6846 = vmatprep.subr.mxu0 0.0
    %6847 = vmatpush1.msra.mxu0 0.0
    %6848 = vmatprep.subr.mxu0 0.0
    %6849 = vmatpush1.msra.mxu0 0.0
    %6850 = vmatprep.subr.mxu0 0.0
    %6851 = vmatpush1.msra.mxu0 0.0
    %6852 = vmatprep.subr.mxu0 0.0
    %6853 = vmatpush1.msra.mxu0 0.0
    %6854 = vmatprep.subr.mxu0 0.0
    %6855 = vmatpush1.msra.mxu0 0.0
    %6856 = vmatprep.subr.mxu0 0.0
    %6857 = vmatpush1.msra.mxu0 0.0
    %6858 = vmatprep.subr.mxu0 0.0
    %6859 = vmatpush1.msra.mxu0 0.0
    %6860 = vmatprep.subr.mxu0 0.0
    %6861 = vmatpush1.msra.mxu0 0.0
    %6862 = vmatprep.subr.mxu0 0.0
    %6863 = vmatpush1.msra.mxu0 0.0
    %6864 = vmatprep.subr.mxu0 0.0
    %6865 = vmatpush1.msra.mxu0 0.0
    %6866 = vmatprep.subr.mxu0 0.0
    %6867 = vmatpush1.msra.mxu0 0.0
    %6868 = vmatprep.subr.mxu0 0.0
    %6869 = vmatpush1.msra.mxu0 0.0
    %6870 = vmatprep.subr.mxu0 0.0
    %6871 = vmatpush1.msra.mxu0 0.0
    %6872 = vmatprep.subr.mxu0 0.0
    %6873 = vmatpush1.msra.mxu0 0.0
    %6874 = vmatprep.subr.mxu0 0.0
    %6875 = vmatpush1.msra.mxu0 0.0
    %6876 = vmatprep.subr.mxu0 0.0
    %6877 = vmatpush1.msra.mxu0 0.0
    %6878 = vmatprep.subr.mxu0 0.0
    %6879 = vmatpush1.msra.mxu0 0.0
    %6880 = vmatprep.mubr.f32.mxu0 0.0
    %6881 = vmatmul.mubr.f32.gmra.mrb[0].mxu0 %v6814
    %v6882 = vpop.f32.mrb[0].mxu0
    %v6883 = vadd.f32 %v2195, %v6882
    %v6884 = vpop.f32.mrb[0].mxu0
    %6885 = vdwg.mxu0
    %v6888 = vunpack.c.l.s4 1966171168
    %v6889 = vunpack.c.0.s8 %v6888
    %v6890 = vlaneseq
    %v6891 = vshrl.u32 %v6890, 7
    %v6892 = vsub.s32 %v6889, %v6891
    %v6893 = vrot.slane %v6883, %v6892
    %v6894 = vcombine.high %v6893, %v6893
    %v6896 = vunpack.c.l.s4 1966171168
    %v6897 = vunpack.c.0.s8 %v6896
    %v6898 = vlaneseq
    %v6899 = vshrl.u32 %v6898, 7
    %v6900 = vsub.s32 %v6897, %v6899
    %v6901 = vrot.slane %v6893, %v6900
    %v6903 = vunpack.c.l.s4 1966171168
    %v6904 = vunpack.c.0.s8 %v6903
    %v6905 = vlaneseq
    %v6906 = vshrl.u32 %v6905, 7
    %v6907 = vsub.s32 %v6904, %v6906
    %v6908 = vrot.slane %v6894, %v6907
    %v6909 = vlaneseq
    %v6910 = vshrl.u32 %v6909, 7
    %v6911 = vsub.s32 0, %v6910
    %v6912 = vrot.slane %v6901, %v6911
    %v6913 = vlaneseq
    %v6914 = vshrl.u32 %v6913, 7
    %v6915 = vsub.s32 0, %v6914
    %v6916 = vrot.slane %v6908, %v6915
    %v6919 = vadd.f32 %v6912, %v2308
    %v6920 = vadd.f32 %v6916, %v2310
    %v6921 = vtanh.pop %v6919
    %v6922 = vtanh.pop %v6920
    %v6923 = vmul.f32 %v6921, 10.0
    %v6924 = vmul.f32 %v6922, 10.0
    %v6925 = vmul.f32 %v6923, %v2323
    %v6926 = vmul.f32 %v6924, %v2323
    %v6927 = vsel %vm356, %v6925, 0.0
    %6928 = vadd.xlane.f32.xlu0 %v6927
    %v6929 = vpop.xlane.xlu0 %6928
    %v6930 = vsel %vm356, %v6926, 0.0
    %6931 = vadd.xlane.f32.xlu0 %v6930
    %v6932 = vpop.xlane.xlu0 %6931
    %v6933 = vsub.f32 %v6929, %v6699
    %v6934 = vsub.f32 %v6932, %v6706
    %6937 = vset.pattern.permute.xlu0 0
    %6938 = vperm.xlu0 %6937, %v6933
    %v6939 = vpop.permute.xlu0 %6938
    %6940 = vset.pattern.permute.xlu0 0
    %6941 = vperm.xlu0 %6940, %v6934
    %v6942 = vpop.permute.xlu0 %6941
    %v6943 = vlaneseq
    %v6944 = vshrl.u32 %v6943, 7
    %v6945 = vsub.s32 %v1856, %v6944
    %v6946 = vrot.slane %v6939, %v6945
    %v6947 = vlaneseq
    %v6948 = vshrl.u32 %v6947, 7
    %v6949 = vsub.s32 %v1856, %v6948
    %v6950 = vrot.slane %v6942, %v6949
    %v6951 = vsel %vm737, %v6950, %v6946
    %v6953 = vsel %vm2108, %v6951, -inf
    %6954 = vmax.xlane.f32.xlu0 %v6953
    %v6955 = vpop.xlane.xlu0 %6954
    %v6957 = vlaneseq
    %v6958 = vshrl.u32 %v6957, 7
    %v6959 = vsub.s32 0, %v6958
    %v6960 = vrot.slane %v6955, %v6959
    %v6961 = vlaneseq
    %v6962 = vshrl.u32 %v6961, 7
    %v6963 = vsub.s32 1, %v6962
    %v6964 = vrot.slane %v6955, %v6963
    %v6967 = vsub.f32 %v6933, %v6960
    %v6968 = vsub.f32 %v6934, %v6964
    %v6969 = vmul.f32 %v6967, 1.442695
    %v6970 = vpow.pop %v6969
    %v6971 = vmul.f32 %v6968, 1.442695
    %v6972 = vpow.pop %v6971
    %6975 = vset.pattern.permute.xlu0 0
    %6976 = vperm.xlu0 %6975, %v6970
    %v6977 = vpop.permute.xlu0 %6976
    %6978 = vset.pattern.permute.xlu0 0
    %6979 = vperm.xlu0 %6978, %v6972
    %v6980 = vpop.permute.xlu0 %6979
    %v6981 = vlaneseq
    %v6982 = vshrl.u32 %v6981, 7
    %v6983 = vsub.s32 %v1856, %v6982
    %v6984 = vrot.slane %v6977, %v6983
    %v6985 = vlaneseq
    %v6986 = vshrl.u32 %v6985, 7
    %v6987 = vsub.s32 %v1856, %v6986
    %v6988 = vrot.slane %v6980, %v6987
    %v6989 = vsel %vm737, %v6988, %v6984
    %v6991 = vsel %vm2108, %v6989, 0.0
    %6992 = vadd.xlane.f32.xlu0 %v6991
    %v6993 = vpop.xlane.xlu0 %6992
    %v6994 = vlog2.pop %v6993
    %v6995 = vmul.f32 %v6994, 0.6931472
    %v6997 = vlaneseq
    %v6998 = vshrl.u32 %v6997, 7
    %v6999 = vsub.s32 0, %v6998
    %v7000 = vrot.slane %v6995, %v6999
    %v7001 = vlaneseq
    %v7002 = vshrl.u32 %v7001, 7
    %v7003 = vsub.s32 1, %v7002
    %v7004 = vrot.slane %v6995, %v7003
    %v7007 = vsub.f32 %v6967, %v7000
    %v7008 = vsub.f32 %v6968, %v7004
    %7011 = vset.pattern.permute.xlu0 0
    %7012 = vperm.xlu0 %7011, %v7007
    %v7013 = vpop.permute.xlu0 %7012
    %7014 = vset.pattern.permute.xlu0 0
    %7015 = vperm.xlu0 %7014, %v7008
    %v7016 = vpop.permute.xlu0 %7015
    %v7017 = vlaneseq
    %v7018 = vshrl.u32 %v7017, 7
    %v7019 = vsub.s32 %v1856, %v7018
    %v7020 = vrot.slane %v7013, %v7019
    %v7021 = vlaneseq
    %v7022 = vshrl.u32 %v7021, 7
    %v7023 = vsub.s32 %v1856, %v7022
    %v7024 = vrot.slane %v7016, %v7023
    %v7025 = vsel %vm737, %v7024, %v7020
    %v7027 = vsel %vm2108, %v7025, -inf
    %7028 = vmax.xlane.f32.xlu0 %v7027
    %v7029 = vpop.xlane.xlu0 %7028
    %v7031 = vlaneseq
    %v7032 = vshrl.u32 %v7031, 7
    %v7033 = vsub.s32 0, %v7032
    %v7034 = vrot.slane %v7029, %v7033
    %v7035 = vlaneseq
    %v7036 = vshrl.u32 %v7035, 7
    %v7037 = vsub.s32 1, %v7036
    %v7038 = vrot.slane %v7029, %v7037
    %vm7041 = vcmp.eq.f32.partialorder %v7007, %v7034
    %vm7042 = vcmp.eq.f32.partialorder %v7008, %v7038
    %v7043 = vsel %vm7041, %v2438, 8.0
    %v7044 = vsel %vm7042, %v2438, 8.0
    %7047 = vset.pattern.permute.xlu0 0
    %7048 = vperm.xlu0 %7047, %v7043
    %v7049 = vpop.permute.xlu0 %7048
    %7050 = vset.pattern.permute.xlu0 0
    %7051 = vperm.xlu0 %7050, %v7044
    %v7052 = vpop.permute.xlu0 %7051
    %v7053 = vlaneseq
    %v7054 = vshrl.u32 %v7053, 7
    %v7055 = vsub.s32 %v1856, %v7054
    %v7056 = vrot.slane %v7049, %v7055
    %v7057 = vlaneseq
    %v7058 = vshrl.u32 %v7057, 7
    %v7059 = vsub.s32 %v1856, %v7058
    %v7060 = vrot.slane %v7052, %v7059
    %v7061 = vsel %vm737, %v7060, %v7056
    %v7063 = vsel %vm2108, %v7061, inf
    %7064 = vmin.xlane.f32.xlu0 %v7063
    %v7065 = vpop.xlane.xlu0 %7064
    %vm7066 = vcmp.eq.f32.partialorder %v1857, %v7065
    %v7067 = vsel %vm7066, 1, 0
    %v7068 = vcvt.s32.f32 %v7067
    %v7069 = vmul.f32 %v7068, %v7025
    %v7070 = vsel %vm2108, %v7069, 0.0
    %7071 = vadd.xlane.f32.xlu0 %v7070
    %v7072 = vpop.xlane.xlu0 %7071
    %v7073 = vadd.f32 %v6416, %v7072
    %vm7074 = vcmask 58424
    %7075 = vst.msk [vmem:[#allocation20] sm:$0x3] %vm7074, %v7065
    %7076 = vst.msk [vmem:[%s20] sm:$0x3] %vm2472, %v7073
    // Predicated region
    $region118: #{tpu_custom_call.1} parent=1 // pred_check
      _
    $region119: #{tpu_custom_call.1} parent=1 // pred_check_branch
      %7078 = sbr.rel (0) target = $region121
    $region120: #{tpu_custom_call.1} parent=1 // pred_region
      %s7080 = ssub.s32 32, 32
      %7081 = vsyncadd [#allocation5], %s7080
      %s7083 = sshll.u32 [#allocation20], 4
      %s7084 = int_to_ptr.vmem [resolvable:$true] %s7083
      %7086 = dma.vmem_to_hbm [thread:$0]  %s7084, 32, %s19, [#allocation5]
    $region121: #{tpu_custom_call.1} parent=1 // pred_fallthru
      _
    // Predicated region
    $region122: #{tpu_custom_call.1} parent=1 // pred_check
      _
    $region123: #{tpu_custom_call.1} parent=1 // pred_check_branch
      %7088 = sbr.rel (0) target = $region125
    $region124: #{tpu_custom_call.1} parent=1 // pred_region
      _
    $region125: #{tpu_custom_call.1} parent=1 // pred_fallthru
      _
    // Predicated region
    $region126: #{tpu_custom_call.1} parent=1 // pred_check
      _
    $region127: #{tpu_custom_call.1} parent=1 // pred_check_branch
      %7090 = sbr.rel (0) target = $region129
    $region128: #{tpu_custom_call.1} parent=1 // pred_region
      %7091 = dma.done [#allocation5], 32
    $region129: #{tpu_custom_call.1} parent=1 // pred_fallthru
      _
    // Predicated region
    $region130: #{tpu_custom_call.1} parent=1 // pred_check
      _
    $region131: #{tpu_custom_call.1} parent=1 // pred_check_branch
      %7093 = sbr.rel (0) target = $region133
    $region132: #{tpu_custom_call.1} parent=1 // pred_region
      _
    $region133: #{tpu_custom_call.1} parent=1 // pred_fallthru
      _
    %7094 = vsyncpa [#allocation4], 1
    %7095 = vsyncpa [#allocation7], 1
    %7096 = vsyncpa [#allocation10], 1
    %7097 = vsyncpa [#allocation13], 1
    %7098 = vsyncpa [#allocation16], 1
    %7099 = vsyncpa [#allocation19], 1
    %7100 = vsyncpa [#allocation5], 1

</llo_original>
